<compile_context>
chip_gen: v5e
topology: v5e:2x2
jax: 0.10.0
libtpu: 0.0.40
codegen_flags: <defaults>
</compile_context>

<pallas_src>
import jax
import jax.numpy as jnp
from jax.experimental import pallas as pl
from jax.experimental.pallas import tpu as pltpu

# ---- "gv" configuration (small, self-consistent synthetic values) ----
H1HIDDEN = 16          # gv['h1hiddensize']  (== crosssize so seqextract chaining is shape-consistent)
POSEMBEDSIZE = 8       # gv['posembedsize']
POSEMBED_SCALE = 0.1   # gv['posembed']
HIDPOOL = True         # gv['hidpool']
CVNUM = 13
SEQLEN = 256
MSEQLEN = 8
CROSSSIZE = 16
RESERVED = 4           # H1Model.__init__ hard-sets self.reserved = 4

F_CAT = CVNUM + H1HIDDEN * int(HIDPOOL)        # cvnumnew = 29
HIDWIN = H1HIDDEN * MSEQLEN                    # hidden window width = 128
K_SE = 4 * F_CAT + HIDWIN                      # concatenated matmul K = 244
NC1 = SEQLEN // MSEQLEN                        # 32 chunks (extractor 1)
NC2 = SEQLEN // (MSEQLEN * MSEQLEN)            # 4 chunks  (extractor 2)
OUTW = 2 * RESERVED * CROSSSIZE                # 128 output lanes (both heads packed)


# ----------------------------------------------------------------------
# Fused H1Model forward kernel (grid = (1,), everything stays in VMEM)
# ----------------------------------------------------------------------
def _h1_fused_kernel(dcv_ref, w1_ref, b1_ref,
                     wse1_ref, bpe1_ref, wse2_ref, bpe2_ref, out_ref):
    T, B, C13 = dcv_ref.shape
    H = w1_ref.shape[-1]

    # --- sanitize: dcv[~dcv.isfinite()] = 0  (abs/compare form: safe Mosaic lowering) ---
    x = dcv_ref[...]
    x = jnp.where(jnp.abs(x) < jnp.inf, x, 0.0)

    # --- dcss1 (CssModel ~ Linear + ReLU) on the flattened sequence, single M=T*B matmul ---
    # TODO(synk): CssModel definition is not provided in the source; approximated as Linear+ReLU.
    dx = jnp.dot(x.reshape(T * B, C13), w1_ref[...], preferred_element_type=jnp.float32)
    dx = jnp.maximum(dx + b1_ref[...], 0.0)
    dx = dx.reshape(T, B, H)

    # --- hidpool: dcv = cat([dcv, dx], -1) -> (T, B, F=29) ---
    xcat = jnp.concatenate([x, dx], axis=-1)

    def seqext(xin, hidden, w_cat, bias_pe, xstride, hiddenstride):
        # One batched chunk computation: pools + hidden window -> single (nc*B, K) matmul.
        Tn, Bn, F = xin.shape
        nc = Tn // xstride
        Hh = hidden.shape[-1]

        xc = xin.reshape(nc, xstride, Bn, F)                 # (nc, stride, B, F)
        mean = jnp.mean(xc, axis=1)                          # (nc, B, F)
        d = xc - mean[:, None, :, :]
        var = jnp.sum(d * d, axis=1) * (1.0 / (xstride - 1)) # unbiased, matches torch .std(dim=0)
        std = jnp.sqrt(var)
        mx = jnp.max(xc, axis=1)
        mn = jnp.min(xc, axis=1)

        # hidden window, (step, feature) order; w_cat's hidden rows use the matching order
        hc = hidden.reshape(nc, hiddenstride, Bn, Hh)        # (nc, hs, B, H)
        pieces = [mean, std, mx, mn] + [hc[:, s] for s in range(hiddenstride)]
        feats = jnp.concatenate(pieces, axis=-1)             # (nc, B, 4F + hs*H)

        y = jnp.dot(feats.reshape(nc * Bn, feats.shape[-1]), w_cat,
                    preferred_element_type=jnp.float32)      # (nc*B, C) single MXU pass
        y = y.reshape(nc, Bn, w_cat.shape[-1]) + bias_pe[:, None, :]  # pos-embed folded bias
        return jnp.maximum(y, 0.0)                           # CssModel activation (ReLU)

    dx1 = seqext(xcat, dx,  wse1_ref[...], bpe1_ref[...], MSEQLEN,           MSEQLEN)  # (32, B, C)
    dx2 = seqext(xcat, dx1, wse2_ref[...], bpe2_ref[...], MSEQLEN * MSEQLEN, MSEQLEN)  # (4,  B, C)

    # --- outputs: last RESERVED chunks of each, permuted to (B, reserved*C), packed lane-dense ---
    nc1, nc2 = dx1.shape[0], dx2.shape[0]
    out_pieces = ([dx1[nc1 - RESERVED + r] for r in range(RESERVED)] +
                  [dx2[nc2 - RESERVED + r] for r in range(RESERVED)])
    out_ref[...] = jnp.concatenate(out_pieces, axis=-1)      # (B, 128) unmasked full-vreg store


def _full_spec(shape):
    nd = len(shape)
    return pl.BlockSpec(shape, lambda i, _nd=nd: (0,) * _nd)


def h1_forward(dcv, params):
    # dcv: (T=256, B, 13) — stands in for d2i.geth1seq(...)[:, valid, :]
    # TODO(synk): d2i.geth1seq + the `valid` boolean gather are host-side data loading;
    # the kernel receives the already-gathered sequence tensor.
    T, B, C13 = dcv.shape

    out = pl.pallas_call(
        _h1_fused_kernel,
        out_shape=jax.ShapeDtypeStruct((B, OUTW), jnp.float32),
        grid_spec=pltpu.PrefetchScalarGridSpec(
            num_scalar_prefetch=0,
            grid=(1,),
            in_specs=[
                _full_spec((T, B, C13)),            # dcv
                _full_spec((CVNUM, H1HIDDEN)),      # dcss1 weight
                _full_spec((1, H1HIDDEN)),          # dcss1 bias
                _full_spec((K_SE, CROSSSIZE)),      # se1 concatenated weight
                _full_spec((NC1, CROSSSIZE)),       # se1 per-chunk bias (pos-embed folded)
                _full_spec((K_SE, CROSSSIZE)),      # se2 concatenated weight
                _full_spec((NC2, CROSSSIZE)),       # se2 per-chunk bias (pos-embed folded)
            ],
            out_specs=_full_spec((B, OUTW)),
        ),
        compiler_params=pltpu.CompilerParams(
            dimension_semantics=("arbitrary",),
            vmem_limit_bytes=32 * 1024 * 1024,
        ),
    )(dcv.astype(jnp.float32),
      params['dcss1_w'], params['dcss1_b'],
      params['se1']['w_cat'], params['se1']['bias_pe'],
      params['se2']['w_cat'], params['se2']['bias_pe'])

    half = RESERVED * CROSSSIZE
    return [out[:, :half], out[:, half:]]


h1_forward = jax.jit(h1_forward)


# ----------------------------------------------------------------------
# Parameters (deterministic synthetic init)
# ----------------------------------------------------------------------
def init_params(key):
    def dense(k, fan_in, fan_out):
        return jax.random.normal(k, (fan_in, fan_out), jnp.float32) / jnp.sqrt(float(fan_in))

    ks = jax.random.split(key, 3)
    params = {
        'dcss1_w': dense(ks[0], CVNUM, H1HIDDEN),
        'dcss1_b': jnp.zeros((1, H1HIDDEN), jnp.float32),
    }

    def seqext_params(kbase, nc):
        kk = jax.random.split(kbase, 7)
        w_avg = dense(kk[0], F_CAT, CROSSSIZE)
        w_std = dense(kk[1], F_CAT, CROSSSIZE)
        w_max = dense(kk[2], F_CAT, CROSSSIZE)
        w_min = dense(kk[3], F_CAT, CROSSSIZE)
        # Hidden-window weight rows stored in (step, feature) order — a fixed row
        # permutation of csm1's (feature, step) layout; identical linear map.
        w_hid = dense(kk[4], HIDWIN, CROSSSIZE)
        w_pe = dense(kk[5], POSEMBEDSIZE, CROSSSIZE)
        b = jnp.zeros((1, CROSSSIZE), jnp.float32)
        pos_embed = jax.random.normal(kk[6], (10240, POSEMBEDSIZE), jnp.float32) * 0.02

        # Single concatenated-K weight; row layout matches kernel feature order
        # [mean | std | max | min | hidden(step-major)].
        w_cat = jnp.concatenate([w_avg, w_std, w_max, w_min, w_hid], axis=0)   # (244, C)
        # Position-embedding contribution folded into a per-chunk bias:
        #   bias_pe[c] = (posembed[c] * scale) @ w_pe + b    (pos = 0..nc-1, as in the reference)
        bias_pe = (pos_embed[:nc] * POSEMBED_SCALE) @ w_pe + b                 # (nc, C)
        return {'w_cat': w_cat, 'bias_pe': bias_pe}

    params['se1'] = seqext_params(ks[1], NC1)
    params['se2'] = seqext_params(ks[2], NC2)
    return params


if __name__ == "__main__":
    key = jax.random.PRNGKey(0)
    pkey, dkey = jax.random.split(key)
    params = init_params(pkey)

    B = 8
    dcv = jax.random.normal(dkey, (SEQLEN, B, CVNUM), jnp.float32)

    outs = h1_forward(dcv, params)
    outs = [jax.block_until_ready(o) for o in outs]

    assert outs[0].shape == (B, RESERVED * CROSSSIZE), outs[0].shape
    assert outs[1].shape == (B, RESERVED * CROSSSIZE), outs[1].shape
    assert all(bool(jnp.all(jnp.isfinite(o))) for o in outs)
    print("KERNEL_OK")
</pallas_src>

<mosaic_0001>
module attributes {stable_mosaic.version = 11 : i64} {
  func.func @_h1_fused_kernel(%arg0: i32, %arg1: memref<256x8x13xf32, #tpu.memory_space<vmem>>, %arg2: memref<13x16xf32, #tpu.memory_space<vmem>>, %arg3: memref<1x16xf32, #tpu.memory_space<vmem>>, %arg4: memref<244x16xf32, #tpu.memory_space<vmem>>, %arg5: memref<32x16xf32, #tpu.memory_space<vmem>>, %arg6: memref<244x16xf32, #tpu.memory_space<vmem>>, %arg7: memref<4x16xf32, #tpu.memory_space<vmem>>, %arg8: memref<8x128xf32, #tpu.memory_space<vmem>>) attributes {dimension_semantics = [#tpu.dimension_semantics<arbitrary>], iteration_bounds = array<i64: 1>, scalar_prefetch = 0 : i64, scratch_operands = 0 : i64, tpu.core_type = #tpu.core_type<tc>, window_params = [{pipeline_mode = #tpu.pipeline_mode<synchronous>, transform_indices = @transform_0, window_bounds = array<i64: 256, 8, 13>}, {pipeline_mode = #tpu.pipeline_mode<synchronous>, transform_indices = @transform_1, window_bounds = array<i64: 13, 16>}, {pipeline_mode = #tpu.pipeline_mode<synchronous>, transform_indices = @transform_2, window_bounds = array<i64: 1, 16>}, {pipeline_mode = #tpu.pipeline_mode<synchronous>, transform_indices = @transform_3, window_bounds = array<i64: 244, 16>}, {pipeline_mode = #tpu.pipeline_mode<synchronous>, transform_indices = @transform_4, window_bounds = array<i64: 32, 16>}, {pipeline_mode = #tpu.pipeline_mode<synchronous>, transform_indices = @transform_5, window_bounds = array<i64: 244, 16>}, {pipeline_mode = #tpu.pipeline_mode<synchronous>, transform_indices = @transform_6, window_bounds = array<i64: 4, 16>}, {pipeline_mode = #tpu.pipeline_mode<synchronous>, transform_indices = @transform_7, window_bounds = array<i64: 8, 128>}]} {
    %c0 = arith.constant 0 : index
    %c0_0 = arith.constant 0 : index
    %c0_1 = arith.constant 0 : index
    %0 = vector.load %arg1[%c0, %c0_0, %c0_1] : memref<256x8x13xf32, #tpu.memory_space<vmem>>, vector<256x8x13xf32>
    %1 = math.absf %0 : vector<256x8x13xf32>
    %cst = arith.constant 0x7F800000 : f32
    %2 = vector.broadcast %cst : f32 to vector<256x8x13xf32>
    %3 = arith.cmpf olt, %1, %2 : vector<256x8x13xf32>
    %cst_2 = arith.constant 0.000000e+00 : f32
    %4 = vector.broadcast %cst_2 : f32 to vector<256x8x13xf32>
    %5 = arith.select %3, %0, %4 : vector<256x8x13xi1>, vector<256x8x13xf32>
    %6 = vector.shape_cast %5 : vector<256x8x13xf32> to vector<2048x13xf32>
    %c0_3 = arith.constant 0 : index
    %c0_4 = arith.constant 0 : index
    %7 = vector.load %arg2[%c0_3, %c0_4] : memref<13x16xf32, #tpu.memory_space<vmem>>, vector<13x16xf32>
    %cst_5 = arith.constant dense<0.000000e+00> : vector<2048x16xf32>
    %8 = tpu.matmul %6, %7, %cst_5 {dimension_numbers = #tpu.dot_dimension_numbers<[1], [0], [0], [1], [0, 0, 1, 1], [], []>} : vector<2048x13xf32>, vector<13x16xf32>, vector<2048x16xf32> -> vector<2048x16xf32>
    %c0_6 = arith.constant 0 : index
    %c0_7 = arith.constant 0 : index
    %9 = vector.load %arg3[%c0_6, %c0_7] : memref<1x16xf32, #tpu.memory_space<vmem>>, vector<1x16xf32>
    %10 = vector.broadcast %9 : vector<1x16xf32> to vector<2048x16xf32>
    %11 = arith.addf %8, %10 : vector<2048x16xf32>
    %cst_8 = arith.constant 0.000000e+00 : f32
    %12 = vector.broadcast %cst_8 : f32 to vector<2048x16xf32>
    %13 = arith.maximumf %11, %12 : vector<2048x16xf32>
    %14 = vector.shape_cast %13 : vector<2048x16xf32> to vector<256x8x16xf32>
    %15 = tpu.concatenate %5, %14 in 2 : vector<256x8x13xf32>, vector<256x8x16xf32> -> vector<256x8x29xf32>
    %c0_9 = arith.constant 0 : index
    %c0_10 = arith.constant 0 : index
    %16 = vector.load %arg4[%c0_9, %c0_10] : memref<244x16xf32, #tpu.memory_space<vmem>>, vector<244x16xf32>
    %c0_11 = arith.constant 0 : index
    %c0_12 = arith.constant 0 : index
    %17 = vector.load %arg5[%c0_11, %c0_12] : memref<32x16xf32, #tpu.memory_space<vmem>>, vector<32x16xf32>
    %18 = vector.shape_cast %15 : vector<256x8x29xf32> to vector<32x8x8x29xf32>
    %cst_13 = arith.constant dense<0.000000e+00> : vector<32x8x29xf32>
    %19 = vector.multi_reduction <add>, %18, %cst_13 [1] : vector<32x8x8x29xf32> to vector<32x8x29xf32>
    %cst_14 = arith.constant 8.000000e+00 : f32
    %20 = vector.broadcast %cst_14 : f32 to vector<32x8x29xf32>
    %21 = arith.divf %19, %20 : vector<32x8x29xf32>
    %22 = vector.shape_cast %21 : vector<32x8x29xf32> to vector<32x1x8x29xf32>
    %23 = vector.broadcast %22 : vector<32x1x8x29xf32> to vector<32x8x8x29xf32>
    %24 = arith.subf %18, %23 : vector<32x8x8x29xf32>
    %25 = arith.mulf %24, %24 : vector<32x8x8x29xf32>
    %cst_15 = arith.constant dense<0.000000e+00> : vector<32x8x29xf32>
    %26 = vector.multi_reduction <add>, %25, %cst_15 [1] : vector<32x8x8x29xf32> to vector<32x8x29xf32>
    %cst_16 = arith.constant 0.142857149 : f32
    %27 = vector.broadcast %cst_16 : f32 to vector<32x8x29xf32>
    %28 = arith.mulf %26, %27 : vector<32x8x29xf32>
    %29 = math.sqrt %28 : vector<32x8x29xf32>
    %cst_17 = arith.constant dense<0xFF800000> : vector<32x8x29xf32>
    %30 = vector.multi_reduction <maximumf>, %18, %cst_17 [1] : vector<32x8x8x29xf32> to vector<32x8x29xf32>
    %cst_18 = arith.constant dense<0x7F800000> : vector<32x8x29xf32>
    %31 = vector.multi_reduction <minimumf>, %18, %cst_18 [1] : vector<32x8x8x29xf32> to vector<32x8x29xf32>
    %32 = vector.shape_cast %14 : vector<256x8x16xf32> to vector<32x8x8x16xf32>
    %33 = vector.extract_strided_slice %32 {offsets = [0, 0, 0, 0], sizes = [32, 1, 8, 16], strides = [1, 1, 1, 1]} : vector<32x8x8x16xf32> to vector<32x1x8x16xf32>
    %34 = vector.shape_cast %33 : vector<32x1x8x16xf32> to vector<32x8x16xf32>
    %35 = vector.extract_strided_slice %32 {offsets = [0, 1, 0, 0], sizes = [32, 1, 8, 16], strides = [1, 1, 1, 1]} : vector<32x8x8x16xf32> to vector<32x1x8x16xf32>
    %36 = vector.shape_cast %35 : vector<32x1x8x16xf32> to vector<32x8x16xf32>
    %37 = vector.extract_strided_slice %32 {offsets = [0, 2, 0, 0], sizes = [32, 1, 8, 16], strides = [1, 1, 1, 1]} : vector<32x8x8x16xf32> to vector<32x1x8x16xf32>
    %38 = vector.shape_cast %37 : vector<32x1x8x16xf32> to vector<32x8x16xf32>
    %39 = vector.extract_strided_slice %32 {offsets = [0, 3, 0, 0], sizes = [32, 1, 8, 16], strides = [1, 1, 1, 1]} : vector<32x8x8x16xf32> to vector<32x1x8x16xf32>
    %40 = vector.shape_cast %39 : vector<32x1x8x16xf32> to vector<32x8x16xf32>
    %41 = vector.extract_strided_slice %32 {offsets = [0, 4, 0, 0], sizes = [32, 1, 8, 16], strides = [1, 1, 1, 1]} : vector<32x8x8x16xf32> to vector<32x1x8x16xf32>
    %42 = vector.shape_cast %41 : vector<32x1x8x16xf32> to vector<32x8x16xf32>
    %43 = vector.extract_strided_slice %32 {offsets = [0, 5, 0, 0], sizes = [32, 1, 8, 16], strides = [1, 1, 1, 1]} : vector<32x8x8x16xf32> to vector<32x1x8x16xf32>
    %44 = vector.shape_cast %43 : vector<32x1x8x16xf32> to vector<32x8x16xf32>
    %45 = vector.extract_strided_slice %32 {offsets = [0, 6, 0, 0], sizes = [32, 1, 8, 16], strides = [1, 1, 1, 1]} : vector<32x8x8x16xf32> to vector<32x1x8x16xf32>
    %46 = vector.shape_cast %45 : vector<32x1x8x16xf32> to vector<32x8x16xf32>
    %47 = vector.extract_strided_slice %32 {offsets = [0, 7, 0, 0], sizes = [32, 1, 8, 16], strides = [1, 1, 1, 1]} : vector<32x8x8x16xf32> to vector<32x1x8x16xf32>
    %48 = vector.shape_cast %47 : vector<32x1x8x16xf32> to vector<32x8x16xf32>
    %49 = tpu.concatenate %21, %29, %30, %31, %34, %36, %38, %40, %42, %44, %46, %48 in 2 : vector<32x8x29xf32>, vector<32x8x29xf32>, vector<32x8x29xf32>, vector<32x8x29xf32>, vector<32x8x16xf32>, vector<32x8x16xf32>, vector<32x8x16xf32>, vector<32x8x16xf32>, vector<32x8x16xf32>, vector<32x8x16xf32>, vector<32x8x16xf32>, vector<32x8x16xf32> -> vector<32x8x244xf32>
    %50 = vector.shape_cast %49 : vector<32x8x244xf32> to vector<256x244xf32>
    %cst_19 = arith.constant dense<0.000000e+00> : vector<256x16xf32>
    %51 = tpu.matmul %50, %16, %cst_19 {dimension_numbers = #tpu.dot_dimension_numbers<[1], [0], [0], [1], [0, 0, 1, 1], [], []>} : vector<256x244xf32>, vector<244x16xf32>, vector<256x16xf32> -> vector<256x16xf32>
    %52 = vector.shape_cast %51 : vector<256x16xf32> to vector<32x8x16xf32>
    %53 = vector.shape_cast %17 : vector<32x16xf32> to vector<32x1x16xf32>
    %54 = vector.broadcast %53 : vector<32x1x16xf32> to vector<32x8x16xf32>
    %55 = arith.addf %52, %54 : vector<32x8x16xf32>
    %cst_20 = arith.constant 0.000000e+00 : f32
    %56 = vector.broadcast %cst_20 : f32 to vector<32x8x16xf32>
    %57 = arith.maximumf %55, %56 : vector<32x8x16xf32>
    %c0_21 = arith.constant 0 : index
    %c0_22 = arith.constant 0 : index
    %58 = vector.load %arg6[%c0_21, %c0_22] : memref<244x16xf32, #tpu.memory_space<vmem>>, vector<244x16xf32>
    %c0_23 = arith.constant 0 : index
    %c0_24 = arith.constant 0 : index
    %59 = vector.load %arg7[%c0_23, %c0_24] : memref<4x16xf32, #tpu.memory_space<vmem>>, vector<4x16xf32>
    %60 = vector.shape_cast %15 : vector<256x8x29xf32> to vector<4x64x8x29xf32>
    %cst_25 = arith.constant dense<0.000000e+00> : vector<4x8x29xf32>
    %61 = vector.multi_reduction <add>, %60, %cst_25 [1] : vector<4x64x8x29xf32> to vector<4x8x29xf32>
    %cst_26 = arith.constant 6.400000e+01 : f32
    %62 = vector.broadcast %cst_26 : f32 to vector<4x8x29xf32>
    %63 = arith.divf %61, %62 : vector<4x8x29xf32>
    %64 = vector.shape_cast %63 : vector<4x8x29xf32> to vector<4x1x8x29xf32>
    %65 = vector.broadcast %64 : vector<4x1x8x29xf32> to vector<4x64x8x29xf32>
    %66 = arith.subf %60, %65 : vector<4x64x8x29xf32>
    %67 = arith.mulf %66, %66 : vector<4x64x8x29xf32>
    %cst_27 = arith.constant dense<0.000000e+00> : vector<4x8x29xf32>
    %68 = vector.multi_reduction <add>, %67, %cst_27 [1] : vector<4x64x8x29xf32> to vector<4x8x29xf32>
    %cst_28 = arith.constant 0.0158730168 : f32
    %69 = vector.broadcast %cst_28 : f32 to vector<4x8x29xf32>
    %70 = arith.mulf %68, %69 : vector<4x8x29xf32>
    %71 = math.sqrt %70 : vector<4x8x29xf32>
    %cst_29 = arith.constant dense<0xFF800000> : vector<4x8x29xf32>
    %72 = vector.multi_reduction <maximumf>, %60, %cst_29 [1] : vector<4x64x8x29xf32> to vector<4x8x29xf32>
    %cst_30 = arith.constant dense<0x7F800000> : vector<4x8x29xf32>
    %73 = vector.multi_reduction <minimumf>, %60, %cst_30 [1] : vector<4x64x8x29xf32> to vector<4x8x29xf32>
    %74 = vector.shape_cast %57 : vector<32x8x16xf32> to vector<4x8x8x16xf32>
    %75 = vector.extract_strided_slice %74 {offsets = [0, 0, 0, 0], sizes = [4, 1, 8, 16], strides = [1, 1, 1, 1]} : vector<4x8x8x16xf32> to vector<4x1x8x16xf32>
    %76 = vector.shape_cast %75 : vector<4x1x8x16xf32> to vector<4x8x16xf32>
    %77 = vector.extract_strided_slice %74 {offsets = [0, 1, 0, 0], sizes = [4, 1, 8, 16], strides = [1, 1, 1, 1]} : vector<4x8x8x16xf32> to vector<4x1x8x16xf32>
    %78 = vector.shape_cast %77 : vector<4x1x8x16xf32> to vector<4x8x16xf32>
    %79 = vector.extract_strided_slice %74 {offsets = [0, 2, 0, 0], sizes = [4, 1, 8, 16], strides = [1, 1, 1, 1]} : vector<4x8x8x16xf32> to vector<4x1x8x16xf32>
    %80 = vector.shape_cast %79 : vector<4x1x8x16xf32> to vector<4x8x16xf32>
    %81 = vector.extract_strided_slice %74 {offsets = [0, 3, 0, 0], sizes = [4, 1, 8, 16], strides = [1, 1, 1, 1]} : vector<4x8x8x16xf32> to vector<4x1x8x16xf32>
    %82 = vector.shape_cast %81 : vector<4x1x8x16xf32> to vector<4x8x16xf32>
    %83 = vector.extract_strided_slice %74 {offsets = [0, 4, 0, 0], sizes = [4, 1, 8, 16], strides = [1, 1, 1, 1]} : vector<4x8x8x16xf32> to vector<4x1x8x16xf32>
    %84 = vector.shape_cast %83 : vector<4x1x8x16xf32> to vector<4x8x16xf32>
    %85 = vector.extract_strided_slice %74 {offsets = [0, 5, 0, 0], sizes = [4, 1, 8, 16], strides = [1, 1, 1, 1]} : vector<4x8x8x16xf32> to vector<4x1x8x16xf32>
    %86 = vector.shape_cast %85 : vector<4x1x8x16xf32> to vector<4x8x16xf32>
    %87 = vector.extract_strided_slice %74 {offsets = [0, 6, 0, 0], sizes = [4, 1, 8, 16], strides = [1, 1, 1, 1]} : vector<4x8x8x16xf32> to vector<4x1x8x16xf32>
    %88 = vector.shape_cast %87 : vector<4x1x8x16xf32> to vector<4x8x16xf32>
    %89 = vector.extract_strided_slice %74 {offsets = [0, 7, 0, 0], sizes = [4, 1, 8, 16], strides = [1, 1, 1, 1]} : vector<4x8x8x16xf32> to vector<4x1x8x16xf32>
    %90 = vector.shape_cast %89 : vector<4x1x8x16xf32> to vector<4x8x16xf32>
    %91 = tpu.concatenate %63, %71, %72, %73, %76, %78, %80, %82, %84, %86, %88, %90 in 2 : vector<4x8x29xf32>, vector<4x8x29xf32>, vector<4x8x29xf32>, vector<4x8x29xf32>, vector<4x8x16xf32>, vector<4x8x16xf32>, vector<4x8x16xf32>, vector<4x8x16xf32>, vector<4x8x16xf32>, vector<4x8x16xf32>, vector<4x8x16xf32>, vector<4x8x16xf32> -> vector<4x8x244xf32>
    %92 = vector.shape_cast %91 : vector<4x8x244xf32> to vector<32x244xf32>
    %cst_31 = arith.constant dense<0.000000e+00> : vector<32x16xf32>
    %93 = tpu.matmul %92, %58, %cst_31 {dimension_numbers = #tpu.dot_dimension_numbers<[1], [0], [0], [1], [0, 0, 1, 1], [], []>} : vector<32x244xf32>, vector<244x16xf32>, vector<32x16xf32> -> vector<32x16xf32>
    %94 = vector.shape_cast %93 : vector<32x16xf32> to vector<4x8x16xf32>
    %95 = vector.shape_cast %59 : vector<4x16xf32> to vector<4x1x16xf32>
    %96 = vector.broadcast %95 : vector<4x1x16xf32> to vector<4x8x16xf32>
    %97 = arith.addf %94, %96 : vector<4x8x16xf32>
    %cst_32 = arith.constant 0.000000e+00 : f32
    %98 = vector.broadcast %cst_32 : f32 to vector<4x8x16xf32>
    %99 = arith.maximumf %97, %98 : vector<4x8x16xf32>
    %100 = vector.extract_strided_slice %57 {offsets = [28, 0, 0], sizes = [1, 8, 16], strides = [1, 1, 1]} : vector<32x8x16xf32> to vector<1x8x16xf32>
    %101 = vector.shape_cast %100 : vector<1x8x16xf32> to vector<8x16xf32>
    %102 = vector.extract_strided_slice %57 {offsets = [29, 0, 0], sizes = [1, 8, 16], strides = [1, 1, 1]} : vector<32x8x16xf32> to vector<1x8x16xf32>
    %103 = vector.shape_cast %102 : vector<1x8x16xf32> to vector<8x16xf32>
    %104 = vector.extract_strided_slice %57 {offsets = [30, 0, 0], sizes = [1, 8, 16], strides = [1, 1, 1]} : vector<32x8x16xf32> to vector<1x8x16xf32>
    %105 = vector.shape_cast %104 : vector<1x8x16xf32> to vector<8x16xf32>
    %106 = vector.extract_strided_slice %57 {offsets = [31, 0, 0], sizes = [1, 8, 16], strides = [1, 1, 1]} : vector<32x8x16xf32> to vector<1x8x16xf32>
    %107 = vector.shape_cast %106 : vector<1x8x16xf32> to vector<8x16xf32>
    %108 = vector.extract_strided_slice %99 {offsets = [0, 0, 0], sizes = [1, 8, 16], strides = [1, 1, 1]} : vector<4x8x16xf32> to vector<1x8x16xf32>
    %109 = vector.shape_cast %108 : vector<1x8x16xf32> to vector<8x16xf32>
    %110 = vector.extract_strided_slice %99 {offsets = [1, 0, 0], sizes = [1, 8, 16], strides = [1, 1, 1]} : vector<4x8x16xf32> to vector<1x8x16xf32>
    %111 = vector.shape_cast %110 : vector<1x8x16xf32> to vector<8x16xf32>
    %112 = vector.extract_strided_slice %99 {offsets = [2, 0, 0], sizes = [1, 8, 16], strides = [1, 1, 1]} : vector<4x8x16xf32> to vector<1x8x16xf32>
    %113 = vector.shape_cast %112 : vector<1x8x16xf32> to vector<8x16xf32>
    %114 = vector.extract_strided_slice %99 {offsets = [3, 0, 0], sizes = [1, 8, 16], strides = [1, 1, 1]} : vector<4x8x16xf32> to vector<1x8x16xf32>
    %115 = vector.shape_cast %114 : vector<1x8x16xf32> to vector<8x16xf32>
    %116 = tpu.concatenate %101, %103, %105, %107, %109, %111, %113, %115 in 1 : vector<8x16xf32>, vector<8x16xf32>, vector<8x16xf32>, vector<8x16xf32>, vector<8x16xf32>, vector<8x16xf32>, vector<8x16xf32>, vector<8x16xf32> -> vector<8x128xf32>
    %c0_33 = arith.constant 0 : index
    %c0_34 = arith.constant 0 : index
    %117 = vector.load %arg8[%c0_33, %c0_34] : memref<8x128xf32, #tpu.memory_space<vmem>>, vector<8x128xf32>
    tpu.vector_store %arg8[%c0_33, %c0_34], %116 {strides = array<i32>} : memref<8x128xf32, #tpu.memory_space<vmem>>, vector<8x128xf32>,
    return
  }
  func.func @transform_0(%arg0: i32) -> (i32, i32, i32) {
    %c0_i32 = arith.constant 0 : i32
    %c0_i32_0 = arith.constant 0 : i32
    %c0_i32_1 = arith.constant 0 : i32
    %c0_i32_2 = arith.constant 0 : i32
    return %c0_i32, %c0_i32_0, %c0_i32_1 : i32, i32, i32
  }
  func.func @transform_1(%arg0: i32) -> (i32, i32) {
    %c0_i32 = arith.constant 0 : i32
    %c0_i32_0 = arith.constant 0 : i32
    %c0_i32_1 = arith.constant 0 : i32
    return %c0_i32, %c0_i32_0 : i32, i32
  }
  func.func @transform_2(%arg0: i32) -> (i32, i32) {
    %c0_i32 = arith.constant 0 : i32
    %c0_i32_0 = arith.constant 0 : i32
    %c0_i32_1 = arith.constant 0 : i32
    return %c0_i32, %c0_i32_0 : i32, i32
  }
  func.func @transform_3(%arg0: i32) -> (i32, i32) {
    %c0_i32 = arith.constant 0 : i32
    %c0_i32_0 = arith.constant 0 : i32
    %c0_i32_1 = arith.constant 0 : i32
    return %c0_i32, %c0_i32_0 : i32, i32
  }
  func.func @transform_4(%arg0: i32) -> (i32, i32) {
    %c0_i32 = arith.constant 0 : i32
    %c0_i32_0 = arith.constant 0 : i32
    %c0_i32_1 = arith.constant 0 : i32
    return %c0_i32, %c0_i32_0 : i32, i32
  }
  func.func @transform_5(%arg0: i32) -> (i32, i32) {
    %c0_i32 = arith.constant 0 : i32
    %c0_i32_0 = arith.constant 0 : i32
    %c0_i32_1 = arith.constant 0 : i32
    return %c0_i32, %c0_i32_0 : i32, i32
  }
  func.func @transform_6(%arg0: i32) -> (i32, i32) {
    %c0_i32 = arith.constant 0 : i32
    %c0_i32_0 = arith.constant 0 : i32
    %c0_i32_1 = arith.constant 0 : i32
    return %c0_i32, %c0_i32_0 : i32, i32
  }
  func.func @transform_7(%arg0: i32) -> (i32, i32) {
    %c0_i32 = arith.constant 0 : i32
    %c0_i32_0 = arith.constant 0 : i32
    %c0_i32_1 = arith.constant 0 : i32
    return %c0_i32, %c0_i32_0 : i32, i32
  }
}

</mosaic_0001>

<llo_original>
// kernel: h1_forward.1
$region0: #{h1_forward.1}
  #allocation0 [shape = 'u32[]', space=smem, size = 0x4, offset = 0x4, fixed_abs, tag = 'smem constant byte address 0x4 - core index']
  #allocation1 [shape = 'u32[72,128]{1,0:T(1,128)}', space=vmem, size = 0x9000, scoped, tag = 'internal scratch']
  %s0 = inlined_call_operand.vmem [shape: f32[256,8,13], index: 0, kind: input, shape index: {}]
  %s1 = inlined_call_operand.vmem [shape: f32[13,16], index: 1, kind: input, shape index: {}]
  %s2 = inlined_call_operand.vmem [shape: f32[1,16], index: 2, kind: input, shape index: {}]
  %s3 = inlined_call_operand.vmem [shape: f32[244,16], index: 3, kind: input, shape index: {}]
  %s4 = inlined_call_operand.vmem [shape: f32[32,16], index: 4, kind: input, shape index: {}]
  %s5 = inlined_call_operand.vmem [shape: f32[244,16], index: 5, kind: input, shape index: {}]
  %s6 = inlined_call_operand.vmem [shape: f32[4,16], index: 6, kind: input, shape index: {}]
  %s7 = inlined_call_operand.vmem [shape: f32[8,128], index: 7, kind: output, shape index: {}]
  %s8 = sld [smem:[#allocation0]]
  $region38: #{h1_forward.1} parent=0
    _
  %s10 = ssub.s32 1, %s8
  %s11 = scalar_select 0, %s10, %s8
  // Predicated region
  $region2: #{h1_forward.1} parent=0 // pred_check
    _
  $region3: #{h1_forward.1} parent=0 // pred_check_branch
    %13 = sbr.rel (0) target = $region5
  $region4: #{h1_forward.1} parent=0 // pred_region
    _
  $region5: #{h1_forward.1} parent=0 // pred_fallthru
    _
  // Predicated region
  $region6: #{h1_forward.1} parent=0 // pred_check
    _
  $region7: #{h1_forward.1} parent=0 // pred_check_branch
    %15 = sbr.rel (0) target = $region9
  $region8: #{h1_forward.1} parent=0 // pred_region
    _
  $region9: #{h1_forward.1} parent=0 // pred_fallthru
    _
  // Predicated region
  $region10: #{h1_forward.1} parent=0 // pred_check
    _
  $region11: #{h1_forward.1} parent=0 // pred_check_branch
    %17 = sbr.rel (0) target = $region13
  $region12: #{h1_forward.1} parent=0 // pred_region
    _
  $region13: #{h1_forward.1} parent=0 // pred_fallthru
    _
  // Predicated region
  $region14: #{h1_forward.1} parent=0 // pred_check
    _
  $region15: #{h1_forward.1} parent=0 // pred_check_branch
    %19 = sbr.rel (0) target = $region17
  $region16: #{h1_forward.1} parent=0 // pred_region
    _
  $region17: #{h1_forward.1} parent=0 // pred_fallthru
    _
  // Predicated region
  $region18: #{h1_forward.1} parent=0 // pred_check
    _
  $region19: #{h1_forward.1} parent=0 // pred_check_branch
    %21 = sbr.rel (0) target = $region21
  $region20: #{h1_forward.1} parent=0 // pred_region
    _
  $region21: #{h1_forward.1} parent=0 // pred_fallthru
    _
  // Predicated region
  $region22: #{h1_forward.1} parent=0 // pred_check
    _
  $region23: #{h1_forward.1} parent=0 // pred_check_branch
    %23 = sbr.rel (0) target = $region25
  $region24: #{h1_forward.1} parent=0 // pred_region
    _
  $region25: #{h1_forward.1} parent=0 // pred_fallthru
    _
  // Predicated region
  $region26: #{h1_forward.1} parent=0 // pred_check
    _
  $region27: #{h1_forward.1} parent=0 // pred_check_branch
    %25 = sbr.rel (0) target = $region29
  $region28: #{h1_forward.1} parent=0 // pred_region
    _
  $region29: #{h1_forward.1} parent=0 // pred_fallthru
    _
  %v26 = vld [vmem:[%s0] sm:$0xff]
  %v27 = vld [vmem:[%s0 + $0x8] sm:$0xff]
  %v28 = vld [vmem:[%s0 + $0x10] sm:$0xff]
  %v29 = vld [vmem:[%s0 + $0x18] sm:$0xff]
  %v30 = vld [vmem:[%s0 + $0x20] sm:$0xff]
  %v31 = vld [vmem:[%s0 + $0x28] sm:$0xff]
  %v32 = vld [vmem:[%s0 + $0x30] sm:$0xff]
  %v33 = vld [vmem:[%s0 + $0x38] sm:$0xff]
  %v34 = vld [vmem:[%s0 + $0x40] sm:$0xff]
  %v35 = vld [vmem:[%s0 + $0x48] sm:$0xff]
  %v36 = vld [vmem:[%s0 + $0x50] sm:$0xff]
  %v37 = vld [vmem:[%s0 + $0x58] sm:$0xff]
  %v38 = vld [vmem:[%s0 + $0x60] sm:$0xff]
  %v39 = vld [vmem:[%s0 + $0x68] sm:$0xff]
  %v40 = vld [vmem:[%s0 + $0x70] sm:$0xff]
  %v41 = vld [vmem:[%s0 + $0x78] sm:$0xff]
  %v42 = vld [vmem:[%s0 + $0x80] sm:$0xff]
  %v43 = vld [vmem:[%s0 + $0x88] sm:$0xff]
  %v44 = vld [vmem:[%s0 + $0x90] sm:$0xff]
  %v45 = vld [vmem:[%s0 + $0x98] sm:$0xff]
  %v46 = vld [vmem:[%s0 + $0xa0] sm:$0xff]
  %v47 = vld [vmem:[%s0 + $0xa8] sm:$0xff]
  %v48 = vld [vmem:[%s0 + $0xb0] sm:$0xff]
  %v49 = vld [vmem:[%s0 + $0xb8] sm:$0xff]
  %v50 = vld [vmem:[%s0 + $0xc0] sm:$0xff]
  %v51 = vld [vmem:[%s0 + $0xc8] sm:$0xff]
  %v52 = vld [vmem:[%s0 + $0xd0] sm:$0xff]
  %v53 = vld [vmem:[%s0 + $0xd8] sm:$0xff]
  %v54 = vld [vmem:[%s0 + $0xe0] sm:$0xff]
  %v55 = vld [vmem:[%s0 + $0xe8] sm:$0xff]
  %v56 = vld [vmem:[%s0 + $0xf0] sm:$0xff]
  %v57 = vld [vmem:[%s0 + $0xf8] sm:$0xff]
  %v58 = vld [vmem:[%s0 + $0x100] sm:$0xff]
  %v59 = vld [vmem:[%s0 + $0x108] sm:$0xff]
  %v60 = vld [vmem:[%s0 + $0x110] sm:$0xff]
  %v61 = vld [vmem:[%s0 + $0x118] sm:$0xff]
  %v62 = vld [vmem:[%s0 + $0x120] sm:$0xff]
  %v63 = vld [vmem:[%s0 + $0x128] sm:$0xff]
  %v64 = vld [vmem:[%s0 + $0x130] sm:$0xff]
  %v65 = vld [vmem:[%s0 + $0x138] sm:$0xff]
  %v66 = vld [vmem:[%s0 + $0x140] sm:$0xff]
  %v67 = vld [vmem:[%s0 + $0x148] sm:$0xff]
  %v68 = vld [vmem:[%s0 + $0x150] sm:$0xff]
  %v69 = vld [vmem:[%s0 + $0x158] sm:$0xff]
  %v70 = vld [vmem:[%s0 + $0x160] sm:$0xff]
  %v71 = vld [vmem:[%s0 + $0x168] sm:$0xff]
  %v72 = vld [vmem:[%s0 + $0x170] sm:$0xff]
  %v73 = vld [vmem:[%s0 + $0x178] sm:$0xff]
  %v74 = vld [vmem:[%s0 + $0x180] sm:$0xff]
  %v75 = vld [vmem:[%s0 + $0x188] sm:$0xff]
  %v76 = vld [vmem:[%s0 + $0x190] sm:$0xff]
  %v77 = vld [vmem:[%s0 + $0x198] sm:$0xff]
  %v78 = vld [vmem:[%s0 + $0x1a0] sm:$0xff]
  %v79 = vld [vmem:[%s0 + $0x1a8] sm:$0xff]
  %v80 = vld [vmem:[%s0 + $0x1b0] sm:$0xff]
  %v81 = vld [vmem:[%s0 + $0x1b8] sm:$0xff]
  %v82 = vld [vmem:[%s0 + $0x1c0] sm:$0xff]
  %v83 = vld [vmem:[%s0 + $0x1c8] sm:$0xff]
  %v84 = vld [vmem:[%s0 + $0x1d0] sm:$0xff]
  %v85 = vld [vmem:[%s0 + $0x1d8] sm:$0xff]
  %v86 = vld [vmem:[%s0 + $0x1e0] sm:$0xff]
  %v87 = vld [vmem:[%s0 + $0x1e8] sm:$0xff]
  %v88 = vld [vmem:[%s0 + $0x1f0] sm:$0xff]
  %v89 = vld [vmem:[%s0 + $0x1f8] sm:$0xff]
  %v90 = vld [vmem:[%s0 + $0x200] sm:$0xff]
  %v91 = vld [vmem:[%s0 + $0x208] sm:$0xff]
  %v92 = vld [vmem:[%s0 + $0x210] sm:$0xff]
  %v93 = vld [vmem:[%s0 + $0x218] sm:$0xff]
  %v94 = vld [vmem:[%s0 + $0x220] sm:$0xff]
  %v95 = vld [vmem:[%s0 + $0x228] sm:$0xff]
  %v96 = vld [vmem:[%s0 + $0x230] sm:$0xff]
  %v97 = vld [vmem:[%s0 + $0x238] sm:$0xff]
  %v98 = vld [vmem:[%s0 + $0x240] sm:$0xff]
  %v99 = vld [vmem:[%s0 + $0x248] sm:$0xff]
  %v100 = vld [vmem:[%s0 + $0x250] sm:$0xff]
  %v101 = vld [vmem:[%s0 + $0x258] sm:$0xff]
  %v102 = vld [vmem:[%s0 + $0x260] sm:$0xff]
  %v103 = vld [vmem:[%s0 + $0x268] sm:$0xff]
  %v104 = vld [vmem:[%s0 + $0x270] sm:$0xff]
  %v105 = vld [vmem:[%s0 + $0x278] sm:$0xff]
  %v106 = vld [vmem:[%s0 + $0x280] sm:$0xff]
  %v107 = vld [vmem:[%s0 + $0x288] sm:$0xff]
  %v108 = vld [vmem:[%s0 + $0x290] sm:$0xff]
  %v109 = vld [vmem:[%s0 + $0x298] sm:$0xff]
  %v110 = vld [vmem:[%s0 + $0x2a0] sm:$0xff]
  %v111 = vld [vmem:[%s0 + $0x2a8] sm:$0xff]
  %v112 = vld [vmem:[%s0 + $0x2b0] sm:$0xff]
  %v113 = vld [vmem:[%s0 + $0x2b8] sm:$0xff]
  %v114 = vld [vmem:[%s0 + $0x2c0] sm:$0xff]
  %v115 = vld [vmem:[%s0 + $0x2c8] sm:$0xff]
  %v116 = vld [vmem:[%s0 + $0x2d0] sm:$0xff]
  %v117 = vld [vmem:[%s0 + $0x2d8] sm:$0xff]
  %v118 = vld [vmem:[%s0 + $0x2e0] sm:$0xff]
  %v119 = vld [vmem:[%s0 + $0x2e8] sm:$0xff]
  %v120 = vld [vmem:[%s0 + $0x2f0] sm:$0xff]
  %v121 = vld [vmem:[%s0 + $0x2f8] sm:$0xff]
  %v122 = vld [vmem:[%s0 + $0x300] sm:$0xff]
  %v123 = vld [vmem:[%s0 + $0x308] sm:$0xff]
  %v124 = vld [vmem:[%s0 + $0x310] sm:$0xff]
  %v125 = vld [vmem:[%s0 + $0x318] sm:$0xff]
  %v126 = vld [vmem:[%s0 + $0x320] sm:$0xff]
  %v127 = vld [vmem:[%s0 + $0x328] sm:$0xff]
  %v128 = vld [vmem:[%s0 + $0x330] sm:$0xff]
  %v129 = vld [vmem:[%s0 + $0x338] sm:$0xff]
  %v130 = vld [vmem:[%s0 + $0x340] sm:$0xff]
  %v131 = vld [vmem:[%s0 + $0x348] sm:$0xff]
  %v132 = vld [vmem:[%s0 + $0x350] sm:$0xff]
  %v133 = vld [vmem:[%s0 + $0x358] sm:$0xff]
  %v134 = vld [vmem:[%s0 + $0x360] sm:$0xff]
  %v135 = vld [vmem:[%s0 + $0x368] sm:$0xff]
  %v136 = vld [vmem:[%s0 + $0x370] sm:$0xff]
  %v137 = vld [vmem:[%s0 + $0x378] sm:$0xff]
  %v138 = vld [vmem:[%s0 + $0x380] sm:$0xff]
  %v139 = vld [vmem:[%s0 + $0x388] sm:$0xff]
  %v140 = vld [vmem:[%s0 + $0x390] sm:$0xff]
  %v141 = vld [vmem:[%s0 + $0x398] sm:$0xff]
  %v142 = vld [vmem:[%s0 + $0x3a0] sm:$0xff]
  %v143 = vld [vmem:[%s0 + $0x3a8] sm:$0xff]
  %v144 = vld [vmem:[%s0 + $0x3b0] sm:$0xff]
  %v145 = vld [vmem:[%s0 + $0x3b8] sm:$0xff]
  %v146 = vld [vmem:[%s0 + $0x3c0] sm:$0xff]
  %v147 = vld [vmem:[%s0 + $0x3c8] sm:$0xff]
  %v148 = vld [vmem:[%s0 + $0x3d0] sm:$0xff]
  %v149 = vld [vmem:[%s0 + $0x3d8] sm:$0xff]
  %v150 = vld [vmem:[%s0 + $0x3e0] sm:$0xff]
  %v151 = vld [vmem:[%s0 + $0x3e8] sm:$0xff]
  %v152 = vld [vmem:[%s0 + $0x3f0] sm:$0xff]
  %v153 = vld [vmem:[%s0 + $0x3f8] sm:$0xff]
  %v154 = vld [vmem:[%s0 + $0x400] sm:$0xff]
  %v155 = vld [vmem:[%s0 + $0x408] sm:$0xff]
  %v156 = vld [vmem:[%s0 + $0x410] sm:$0xff]
  %v157 = vld [vmem:[%s0 + $0x418] sm:$0xff]
  %v158 = vld [vmem:[%s0 + $0x420] sm:$0xff]
  %v159 = vld [vmem:[%s0 + $0x428] sm:$0xff]
  %v160 = vld [vmem:[%s0 + $0x430] sm:$0xff]
  %v161 = vld [vmem:[%s0 + $0x438] sm:$0xff]
  %v162 = vld [vmem:[%s0 + $0x440] sm:$0xff]
  %v163 = vld [vmem:[%s0 + $0x448] sm:$0xff]
  %v164 = vld [vmem:[%s0 + $0x450] sm:$0xff]
  %v165 = vld [vmem:[%s0 + $0x458] sm:$0xff]
  %v166 = vld [vmem:[%s0 + $0x460] sm:$0xff]
  %v167 = vld [vmem:[%s0 + $0x468] sm:$0xff]
  %v168 = vld [vmem:[%s0 + $0x470] sm:$0xff]
  %v169 = vld [vmem:[%s0 + $0x478] sm:$0xff]
  %v170 = vld [vmem:[%s0 + $0x480] sm:$0xff]
  %v171 = vld [vmem:[%s0 + $0x488] sm:$0xff]
  %v172 = vld [vmem:[%s0 + $0x490] sm:$0xff]
  %v173 = vld [vmem:[%s0 + $0x498] sm:$0xff]
  %v174 = vld [vmem:[%s0 + $0x4a0] sm:$0xff]
  %v175 = vld [vmem:[%s0 + $0x4a8] sm:$0xff]
  %v176 = vld [vmem:[%s0 + $0x4b0] sm:$0xff]
  %v177 = vld [vmem:[%s0 + $0x4b8] sm:$0xff]
  %v178 = vld [vmem:[%s0 + $0x4c0] sm:$0xff]
  %v179 = vld [vmem:[%s0 + $0x4c8] sm:$0xff]
  %v180 = vld [vmem:[%s0 + $0x4d0] sm:$0xff]
  %v181 = vld [vmem:[%s0 + $0x4d8] sm:$0xff]
  %v182 = vld [vmem:[%s0 + $0x4e0] sm:$0xff]
  %v183 = vld [vmem:[%s0 + $0x4e8] sm:$0xff]
  %v184 = vld [vmem:[%s0 + $0x4f0] sm:$0xff]
  %v185 = vld [vmem:[%s0 + $0x4f8] sm:$0xff]
  %v186 = vld [vmem:[%s0 + $0x500] sm:$0xff]
  %v187 = vld [vmem:[%s0 + $0x508] sm:$0xff]
  %v188 = vld [vmem:[%s0 + $0x510] sm:$0xff]
  %v189 = vld [vmem:[%s0 + $0x518] sm:$0xff]
  %v190 = vld [vmem:[%s0 + $0x520] sm:$0xff]
  %v191 = vld [vmem:[%s0 + $0x528] sm:$0xff]
  %v192 = vld [vmem:[%s0 + $0x530] sm:$0xff]
  %v193 = vld [vmem:[%s0 + $0x538] sm:$0xff]
  %v194 = vld [vmem:[%s0 + $0x540] sm:$0xff]
  %v195 = vld [vmem:[%s0 + $0x548] sm:$0xff]
  %v196 = vld [vmem:[%s0 + $0x550] sm:$0xff]
  %v197 = vld [vmem:[%s0 + $0x558] sm:$0xff]
  %v198 = vld [vmem:[%s0 + $0x560] sm:$0xff]
  %v199 = vld [vmem:[%s0 + $0x568] sm:$0xff]
  %v200 = vld [vmem:[%s0 + $0x570] sm:$0xff]
  %v201 = vld [vmem:[%s0 + $0x578] sm:$0xff]
  %v202 = vld [vmem:[%s0 + $0x580] sm:$0xff]
  %v203 = vld [vmem:[%s0 + $0x588] sm:$0xff]
  %v204 = vld [vmem:[%s0 + $0x590] sm:$0xff]
  %v205 = vld [vmem:[%s0 + $0x598] sm:$0xff]
  %v206 = vld [vmem:[%s0 + $0x5a0] sm:$0xff]
  %v207 = vld [vmem:[%s0 + $0x5a8] sm:$0xff]
  %v208 = vld [vmem:[%s0 + $0x5b0] sm:$0xff]
  %v209 = vld [vmem:[%s0 + $0x5b8] sm:$0xff]
  %v210 = vld [vmem:[%s0 + $0x5c0] sm:$0xff]
  %v211 = vld [vmem:[%s0 + $0x5c8] sm:$0xff]
  %v212 = vld [vmem:[%s0 + $0x5d0] sm:$0xff]
  %v213 = vld [vmem:[%s0 + $0x5d8] sm:$0xff]
  %v214 = vld [vmem:[%s0 + $0x5e0] sm:$0xff]
  %v215 = vld [vmem:[%s0 + $0x5e8] sm:$0xff]
  %v216 = vld [vmem:[%s0 + $0x5f0] sm:$0xff]
  %v217 = vld [vmem:[%s0 + $0x5f8] sm:$0xff]
  %v218 = vld [vmem:[%s0 + $0x600] sm:$0xff]
  %v219 = vld [vmem:[%s0 + $0x608] sm:$0xff]
  %v220 = vld [vmem:[%s0 + $0x610] sm:$0xff]
  %v221 = vld [vmem:[%s0 + $0x618] sm:$0xff]
  %v222 = vld [vmem:[%s0 + $0x620] sm:$0xff]
  %v223 = vld [vmem:[%s0 + $0x628] sm:$0xff]
  %v224 = vld [vmem:[%s0 + $0x630] sm:$0xff]
  %v225 = vld [vmem:[%s0 + $0x638] sm:$0xff]
  %v226 = vld [vmem:[%s0 + $0x640] sm:$0xff]
  %v227 = vld [vmem:[%s0 + $0x648] sm:$0xff]
  %v228 = vld [vmem:[%s0 + $0x650] sm:$0xff]
  %v229 = vld [vmem:[%s0 + $0x658] sm:$0xff]
  %v230 = vld [vmem:[%s0 + $0x660] sm:$0xff]
  %v231 = vld [vmem:[%s0 + $0x668] sm:$0xff]
  %v232 = vld [vmem:[%s0 + $0x670] sm:$0xff]
  %v233 = vld [vmem:[%s0 + $0x678] sm:$0xff]
  %v234 = vld [vmem:[%s0 + $0x680] sm:$0xff]
  %v235 = vld [vmem:[%s0 + $0x688] sm:$0xff]
  %v236 = vld [vmem:[%s0 + $0x690] sm:$0xff]
  %v237 = vld [vmem:[%s0 + $0x698] sm:$0xff]
  %v238 = vld [vmem:[%s0 + $0x6a0] sm:$0xff]
  %v239 = vld [vmem:[%s0 + $0x6a8] sm:$0xff]
  %v240 = vld [vmem:[%s0 + $0x6b0] sm:$0xff]
  %v241 = vld [vmem:[%s0 + $0x6b8] sm:$0xff]
  %v242 = vld [vmem:[%s0 + $0x6c0] sm:$0xff]
  %v243 = vld [vmem:[%s0 + $0x6c8] sm:$0xff]
  %v244 = vld [vmem:[%s0 + $0x6d0] sm:$0xff]
  %v245 = vld [vmem:[%s0 + $0x6d8] sm:$0xff]
  %v246 = vld [vmem:[%s0 + $0x6e0] sm:$0xff]
  %v247 = vld [vmem:[%s0 + $0x6e8] sm:$0xff]
  %v248 = vld [vmem:[%s0 + $0x6f0] sm:$0xff]
  %v249 = vld [vmem:[%s0 + $0x6f8] sm:$0xff]
  %v250 = vld [vmem:[%s0 + $0x700] sm:$0xff]
  %v251 = vld [vmem:[%s0 + $0x708] sm:$0xff]
  %v252 = vld [vmem:[%s0 + $0x710] sm:$0xff]
  %v253 = vld [vmem:[%s0 + $0x718] sm:$0xff]
  %v254 = vld [vmem:[%s0 + $0x720] sm:$0xff]
  %v255 = vld [vmem:[%s0 + $0x728] sm:$0xff]
  %v256 = vld [vmem:[%s0 + $0x730] sm:$0xff]
  %v257 = vld [vmem:[%s0 + $0x738] sm:$0xff]
  %v258 = vld [vmem:[%s0 + $0x740] sm:$0xff]
  %v259 = vld [vmem:[%s0 + $0x748] sm:$0xff]
  %v260 = vld [vmem:[%s0 + $0x750] sm:$0xff]
  %v261 = vld [vmem:[%s0 + $0x758] sm:$0xff]
  %v262 = vld [vmem:[%s0 + $0x760] sm:$0xff]
  %v263 = vld [vmem:[%s0 + $0x768] sm:$0xff]
  %v264 = vld [vmem:[%s0 + $0x770] sm:$0xff]
  %v265 = vld [vmem:[%s0 + $0x778] sm:$0xff]
  %v266 = vld [vmem:[%s0 + $0x780] sm:$0xff]
  %v267 = vld [vmem:[%s0 + $0x788] sm:$0xff]
  %v268 = vld [vmem:[%s0 + $0x790] sm:$0xff]
  %v269 = vld [vmem:[%s0 + $0x798] sm:$0xff]
  %v270 = vld [vmem:[%s0 + $0x7a0] sm:$0xff]
  %v271 = vld [vmem:[%s0 + $0x7a8] sm:$0xff]
  %v272 = vld [vmem:[%s0 + $0x7b0] sm:$0xff]
  %v273 = vld [vmem:[%s0 + $0x7b8] sm:$0xff]
  %v274 = vld [vmem:[%s0 + $0x7c0] sm:$0xff]
  %v275 = vld [vmem:[%s0 + $0x7c8] sm:$0xff]
  %v276 = vld [vmem:[%s0 + $0x7d0] sm:$0xff]
  %v277 = vld [vmem:[%s0 + $0x7d8] sm:$0xff]
  %v278 = vld [vmem:[%s0 + $0x7e0] sm:$0xff]
  %v279 = vld [vmem:[%s0 + $0x7e8] sm:$0xff]
  %v280 = vld [vmem:[%s0 + $0x7f0] sm:$0xff]
  %v281 = vld [vmem:[%s0 + $0x7f8] sm:$0xff]
  %v282 = vand.u32 2147483647, %v26
  %v283 = vand.u32 2147483647, %v27
  %v284 = vand.u32 2147483647, %v28
  %v285 = vand.u32 2147483647, %v29
  %v286 = vand.u32 2147483647, %v30
  %v287 = vand.u32 2147483647, %v31
  %v288 = vand.u32 2147483647, %v32
  %v289 = vand.u32 2147483647, %v33
  %v290 = vand.u32 2147483647, %v34
  %v291 = vand.u32 2147483647, %v35
  %v292 = vand.u32 2147483647, %v36
  %v293 = vand.u32 2147483647, %v37
  %v294 = vand.u32 2147483647, %v38
  %v295 = vand.u32 2147483647, %v39
  %v296 = vand.u32 2147483647, %v40
  %v297 = vand.u32 2147483647, %v41
  %v298 = vand.u32 2147483647, %v42
  %v299 = vand.u32 2147483647, %v43
  %v300 = vand.u32 2147483647, %v44
  %v301 = vand.u32 2147483647, %v45
  %v302 = vand.u32 2147483647, %v46
  %v303 = vand.u32 2147483647, %v47
  %v304 = vand.u32 2147483647, %v48
  %v305 = vand.u32 2147483647, %v49
  %v306 = vand.u32 2147483647, %v50
  %v307 = vand.u32 2147483647, %v51
  %v308 = vand.u32 2147483647, %v52
  %v309 = vand.u32 2147483647, %v53
  %v310 = vand.u32 2147483647, %v54
  %v311 = vand.u32 2147483647, %v55
  %v312 = vand.u32 2147483647, %v56
  %v313 = vand.u32 2147483647, %v57
  %v314 = vand.u32 2147483647, %v58
  %v315 = vand.u32 2147483647, %v59
  %v316 = vand.u32 2147483647, %v60
  %v317 = vand.u32 2147483647, %v61
  %v318 = vand.u32 2147483647, %v62
  %v319 = vand.u32 2147483647, %v63
  %v320 = vand.u32 2147483647, %v64
  %v321 = vand.u32 2147483647, %v65
  %v322 = vand.u32 2147483647, %v66
  %v323 = vand.u32 2147483647, %v67
  %v324 = vand.u32 2147483647, %v68
  %v325 = vand.u32 2147483647, %v69
  %v326 = vand.u32 2147483647, %v70
  %v327 = vand.u32 2147483647, %v71
  %v328 = vand.u32 2147483647, %v72
  %v329 = vand.u32 2147483647, %v73
  %v330 = vand.u32 2147483647, %v74
  %v331 = vand.u32 2147483647, %v75
  %v332 = vand.u32 2147483647, %v76
  %v333 = vand.u32 2147483647, %v77
  %v334 = vand.u32 2147483647, %v78
  %v335 = vand.u32 2147483647, %v79
  %v336 = vand.u32 2147483647, %v80
  %v337 = vand.u32 2147483647, %v81
  %v338 = vand.u32 2147483647, %v82
  %v339 = vand.u32 2147483647, %v83
  %v340 = vand.u32 2147483647, %v84
  %v341 = vand.u32 2147483647, %v85
  %v342 = vand.u32 2147483647, %v86
  %v343 = vand.u32 2147483647, %v87
  %v344 = vand.u32 2147483647, %v88
  %v345 = vand.u32 2147483647, %v89
  %v346 = vand.u32 2147483647, %v90
  %v347 = vand.u32 2147483647, %v91
  %v348 = vand.u32 2147483647, %v92
  %v349 = vand.u32 2147483647, %v93
  %v350 = vand.u32 2147483647, %v94
  %v351 = vand.u32 2147483647, %v95
  %v352 = vand.u32 2147483647, %v96
  %v353 = vand.u32 2147483647, %v97
  %v354 = vand.u32 2147483647, %v98
  %v355 = vand.u32 2147483647, %v99
  %v356 = vand.u32 2147483647, %v100
  %v357 = vand.u32 2147483647, %v101
  %v358 = vand.u32 2147483647, %v102
  %v359 = vand.u32 2147483647, %v103
  %v360 = vand.u32 2147483647, %v104
  %v361 = vand.u32 2147483647, %v105
  %v362 = vand.u32 2147483647, %v106
  %v363 = vand.u32 2147483647, %v107
  %v364 = vand.u32 2147483647, %v108
  %v365 = vand.u32 2147483647, %v109
  %v366 = vand.u32 2147483647, %v110
  %v367 = vand.u32 2147483647, %v111
  %v368 = vand.u32 2147483647, %v112
  %v369 = vand.u32 2147483647, %v113
  %v370 = vand.u32 2147483647, %v114
  %v371 = vand.u32 2147483647, %v115
  %v372 = vand.u32 2147483647, %v116
  %v373 = vand.u32 2147483647, %v117
  %v374 = vand.u32 2147483647, %v118
  %v375 = vand.u32 2147483647, %v119
  %v376 = vand.u32 2147483647, %v120
  %v377 = vand.u32 2147483647, %v121
  %v378 = vand.u32 2147483647, %v122
  %v379 = vand.u32 2147483647, %v123
  %v380 = vand.u32 2147483647, %v124
  %v381 = vand.u32 2147483647, %v125
  %v382 = vand.u32 2147483647, %v126
  %v383 = vand.u32 2147483647, %v127
  %v384 = vand.u32 2147483647, %v128
  %v385 = vand.u32 2147483647, %v129
  %v386 = vand.u32 2147483647, %v130
  %v387 = vand.u32 2147483647, %v131
  %v388 = vand.u32 2147483647, %v132
  %v389 = vand.u32 2147483647, %v133
  %v390 = vand.u32 2147483647, %v134
  %v391 = vand.u32 2147483647, %v135
  %v392 = vand.u32 2147483647, %v136
  %v393 = vand.u32 2147483647, %v137
  %v394 = vand.u32 2147483647, %v138
  %v395 = vand.u32 2147483647, %v139
  %v396 = vand.u32 2147483647, %v140
  %v397 = vand.u32 2147483647, %v141
  %v398 = vand.u32 2147483647, %v142
  %v399 = vand.u32 2147483647, %v143
  %v400 = vand.u32 2147483647, %v144
  %v401 = vand.u32 2147483647, %v145
  %v402 = vand.u32 2147483647, %v146
  %v403 = vand.u32 2147483647, %v147
  %v404 = vand.u32 2147483647, %v148
  %v405 = vand.u32 2147483647, %v149
  %v406 = vand.u32 2147483647, %v150
  %v407 = vand.u32 2147483647, %v151
  %v408 = vand.u32 2147483647, %v152
  %v409 = vand.u32 2147483647, %v153
  %v410 = vand.u32 2147483647, %v154
  %v411 = vand.u32 2147483647, %v155
  %v412 = vand.u32 2147483647, %v156
  %v413 = vand.u32 2147483647, %v157
  %v414 = vand.u32 2147483647, %v158
  %v415 = vand.u32 2147483647, %v159
  %v416 = vand.u32 2147483647, %v160
  %v417 = vand.u32 2147483647, %v161
  %v418 = vand.u32 2147483647, %v162
  %v419 = vand.u32 2147483647, %v163
  %v420 = vand.u32 2147483647, %v164
  %v421 = vand.u32 2147483647, %v165
  %v422 = vand.u32 2147483647, %v166
  %v423 = vand.u32 2147483647, %v167
  %v424 = vand.u32 2147483647, %v168
  %v425 = vand.u32 2147483647, %v169
  %v426 = vand.u32 2147483647, %v170
  %v427 = vand.u32 2147483647, %v171
  %v428 = vand.u32 2147483647, %v172
  %v429 = vand.u32 2147483647, %v173
  %v430 = vand.u32 2147483647, %v174
  %v431 = vand.u32 2147483647, %v175
  %v432 = vand.u32 2147483647, %v176
  %v433 = vand.u32 2147483647, %v177
  %v434 = vand.u32 2147483647, %v178
  %v435 = vand.u32 2147483647, %v179
  %v436 = vand.u32 2147483647, %v180
  %v437 = vand.u32 2147483647, %v181
  %v438 = vand.u32 2147483647, %v182
  %v439 = vand.u32 2147483647, %v183
  %v440 = vand.u32 2147483647, %v184
  %v441 = vand.u32 2147483647, %v185
  %v442 = vand.u32 2147483647, %v186
  %v443 = vand.u32 2147483647, %v187
  %v444 = vand.u32 2147483647, %v188
  %v445 = vand.u32 2147483647, %v189
  %v446 = vand.u32 2147483647, %v190
  %v447 = vand.u32 2147483647, %v191
  %v448 = vand.u32 2147483647, %v192
  %v449 = vand.u32 2147483647, %v193
  %v450 = vand.u32 2147483647, %v194
  %v451 = vand.u32 2147483647, %v195
  %v452 = vand.u32 2147483647, %v196
  %v453 = vand.u32 2147483647, %v197
  %v454 = vand.u32 2147483647, %v198
  %v455 = vand.u32 2147483647, %v199
  %v456 = vand.u32 2147483647, %v200
  %v457 = vand.u32 2147483647, %v201
  %v458 = vand.u32 2147483647, %v202
  %v459 = vand.u32 2147483647, %v203
  %v460 = vand.u32 2147483647, %v204
  %v461 = vand.u32 2147483647, %v205
  %v462 = vand.u32 2147483647, %v206
  %v463 = vand.u32 2147483647, %v207
  %v464 = vand.u32 2147483647, %v208
  %v465 = vand.u32 2147483647, %v209
  %v466 = vand.u32 2147483647, %v210
  %v467 = vand.u32 2147483647, %v211
  %v468 = vand.u32 2147483647, %v212
  %v469 = vand.u32 2147483647, %v213
  %v470 = vand.u32 2147483647, %v214
  %v471 = vand.u32 2147483647, %v215
  %v472 = vand.u32 2147483647, %v216
  %v473 = vand.u32 2147483647, %v217
  %v474 = vand.u32 2147483647, %v218
  %v475 = vand.u32 2147483647, %v219
  %v476 = vand.u32 2147483647, %v220
  %v477 = vand.u32 2147483647, %v221
  %v478 = vand.u32 2147483647, %v222
  %v479 = vand.u32 2147483647, %v223
  %v480 = vand.u32 2147483647, %v224
  %v481 = vand.u32 2147483647, %v225
  %v482 = vand.u32 2147483647, %v226
  %v483 = vand.u32 2147483647, %v227
  %v484 = vand.u32 2147483647, %v228
  %v485 = vand.u32 2147483647, %v229
  %v486 = vand.u32 2147483647, %v230
  %v487 = vand.u32 2147483647, %v231
  %v488 = vand.u32 2147483647, %v232
  %v489 = vand.u32 2147483647, %v233
  %v490 = vand.u32 2147483647, %v234
  %v491 = vand.u32 2147483647, %v235
  %v492 = vand.u32 2147483647, %v236
  %v493 = vand.u32 2147483647, %v237
  %v494 = vand.u32 2147483647, %v238
  %v495 = vand.u32 2147483647, %v239
  %v496 = vand.u32 2147483647, %v240
  %v497 = vand.u32 2147483647, %v241
  %v498 = vand.u32 2147483647, %v242
  %v499 = vand.u32 2147483647, %v243
  %v500 = vand.u32 2147483647, %v244
  %v501 = vand.u32 2147483647, %v245
  %v502 = vand.u32 2147483647, %v246
  %v503 = vand.u32 2147483647, %v247
  %v504 = vand.u32 2147483647, %v248
  %v505 = vand.u32 2147483647, %v249
  %v506 = vand.u32 2147483647, %v250
  %v507 = vand.u32 2147483647, %v251
  %v508 = vand.u32 2147483647, %v252
  %v509 = vand.u32 2147483647, %v253
  %v510 = vand.u32 2147483647, %v254
  %v511 = vand.u32 2147483647, %v255
  %v512 = vand.u32 2147483647, %v256
  %v513 = vand.u32 2147483647, %v257
  %v514 = vand.u32 2147483647, %v258
  %v515 = vand.u32 2147483647, %v259
  %v516 = vand.u32 2147483647, %v260
  %v517 = vand.u32 2147483647, %v261
  %v518 = vand.u32 2147483647, %v262
  %v519 = vand.u32 2147483647, %v263
  %v520 = vand.u32 2147483647, %v264
  %v521 = vand.u32 2147483647, %v265
  %v522 = vand.u32 2147483647, %v266
  %v523 = vand.u32 2147483647, %v267
  %v524 = vand.u32 2147483647, %v268
  %v525 = vand.u32 2147483647, %v269
  %v526 = vand.u32 2147483647, %v270
  %v527 = vand.u32 2147483647, %v271
  %v528 = vand.u32 2147483647, %v272
  %v529 = vand.u32 2147483647, %v273
  %v530 = vand.u32 2147483647, %v274
  %v531 = vand.u32 2147483647, %v275
  %v532 = vand.u32 2147483647, %v276
  %v533 = vand.u32 2147483647, %v277
  %v534 = vand.u32 2147483647, %v278
  %v535 = vand.u32 2147483647, %v279
  %v536 = vand.u32 2147483647, %v280
  %v537 = vand.u32 2147483647, %v281
  %vm538 = vcmp.lt.f32.partialorder %v282, inf
  %vm539 = vcmp.lt.f32.partialorder %v283, inf
  %vm540 = vcmp.lt.f32.partialorder %v284, inf
  %vm541 = vcmp.lt.f32.partialorder %v285, inf
  %vm542 = vcmp.lt.f32.partialorder %v286, inf
  %vm543 = vcmp.lt.f32.partialorder %v287, inf
  %vm544 = vcmp.lt.f32.partialorder %v288, inf
  %vm545 = vcmp.lt.f32.partialorder %v289, inf
  %vm546 = vcmp.lt.f32.partialorder %v290, inf
  %vm547 = vcmp.lt.f32.partialorder %v291, inf
  %vm548 = vcmp.lt.f32.partialorder %v292, inf
  %vm549 = vcmp.lt.f32.partialorder %v293, inf
  %vm550 = vcmp.lt.f32.partialorder %v294, inf
  %vm551 = vcmp.lt.f32.partialorder %v295, inf
  %vm552 = vcmp.lt.f32.partialorder %v296, inf
  %vm553 = vcmp.lt.f32.partialorder %v297, inf
  %vm554 = vcmp.lt.f32.partialorder %v298, inf
  %vm555 = vcmp.lt.f32.partialorder %v299, inf
  %vm556 = vcmp.lt.f32.partialorder %v300, inf
  %vm557 = vcmp.lt.f32.partialorder %v301, inf
  %vm558 = vcmp.lt.f32.partialorder %v302, inf
  %vm559 = vcmp.lt.f32.partialorder %v303, inf
  %vm560 = vcmp.lt.f32.partialorder %v304, inf
  %vm561 = vcmp.lt.f32.partialorder %v305, inf
  %vm562 = vcmp.lt.f32.partialorder %v306, inf
  %vm563 = vcmp.lt.f32.partialorder %v307, inf
  %vm564 = vcmp.lt.f32.partialorder %v308, inf
  %vm565 = vcmp.lt.f32.partialorder %v309, inf
  %vm566 = vcmp.lt.f32.partialorder %v310, inf
  %vm567 = vcmp.lt.f32.partialorder %v311, inf
  %vm568 = vcmp.lt.f32.partialorder %v312, inf
  %vm569 = vcmp.lt.f32.partialorder %v313, inf
  %vm570 = vcmp.lt.f32.partialorder %v314, inf
  %vm571 = vcmp.lt.f32.partialorder %v315, inf
  %vm572 = vcmp.lt.f32.partialorder %v316, inf
  %vm573 = vcmp.lt.f32.partialorder %v317, inf
  %vm574 = vcmp.lt.f32.partialorder %v318, inf
  %vm575 = vcmp.lt.f32.partialorder %v319, inf
  %vm576 = vcmp.lt.f32.partialorder %v320, inf
  %vm577 = vcmp.lt.f32.partialorder %v321, inf
  %vm578 = vcmp.lt.f32.partialorder %v322, inf
  %vm579 = vcmp.lt.f32.partialorder %v323, inf
  %vm580 = vcmp.lt.f32.partialorder %v324, inf
  %vm581 = vcmp.lt.f32.partialorder %v325, inf
  %vm582 = vcmp.lt.f32.partialorder %v326, inf
  %vm583 = vcmp.lt.f32.partialorder %v327, inf
  %vm584 = vcmp.lt.f32.partialorder %v328, inf
  %vm585 = vcmp.lt.f32.partialorder %v329, inf
  %vm586 = vcmp.lt.f32.partialorder %v330, inf
  %vm587 = vcmp.lt.f32.partialorder %v331, inf
  %vm588 = vcmp.lt.f32.partialorder %v332, inf
  %vm589 = vcmp.lt.f32.partialorder %v333, inf
  %vm590 = vcmp.lt.f32.partialorder %v334, inf
  %vm591 = vcmp.lt.f32.partialorder %v335, inf
  %vm592 = vcmp.lt.f32.partialorder %v336, inf
  %vm593 = vcmp.lt.f32.partialorder %v337, inf
  %vm594 = vcmp.lt.f32.partialorder %v338, inf
  %vm595 = vcmp.lt.f32.partialorder %v339, inf
  %vm596 = vcmp.lt.f32.partialorder %v340, inf
  %vm597 = vcmp.lt.f32.partialorder %v341, inf
  %vm598 = vcmp.lt.f32.partialorder %v342, inf
  %vm599 = vcmp.lt.f32.partialorder %v343, inf
  %vm600 = vcmp.lt.f32.partialorder %v344, inf
  %vm601 = vcmp.lt.f32.partialorder %v345, inf
  %vm602 = vcmp.lt.f32.partialorder %v346, inf
  %vm603 = vcmp.lt.f32.partialorder %v347, inf
  %vm604 = vcmp.lt.f32.partialorder %v348, inf
  %vm605 = vcmp.lt.f32.partialorder %v349, inf
  %vm606 = vcmp.lt.f32.partialorder %v350, inf
  %vm607 = vcmp.lt.f32.partialorder %v351, inf
  %vm608 = vcmp.lt.f32.partialorder %v352, inf
  %vm609 = vcmp.lt.f32.partialorder %v353, inf
  %vm610 = vcmp.lt.f32.partialorder %v354, inf
  %vm611 = vcmp.lt.f32.partialorder %v355, inf
  %vm612 = vcmp.lt.f32.partialorder %v356, inf
  %vm613 = vcmp.lt.f32.partialorder %v357, inf
  %vm614 = vcmp.lt.f32.partialorder %v358, inf
  %vm615 = vcmp.lt.f32.partialorder %v359, inf
  %vm616 = vcmp.lt.f32.partialorder %v360, inf
  %vm617 = vcmp.lt.f32.partialorder %v361, inf
  %vm618 = vcmp.lt.f32.partialorder %v362, inf
  %vm619 = vcmp.lt.f32.partialorder %v363, inf
  %vm620 = vcmp.lt.f32.partialorder %v364, inf
  %vm621 = vcmp.lt.f32.partialorder %v365, inf
  %vm622 = vcmp.lt.f32.partialorder %v366, inf
  %vm623 = vcmp.lt.f32.partialorder %v367, inf
  %vm624 = vcmp.lt.f32.partialorder %v368, inf
  %vm625 = vcmp.lt.f32.partialorder %v369, inf
  %vm626 = vcmp.lt.f32.partialorder %v370, inf
  %vm627 = vcmp.lt.f32.partialorder %v371, inf
  %vm628 = vcmp.lt.f32.partialorder %v372, inf
  %vm629 = vcmp.lt.f32.partialorder %v373, inf
  %vm630 = vcmp.lt.f32.partialorder %v374, inf
  %vm631 = vcmp.lt.f32.partialorder %v375, inf
  %vm632 = vcmp.lt.f32.partialorder %v376, inf
  %vm633 = vcmp.lt.f32.partialorder %v377, inf
  %vm634 = vcmp.lt.f32.partialorder %v378, inf
  %vm635 = vcmp.lt.f32.partialorder %v379, inf
  %vm636 = vcmp.lt.f32.partialorder %v380, inf
  %vm637 = vcmp.lt.f32.partialorder %v381, inf
  %vm638 = vcmp.lt.f32.partialorder %v382, inf
  %vm639 = vcmp.lt.f32.partialorder %v383, inf
  %vm640 = vcmp.lt.f32.partialorder %v384, inf
  %vm641 = vcmp.lt.f32.partialorder %v385, inf
  %vm642 = vcmp.lt.f32.partialorder %v386, inf
  %vm643 = vcmp.lt.f32.partialorder %v387, inf
  %vm644 = vcmp.lt.f32.partialorder %v388, inf
  %vm645 = vcmp.lt.f32.partialorder %v389, inf
  %vm646 = vcmp.lt.f32.partialorder %v390, inf
  %vm647 = vcmp.lt.f32.partialorder %v391, inf
  %vm648 = vcmp.lt.f32.partialorder %v392, inf
  %vm649 = vcmp.lt.f32.partialorder %v393, inf
  %vm650 = vcmp.lt.f32.partialorder %v394, inf
  %vm651 = vcmp.lt.f32.partialorder %v395, inf
  %vm652 = vcmp.lt.f32.partialorder %v396, inf
  %vm653 = vcmp.lt.f32.partialorder %v397, inf
  %vm654 = vcmp.lt.f32.partialorder %v398, inf
  %vm655 = vcmp.lt.f32.partialorder %v399, inf
  %vm656 = vcmp.lt.f32.partialorder %v400, inf
  %vm657 = vcmp.lt.f32.partialorder %v401, inf
  %vm658 = vcmp.lt.f32.partialorder %v402, inf
  %vm659 = vcmp.lt.f32.partialorder %v403, inf
  %vm660 = vcmp.lt.f32.partialorder %v404, inf
  %vm661 = vcmp.lt.f32.partialorder %v405, inf
  %vm662 = vcmp.lt.f32.partialorder %v406, inf
  %vm663 = vcmp.lt.f32.partialorder %v407, inf
  %vm664 = vcmp.lt.f32.partialorder %v408, inf
  %vm665 = vcmp.lt.f32.partialorder %v409, inf
  %vm666 = vcmp.lt.f32.partialorder %v410, inf
  %vm667 = vcmp.lt.f32.partialorder %v411, inf
  %vm668 = vcmp.lt.f32.partialorder %v412, inf
  %vm669 = vcmp.lt.f32.partialorder %v413, inf
  %vm670 = vcmp.lt.f32.partialorder %v414, inf
  %vm671 = vcmp.lt.f32.partialorder %v415, inf
  %vm672 = vcmp.lt.f32.partialorder %v416, inf
  %vm673 = vcmp.lt.f32.partialorder %v417, inf
  %vm674 = vcmp.lt.f32.partialorder %v418, inf
  %vm675 = vcmp.lt.f32.partialorder %v419, inf
  %vm676 = vcmp.lt.f32.partialorder %v420, inf
  %vm677 = vcmp.lt.f32.partialorder %v421, inf
  %vm678 = vcmp.lt.f32.partialorder %v422, inf
  %vm679 = vcmp.lt.f32.partialorder %v423, inf
  %vm680 = vcmp.lt.f32.partialorder %v424, inf
  %vm681 = vcmp.lt.f32.partialorder %v425, inf
  %vm682 = vcmp.lt.f32.partialorder %v426, inf
  %vm683 = vcmp.lt.f32.partialorder %v427, inf
  %vm684 = vcmp.lt.f32.partialorder %v428, inf
  %vm685 = vcmp.lt.f32.partialorder %v429, inf
  %vm686 = vcmp.lt.f32.partialorder %v430, inf
  %vm687 = vcmp.lt.f32.partialorder %v431, inf
  %vm688 = vcmp.lt.f32.partialorder %v432, inf
  %vm689 = vcmp.lt.f32.partialorder %v433, inf
  %vm690 = vcmp.lt.f32.partialorder %v434, inf
  %vm691 = vcmp.lt.f32.partialorder %v435, inf
  %vm692 = vcmp.lt.f32.partialorder %v436, inf
  %vm693 = vcmp.lt.f32.partialorder %v437, inf
  %vm694 = vcmp.lt.f32.partialorder %v438, inf
  %vm695 = vcmp.lt.f32.partialorder %v439, inf
  %vm696 = vcmp.lt.f32.partialorder %v440, inf
  %vm697 = vcmp.lt.f32.partialorder %v441, inf
  %vm698 = vcmp.lt.f32.partialorder %v442, inf
  %vm699 = vcmp.lt.f32.partialorder %v443, inf
  %vm700 = vcmp.lt.f32.partialorder %v444, inf
  %vm701 = vcmp.lt.f32.partialorder %v445, inf
  %vm702 = vcmp.lt.f32.partialorder %v446, inf
  %vm703 = vcmp.lt.f32.partialorder %v447, inf
  %vm704 = vcmp.lt.f32.partialorder %v448, inf
  %vm705 = vcmp.lt.f32.partialorder %v449, inf
  %vm706 = vcmp.lt.f32.partialorder %v450, inf
  %vm707 = vcmp.lt.f32.partialorder %v451, inf
  %vm708 = vcmp.lt.f32.partialorder %v452, inf
  %vm709 = vcmp.lt.f32.partialorder %v453, inf
  %vm710 = vcmp.lt.f32.partialorder %v454, inf
  %vm711 = vcmp.lt.f32.partialorder %v455, inf
  %vm712 = vcmp.lt.f32.partialorder %v456, inf
  %vm713 = vcmp.lt.f32.partialorder %v457, inf
  %vm714 = vcmp.lt.f32.partialorder %v458, inf
  %vm715 = vcmp.lt.f32.partialorder %v459, inf
  %vm716 = vcmp.lt.f32.partialorder %v460, inf
  %vm717 = vcmp.lt.f32.partialorder %v461, inf
  %vm718 = vcmp.lt.f32.partialorder %v462, inf
  %vm719 = vcmp.lt.f32.partialorder %v463, inf
  %vm720 = vcmp.lt.f32.partialorder %v464, inf
  %vm721 = vcmp.lt.f32.partialorder %v465, inf
  %vm722 = vcmp.lt.f32.partialorder %v466, inf
  %vm723 = vcmp.lt.f32.partialorder %v467, inf
  %vm724 = vcmp.lt.f32.partialorder %v468, inf
  %vm725 = vcmp.lt.f32.partialorder %v469, inf
  %vm726 = vcmp.lt.f32.partialorder %v470, inf
  %vm727 = vcmp.lt.f32.partialorder %v471, inf
  %vm728 = vcmp.lt.f32.partialorder %v472, inf
  %vm729 = vcmp.lt.f32.partialorder %v473, inf
  %vm730 = vcmp.lt.f32.partialorder %v474, inf
  %vm731 = vcmp.lt.f32.partialorder %v475, inf
  %vm732 = vcmp.lt.f32.partialorder %v476, inf
  %vm733 = vcmp.lt.f32.partialorder %v477, inf
  %vm734 = vcmp.lt.f32.partialorder %v478, inf
  %vm735 = vcmp.lt.f32.partialorder %v479, inf
  %vm736 = vcmp.lt.f32.partialorder %v480, inf
  %vm737 = vcmp.lt.f32.partialorder %v481, inf
  %vm738 = vcmp.lt.f32.partialorder %v482, inf
  %vm739 = vcmp.lt.f32.partialorder %v483, inf
  %vm740 = vcmp.lt.f32.partialorder %v484, inf
  %vm741 = vcmp.lt.f32.partialorder %v485, inf
  %vm742 = vcmp.lt.f32.partialorder %v486, inf
  %vm743 = vcmp.lt.f32.partialorder %v487, inf
  %vm744 = vcmp.lt.f32.partialorder %v488, inf
  %vm745 = vcmp.lt.f32.partialorder %v489, inf
  %vm746 = vcmp.lt.f32.partialorder %v490, inf
  %vm747 = vcmp.lt.f32.partialorder %v491, inf
  %vm748 = vcmp.lt.f32.partialorder %v492, inf
  %vm749 = vcmp.lt.f32.partialorder %v493, inf
  %vm750 = vcmp.lt.f32.partialorder %v494, inf
  %vm751 = vcmp.lt.f32.partialorder %v495, inf
  %vm752 = vcmp.lt.f32.partialorder %v496, inf
  %vm753 = vcmp.lt.f32.partialorder %v497, inf
  %vm754 = vcmp.lt.f32.partialorder %v498, inf
  %vm755 = vcmp.lt.f32.partialorder %v499, inf
  %vm756 = vcmp.lt.f32.partialorder %v500, inf
  %vm757 = vcmp.lt.f32.partialorder %v501, inf
  %vm758 = vcmp.lt.f32.partialorder %v502, inf
  %vm759 = vcmp.lt.f32.partialorder %v503, inf
  %vm760 = vcmp.lt.f32.partialorder %v504, inf
  %vm761 = vcmp.lt.f32.partialorder %v505, inf
  %vm762 = vcmp.lt.f32.partialorder %v506, inf
  %vm763 = vcmp.lt.f32.partialorder %v507, inf
  %vm764 = vcmp.lt.f32.partialorder %v508, inf
  %vm765 = vcmp.lt.f32.partialorder %v509, inf
  %vm766 = vcmp.lt.f32.partialorder %v510, inf
  %vm767 = vcmp.lt.f32.partialorder %v511, inf
  %vm768 = vcmp.lt.f32.partialorder %v512, inf
  %vm769 = vcmp.lt.f32.partialorder %v513, inf
  %vm770 = vcmp.lt.f32.partialorder %v514, inf
  %vm771 = vcmp.lt.f32.partialorder %v515, inf
  %vm772 = vcmp.lt.f32.partialorder %v516, inf
  %vm773 = vcmp.lt.f32.partialorder %v517, inf
  %vm774 = vcmp.lt.f32.partialorder %v518, inf
  %vm775 = vcmp.lt.f32.partialorder %v519, inf
  %vm776 = vcmp.lt.f32.partialorder %v520, inf
  %vm777 = vcmp.lt.f32.partialorder %v521, inf
  %vm778 = vcmp.lt.f32.partialorder %v522, inf
  %vm779 = vcmp.lt.f32.partialorder %v523, inf
  %vm780 = vcmp.lt.f32.partialorder %v524, inf
  %vm781 = vcmp.lt.f32.partialorder %v525, inf
  %vm782 = vcmp.lt.f32.partialorder %v526, inf
  %vm783 = vcmp.lt.f32.partialorder %v527, inf
  %vm784 = vcmp.lt.f32.partialorder %v528, inf
  %vm785 = vcmp.lt.f32.partialorder %v529, inf
  %vm786 = vcmp.lt.f32.partialorder %v530, inf
  %vm787 = vcmp.lt.f32.partialorder %v531, inf
  %vm788 = vcmp.lt.f32.partialorder %v532, inf
  %vm789 = vcmp.lt.f32.partialorder %v533, inf
  %vm790 = vcmp.lt.f32.partialorder %v534, inf
  %vm791 = vcmp.lt.f32.partialorder %v535, inf
  %vm792 = vcmp.lt.f32.partialorder %v536, inf
  %vm793 = vcmp.lt.f32.partialorder %v537, inf
  %v794 = vsel %vm538, %v26, 0.0
  %v795 = vsel %vm539, %v27, 0.0
  %v796 = vsel %vm540, %v28, 0.0
  %v797 = vsel %vm541, %v29, 0.0
  %v798 = vsel %vm542, %v30, 0.0
  %v799 = vsel %vm543, %v31, 0.0
  %v800 = vsel %vm544, %v32, 0.0
  %v801 = vsel %vm545, %v33, 0.0
  %v802 = vsel %vm546, %v34, 0.0
  %v803 = vsel %vm547, %v35, 0.0
  %v804 = vsel %vm548, %v36, 0.0
  %v805 = vsel %vm549, %v37, 0.0
  %v806 = vsel %vm550, %v38, 0.0
  %v807 = vsel %vm551, %v39, 0.0
  %v808 = vsel %vm552, %v40, 0.0
  %v809 = vsel %vm553, %v41, 0.0
  %v810 = vsel %vm554, %v42, 0.0
  %v811 = vsel %vm555, %v43, 0.0
  %v812 = vsel %vm556, %v44, 0.0
  %v813 = vsel %vm557, %v45, 0.0
  %v814 = vsel %vm558, %v46, 0.0
  %v815 = vsel %vm559, %v47, 0.0
  %v816 = vsel %vm560, %v48, 0.0
  %v817 = vsel %vm561, %v49, 0.0
  %v818 = vsel %vm562, %v50, 0.0
  %v819 = vsel %vm563, %v51, 0.0
  %v820 = vsel %vm564, %v52, 0.0
  %v821 = vsel %vm565, %v53, 0.0
  %v822 = vsel %vm566, %v54, 0.0
  %v823 = vsel %vm567, %v55, 0.0
  %v824 = vsel %vm568, %v56, 0.0
  %v825 = vsel %vm569, %v57, 0.0
  %v826 = vsel %vm570, %v58, 0.0
  %v827 = vsel %vm571, %v59, 0.0
  %v828 = vsel %vm572, %v60, 0.0
  %v829 = vsel %vm573, %v61, 0.0
  %v830 = vsel %vm574, %v62, 0.0
  %v831 = vsel %vm575, %v63, 0.0
  %v832 = vsel %vm576, %v64, 0.0
  %v833 = vsel %vm577, %v65, 0.0
  %v834 = vsel %vm578, %v66, 0.0
  %v835 = vsel %vm579, %v67, 0.0
  %v836 = vsel %vm580, %v68, 0.0
  %v837 = vsel %vm581, %v69, 0.0
  %v838 = vsel %vm582, %v70, 0.0
  %v839 = vsel %vm583, %v71, 0.0
  %v840 = vsel %vm584, %v72, 0.0
  %v841 = vsel %vm585, %v73, 0.0
  %v842 = vsel %vm586, %v74, 0.0
  %v843 = vsel %vm587, %v75, 0.0
  %v844 = vsel %vm588, %v76, 0.0
  %v845 = vsel %vm589, %v77, 0.0
  %v846 = vsel %vm590, %v78, 0.0
  %v847 = vsel %vm591, %v79, 0.0
  %v848 = vsel %vm592, %v80, 0.0
  %v849 = vsel %vm593, %v81, 0.0
  %v850 = vsel %vm594, %v82, 0.0
  %v851 = vsel %vm595, %v83, 0.0
  %v852 = vsel %vm596, %v84, 0.0
  %v853 = vsel %vm597, %v85, 0.0
  %v854 = vsel %vm598, %v86, 0.0
  %v855 = vsel %vm599, %v87, 0.0
  %v856 = vsel %vm600, %v88, 0.0
  %v857 = vsel %vm601, %v89, 0.0
  %v858 = vsel %vm602, %v90, 0.0
  %v859 = vsel %vm603, %v91, 0.0
  %v860 = vsel %vm604, %v92, 0.0
  %v861 = vsel %vm605, %v93, 0.0
  %v862 = vsel %vm606, %v94, 0.0
  %v863 = vsel %vm607, %v95, 0.0
  %v864 = vsel %vm608, %v96, 0.0
  %v865 = vsel %vm609, %v97, 0.0
  %v866 = vsel %vm610, %v98, 0.0
  %v867 = vsel %vm611, %v99, 0.0
  %v868 = vsel %vm612, %v100, 0.0
  %v869 = vsel %vm613, %v101, 0.0
  %v870 = vsel %vm614, %v102, 0.0
  %v871 = vsel %vm615, %v103, 0.0
  %v872 = vsel %vm616, %v104, 0.0
  %v873 = vsel %vm617, %v105, 0.0
  %v874 = vsel %vm618, %v106, 0.0
  %v875 = vsel %vm619, %v107, 0.0
  %v876 = vsel %vm620, %v108, 0.0
  %v877 = vsel %vm621, %v109, 0.0
  %v878 = vsel %vm622, %v110, 0.0
  %v879 = vsel %vm623, %v111, 0.0
  %v880 = vsel %vm624, %v112, 0.0
  %v881 = vsel %vm625, %v113, 0.0
  %v882 = vsel %vm626, %v114, 0.0
  %v883 = vsel %vm627, %v115, 0.0
  %v884 = vsel %vm628, %v116, 0.0
  %v885 = vsel %vm629, %v117, 0.0
  %v886 = vsel %vm630, %v118, 0.0
  %v887 = vsel %vm631, %v119, 0.0
  %v888 = vsel %vm632, %v120, 0.0
  %v889 = vsel %vm633, %v121, 0.0
  %v890 = vsel %vm634, %v122, 0.0
  %v891 = vsel %vm635, %v123, 0.0
  %v892 = vsel %vm636, %v124, 0.0
  %v893 = vsel %vm637, %v125, 0.0
  %v894 = vsel %vm638, %v126, 0.0
  %v895 = vsel %vm639, %v127, 0.0
  %v896 = vsel %vm640, %v128, 0.0
  %v897 = vsel %vm641, %v129, 0.0
  %v898 = vsel %vm642, %v130, 0.0
  %v899 = vsel %vm643, %v131, 0.0
  %v900 = vsel %vm644, %v132, 0.0
  %v901 = vsel %vm645, %v133, 0.0
  %v902 = vsel %vm646, %v134, 0.0
  %v903 = vsel %vm647, %v135, 0.0
  %v904 = vsel %vm648, %v136, 0.0
  %v905 = vsel %vm649, %v137, 0.0
  %v906 = vsel %vm650, %v138, 0.0
  %v907 = vsel %vm651, %v139, 0.0
  %v908 = vsel %vm652, %v140, 0.0
  %v909 = vsel %vm653, %v141, 0.0
  %v910 = vsel %vm654, %v142, 0.0
  %v911 = vsel %vm655, %v143, 0.0
  %v912 = vsel %vm656, %v144, 0.0
  %v913 = vsel %vm657, %v145, 0.0
  %v914 = vsel %vm658, %v146, 0.0
  %v915 = vsel %vm659, %v147, 0.0
  %v916 = vsel %vm660, %v148, 0.0
  %v917 = vsel %vm661, %v149, 0.0
  %v918 = vsel %vm662, %v150, 0.0
  %v919 = vsel %vm663, %v151, 0.0
  %v920 = vsel %vm664, %v152, 0.0
  %v921 = vsel %vm665, %v153, 0.0
  %v922 = vsel %vm666, %v154, 0.0
  %v923 = vsel %vm667, %v155, 0.0
  %v924 = vsel %vm668, %v156, 0.0
  %v925 = vsel %vm669, %v157, 0.0
  %v926 = vsel %vm670, %v158, 0.0
  %v927 = vsel %vm671, %v159, 0.0
  %v928 = vsel %vm672, %v160, 0.0
  %v929 = vsel %vm673, %v161, 0.0
  %v930 = vsel %vm674, %v162, 0.0
  %v931 = vsel %vm675, %v163, 0.0
  %v932 = vsel %vm676, %v164, 0.0
  %v933 = vsel %vm677, %v165, 0.0
  %v934 = vsel %vm678, %v166, 0.0
  %v935 = vsel %vm679, %v167, 0.0
  %v936 = vsel %vm680, %v168, 0.0
  %v937 = vsel %vm681, %v169, 0.0
  %v938 = vsel %vm682, %v170, 0.0
  %v939 = vsel %vm683, %v171, 0.0
  %v940 = vsel %vm684, %v172, 0.0
  %v941 = vsel %vm685, %v173, 0.0
  %v942 = vsel %vm686, %v174, 0.0
  %v943 = vsel %vm687, %v175, 0.0
  %v944 = vsel %vm688, %v176, 0.0
  %v945 = vsel %vm689, %v177, 0.0
  %v946 = vsel %vm690, %v178, 0.0
  %v947 = vsel %vm691, %v179, 0.0
  %v948 = vsel %vm692, %v180, 0.0
  %v949 = vsel %vm693, %v181, 0.0
  %v950 = vsel %vm694, %v182, 0.0
  %v951 = vsel %vm695, %v183, 0.0
  %v952 = vsel %vm696, %v184, 0.0
  %v953 = vsel %vm697, %v185, 0.0
  %v954 = vsel %vm698, %v186, 0.0
  %v955 = vsel %vm699, %v187, 0.0
  %v956 = vsel %vm700, %v188, 0.0
  %v957 = vsel %vm701, %v189, 0.0
  %v958 = vsel %vm702, %v190, 0.0
  %v959 = vsel %vm703, %v191, 0.0
  %v960 = vsel %vm704, %v192, 0.0
  %v961 = vsel %vm705, %v193, 0.0
  %v962 = vsel %vm706, %v194, 0.0
  %v963 = vsel %vm707, %v195, 0.0
  %v964 = vsel %vm708, %v196, 0.0
  %v965 = vsel %vm709, %v197, 0.0
  %v966 = vsel %vm710, %v198, 0.0
  %v967 = vsel %vm711, %v199, 0.0
  %v968 = vsel %vm712, %v200, 0.0
  %v969 = vsel %vm713, %v201, 0.0
  %v970 = vsel %vm714, %v202, 0.0
  %v971 = vsel %vm715, %v203, 0.0
  %v972 = vsel %vm716, %v204, 0.0
  %v973 = vsel %vm717, %v205, 0.0
  %v974 = vsel %vm718, %v206, 0.0
  %v975 = vsel %vm719, %v207, 0.0
  %v976 = vsel %vm720, %v208, 0.0
  %v977 = vsel %vm721, %v209, 0.0
  %v978 = vsel %vm722, %v210, 0.0
  %v979 = vsel %vm723, %v211, 0.0
  %v980 = vsel %vm724, %v212, 0.0
  %v981 = vsel %vm725, %v213, 0.0
  %v982 = vsel %vm726, %v214, 0.0
  %v983 = vsel %vm727, %v215, 0.0
  %v984 = vsel %vm728, %v216, 0.0
  %v985 = vsel %vm729, %v217, 0.0
  %v986 = vsel %vm730, %v218, 0.0
  %v987 = vsel %vm731, %v219, 0.0
  %v988 = vsel %vm732, %v220, 0.0
  %v989 = vsel %vm733, %v221, 0.0
  %v990 = vsel %vm734, %v222, 0.0
  %v991 = vsel %vm735, %v223, 0.0
  %v992 = vsel %vm736, %v224, 0.0
  %v993 = vsel %vm737, %v225, 0.0
  %v994 = vsel %vm738, %v226, 0.0
  %v995 = vsel %vm739, %v227, 0.0
  %v996 = vsel %vm740, %v228, 0.0
  %v997 = vsel %vm741, %v229, 0.0
  %v998 = vsel %vm742, %v230, 0.0
  %v999 = vsel %vm743, %v231, 0.0
  %v1000 = vsel %vm744, %v232, 0.0
  %v1001 = vsel %vm745, %v233, 0.0
  %v1002 = vsel %vm746, %v234, 0.0
  %v1003 = vsel %vm747, %v235, 0.0
  %v1004 = vsel %vm748, %v236, 0.0
  %v1005 = vsel %vm749, %v237, 0.0
  %v1006 = vsel %vm750, %v238, 0.0
  %v1007 = vsel %vm751, %v239, 0.0
  %v1008 = vsel %vm752, %v240, 0.0
  %v1009 = vsel %vm753, %v241, 0.0
  %v1010 = vsel %vm754, %v242, 0.0
  %v1011 = vsel %vm755, %v243, 0.0
  %v1012 = vsel %vm756, %v244, 0.0
  %v1013 = vsel %vm757, %v245, 0.0
  %v1014 = vsel %vm758, %v246, 0.0
  %v1015 = vsel %vm759, %v247, 0.0
  %v1016 = vsel %vm760, %v248, 0.0
  %v1017 = vsel %vm761, %v249, 0.0
  %v1018 = vsel %vm762, %v250, 0.0
  %v1019 = vsel %vm763, %v251, 0.0
  %v1020 = vsel %vm764, %v252, 0.0
  %v1021 = vsel %vm765, %v253, 0.0
  %v1022 = vsel %vm766, %v254, 0.0
  %v1023 = vsel %vm767, %v255, 0.0
  %v1024 = vsel %vm768, %v256, 0.0
  %v1025 = vsel %vm769, %v257, 0.0
  %v1026 = vsel %vm770, %v258, 0.0
  %v1027 = vsel %vm771, %v259, 0.0
  %v1028 = vsel %vm772, %v260, 0.0
  %v1029 = vsel %vm773, %v261, 0.0
  %v1030 = vsel %vm774, %v262, 0.0
  %v1031 = vsel %vm775, %v263, 0.0
  %v1032 = vsel %vm776, %v264, 0.0
  %v1033 = vsel %vm777, %v265, 0.0
  %v1034 = vsel %vm778, %v266, 0.0
  %v1035 = vsel %vm779, %v267, 0.0
  %v1036 = vsel %vm780, %v268, 0.0
  %v1037 = vsel %vm781, %v269, 0.0
  %v1038 = vsel %vm782, %v270, 0.0
  %v1039 = vsel %vm783, %v271, 0.0
  %v1040 = vsel %vm784, %v272, 0.0
  %v1041 = vsel %vm785, %v273, 0.0
  %v1042 = vsel %vm786, %v274, 0.0
  %v1043 = vsel %vm787, %v275, 0.0
  %v1044 = vsel %vm788, %v276, 0.0
  %v1045 = vsel %vm789, %v277, 0.0
  %v1046 = vsel %vm790, %v278, 0.0
  %v1047 = vsel %vm791, %v279, 0.0
  %v1048 = vsel %vm792, %v280, 0.0
  %v1049 = vsel %vm793, %v281, 0.0
  %v1050 = vld [vmem:[%s1] sm:$0xff]
  %v1051 = vld [vmem:[%s1 + $0x8] sm:$0x1f]
  %v1052 = vld [vmem:[%s2] sm:$0x1]
  %v1054 = vperm.slane %v1052, 0
  %vm1056 = vcmask 105472
  %v1058 = vsel %vm1056, %v794, 0
  %v1061 = vsel %vm1056, %v795, 0
  %v1064 = vsel %vm1056, %v796, 0
  %v1067 = vsel %vm1056, %v797, 0
  %v1070 = vsel %vm1056, %v798, 0
  %v1073 = vsel %vm1056, %v799, 0
  %v1076 = vsel %vm1056, %v800, 0
  %v1079 = vsel %vm1056, %v801, 0
  %v1082 = vsel %vm1056, %v802, 0
  %v1085 = vsel %vm1056, %v803, 0
  %v1088 = vsel %vm1056, %v804, 0
  %v1091 = vsel %vm1056, %v805, 0
  %v1094 = vsel %vm1056, %v806, 0
  %v1097 = vsel %vm1056, %v807, 0
  %v1100 = vsel %vm1056, %v808, 0
  %v1103 = vsel %vm1056, %v809, 0
  %v1106 = vsel %vm1056, %v810, 0
  %v1109 = vsel %vm1056, %v811, 0
  %v1112 = vsel %vm1056, %v812, 0
  %v1115 = vsel %vm1056, %v813, 0
  %v1118 = vsel %vm1056, %v814, 0
  %v1121 = vsel %vm1056, %v815, 0
  %v1124 = vsel %vm1056, %v816, 0
  %v1127 = vsel %vm1056, %v817, 0
  %v1130 = vsel %vm1056, %v818, 0
  %v1133 = vsel %vm1056, %v819, 0
  %v1136 = vsel %vm1056, %v820, 0
  %v1139 = vsel %vm1056, %v821, 0
  %v1142 = vsel %vm1056, %v822, 0
  %v1145 = vsel %vm1056, %v823, 0
  %v1148 = vsel %vm1056, %v824, 0
  %v1151 = vsel %vm1056, %v825, 0
  %v1154 = vsel %vm1056, %v826, 0
  %v1157 = vsel %vm1056, %v827, 0
  %v1160 = vsel %vm1056, %v828, 0
  %v1163 = vsel %vm1056, %v829, 0
  %v1166 = vsel %vm1056, %v830, 0
  %v1169 = vsel %vm1056, %v831, 0
  %v1172 = vsel %vm1056, %v832, 0
  %v1175 = vsel %vm1056, %v833, 0
  %v1178 = vsel %vm1056, %v834, 0
  %v1181 = vsel %vm1056, %v835, 0
  %v1184 = vsel %vm1056, %v836, 0
  %v1187 = vsel %vm1056, %v837, 0
  %v1190 = vsel %vm1056, %v838, 0
  %v1193 = vsel %vm1056, %v839, 0
  %v1196 = vsel %vm1056, %v840, 0
  %v1199 = vsel %vm1056, %v841, 0
  %v1202 = vsel %vm1056, %v842, 0
  %v1205 = vsel %vm1056, %v843, 0
  %v1208 = vsel %vm1056, %v844, 0
  %v1211 = vsel %vm1056, %v845, 0
  %v1214 = vsel %vm1056, %v846, 0
  %v1217 = vsel %vm1056, %v847, 0
  %v1220 = vsel %vm1056, %v848, 0
  %v1223 = vsel %vm1056, %v849, 0
  %v1226 = vsel %vm1056, %v850, 0
  %v1229 = vsel %vm1056, %v851, 0
  %v1232 = vsel %vm1056, %v852, 0
  %v1235 = vsel %vm1056, %v853, 0
  %v1238 = vsel %vm1056, %v854, 0
  %v1241 = vsel %vm1056, %v855, 0
  %v1244 = vsel %vm1056, %v856, 0
  %v1247 = vsel %vm1056, %v857, 0
  %v1250 = vsel %vm1056, %v858, 0
  %v1253 = vsel %vm1056, %v859, 0
  %v1256 = vsel %vm1056, %v860, 0
  %v1259 = vsel %vm1056, %v861, 0
  %v1262 = vsel %vm1056, %v862, 0
  %v1265 = vsel %vm1056, %v863, 0
  %v1268 = vsel %vm1056, %v864, 0
  %v1271 = vsel %vm1056, %v865, 0
  %v1274 = vsel %vm1056, %v866, 0
  %v1277 = vsel %vm1056, %v867, 0
  %v1280 = vsel %vm1056, %v868, 0
  %v1283 = vsel %vm1056, %v869, 0
  %v1286 = vsel %vm1056, %v870, 0
  %v1289 = vsel %vm1056, %v871, 0
  %v1292 = vsel %vm1056, %v872, 0
  %v1295 = vsel %vm1056, %v873, 0
  %v1298 = vsel %vm1056, %v874, 0
  %v1301 = vsel %vm1056, %v875, 0
  %v1304 = vsel %vm1056, %v876, 0
  %v1307 = vsel %vm1056, %v877, 0
  %v1310 = vsel %vm1056, %v878, 0
  %v1313 = vsel %vm1056, %v879, 0
  %v1316 = vsel %vm1056, %v880, 0
  %v1319 = vsel %vm1056, %v881, 0
  %v1322 = vsel %vm1056, %v882, 0
  %v1325 = vsel %vm1056, %v883, 0
  %v1328 = vsel %vm1056, %v884, 0
  %v1331 = vsel %vm1056, %v885, 0
  %v1334 = vsel %vm1056, %v886, 0
  %v1337 = vsel %vm1056, %v887, 0
  %v1340 = vsel %vm1056, %v888, 0
  %v1343 = vsel %vm1056, %v889, 0
  %v1346 = vsel %vm1056, %v890, 0
  %v1349 = vsel %vm1056, %v891, 0
  %v1352 = vsel %vm1056, %v892, 0
  %v1355 = vsel %vm1056, %v893, 0
  %v1358 = vsel %vm1056, %v894, 0
  %v1361 = vsel %vm1056, %v895, 0
  %v1364 = vsel %vm1056, %v896, 0
  %v1367 = vsel %vm1056, %v897, 0
  %v1370 = vsel %vm1056, %v898, 0
  %v1373 = vsel %vm1056, %v899, 0
  %v1376 = vsel %vm1056, %v900, 0
  %v1379 = vsel %vm1056, %v901, 0
  %v1382 = vsel %vm1056, %v902, 0
  %v1385 = vsel %vm1056, %v903, 0
  %v1388 = vsel %vm1056, %v904, 0
  %v1391 = vsel %vm1056, %v905, 0
  %v1394 = vsel %vm1056, %v906, 0
  %v1397 = vsel %vm1056, %v907, 0
  %v1400 = vsel %vm1056, %v908, 0
  %v1403 = vsel %vm1056, %v909, 0
  %v1406 = vsel %vm1056, %v910, 0
  %v1409 = vsel %vm1056, %v911, 0
  %v1412 = vsel %vm1056, %v912, 0
  %v1415 = vsel %vm1056, %v913, 0
  %v1418 = vsel %vm1056, %v914, 0
  %v1421 = vsel %vm1056, %v915, 0
  %v1424 = vsel %vm1056, %v916, 0
  %v1427 = vsel %vm1056, %v917, 0
  %v1430 = vsel %vm1056, %v918, 0
  %v1433 = vsel %vm1056, %v919, 0
  %v1436 = vsel %vm1056, %v920, 0
  %v1439 = vsel %vm1056, %v921, 0
  %v1442 = vsel %vm1056, %v922, 0
  %v1445 = vsel %vm1056, %v923, 0
  %v1448 = vsel %vm1056, %v924, 0
  %v1451 = vsel %vm1056, %v925, 0
  %v1454 = vsel %vm1056, %v926, 0
  %v1457 = vsel %vm1056, %v927, 0
  %v1460 = vsel %vm1056, %v928, 0
  %v1463 = vsel %vm1056, %v929, 0
  %v1466 = vsel %vm1056, %v930, 0
  %v1469 = vsel %vm1056, %v931, 0
  %v1472 = vsel %vm1056, %v932, 0
  %v1475 = vsel %vm1056, %v933, 0
  %v1478 = vsel %vm1056, %v934, 0
  %v1481 = vsel %vm1056, %v935, 0
  %v1484 = vsel %vm1056, %v936, 0
  %v1487 = vsel %vm1056, %v937, 0
  %v1490 = vsel %vm1056, %v938, 0
  %v1493 = vsel %vm1056, %v939, 0
  %v1496 = vsel %vm1056, %v940, 0
  %v1499 = vsel %vm1056, %v941, 0
  %v1502 = vsel %vm1056, %v942, 0
  %v1505 = vsel %vm1056, %v943, 0
  %v1508 = vsel %vm1056, %v944, 0
  %v1511 = vsel %vm1056, %v945, 0
  %v1514 = vsel %vm1056, %v946, 0
  %v1517 = vsel %vm1056, %v947, 0
  %v1520 = vsel %vm1056, %v948, 0
  %v1523 = vsel %vm1056, %v949, 0
  %v1526 = vsel %vm1056, %v950, 0
  %v1529 = vsel %vm1056, %v951, 0
  %v1532 = vsel %vm1056, %v952, 0
  %v1535 = vsel %vm1056, %v953, 0
  %v1538 = vsel %vm1056, %v954, 0
  %v1541 = vsel %vm1056, %v955, 0
  %v1544 = vsel %vm1056, %v956, 0
  %v1547 = vsel %vm1056, %v957, 0
  %v1550 = vsel %vm1056, %v958, 0
  %v1553 = vsel %vm1056, %v959, 0
  %v1556 = vsel %vm1056, %v960, 0
  %v1559 = vsel %vm1056, %v961, 0
  %v1562 = vsel %vm1056, %v962, 0
  %v1565 = vsel %vm1056, %v963, 0
  %v1568 = vsel %vm1056, %v964, 0
  %v1571 = vsel %vm1056, %v965, 0
  %v1574 = vsel %vm1056, %v966, 0
  %v1577 = vsel %vm1056, %v967, 0
  %v1580 = vsel %vm1056, %v968, 0
  %v1583 = vsel %vm1056, %v969, 0
  %v1586 = vsel %vm1056, %v970, 0
  %v1589 = vsel %vm1056, %v971, 0
  %v1592 = vsel %vm1056, %v972, 0
  %v1595 = vsel %vm1056, %v973, 0
  %v1598 = vsel %vm1056, %v974, 0
  %v1601 = vsel %vm1056, %v975, 0
  %v1604 = vsel %vm1056, %v976, 0
  %v1607 = vsel %vm1056, %v977, 0
  %v1610 = vsel %vm1056, %v978, 0
  %v1613 = vsel %vm1056, %v979, 0
  %v1616 = vsel %vm1056, %v980, 0
  %v1619 = vsel %vm1056, %v981, 0
  %v1622 = vsel %vm1056, %v982, 0
  %v1625 = vsel %vm1056, %v983, 0
  %v1628 = vsel %vm1056, %v984, 0
  %v1631 = vsel %vm1056, %v985, 0
  %v1634 = vsel %vm1056, %v986, 0
  %v1637 = vsel %vm1056, %v987, 0
  %v1640 = vsel %vm1056, %v988, 0
  %v1643 = vsel %vm1056, %v989, 0
  %v1646 = vsel %vm1056, %v990, 0
  %v1649 = vsel %vm1056, %v991, 0
  %v1652 = vsel %vm1056, %v992, 0
  %v1655 = vsel %vm1056, %v993, 0
  %v1658 = vsel %vm1056, %v994, 0
  %v1661 = vsel %vm1056, %v995, 0
  %v1664 = vsel %vm1056, %v996, 0
  %v1667 = vsel %vm1056, %v997, 0
  %v1670 = vsel %vm1056, %v998, 0
  %v1673 = vsel %vm1056, %v999, 0
  %v1676 = vsel %vm1056, %v1000, 0
  %v1679 = vsel %vm1056, %v1001, 0
  %v1682 = vsel %vm1056, %v1002, 0
  %v1685 = vsel %vm1056, %v1003, 0
  %v1688 = vsel %vm1056, %v1004, 0
  %v1691 = vsel %vm1056, %v1005, 0
  %v1694 = vsel %vm1056, %v1006, 0
  %v1697 = vsel %vm1056, %v1007, 0
  %v1700 = vsel %vm1056, %v1008, 0
  %v1703 = vsel %vm1056, %v1009, 0
  %v1706 = vsel %vm1056, %v1010, 0
  %v1709 = vsel %vm1056, %v1011, 0
  %v1712 = vsel %vm1056, %v1012, 0
  %v1715 = vsel %vm1056, %v1013, 0
  %v1718 = vsel %vm1056, %v1014, 0
  %v1721 = vsel %vm1056, %v1015, 0
  %v1724 = vsel %vm1056, %v1016, 0
  %v1727 = vsel %vm1056, %v1017, 0
  %v1730 = vsel %vm1056, %v1018, 0
  %v1733 = vsel %vm1056, %v1019, 0
  %v1736 = vsel %vm1056, %v1020, 0
  %v1739 = vsel %vm1056, %v1021, 0
  %v1742 = vsel %vm1056, %v1022, 0
  %v1745 = vsel %vm1056, %v1023, 0
  %v1748 = vsel %vm1056, %v1024, 0
  %v1751 = vsel %vm1056, %v1025, 0
  %v1754 = vsel %vm1056, %v1026, 0
  %v1757 = vsel %vm1056, %v1027, 0
  %v1760 = vsel %vm1056, %v1028, 0
  %v1763 = vsel %vm1056, %v1029, 0
  %v1766 = vsel %vm1056, %v1030, 0
  %v1769 = vsel %vm1056, %v1031, 0
  %v1772 = vsel %vm1056, %v1032, 0
  %v1775 = vsel %vm1056, %v1033, 0
  %v1778 = vsel %vm1056, %v1034, 0
  %v1781 = vsel %vm1056, %v1035, 0
  %v1784 = vsel %vm1056, %v1036, 0
  %v1787 = vsel %vm1056, %v1037, 0
  %v1790 = vsel %vm1056, %v1038, 0
  %v1793 = vsel %vm1056, %v1039, 0
  %v1796 = vsel %vm1056, %v1040, 0
  %v1799 = vsel %vm1056, %v1041, 0
  %v1802 = vsel %vm1056, %v1042, 0
  %v1805 = vsel %vm1056, %v1043, 0
  %v1808 = vsel %vm1056, %v1044, 0
  %v1811 = vsel %vm1056, %v1045, 0
  %v1814 = vsel %vm1056, %v1046, 0
  %v1817 = vsel %vm1056, %v1047, 0
  %v1820 = vsel %vm1056, %v1048, 0
  %v1823 = vsel %vm1056, %v1049, 0
  %vm1825 = vcmask 1044480
  %v1827 = vsel %vm1825, %v1051, 0
  %1829 = vmatpush.msra.mxu0 0.0
  %1830 = vmatpush.msra.mxu0 0.0
  %1831 = vmatpush.msra.mxu0 0.0
  %1832 = vmatpush.msra.mxu0 0.0
  %1833 = vmatpush.msra.mxu0 0.0
  %1834 = vmatpush.msra.mxu0 0.0
  %1835 = vmatpush.msra.mxu0 0.0
  %1836 = vmatpush.msra.mxu0 0.0
  %1837 = vmatpush.msra.mxu0 0.0
  %1838 = vmatpush.msra.mxu0 0.0
  %1839 = vmatpush.msra.mxu0 0.0
  %1840 = vmatpush.msra.mxu0 0.0
  %1841 = vmatpush.msra.mxu0 0.0
  %1842 = vmatpush.msra.mxu0 0.0
  %1843 = vmatpush.msra.mxu0 %v1827
  %1844 = vmatpush.msra.mxu0 %v1050
  %1845 = vmatmul.f32.gmra.mxu0 %v1058
  %v1846 = vpop.f32.mrf.mxu0
  %v1847 = vadd.f32 %v1054, %v1846
  %1848 = vmatmul.f32.gmra.mxu0 %v1061
  %v1849 = vpop.f32.mrf.mxu0
  %v1850 = vadd.f32 %v1054, %v1849
  %1851 = vmatmul.f32.gmra.mxu0 %v1064
  %v1852 = vpop.f32.mrf.mxu0
  %v1853 = vadd.f32 %v1054, %v1852
  %1854 = vmatmul.f32.gmra.mxu0 %v1067
  %v1855 = vpop.f32.mrf.mxu0
  %v1856 = vadd.f32 %v1054, %v1855
  %1857 = vmatmul.f32.gmra.mxu0 %v1070
  %v1858 = vpop.f32.mrf.mxu0
  %v1859 = vadd.f32 %v1054, %v1858
  %1860 = vmatmul.f32.gmra.mxu0 %v1073
  %v1861 = vpop.f32.mrf.mxu0
  %v1862 = vadd.f32 %v1054, %v1861
  %1863 = vmatmul.f32.gmra.mxu0 %v1076
  %v1864 = vpop.f32.mrf.mxu0
  %v1865 = vadd.f32 %v1054, %v1864
  %1866 = vmatmul.f32.gmra.mxu0 %v1079
  %v1867 = vpop.f32.mrf.mxu0
  %v1868 = vadd.f32 %v1054, %v1867
  %1869 = vmatmul.f32.gmra.mxu0 %v1082
  %v1870 = vpop.f32.mrf.mxu0
  %v1871 = vadd.f32 %v1054, %v1870
  %1872 = vmatmul.f32.gmra.mxu0 %v1085
  %v1873 = vpop.f32.mrf.mxu0
  %v1874 = vadd.f32 %v1054, %v1873
  %1875 = vmatmul.f32.gmra.mxu0 %v1088
  %v1876 = vpop.f32.mrf.mxu0
  %v1877 = vadd.f32 %v1054, %v1876
  %1878 = vmatmul.f32.gmra.mxu0 %v1091
  %v1879 = vpop.f32.mrf.mxu0
  %v1880 = vadd.f32 %v1054, %v1879
  %1881 = vmatmul.f32.gmra.mxu0 %v1094
  %v1882 = vpop.f32.mrf.mxu0
  %v1883 = vadd.f32 %v1054, %v1882
  %1884 = vmatmul.f32.gmra.mxu0 %v1097
  %v1885 = vpop.f32.mrf.mxu0
  %v1886 = vadd.f32 %v1054, %v1885
  %1887 = vmatmul.f32.gmra.mxu0 %v1100
  %v1888 = vpop.f32.mrf.mxu0
  %v1889 = vadd.f32 %v1054, %v1888
  %1890 = vmatmul.f32.gmra.mxu0 %v1103
  %v1891 = vpop.f32.mrf.mxu0
  %v1892 = vadd.f32 %v1054, %v1891
  %1893 = vmatmul.f32.gmra.mxu0 %v1106
  %v1894 = vpop.f32.mrf.mxu0
  %v1895 = vadd.f32 %v1054, %v1894
  %1896 = vmatmul.f32.gmra.mxu0 %v1109
  %v1897 = vpop.f32.mrf.mxu0
  %v1898 = vadd.f32 %v1054, %v1897
  %1899 = vmatmul.f32.gmra.mxu0 %v1112
  %v1900 = vpop.f32.mrf.mxu0
  %v1901 = vadd.f32 %v1054, %v1900
  %1902 = vmatmul.f32.gmra.mxu0 %v1115
  %v1903 = vpop.f32.mrf.mxu0
  %v1904 = vadd.f32 %v1054, %v1903
  %1905 = vmatmul.f32.gmra.mxu0 %v1118
  %v1906 = vpop.f32.mrf.mxu0
  %v1907 = vadd.f32 %v1054, %v1906
  %1908 = vmatmul.f32.gmra.mxu0 %v1121
  %v1909 = vpop.f32.mrf.mxu0
  %v1910 = vadd.f32 %v1054, %v1909
  %1911 = vmatmul.f32.gmra.mxu0 %v1124
  %v1912 = vpop.f32.mrf.mxu0
  %v1913 = vadd.f32 %v1054, %v1912
  %1914 = vmatmul.f32.gmra.mxu0 %v1127
  %v1915 = vpop.f32.mrf.mxu0
  %v1916 = vadd.f32 %v1054, %v1915
  %1917 = vmatmul.f32.gmra.mxu0 %v1130
  %v1918 = vpop.f32.mrf.mxu0
  %v1919 = vadd.f32 %v1054, %v1918
  %1920 = vmatmul.f32.gmra.mxu0 %v1133
  %v1921 = vpop.f32.mrf.mxu0
  %v1922 = vadd.f32 %v1054, %v1921
  %1923 = vmatmul.f32.gmra.mxu0 %v1136
  %v1924 = vpop.f32.mrf.mxu0
  %v1925 = vadd.f32 %v1054, %v1924
  %1926 = vmatmul.f32.gmra.mxu0 %v1139
  %v1927 = vpop.f32.mrf.mxu0
  %v1928 = vadd.f32 %v1054, %v1927
  %1929 = vmatmul.f32.gmra.mxu0 %v1142
  %v1930 = vpop.f32.mrf.mxu0
  %v1931 = vadd.f32 %v1054, %v1930
  %1932 = vmatmul.f32.gmra.mxu0 %v1145
  %v1933 = vpop.f32.mrf.mxu0
  %v1934 = vadd.f32 %v1054, %v1933
  %1935 = vmatmul.f32.gmra.mxu0 %v1148
  %v1936 = vpop.f32.mrf.mxu0
  %v1937 = vadd.f32 %v1054, %v1936
  %1938 = vmatmul.f32.gmra.mxu0 %v1151
  %v1939 = vpop.f32.mrf.mxu0
  %v1940 = vadd.f32 %v1054, %v1939
  %1941 = vmatmul.f32.gmra.mxu0 %v1154
  %v1942 = vpop.f32.mrf.mxu0
  %v1943 = vadd.f32 %v1054, %v1942
  %1944 = vmatmul.f32.gmra.mxu0 %v1157
  %v1945 = vpop.f32.mrf.mxu0
  %v1946 = vadd.f32 %v1054, %v1945
  %1947 = vmatmul.f32.gmra.mxu0 %v1160
  %v1948 = vpop.f32.mrf.mxu0
  %v1949 = vadd.f32 %v1054, %v1948
  %1950 = vmatmul.f32.gmra.mxu0 %v1163
  %v1951 = vpop.f32.mrf.mxu0
  %v1952 = vadd.f32 %v1054, %v1951
  %1953 = vmatmul.f32.gmra.mxu0 %v1166
  %v1954 = vpop.f32.mrf.mxu0
  %v1955 = vadd.f32 %v1054, %v1954
  %1956 = vmatmul.f32.gmra.mxu0 %v1169
  %v1957 = vpop.f32.mrf.mxu0
  %v1958 = vadd.f32 %v1054, %v1957
  %1959 = vmatmul.f32.gmra.mxu0 %v1172
  %v1960 = vpop.f32.mrf.mxu0
  %v1961 = vadd.f32 %v1054, %v1960
  %1962 = vmatmul.f32.gmra.mxu0 %v1175
  %v1963 = vpop.f32.mrf.mxu0
  %v1964 = vadd.f32 %v1054, %v1963
  %1965 = vmatmul.f32.gmra.mxu0 %v1178
  %v1966 = vpop.f32.mrf.mxu0
  %v1967 = vadd.f32 %v1054, %v1966
  %1968 = vmatmul.f32.gmra.mxu0 %v1181
  %v1969 = vpop.f32.mrf.mxu0
  %v1970 = vadd.f32 %v1054, %v1969
  %1971 = vmatmul.f32.gmra.mxu0 %v1184
  %v1972 = vpop.f32.mrf.mxu0
  %v1973 = vadd.f32 %v1054, %v1972
  %1974 = vmatmul.f32.gmra.mxu0 %v1187
  %v1975 = vpop.f32.mrf.mxu0
  %v1976 = vadd.f32 %v1054, %v1975
  %1977 = vmatmul.f32.gmra.mxu0 %v1190
  %v1978 = vpop.f32.mrf.mxu0
  %v1979 = vadd.f32 %v1054, %v1978
  %1980 = vmatmul.f32.gmra.mxu0 %v1193
  %v1981 = vpop.f32.mrf.mxu0
  %v1982 = vadd.f32 %v1054, %v1981
  %1983 = vmatmul.f32.gmra.mxu0 %v1196
  %v1984 = vpop.f32.mrf.mxu0
  %v1985 = vadd.f32 %v1054, %v1984
  %1986 = vmatmul.f32.gmra.mxu0 %v1199
  %v1987 = vpop.f32.mrf.mxu0
  %v1988 = vadd.f32 %v1054, %v1987
  %1989 = vmatmul.f32.gmra.mxu0 %v1202
  %v1990 = vpop.f32.mrf.mxu0
  %v1991 = vadd.f32 %v1054, %v1990
  %1992 = vmatmul.f32.gmra.mxu0 %v1205
  %v1993 = vpop.f32.mrf.mxu0
  %v1994 = vadd.f32 %v1054, %v1993
  %1995 = vmatmul.f32.gmra.mxu0 %v1208
  %v1996 = vpop.f32.mrf.mxu0
  %v1997 = vadd.f32 %v1054, %v1996
  %1998 = vmatmul.f32.gmra.mxu0 %v1211
  %v1999 = vpop.f32.mrf.mxu0
  %v2000 = vadd.f32 %v1054, %v1999
  %2001 = vmatmul.f32.gmra.mxu0 %v1214
  %v2002 = vpop.f32.mrf.mxu0
  %v2003 = vadd.f32 %v1054, %v2002
  %2004 = vmatmul.f32.gmra.mxu0 %v1217
  %v2005 = vpop.f32.mrf.mxu0
  %v2006 = vadd.f32 %v1054, %v2005
  %2007 = vmatmul.f32.gmra.mxu0 %v1220
  %v2008 = vpop.f32.mrf.mxu0
  %v2009 = vadd.f32 %v1054, %v2008
  %2010 = vmatmul.f32.gmra.mxu0 %v1223
  %v2011 = vpop.f32.mrf.mxu0
  %v2012 = vadd.f32 %v1054, %v2011
  %2013 = vmatmul.f32.gmra.mxu0 %v1226
  %v2014 = vpop.f32.mrf.mxu0
  %v2015 = vadd.f32 %v1054, %v2014
  %2016 = vmatmul.f32.gmra.mxu0 %v1229
  %v2017 = vpop.f32.mrf.mxu0
  %v2018 = vadd.f32 %v1054, %v2017
  %2019 = vmatmul.f32.gmra.mxu0 %v1232
  %v2020 = vpop.f32.mrf.mxu0
  %v2021 = vadd.f32 %v1054, %v2020
  %2022 = vmatmul.f32.gmra.mxu0 %v1235
  %v2023 = vpop.f32.mrf.mxu0
  %v2024 = vadd.f32 %v1054, %v2023
  %2025 = vmatmul.f32.gmra.mxu0 %v1238
  %v2026 = vpop.f32.mrf.mxu0
  %v2027 = vadd.f32 %v1054, %v2026
  %2028 = vmatmul.f32.gmra.mxu0 %v1241
  %v2029 = vpop.f32.mrf.mxu0
  %v2030 = vadd.f32 %v1054, %v2029
  %2031 = vmatmul.f32.gmra.mxu0 %v1244
  %v2032 = vpop.f32.mrf.mxu0
  %v2033 = vadd.f32 %v1054, %v2032
  %2034 = vmatmul.f32.gmra.mxu0 %v1247
  %v2035 = vpop.f32.mrf.mxu0
  %v2036 = vadd.f32 %v1054, %v2035
  %2037 = vmatmul.f32.gmra.mxu0 %v1250
  %v2038 = vpop.f32.mrf.mxu0
  %v2039 = vadd.f32 %v1054, %v2038
  %2040 = vmatmul.f32.gmra.mxu0 %v1253
  %v2041 = vpop.f32.mrf.mxu0
  %v2042 = vadd.f32 %v1054, %v2041
  %2043 = vmatmul.f32.gmra.mxu0 %v1256
  %v2044 = vpop.f32.mrf.mxu0
  %v2045 = vadd.f32 %v1054, %v2044
  %2046 = vmatmul.f32.gmra.mxu0 %v1259
  %v2047 = vpop.f32.mrf.mxu0
  %v2048 = vadd.f32 %v1054, %v2047
  %2049 = vmatmul.f32.gmra.mxu0 %v1262
  %v2050 = vpop.f32.mrf.mxu0
  %v2051 = vadd.f32 %v1054, %v2050
  %2052 = vmatmul.f32.gmra.mxu0 %v1265
  %v2053 = vpop.f32.mrf.mxu0
  %v2054 = vadd.f32 %v1054, %v2053
  %2055 = vmatmul.f32.gmra.mxu0 %v1268
  %v2056 = vpop.f32.mrf.mxu0
  %v2057 = vadd.f32 %v1054, %v2056
  %2058 = vmatmul.f32.gmra.mxu0 %v1271
  %v2059 = vpop.f32.mrf.mxu0
  %v2060 = vadd.f32 %v1054, %v2059
  %2061 = vmatmul.f32.gmra.mxu0 %v1274
  %v2062 = vpop.f32.mrf.mxu0
  %v2063 = vadd.f32 %v1054, %v2062
  %2064 = vmatmul.f32.gmra.mxu0 %v1277
  %v2065 = vpop.f32.mrf.mxu0
  %v2066 = vadd.f32 %v1054, %v2065
  %2067 = vmatmul.f32.gmra.mxu0 %v1280
  %v2068 = vpop.f32.mrf.mxu0
  %v2069 = vadd.f32 %v1054, %v2068
  %2070 = vmatmul.f32.gmra.mxu0 %v1283
  %v2071 = vpop.f32.mrf.mxu0
  %v2072 = vadd.f32 %v1054, %v2071
  %2073 = vmatmul.f32.gmra.mxu0 %v1286
  %v2074 = vpop.f32.mrf.mxu0
  %v2075 = vadd.f32 %v1054, %v2074
  %2076 = vmatmul.f32.gmra.mxu0 %v1289
  %v2077 = vpop.f32.mrf.mxu0
  %v2078 = vadd.f32 %v1054, %v2077
  %2079 = vmatmul.f32.gmra.mxu0 %v1292
  %v2080 = vpop.f32.mrf.mxu0
  %v2081 = vadd.f32 %v1054, %v2080
  %2082 = vmatmul.f32.gmra.mxu0 %v1295
  %v2083 = vpop.f32.mrf.mxu0
  %v2084 = vadd.f32 %v1054, %v2083
  %2085 = vmatmul.f32.gmra.mxu0 %v1298
  %v2086 = vpop.f32.mrf.mxu0
  %v2087 = vadd.f32 %v1054, %v2086
  %2088 = vmatmul.f32.gmra.mxu0 %v1301
  %v2089 = vpop.f32.mrf.mxu0
  %v2090 = vadd.f32 %v1054, %v2089
  %2091 = vmatmul.f32.gmra.mxu0 %v1304
  %v2092 = vpop.f32.mrf.mxu0
  %v2093 = vadd.f32 %v1054, %v2092
  %2094 = vmatmul.f32.gmra.mxu0 %v1307
  %v2095 = vpop.f32.mrf.mxu0
  %v2096 = vadd.f32 %v1054, %v2095
  %2097 = vmatmul.f32.gmra.mxu0 %v1310
  %v2098 = vpop.f32.mrf.mxu0
  %v2099 = vadd.f32 %v1054, %v2098
  %2100 = vmatmul.f32.gmra.mxu0 %v1313
  %v2101 = vpop.f32.mrf.mxu0
  %v2102 = vadd.f32 %v1054, %v2101
  %2103 = vmatmul.f32.gmra.mxu0 %v1316
  %v2104 = vpop.f32.mrf.mxu0
  %v2105 = vadd.f32 %v1054, %v2104
  %2106 = vmatmul.f32.gmra.mxu0 %v1319
  %v2107 = vpop.f32.mrf.mxu0
  %v2108 = vadd.f32 %v1054, %v2107
  %2109 = vmatmul.f32.gmra.mxu0 %v1322
  %v2110 = vpop.f32.mrf.mxu0
  %v2111 = vadd.f32 %v1054, %v2110
  %2112 = vmatmul.f32.gmra.mxu0 %v1325
  %v2113 = vpop.f32.mrf.mxu0
  %v2114 = vadd.f32 %v1054, %v2113
  %2115 = vmatmul.f32.gmra.mxu0 %v1328
  %v2116 = vpop.f32.mrf.mxu0
  %v2117 = vadd.f32 %v1054, %v2116
  %2118 = vmatmul.f32.gmra.mxu0 %v1331
  %v2119 = vpop.f32.mrf.mxu0
  %v2120 = vadd.f32 %v1054, %v2119
  %2121 = vmatmul.f32.gmra.mxu0 %v1334
  %v2122 = vpop.f32.mrf.mxu0
  %v2123 = vadd.f32 %v1054, %v2122
  %2124 = vmatmul.f32.gmra.mxu0 %v1337
  %v2125 = vpop.f32.mrf.mxu0
  %v2126 = vadd.f32 %v1054, %v2125
  %2127 = vmatmul.f32.gmra.mxu0 %v1340
  %v2128 = vpop.f32.mrf.mxu0
  %v2129 = vadd.f32 %v1054, %v2128
  %2130 = vmatmul.f32.gmra.mxu0 %v1343
  %v2131 = vpop.f32.mrf.mxu0
  %v2132 = vadd.f32 %v1054, %v2131
  %2133 = vmatmul.f32.gmra.mxu0 %v1346
  %v2134 = vpop.f32.mrf.mxu0
  %v2135 = vadd.f32 %v1054, %v2134
  %2136 = vmatmul.f32.gmra.mxu0 %v1349
  %v2137 = vpop.f32.mrf.mxu0
  %v2138 = vadd.f32 %v1054, %v2137
  %2139 = vmatmul.f32.gmra.mxu0 %v1352
  %v2140 = vpop.f32.mrf.mxu0
  %v2141 = vadd.f32 %v1054, %v2140
  %2142 = vmatmul.f32.gmra.mxu0 %v1355
  %v2143 = vpop.f32.mrf.mxu0
  %v2144 = vadd.f32 %v1054, %v2143
  %2145 = vmatmul.f32.gmra.mxu0 %v1358
  %v2146 = vpop.f32.mrf.mxu0
  %v2147 = vadd.f32 %v1054, %v2146
  %2148 = vmatmul.f32.gmra.mxu0 %v1361
  %v2149 = vpop.f32.mrf.mxu0
  %v2150 = vadd.f32 %v1054, %v2149
  %2151 = vmatmul.f32.gmra.mxu0 %v1364
  %v2152 = vpop.f32.mrf.mxu0
  %v2153 = vadd.f32 %v1054, %v2152
  %2154 = vmatmul.f32.gmra.mxu0 %v1367
  %v2155 = vpop.f32.mrf.mxu0
  %v2156 = vadd.f32 %v1054, %v2155
  %2157 = vmatmul.f32.gmra.mxu0 %v1370
  %v2158 = vpop.f32.mrf.mxu0
  %v2159 = vadd.f32 %v1054, %v2158
  %2160 = vmatmul.f32.gmra.mxu0 %v1373
  %v2161 = vpop.f32.mrf.mxu0
  %v2162 = vadd.f32 %v1054, %v2161
  %2163 = vmatmul.f32.gmra.mxu0 %v1376
  %v2164 = vpop.f32.mrf.mxu0
  %v2165 = vadd.f32 %v1054, %v2164
  %2166 = vmatmul.f32.gmra.mxu0 %v1379
  %v2167 = vpop.f32.mrf.mxu0
  %v2168 = vadd.f32 %v1054, %v2167
  %2169 = vmatmul.f32.gmra.mxu0 %v1382
  %v2170 = vpop.f32.mrf.mxu0
  %v2171 = vadd.f32 %v1054, %v2170
  %2172 = vmatmul.f32.gmra.mxu0 %v1385
  %v2173 = vpop.f32.mrf.mxu0
  %v2174 = vadd.f32 %v1054, %v2173
  %2175 = vmatmul.f32.gmra.mxu0 %v1388
  %v2176 = vpop.f32.mrf.mxu0
  %v2177 = vadd.f32 %v1054, %v2176
  %2178 = vmatmul.f32.gmra.mxu0 %v1391
  %v2179 = vpop.f32.mrf.mxu0
  %v2180 = vadd.f32 %v1054, %v2179
  %2181 = vmatmul.f32.gmra.mxu0 %v1394
  %v2182 = vpop.f32.mrf.mxu0
  %v2183 = vadd.f32 %v1054, %v2182
  %2184 = vmatmul.f32.gmra.mxu0 %v1397
  %v2185 = vpop.f32.mrf.mxu0
  %v2186 = vadd.f32 %v1054, %v2185
  %2187 = vmatmul.f32.gmra.mxu0 %v1400
  %v2188 = vpop.f32.mrf.mxu0
  %v2189 = vadd.f32 %v1054, %v2188
  %2190 = vmatmul.f32.gmra.mxu0 %v1403
  %v2191 = vpop.f32.mrf.mxu0
  %v2192 = vadd.f32 %v1054, %v2191
  %2193 = vmatmul.f32.gmra.mxu0 %v1406
  %v2194 = vpop.f32.mrf.mxu0
  %v2195 = vadd.f32 %v1054, %v2194
  %2196 = vmatmul.f32.gmra.mxu0 %v1409
  %v2197 = vpop.f32.mrf.mxu0
  %v2198 = vadd.f32 %v1054, %v2197
  %2199 = vmatmul.f32.gmra.mxu0 %v1412
  %v2200 = vpop.f32.mrf.mxu0
  %v2201 = vadd.f32 %v1054, %v2200
  %2202 = vmatmul.f32.gmra.mxu0 %v1415
  %v2203 = vpop.f32.mrf.mxu0
  %v2204 = vadd.f32 %v1054, %v2203
  %2205 = vmatmul.f32.gmra.mxu0 %v1418
  %v2206 = vpop.f32.mrf.mxu0
  %v2207 = vadd.f32 %v1054, %v2206
  %2208 = vmatmul.f32.gmra.mxu0 %v1421
  %v2209 = vpop.f32.mrf.mxu0
  %v2210 = vadd.f32 %v1054, %v2209
  %2211 = vmatmul.f32.gmra.mxu0 %v1424
  %v2212 = vpop.f32.mrf.mxu0
  %v2213 = vadd.f32 %v1054, %v2212
  %2214 = vmatmul.f32.gmra.mxu0 %v1427
  %v2215 = vpop.f32.mrf.mxu0
  %v2216 = vadd.f32 %v1054, %v2215
  %2217 = vmatmul.f32.gmra.mxu0 %v1430
  %v2218 = vpop.f32.mrf.mxu0
  %v2219 = vadd.f32 %v1054, %v2218
  %2220 = vmatmul.f32.gmra.mxu0 %v1433
  %v2221 = vpop.f32.mrf.mxu0
  %v2222 = vadd.f32 %v1054, %v2221
  %2223 = vmatmul.f32.gmra.mxu0 %v1436
  %v2224 = vpop.f32.mrf.mxu0
  %v2225 = vadd.f32 %v1054, %v2224
  %2226 = vmatmul.f32.gmra.mxu0 %v1439
  %v2227 = vpop.f32.mrf.mxu0
  %v2228 = vadd.f32 %v1054, %v2227
  %2229 = vmatmul.f32.gmra.mxu0 %v1442
  %v2230 = vpop.f32.mrf.mxu0
  %v2231 = vadd.f32 %v1054, %v2230
  %2232 = vmatmul.f32.gmra.mxu0 %v1445
  %v2233 = vpop.f32.mrf.mxu0
  %v2234 = vadd.f32 %v1054, %v2233
  %2235 = vmatmul.f32.gmra.mxu0 %v1448
  %v2236 = vpop.f32.mrf.mxu0
  %v2237 = vadd.f32 %v1054, %v2236
  %2238 = vmatmul.f32.gmra.mxu0 %v1451
  %v2239 = vpop.f32.mrf.mxu0
  %v2240 = vadd.f32 %v1054, %v2239
  %2241 = vmatmul.f32.gmra.mxu0 %v1454
  %v2242 = vpop.f32.mrf.mxu0
  %v2243 = vadd.f32 %v1054, %v2242
  %2244 = vmatmul.f32.gmra.mxu0 %v1457
  %v2245 = vpop.f32.mrf.mxu0
  %v2246 = vadd.f32 %v1054, %v2245
  %2247 = vmatmul.f32.gmra.mxu0 %v1460
  %v2248 = vpop.f32.mrf.mxu0
  %v2249 = vadd.f32 %v1054, %v2248
  %2250 = vmatmul.f32.gmra.mxu0 %v1463
  %v2251 = vpop.f32.mrf.mxu0
  %v2252 = vadd.f32 %v1054, %v2251
  %2253 = vmatmul.f32.gmra.mxu0 %v1466
  %v2254 = vpop.f32.mrf.mxu0
  %v2255 = vadd.f32 %v1054, %v2254
  %2256 = vmatmul.f32.gmra.mxu0 %v1469
  %v2257 = vpop.f32.mrf.mxu0
  %v2258 = vadd.f32 %v1054, %v2257
  %2259 = vmatmul.f32.gmra.mxu0 %v1472
  %v2260 = vpop.f32.mrf.mxu0
  %v2261 = vadd.f32 %v1054, %v2260
  %2262 = vmatmul.f32.gmra.mxu0 %v1475
  %v2263 = vpop.f32.mrf.mxu0
  %v2264 = vadd.f32 %v1054, %v2263
  %2265 = vmatmul.f32.gmra.mxu0 %v1478
  %v2266 = vpop.f32.mrf.mxu0
  %v2267 = vadd.f32 %v1054, %v2266
  %2268 = vmatmul.f32.gmra.mxu0 %v1481
  %v2269 = vpop.f32.mrf.mxu0
  %v2270 = vadd.f32 %v1054, %v2269
  %2271 = vmatmul.f32.gmra.mxu0 %v1484
  %v2272 = vpop.f32.mrf.mxu0
  %v2273 = vadd.f32 %v1054, %v2272
  %2274 = vmatmul.f32.gmra.mxu0 %v1487
  %v2275 = vpop.f32.mrf.mxu0
  %v2276 = vadd.f32 %v1054, %v2275
  %2277 = vmatmul.f32.gmra.mxu0 %v1490
  %v2278 = vpop.f32.mrf.mxu0
  %v2279 = vadd.f32 %v1054, %v2278
  %2280 = vmatmul.f32.gmra.mxu0 %v1493
  %v2281 = vpop.f32.mrf.mxu0
  %v2282 = vadd.f32 %v1054, %v2281
  %2283 = vmatmul.f32.gmra.mxu0 %v1496
  %v2284 = vpop.f32.mrf.mxu0
  %v2285 = vadd.f32 %v1054, %v2284
  %2286 = vmatmul.f32.gmra.mxu0 %v1499
  %v2287 = vpop.f32.mrf.mxu0
  %v2288 = vadd.f32 %v1054, %v2287
  %2289 = vmatmul.f32.gmra.mxu0 %v1502
  %v2290 = vpop.f32.mrf.mxu0
  %v2291 = vadd.f32 %v1054, %v2290
  %2292 = vmatmul.f32.gmra.mxu0 %v1505
  %v2293 = vpop.f32.mrf.mxu0
  %v2294 = vadd.f32 %v1054, %v2293
  %2295 = vmatmul.f32.gmra.mxu0 %v1508
  %v2296 = vpop.f32.mrf.mxu0
  %v2297 = vadd.f32 %v1054, %v2296
  %2298 = vmatmul.f32.gmra.mxu0 %v1511
  %v2299 = vpop.f32.mrf.mxu0
  %v2300 = vadd.f32 %v1054, %v2299
  %2301 = vmatmul.f32.gmra.mxu0 %v1514
  %v2302 = vpop.f32.mrf.mxu0
  %v2303 = vadd.f32 %v1054, %v2302
  %2304 = vmatmul.f32.gmra.mxu0 %v1517
  %v2305 = vpop.f32.mrf.mxu0
  %v2306 = vadd.f32 %v1054, %v2305
  %2307 = vmatmul.f32.gmra.mxu0 %v1520
  %v2308 = vpop.f32.mrf.mxu0
  %v2309 = vadd.f32 %v1054, %v2308
  %2310 = vmatmul.f32.gmra.mxu0 %v1523
  %v2311 = vpop.f32.mrf.mxu0
  %v2312 = vadd.f32 %v1054, %v2311
  %2313 = vmatmul.f32.gmra.mxu0 %v1526
  %v2314 = vpop.f32.mrf.mxu0
  %v2315 = vadd.f32 %v1054, %v2314
  %2316 = vmatmul.f32.gmra.mxu0 %v1529
  %v2317 = vpop.f32.mrf.mxu0
  %v2318 = vadd.f32 %v1054, %v2317
  %2319 = vmatmul.f32.gmra.mxu0 %v1532
  %v2320 = vpop.f32.mrf.mxu0
  %v2321 = vadd.f32 %v1054, %v2320
  %2322 = vmatmul.f32.gmra.mxu0 %v1535
  %v2323 = vpop.f32.mrf.mxu0
  %v2324 = vadd.f32 %v1054, %v2323
  %2325 = vmatmul.f32.gmra.mxu0 %v1538
  %v2326 = vpop.f32.mrf.mxu0
  %v2327 = vadd.f32 %v1054, %v2326
  %2328 = vmatmul.f32.gmra.mxu0 %v1541
  %v2329 = vpop.f32.mrf.mxu0
  %v2330 = vadd.f32 %v1054, %v2329
  %2331 = vmatmul.f32.gmra.mxu0 %v1544
  %v2332 = vpop.f32.mrf.mxu0
  %v2333 = vadd.f32 %v1054, %v2332
  %2334 = vmatmul.f32.gmra.mxu0 %v1547
  %v2335 = vpop.f32.mrf.mxu0
  %v2336 = vadd.f32 %v1054, %v2335
  %2337 = vmatmul.f32.gmra.mxu0 %v1550
  %v2338 = vpop.f32.mrf.mxu0
  %v2339 = vadd.f32 %v1054, %v2338
  %2340 = vmatmul.f32.gmra.mxu0 %v1553
  %v2341 = vpop.f32.mrf.mxu0
  %v2342 = vadd.f32 %v1054, %v2341
  %2343 = vmatmul.f32.gmra.mxu0 %v1556
  %v2344 = vpop.f32.mrf.mxu0
  %v2345 = vadd.f32 %v1054, %v2344
  %2346 = vmatmul.f32.gmra.mxu0 %v1559
  %v2347 = vpop.f32.mrf.mxu0
  %v2348 = vadd.f32 %v1054, %v2347
  %2349 = vmatmul.f32.gmra.mxu0 %v1562
  %v2350 = vpop.f32.mrf.mxu0
  %v2351 = vadd.f32 %v1054, %v2350
  %2352 = vmatmul.f32.gmra.mxu0 %v1565
  %v2353 = vpop.f32.mrf.mxu0
  %v2354 = vadd.f32 %v1054, %v2353
  %2355 = vmatmul.f32.gmra.mxu0 %v1568
  %v2356 = vpop.f32.mrf.mxu0
  %v2357 = vadd.f32 %v1054, %v2356
  %2358 = vmatmul.f32.gmra.mxu0 %v1571
  %v2359 = vpop.f32.mrf.mxu0
  %v2360 = vadd.f32 %v1054, %v2359
  %2361 = vmatmul.f32.gmra.mxu0 %v1574
  %v2362 = vpop.f32.mrf.mxu0
  %v2363 = vadd.f32 %v1054, %v2362
  %2364 = vmatmul.f32.gmra.mxu0 %v1577
  %v2365 = vpop.f32.mrf.mxu0
  %v2366 = vadd.f32 %v1054, %v2365
  %2367 = vmatmul.f32.gmra.mxu0 %v1580
  %v2368 = vpop.f32.mrf.mxu0
  %v2369 = vadd.f32 %v1054, %v2368
  %2370 = vmatmul.f32.gmra.mxu0 %v1583
  %v2371 = vpop.f32.mrf.mxu0
  %v2372 = vadd.f32 %v1054, %v2371
  %2373 = vmatmul.f32.gmra.mxu0 %v1586
  %v2374 = vpop.f32.mrf.mxu0
  %v2375 = vadd.f32 %v1054, %v2374
  %2376 = vmatmul.f32.gmra.mxu0 %v1589
  %v2377 = vpop.f32.mrf.mxu0
  %v2378 = vadd.f32 %v1054, %v2377
  %2379 = vmatmul.f32.gmra.mxu0 %v1592
  %v2380 = vpop.f32.mrf.mxu0
  %v2381 = vadd.f32 %v1054, %v2380
  %2382 = vmatmul.f32.gmra.mxu0 %v1595
  %v2383 = vpop.f32.mrf.mxu0
  %v2384 = vadd.f32 %v1054, %v2383
  %2385 = vmatmul.f32.gmra.mxu0 %v1598
  %v2386 = vpop.f32.mrf.mxu0
  %v2387 = vadd.f32 %v1054, %v2386
  %2388 = vmatmul.f32.gmra.mxu0 %v1601
  %v2389 = vpop.f32.mrf.mxu0
  %v2390 = vadd.f32 %v1054, %v2389
  %2391 = vmatmul.f32.gmra.mxu0 %v1604
  %v2392 = vpop.f32.mrf.mxu0
  %v2393 = vadd.f32 %v1054, %v2392
  %2394 = vmatmul.f32.gmra.mxu0 %v1607
  %v2395 = vpop.f32.mrf.mxu0
  %v2396 = vadd.f32 %v1054, %v2395
  %2397 = vmatmul.f32.gmra.mxu0 %v1610
  %v2398 = vpop.f32.mrf.mxu0
  %v2399 = vadd.f32 %v1054, %v2398
  %2400 = vmatmul.f32.gmra.mxu0 %v1613
  %v2401 = vpop.f32.mrf.mxu0
  %v2402 = vadd.f32 %v1054, %v2401
  %2403 = vmatmul.f32.gmra.mxu0 %v1616
  %v2404 = vpop.f32.mrf.mxu0
  %v2405 = vadd.f32 %v1054, %v2404
  %2406 = vmatmul.f32.gmra.mxu0 %v1619
  %v2407 = vpop.f32.mrf.mxu0
  %v2408 = vadd.f32 %v1054, %v2407
  %2409 = vmatmul.f32.gmra.mxu0 %v1622
  %v2410 = vpop.f32.mrf.mxu0
  %v2411 = vadd.f32 %v1054, %v2410
  %2412 = vmatmul.f32.gmra.mxu0 %v1625
  %v2413 = vpop.f32.mrf.mxu0
  %v2414 = vadd.f32 %v1054, %v2413
  %2415 = vmatmul.f32.gmra.mxu0 %v1628
  %v2416 = vpop.f32.mrf.mxu0
  %v2417 = vadd.f32 %v1054, %v2416
  %2418 = vmatmul.f32.gmra.mxu0 %v1631
  %v2419 = vpop.f32.mrf.mxu0
  %v2420 = vadd.f32 %v1054, %v2419
  %2421 = vmatmul.f32.gmra.mxu0 %v1634
  %v2422 = vpop.f32.mrf.mxu0
  %v2423 = vadd.f32 %v1054, %v2422
  %2424 = vmatmul.f32.gmra.mxu0 %v1637
  %v2425 = vpop.f32.mrf.mxu0
  %v2426 = vadd.f32 %v1054, %v2425
  %2427 = vmatmul.f32.gmra.mxu0 %v1640
  %v2428 = vpop.f32.mrf.mxu0
  %v2429 = vadd.f32 %v1054, %v2428
  %2430 = vmatmul.f32.gmra.mxu0 %v1643
  %v2431 = vpop.f32.mrf.mxu0
  %v2432 = vadd.f32 %v1054, %v2431
  %2433 = vmatmul.f32.gmra.mxu0 %v1646
  %v2434 = vpop.f32.mrf.mxu0
  %v2435 = vadd.f32 %v1054, %v2434
  %2436 = vmatmul.f32.gmra.mxu0 %v1649
  %v2437 = vpop.f32.mrf.mxu0
  %v2438 = vadd.f32 %v1054, %v2437
  %2439 = vmatmul.f32.gmra.mxu0 %v1652
  %v2440 = vpop.f32.mrf.mxu0
  %v2441 = vadd.f32 %v1054, %v2440
  %2442 = vmatmul.f32.gmra.mxu0 %v1655
  %v2443 = vpop.f32.mrf.mxu0
  %v2444 = vadd.f32 %v1054, %v2443
  %2445 = vmatmul.f32.gmra.mxu0 %v1658
  %v2446 = vpop.f32.mrf.mxu0
  %v2447 = vadd.f32 %v1054, %v2446
  %2448 = vmatmul.f32.gmra.mxu0 %v1661
  %v2449 = vpop.f32.mrf.mxu0
  %v2450 = vadd.f32 %v1054, %v2449
  %2451 = vmatmul.f32.gmra.mxu0 %v1664
  %v2452 = vpop.f32.mrf.mxu0
  %v2453 = vadd.f32 %v1054, %v2452
  %2454 = vmatmul.f32.gmra.mxu0 %v1667
  %v2455 = vpop.f32.mrf.mxu0
  %v2456 = vadd.f32 %v1054, %v2455
  %2457 = vmatmul.f32.gmra.mxu0 %v1670
  %v2458 = vpop.f32.mrf.mxu0
  %v2459 = vadd.f32 %v1054, %v2458
  %2460 = vmatmul.f32.gmra.mxu0 %v1673
  %v2461 = vpop.f32.mrf.mxu0
  %v2462 = vadd.f32 %v1054, %v2461
  %2463 = vmatmul.f32.gmra.mxu0 %v1676
  %v2464 = vpop.f32.mrf.mxu0
  %v2465 = vadd.f32 %v1054, %v2464
  %2466 = vmatmul.f32.gmra.mxu0 %v1679
  %v2467 = vpop.f32.mrf.mxu0
  %v2468 = vadd.f32 %v1054, %v2467
  %2469 = vmatmul.f32.gmra.mxu0 %v1682
  %v2470 = vpop.f32.mrf.mxu0
  %v2471 = vadd.f32 %v1054, %v2470
  %2472 = vmatmul.f32.gmra.mxu0 %v1685
  %v2473 = vpop.f32.mrf.mxu0
  %v2474 = vadd.f32 %v1054, %v2473
  %2475 = vmatmul.f32.gmra.mxu0 %v1688
  %v2476 = vpop.f32.mrf.mxu0
  %v2477 = vadd.f32 %v1054, %v2476
  %2478 = vmatmul.f32.gmra.mxu0 %v1691
  %v2479 = vpop.f32.mrf.mxu0
  %v2480 = vadd.f32 %v1054, %v2479
  %2481 = vmatmul.f32.gmra.mxu0 %v1694
  %v2482 = vpop.f32.mrf.mxu0
  %v2483 = vadd.f32 %v1054, %v2482
  %2484 = vmatmul.f32.gmra.mxu0 %v1697
  %v2485 = vpop.f32.mrf.mxu0
  %v2486 = vadd.f32 %v1054, %v2485
  %2487 = vmatmul.f32.gmra.mxu0 %v1700
  %v2488 = vpop.f32.mrf.mxu0
  %v2489 = vadd.f32 %v1054, %v2488
  %2490 = vmatmul.f32.gmra.mxu0 %v1703
  %v2491 = vpop.f32.mrf.mxu0
  %v2492 = vadd.f32 %v1054, %v2491
  %2493 = vmatmul.f32.gmra.mxu0 %v1706
  %v2494 = vpop.f32.mrf.mxu0
  %v2495 = vadd.f32 %v1054, %v2494
  %2496 = vmatmul.f32.gmra.mxu0 %v1709
  %v2497 = vpop.f32.mrf.mxu0
  %v2498 = vadd.f32 %v1054, %v2497
  %2499 = vmatmul.f32.gmra.mxu0 %v1712
  %v2500 = vpop.f32.mrf.mxu0
  %v2501 = vadd.f32 %v1054, %v2500
  %2502 = vmatmul.f32.gmra.mxu0 %v1715
  %v2503 = vpop.f32.mrf.mxu0
  %v2504 = vadd.f32 %v1054, %v2503
  %2505 = vmatmul.f32.gmra.mxu0 %v1718
  %v2506 = vpop.f32.mrf.mxu0
  %v2507 = vadd.f32 %v1054, %v2506
  %2508 = vmatmul.f32.gmra.mxu0 %v1721
  %v2509 = vpop.f32.mrf.mxu0
  %v2510 = vadd.f32 %v1054, %v2509
  %2511 = vmatmul.f32.gmra.mxu0 %v1724
  %v2512 = vpop.f32.mrf.mxu0
  %v2513 = vadd.f32 %v1054, %v2512
  %2514 = vmatmul.f32.gmra.mxu0 %v1727
  %v2515 = vpop.f32.mrf.mxu0
  %v2516 = vadd.f32 %v1054, %v2515
  %2517 = vmatmul.f32.gmra.mxu0 %v1730
  %v2518 = vpop.f32.mrf.mxu0
  %v2519 = vadd.f32 %v1054, %v2518
  %2520 = vmatmul.f32.gmra.mxu0 %v1733
  %v2521 = vpop.f32.mrf.mxu0
  %v2522 = vadd.f32 %v1054, %v2521
  %2523 = vmatmul.f32.gmra.mxu0 %v1736
  %v2524 = vpop.f32.mrf.mxu0
  %v2525 = vadd.f32 %v1054, %v2524
  %2526 = vmatmul.f32.gmra.mxu0 %v1739
  %v2527 = vpop.f32.mrf.mxu0
  %v2528 = vadd.f32 %v1054, %v2527
  %2529 = vmatmul.f32.gmra.mxu0 %v1742
  %v2530 = vpop.f32.mrf.mxu0
  %v2531 = vadd.f32 %v1054, %v2530
  %2532 = vmatmul.f32.gmra.mxu0 %v1745
  %v2533 = vpop.f32.mrf.mxu0
  %v2534 = vadd.f32 %v1054, %v2533
  %2535 = vmatmul.f32.gmra.mxu0 %v1748
  %v2536 = vpop.f32.mrf.mxu0
  %v2537 = vadd.f32 %v1054, %v2536
  %2538 = vmatmul.f32.gmra.mxu0 %v1751
  %v2539 = vpop.f32.mrf.mxu0
  %v2540 = vadd.f32 %v1054, %v2539
  %2541 = vmatmul.f32.gmra.mxu0 %v1754
  %v2542 = vpop.f32.mrf.mxu0
  %v2543 = vadd.f32 %v1054, %v2542
  %2544 = vmatmul.f32.gmra.mxu0 %v1757
  %v2545 = vpop.f32.mrf.mxu0
  %v2546 = vadd.f32 %v1054, %v2545
  %2547 = vmatmul.f32.gmra.mxu0 %v1760
  %v2548 = vpop.f32.mrf.mxu0
  %v2549 = vadd.f32 %v1054, %v2548
  %2550 = vmatmul.f32.gmra.mxu0 %v1763
  %v2551 = vpop.f32.mrf.mxu0
  %v2552 = vadd.f32 %v1054, %v2551
  %2553 = vmatmul.f32.gmra.mxu0 %v1766
  %v2554 = vpop.f32.mrf.mxu0
  %v2555 = vadd.f32 %v1054, %v2554
  %2556 = vmatmul.f32.gmra.mxu0 %v1769
  %v2557 = vpop.f32.mrf.mxu0
  %v2558 = vadd.f32 %v1054, %v2557
  %2559 = vmatmul.f32.gmra.mxu0 %v1772
  %v2560 = vpop.f32.mrf.mxu0
  %v2561 = vadd.f32 %v1054, %v2560
  %2562 = vmatmul.f32.gmra.mxu0 %v1775
  %v2563 = vpop.f32.mrf.mxu0
  %v2564 = vadd.f32 %v1054, %v2563
  %2565 = vmatmul.f32.gmra.mxu0 %v1778
  %v2566 = vpop.f32.mrf.mxu0
  %v2567 = vadd.f32 %v1054, %v2566
  %2568 = vmatmul.f32.gmra.mxu0 %v1781
  %v2569 = vpop.f32.mrf.mxu0
  %v2570 = vadd.f32 %v1054, %v2569
  %2571 = vmatmul.f32.gmra.mxu0 %v1784
  %v2572 = vpop.f32.mrf.mxu0
  %v2573 = vadd.f32 %v1054, %v2572
  %2574 = vmatmul.f32.gmra.mxu0 %v1787
  %v2575 = vpop.f32.mrf.mxu0
  %v2576 = vadd.f32 %v1054, %v2575
  %2577 = vmatmul.f32.gmra.mxu0 %v1790
  %v2578 = vpop.f32.mrf.mxu0
  %v2579 = vadd.f32 %v1054, %v2578
  %2580 = vmatmul.f32.gmra.mxu0 %v1793
  %v2581 = vpop.f32.mrf.mxu0
  %v2582 = vadd.f32 %v1054, %v2581
  %2583 = vmatmul.f32.gmra.mxu0 %v1796
  %v2584 = vpop.f32.mrf.mxu0
  %v2585 = vadd.f32 %v1054, %v2584
  %2586 = vmatmul.f32.gmra.mxu0 %v1799
  %v2587 = vpop.f32.mrf.mxu0
  %v2588 = vadd.f32 %v1054, %v2587
  %2589 = vmatmul.f32.gmra.mxu0 %v1802
  %v2590 = vpop.f32.mrf.mxu0
  %v2591 = vadd.f32 %v1054, %v2590
  %2592 = vmatmul.f32.gmra.mxu0 %v1805
  %v2593 = vpop.f32.mrf.mxu0
  %v2594 = vadd.f32 %v1054, %v2593
  %2595 = vmatmul.f32.gmra.mxu0 %v1808
  %v2596 = vpop.f32.mrf.mxu0
  %v2597 = vadd.f32 %v1054, %v2596
  %2598 = vmatmul.f32.gmra.mxu0 %v1811
  %v2599 = vpop.f32.mrf.mxu0
  %v2600 = vadd.f32 %v1054, %v2599
  %2601 = vmatmul.f32.gmra.mxu0 %v1814
  %v2602 = vpop.f32.mrf.mxu0
  %v2603 = vadd.f32 %v1054, %v2602
  %2604 = vmatmul.f32.gmra.mxu0 %v1817
  %v2605 = vpop.f32.mrf.mxu0
  %v2606 = vadd.f32 %v1054, %v2605
  %2607 = vmatmul.f32.gmra.mxu0 %v1820
  %v2608 = vpop.f32.mrf.mxu0
  %v2609 = vadd.f32 %v1054, %v2608
  %2610 = vmatmul.f32.gmra.mxu0 %v1823
  %v2611 = vpop.f32.mrf.mxu0
  %v2612 = vadd.f32 %v1054, %v2611
  %2613 = vdwg.mxu0
  %v2614 = vmax.f32 %v1847, 0.0
  %v2615 = vmax.f32 %v1850, 0.0
  %v2616 = vmax.f32 %v1853, 0.0
  %v2617 = vmax.f32 %v1856, 0.0
  %v2618 = vmax.f32 %v1859, 0.0
  %v2619 = vmax.f32 %v1862, 0.0
  %v2620 = vmax.f32 %v1865, 0.0
  %v2621 = vmax.f32 %v1868, 0.0
  %v2622 = vmax.f32 %v1871, 0.0
  %v2623 = vmax.f32 %v1874, 0.0
  %v2624 = vmax.f32 %v1877, 0.0
  %v2625 = vmax.f32 %v1880, 0.0
  %v2626 = vmax.f32 %v1883, 0.0
  %v2627 = vmax.f32 %v1886, 0.0
  %v2628 = vmax.f32 %v1889, 0.0
  %v2629 = vmax.f32 %v1892, 0.0
  %v2630 = vmax.f32 %v1895, 0.0
  %v2631 = vmax.f32 %v1898, 0.0
  %v2632 = vmax.f32 %v1901, 0.0
  %v2633 = vmax.f32 %v1904, 0.0
  %v2634 = vmax.f32 %v1907, 0.0
  %v2635 = vmax.f32 %v1910, 0.0
  %v2636 = vmax.f32 %v1913, 0.0
  %v2637 = vmax.f32 %v1916, 0.0
  %v2638 = vmax.f32 %v1919, 0.0
  %v2639 = vmax.f32 %v1922, 0.0
  %v2640 = vmax.f32 %v1925, 0.0
  %v2641 = vmax.f32 %v1928, 0.0
  %v2642 = vmax.f32 %v1931, 0.0
  %v2643 = vmax.f32 %v1934, 0.0
  %v2644 = vmax.f32 %v1937, 0.0
  %v2645 = vmax.f32 %v1940, 0.0
  %v2646 = vmax.f32 %v1943, 0.0
  %v2647 = vmax.f32 %v1946, 0.0
  %v2648 = vmax.f32 %v1949, 0.0
  %v2649 = vmax.f32 %v1952, 0.0
  %v2650 = vmax.f32 %v1955, 0.0
  %v2651 = vmax.f32 %v1958, 0.0
  %v2652 = vmax.f32 %v1961, 0.0
  %v2653 = vmax.f32 %v1964, 0.0
  %v2654 = vmax.f32 %v1967, 0.0
  %v2655 = vmax.f32 %v1970, 0.0
  %v2656 = vmax.f32 %v1973, 0.0
  %v2657 = vmax.f32 %v1976, 0.0
  %v2658 = vmax.f32 %v1979, 0.0
  %v2659 = vmax.f32 %v1982, 0.0
  %v2660 = vmax.f32 %v1985, 0.0
  %v2661 = vmax.f32 %v1988, 0.0
  %v2662 = vmax.f32 %v1991, 0.0
  %v2663 = vmax.f32 %v1994, 0.0
  %v2664 = vmax.f32 %v1997, 0.0
  %v2665 = vmax.f32 %v2000, 0.0
  %v2666 = vmax.f32 %v2003, 0.0
  %v2667 = vmax.f32 %v2006, 0.0
  %v2668 = vmax.f32 %v2009, 0.0
  %v2669 = vmax.f32 %v2012, 0.0
  %v2670 = vmax.f32 %v2015, 0.0
  %v2671 = vmax.f32 %v2018, 0.0
  %v2672 = vmax.f32 %v2021, 0.0
  %v2673 = vmax.f32 %v2024, 0.0
  %v2674 = vmax.f32 %v2027, 0.0
  %v2675 = vmax.f32 %v2030, 0.0
  %v2676 = vmax.f32 %v2033, 0.0
  %v2677 = vmax.f32 %v2036, 0.0
  %v2678 = vmax.f32 %v2039, 0.0
  %v2679 = vmax.f32 %v2042, 0.0
  %v2680 = vmax.f32 %v2045, 0.0
  %v2681 = vmax.f32 %v2048, 0.0
  %v2682 = vmax.f32 %v2051, 0.0
  %v2683 = vmax.f32 %v2054, 0.0
  %v2684 = vmax.f32 %v2057, 0.0
  %v2685 = vmax.f32 %v2060, 0.0
  %v2686 = vmax.f32 %v2063, 0.0
  %v2687 = vmax.f32 %v2066, 0.0
  %v2688 = vmax.f32 %v2069, 0.0
  %v2689 = vmax.f32 %v2072, 0.0
  %v2690 = vmax.f32 %v2075, 0.0
  %v2691 = vmax.f32 %v2078, 0.0
  %v2692 = vmax.f32 %v2081, 0.0
  %v2693 = vmax.f32 %v2084, 0.0
  %v2694 = vmax.f32 %v2087, 0.0
  %v2695 = vmax.f32 %v2090, 0.0
  %v2696 = vmax.f32 %v2093, 0.0
  %v2697 = vmax.f32 %v2096, 0.0
  %v2698 = vmax.f32 %v2099, 0.0
  %v2699 = vmax.f32 %v2102, 0.0
  %v2700 = vmax.f32 %v2105, 0.0
  %v2701 = vmax.f32 %v2108, 0.0
  %v2702 = vmax.f32 %v2111, 0.0
  %v2703 = vmax.f32 %v2114, 0.0
  %v2704 = vmax.f32 %v2117, 0.0
  %v2705 = vmax.f32 %v2120, 0.0
  %v2706 = vmax.f32 %v2123, 0.0
  %v2707 = vmax.f32 %v2126, 0.0
  %v2708 = vmax.f32 %v2129, 0.0
  %v2709 = vmax.f32 %v2132, 0.0
  %v2710 = vmax.f32 %v2135, 0.0
  %v2711 = vmax.f32 %v2138, 0.0
  %v2712 = vmax.f32 %v2141, 0.0
  %v2713 = vmax.f32 %v2144, 0.0
  %v2714 = vmax.f32 %v2147, 0.0
  %v2715 = vmax.f32 %v2150, 0.0
  %v2716 = vmax.f32 %v2153, 0.0
  %v2717 = vmax.f32 %v2156, 0.0
  %v2718 = vmax.f32 %v2159, 0.0
  %v2719 = vmax.f32 %v2162, 0.0
  %v2720 = vmax.f32 %v2165, 0.0
  %v2721 = vmax.f32 %v2168, 0.0
  %v2722 = vmax.f32 %v2171, 0.0
  %v2723 = vmax.f32 %v2174, 0.0
  %v2724 = vmax.f32 %v2177, 0.0
  %v2725 = vmax.f32 %v2180, 0.0
  %v2726 = vmax.f32 %v2183, 0.0
  %v2727 = vmax.f32 %v2186, 0.0
  %v2728 = vmax.f32 %v2189, 0.0
  %v2729 = vmax.f32 %v2192, 0.0
  %v2730 = vmax.f32 %v2195, 0.0
  %v2731 = vmax.f32 %v2198, 0.0
  %v2732 = vmax.f32 %v2201, 0.0
  %v2733 = vmax.f32 %v2204, 0.0
  %v2734 = vmax.f32 %v2207, 0.0
  %v2735 = vmax.f32 %v2210, 0.0
  %v2736 = vmax.f32 %v2213, 0.0
  %v2737 = vmax.f32 %v2216, 0.0
  %v2738 = vmax.f32 %v2219, 0.0
  %v2739 = vmax.f32 %v2222, 0.0
  %v2740 = vmax.f32 %v2225, 0.0
  %v2741 = vmax.f32 %v2228, 0.0
  %v2742 = vmax.f32 %v2231, 0.0
  %v2743 = vmax.f32 %v2234, 0.0
  %v2744 = vmax.f32 %v2237, 0.0
  %v2745 = vmax.f32 %v2240, 0.0
  %v2746 = vmax.f32 %v2243, 0.0
  %v2747 = vmax.f32 %v2246, 0.0
  %v2748 = vmax.f32 %v2249, 0.0
  %v2749 = vmax.f32 %v2252, 0.0
  %v2750 = vmax.f32 %v2255, 0.0
  %v2751 = vmax.f32 %v2258, 0.0
  %v2752 = vmax.f32 %v2261, 0.0
  %v2753 = vmax.f32 %v2264, 0.0
  %v2754 = vmax.f32 %v2267, 0.0
  %v2755 = vmax.f32 %v2270, 0.0
  %v2756 = vmax.f32 %v2273, 0.0
  %v2757 = vmax.f32 %v2276, 0.0
  %v2758 = vmax.f32 %v2279, 0.0
  %v2759 = vmax.f32 %v2282, 0.0
  %v2760 = vmax.f32 %v2285, 0.0
  %v2761 = vmax.f32 %v2288, 0.0
  %v2762 = vmax.f32 %v2291, 0.0
  %v2763 = vmax.f32 %v2294, 0.0
  %v2764 = vmax.f32 %v2297, 0.0
  %v2765 = vmax.f32 %v2300, 0.0
  %v2766 = vmax.f32 %v2303, 0.0
  %v2767 = vmax.f32 %v2306, 0.0
  %v2768 = vmax.f32 %v2309, 0.0
  %v2769 = vmax.f32 %v2312, 0.0
  %v2770 = vmax.f32 %v2315, 0.0
  %v2771 = vmax.f32 %v2318, 0.0
  %v2772 = vmax.f32 %v2321, 0.0
  %v2773 = vmax.f32 %v2324, 0.0
  %v2774 = vmax.f32 %v2327, 0.0
  %v2775 = vmax.f32 %v2330, 0.0
  %v2776 = vmax.f32 %v2333, 0.0
  %v2777 = vmax.f32 %v2336, 0.0
  %v2778 = vmax.f32 %v2339, 0.0
  %v2779 = vmax.f32 %v2342, 0.0
  %v2780 = vmax.f32 %v2345, 0.0
  %v2781 = vmax.f32 %v2348, 0.0
  %v2782 = vmax.f32 %v2351, 0.0
  %v2783 = vmax.f32 %v2354, 0.0
  %v2784 = vmax.f32 %v2357, 0.0
  %v2785 = vmax.f32 %v2360, 0.0
  %v2786 = vmax.f32 %v2363, 0.0
  %v2787 = vmax.f32 %v2366, 0.0
  %v2788 = vmax.f32 %v2369, 0.0
  %v2789 = vmax.f32 %v2372, 0.0
  %v2790 = vmax.f32 %v2375, 0.0
  %v2791 = vmax.f32 %v2378, 0.0
  %v2792 = vmax.f32 %v2381, 0.0
  %v2793 = vmax.f32 %v2384, 0.0
  %v2794 = vmax.f32 %v2387, 0.0
  %v2795 = vmax.f32 %v2390, 0.0
  %v2796 = vmax.f32 %v2393, 0.0
  %v2797 = vmax.f32 %v2396, 0.0
  %v2798 = vmax.f32 %v2399, 0.0
  %v2799 = vmax.f32 %v2402, 0.0
  %v2800 = vmax.f32 %v2405, 0.0
  %v2801 = vmax.f32 %v2408, 0.0
  %v2802 = vmax.f32 %v2411, 0.0
  %v2803 = vmax.f32 %v2414, 0.0
  %v2804 = vmax.f32 %v2417, 0.0
  %v2805 = vmax.f32 %v2420, 0.0
  %v2806 = vmax.f32 %v2423, 0.0
  %v2807 = vmax.f32 %v2426, 0.0
  %v2808 = vmax.f32 %v2429, 0.0
  %v2809 = vmax.f32 %v2432, 0.0
  %v2810 = vmax.f32 %v2435, 0.0
  %v2811 = vmax.f32 %v2438, 0.0
  %v2812 = vmax.f32 %v2441, 0.0
  %v2813 = vmax.f32 %v2444, 0.0
  %v2814 = vmax.f32 %v2447, 0.0
  %v2815 = vmax.f32 %v2450, 0.0
  %v2816 = vmax.f32 %v2453, 0.0
  %v2817 = vmax.f32 %v2456, 0.0
  %v2818 = vmax.f32 %v2459, 0.0
  %v2819 = vmax.f32 %v2462, 0.0
  %v2820 = vmax.f32 %v2465, 0.0
  %v2821 = vmax.f32 %v2468, 0.0
  %v2822 = vmax.f32 %v2471, 0.0
  %v2823 = vmax.f32 %v2474, 0.0
  %v2824 = vmax.f32 %v2477, 0.0
  %v2825 = vmax.f32 %v2480, 0.0
  %v2826 = vmax.f32 %v2483, 0.0
  %v2827 = vmax.f32 %v2486, 0.0
  %v2828 = vmax.f32 %v2489, 0.0
  %v2829 = vmax.f32 %v2492, 0.0
  %v2830 = vmax.f32 %v2495, 0.0
  %v2831 = vmax.f32 %v2498, 0.0
  %v2832 = vmax.f32 %v2501, 0.0
  %v2833 = vmax.f32 %v2504, 0.0
  %v2834 = vmax.f32 %v2507, 0.0
  %v2835 = vmax.f32 %v2510, 0.0
  %v2836 = vmax.f32 %v2513, 0.0
  %v2837 = vmax.f32 %v2516, 0.0
  %v2838 = vmax.f32 %v2519, 0.0
  %v2839 = vmax.f32 %v2522, 0.0
  %v2840 = vmax.f32 %v2525, 0.0
  %v2841 = vmax.f32 %v2528, 0.0
  %v2842 = vmax.f32 %v2531, 0.0
  %v2843 = vmax.f32 %v2534, 0.0
  %v2844 = vmax.f32 %v2537, 0.0
  %v2845 = vmax.f32 %v2540, 0.0
  %v2846 = vmax.f32 %v2543, 0.0
  %v2847 = vmax.f32 %v2546, 0.0
  %v2848 = vmax.f32 %v2549, 0.0
  %v2849 = vmax.f32 %v2552, 0.0
  %v2850 = vmax.f32 %v2555, 0.0
  %v2851 = vmax.f32 %v2558, 0.0
  %v2852 = vmax.f32 %v2561, 0.0
  %v2853 = vmax.f32 %v2564, 0.0
  %v2854 = vmax.f32 %v2567, 0.0
  %v2855 = vmax.f32 %v2570, 0.0
  %v2856 = vmax.f32 %v2573, 0.0
  %v2857 = vmax.f32 %v2576, 0.0
  %v2858 = vmax.f32 %v2579, 0.0
  %v2859 = vmax.f32 %v2582, 0.0
  %v2860 = vmax.f32 %v2585, 0.0
  %v2861 = vmax.f32 %v2588, 0.0
  %v2862 = vmax.f32 %v2591, 0.0
  %v2863 = vmax.f32 %v2594, 0.0
  %v2864 = vmax.f32 %v2597, 0.0
  %v2865 = vmax.f32 %v2600, 0.0
  %v2866 = vmax.f32 %v2603, 0.0
  %v2867 = vmax.f32 %v2606, 0.0
  %v2868 = vmax.f32 %v2609, 0.0
  %v2869 = vmax.f32 %v2612, 0.0
  %3126 = vrot.lane.b32.xlu0 %v2614, 13
  %v3127 = vpop.permute.xlu0 %3126
  %3128 = vrot.lane.b32.xlu0 %v2615, 13
  %v3129 = vpop.permute.xlu0 %3128
  %3130 = vrot.lane.b32.xlu0 %v2616, 13
  %v3131 = vpop.permute.xlu0 %3130
  %3132 = vrot.lane.b32.xlu0 %v2617, 13
  %v3133 = vpop.permute.xlu0 %3132
  %3134 = vrot.lane.b32.xlu0 %v2618, 13
  %v3135 = vpop.permute.xlu0 %3134
  %3136 = vrot.lane.b32.xlu0 %v2619, 13
  %v3137 = vpop.permute.xlu0 %3136
  %3138 = vrot.lane.b32.xlu0 %v2620, 13
  %v3139 = vpop.permute.xlu0 %3138
  %3140 = vrot.lane.b32.xlu0 %v2621, 13
  %v3141 = vpop.permute.xlu0 %3140
  %3142 = vrot.lane.b32.xlu0 %v2622, 13
  %v3143 = vpop.permute.xlu0 %3142
  %3144 = vrot.lane.b32.xlu0 %v2623, 13
  %v3145 = vpop.permute.xlu0 %3144
  %3146 = vrot.lane.b32.xlu0 %v2624, 13
  %v3147 = vpop.permute.xlu0 %3146
  %3148 = vrot.lane.b32.xlu0 %v2625, 13
  %v3149 = vpop.permute.xlu0 %3148
  %3150 = vrot.lane.b32.xlu0 %v2626, 13
  %v3151 = vpop.permute.xlu0 %3150
  %3152 = vrot.lane.b32.xlu0 %v2627, 13
  %v3153 = vpop.permute.xlu0 %3152
  %3154 = vrot.lane.b32.xlu0 %v2628, 13
  %v3155 = vpop.permute.xlu0 %3154
  %3156 = vrot.lane.b32.xlu0 %v2629, 13
  %v3157 = vpop.permute.xlu0 %3156
  %3158 = vrot.lane.b32.xlu0 %v2630, 13
  %v3159 = vpop.permute.xlu0 %3158
  %3160 = vrot.lane.b32.xlu0 %v2631, 13
  %v3161 = vpop.permute.xlu0 %3160
  %3162 = vrot.lane.b32.xlu0 %v2632, 13
  %v3163 = vpop.permute.xlu0 %3162
  %3164 = vrot.lane.b32.xlu0 %v2633, 13
  %v3165 = vpop.permute.xlu0 %3164
  %3166 = vrot.lane.b32.xlu0 %v2634, 13
  %v3167 = vpop.permute.xlu0 %3166
  %3168 = vrot.lane.b32.xlu0 %v2635, 13
  %v3169 = vpop.permute.xlu0 %3168
  %3170 = vrot.lane.b32.xlu0 %v2636, 13
  %v3171 = vpop.permute.xlu0 %3170
  %3172 = vrot.lane.b32.xlu0 %v2637, 13
  %v3173 = vpop.permute.xlu0 %3172
  %3174 = vrot.lane.b32.xlu0 %v2638, 13
  %v3175 = vpop.permute.xlu0 %3174
  %3176 = vrot.lane.b32.xlu0 %v2639, 13
  %v3177 = vpop.permute.xlu0 %3176
  %3178 = vrot.lane.b32.xlu0 %v2640, 13
  %v3179 = vpop.permute.xlu0 %3178
  %3180 = vrot.lane.b32.xlu0 %v2641, 13
  %v3181 = vpop.permute.xlu0 %3180
  %3182 = vrot.lane.b32.xlu0 %v2642, 13
  %v3183 = vpop.permute.xlu0 %3182
  %3184 = vrot.lane.b32.xlu0 %v2643, 13
  %v3185 = vpop.permute.xlu0 %3184
  %3186 = vrot.lane.b32.xlu0 %v2644, 13
  %v3187 = vpop.permute.xlu0 %3186
  %3188 = vrot.lane.b32.xlu0 %v2645, 13
  %v3189 = vpop.permute.xlu0 %3188
  %3190 = vrot.lane.b32.xlu0 %v2646, 13
  %v3191 = vpop.permute.xlu0 %3190
  %3192 = vrot.lane.b32.xlu0 %v2647, 13
  %v3193 = vpop.permute.xlu0 %3192
  %3194 = vrot.lane.b32.xlu0 %v2648, 13
  %v3195 = vpop.permute.xlu0 %3194
  %3196 = vrot.lane.b32.xlu0 %v2649, 13
  %v3197 = vpop.permute.xlu0 %3196
  %3198 = vrot.lane.b32.xlu0 %v2650, 13
  %v3199 = vpop.permute.xlu0 %3198
  %3200 = vrot.lane.b32.xlu0 %v2651, 13
  %v3201 = vpop.permute.xlu0 %3200
  %3202 = vrot.lane.b32.xlu0 %v2652, 13
  %v3203 = vpop.permute.xlu0 %3202
  %3204 = vrot.lane.b32.xlu0 %v2653, 13
  %v3205 = vpop.permute.xlu0 %3204
  %3206 = vrot.lane.b32.xlu0 %v2654, 13
  %v3207 = vpop.permute.xlu0 %3206
  %3208 = vrot.lane.b32.xlu0 %v2655, 13
  %v3209 = vpop.permute.xlu0 %3208
  %3210 = vrot.lane.b32.xlu0 %v2656, 13
  %v3211 = vpop.permute.xlu0 %3210
  %3212 = vrot.lane.b32.xlu0 %v2657, 13
  %v3213 = vpop.permute.xlu0 %3212
  %3214 = vrot.lane.b32.xlu0 %v2658, 13
  %v3215 = vpop.permute.xlu0 %3214
  %3216 = vrot.lane.b32.xlu0 %v2659, 13
  %v3217 = vpop.permute.xlu0 %3216
  %3218 = vrot.lane.b32.xlu0 %v2660, 13
  %v3219 = vpop.permute.xlu0 %3218
  %3220 = vrot.lane.b32.xlu0 %v2661, 13
  %v3221 = vpop.permute.xlu0 %3220
  %3222 = vrot.lane.b32.xlu0 %v2662, 13
  %v3223 = vpop.permute.xlu0 %3222
  %3224 = vrot.lane.b32.xlu0 %v2663, 13
  %v3225 = vpop.permute.xlu0 %3224
  %3226 = vrot.lane.b32.xlu0 %v2664, 13
  %v3227 = vpop.permute.xlu0 %3226
  %3228 = vrot.lane.b32.xlu0 %v2665, 13
  %v3229 = vpop.permute.xlu0 %3228
  %3230 = vrot.lane.b32.xlu0 %v2666, 13
  %v3231 = vpop.permute.xlu0 %3230
  %3232 = vrot.lane.b32.xlu0 %v2667, 13
  %v3233 = vpop.permute.xlu0 %3232
  %3234 = vrot.lane.b32.xlu0 %v2668, 13
  %v3235 = vpop.permute.xlu0 %3234
  %3236 = vrot.lane.b32.xlu0 %v2669, 13
  %v3237 = vpop.permute.xlu0 %3236
  %3238 = vrot.lane.b32.xlu0 %v2670, 13
  %v3239 = vpop.permute.xlu0 %3238
  %3240 = vrot.lane.b32.xlu0 %v2671, 13
  %v3241 = vpop.permute.xlu0 %3240
  %3242 = vrot.lane.b32.xlu0 %v2672, 13
  %v3243 = vpop.permute.xlu0 %3242
  %3244 = vrot.lane.b32.xlu0 %v2673, 13
  %v3245 = vpop.permute.xlu0 %3244
  %3246 = vrot.lane.b32.xlu0 %v2674, 13
  %v3247 = vpop.permute.xlu0 %3246
  %3248 = vrot.lane.b32.xlu0 %v2675, 13
  %v3249 = vpop.permute.xlu0 %3248
  %3250 = vrot.lane.b32.xlu0 %v2676, 13
  %v3251 = vpop.permute.xlu0 %3250
  %3252 = vrot.lane.b32.xlu0 %v2677, 13
  %v3253 = vpop.permute.xlu0 %3252
  %3254 = vrot.lane.b32.xlu0 %v2678, 13
  %v3255 = vpop.permute.xlu0 %3254
  %3256 = vrot.lane.b32.xlu0 %v2679, 13
  %v3257 = vpop.permute.xlu0 %3256
  %3258 = vrot.lane.b32.xlu0 %v2680, 13
  %v3259 = vpop.permute.xlu0 %3258
  %3260 = vrot.lane.b32.xlu0 %v2681, 13
  %v3261 = vpop.permute.xlu0 %3260
  %3262 = vrot.lane.b32.xlu0 %v2682, 13
  %v3263 = vpop.permute.xlu0 %3262
  %3264 = vrot.lane.b32.xlu0 %v2683, 13
  %v3265 = vpop.permute.xlu0 %3264
  %3266 = vrot.lane.b32.xlu0 %v2684, 13
  %v3267 = vpop.permute.xlu0 %3266
  %3268 = vrot.lane.b32.xlu0 %v2685, 13
  %v3269 = vpop.permute.xlu0 %3268
  %3270 = vrot.lane.b32.xlu0 %v2686, 13
  %v3271 = vpop.permute.xlu0 %3270
  %3272 = vrot.lane.b32.xlu0 %v2687, 13
  %v3273 = vpop.permute.xlu0 %3272
  %3274 = vrot.lane.b32.xlu0 %v2688, 13
  %v3275 = vpop.permute.xlu0 %3274
  %3276 = vrot.lane.b32.xlu0 %v2689, 13
  %v3277 = vpop.permute.xlu0 %3276
  %3278 = vrot.lane.b32.xlu0 %v2690, 13
  %v3279 = vpop.permute.xlu0 %3278
  %3280 = vrot.lane.b32.xlu0 %v2691, 13
  %v3281 = vpop.permute.xlu0 %3280
  %3282 = vrot.lane.b32.xlu0 %v2692, 13
  %v3283 = vpop.permute.xlu0 %3282
  %3284 = vrot.lane.b32.xlu0 %v2693, 13
  %v3285 = vpop.permute.xlu0 %3284
  %3286 = vrot.lane.b32.xlu0 %v2694, 13
  %v3287 = vpop.permute.xlu0 %3286
  %3288 = vrot.lane.b32.xlu0 %v2695, 13
  %v3289 = vpop.permute.xlu0 %3288
  %3290 = vrot.lane.b32.xlu0 %v2696, 13
  %v3291 = vpop.permute.xlu0 %3290
  %3292 = vrot.lane.b32.xlu0 %v2697, 13
  %v3293 = vpop.permute.xlu0 %3292
  %3294 = vrot.lane.b32.xlu0 %v2698, 13
  %v3295 = vpop.permute.xlu0 %3294
  %3296 = vrot.lane.b32.xlu0 %v2699, 13
  %v3297 = vpop.permute.xlu0 %3296
  %3298 = vrot.lane.b32.xlu0 %v2700, 13
  %v3299 = vpop.permute.xlu0 %3298
  %3300 = vrot.lane.b32.xlu0 %v2701, 13
  %v3301 = vpop.permute.xlu0 %3300
  %3302 = vrot.lane.b32.xlu0 %v2702, 13
  %v3303 = vpop.permute.xlu0 %3302
  %3304 = vrot.lane.b32.xlu0 %v2703, 13
  %v3305 = vpop.permute.xlu0 %3304
  %3306 = vrot.lane.b32.xlu0 %v2704, 13
  %v3307 = vpop.permute.xlu0 %3306
  %3308 = vrot.lane.b32.xlu0 %v2705, 13
  %v3309 = vpop.permute.xlu0 %3308
  %3310 = vrot.lane.b32.xlu0 %v2706, 13
  %v3311 = vpop.permute.xlu0 %3310
  %3312 = vrot.lane.b32.xlu0 %v2707, 13
  %v3313 = vpop.permute.xlu0 %3312
  %3314 = vrot.lane.b32.xlu0 %v2708, 13
  %v3315 = vpop.permute.xlu0 %3314
  %3316 = vrot.lane.b32.xlu0 %v2709, 13
  %v3317 = vpop.permute.xlu0 %3316
  %3318 = vrot.lane.b32.xlu0 %v2710, 13
  %v3319 = vpop.permute.xlu0 %3318
  %3320 = vrot.lane.b32.xlu0 %v2711, 13
  %v3321 = vpop.permute.xlu0 %3320
  %3322 = vrot.lane.b32.xlu0 %v2712, 13
  %v3323 = vpop.permute.xlu0 %3322
  %3324 = vrot.lane.b32.xlu0 %v2713, 13
  %v3325 = vpop.permute.xlu0 %3324
  %3326 = vrot.lane.b32.xlu0 %v2714, 13
  %v3327 = vpop.permute.xlu0 %3326
  %3328 = vrot.lane.b32.xlu0 %v2715, 13
  %v3329 = vpop.permute.xlu0 %3328
  %3330 = vrot.lane.b32.xlu0 %v2716, 13
  %v3331 = vpop.permute.xlu0 %3330
  %3332 = vrot.lane.b32.xlu0 %v2717, 13
  %v3333 = vpop.permute.xlu0 %3332
  %3334 = vrot.lane.b32.xlu0 %v2718, 13
  %v3335 = vpop.permute.xlu0 %3334
  %3336 = vrot.lane.b32.xlu0 %v2719, 13
  %v3337 = vpop.permute.xlu0 %3336
  %3338 = vrot.lane.b32.xlu0 %v2720, 13
  %v3339 = vpop.permute.xlu0 %3338
  %3340 = vrot.lane.b32.xlu0 %v2721, 13
  %v3341 = vpop.permute.xlu0 %3340
  %3342 = vrot.lane.b32.xlu0 %v2722, 13
  %v3343 = vpop.permute.xlu0 %3342
  %3344 = vrot.lane.b32.xlu0 %v2723, 13
  %v3345 = vpop.permute.xlu0 %3344
  %3346 = vrot.lane.b32.xlu0 %v2724, 13
  %v3347 = vpop.permute.xlu0 %3346
  %3348 = vrot.lane.b32.xlu0 %v2725, 13
  %v3349 = vpop.permute.xlu0 %3348
  %3350 = vrot.lane.b32.xlu0 %v2726, 13
  %v3351 = vpop.permute.xlu0 %3350
  %3352 = vrot.lane.b32.xlu0 %v2727, 13
  %v3353 = vpop.permute.xlu0 %3352
  %3354 = vrot.lane.b32.xlu0 %v2728, 13
  %v3355 = vpop.permute.xlu0 %3354
  %3356 = vrot.lane.b32.xlu0 %v2729, 13
  %v3357 = vpop.permute.xlu0 %3356
  %3358 = vrot.lane.b32.xlu0 %v2730, 13
  %v3359 = vpop.permute.xlu0 %3358
  %3360 = vrot.lane.b32.xlu0 %v2731, 13
  %v3361 = vpop.permute.xlu0 %3360
  %3362 = vrot.lane.b32.xlu0 %v2732, 13
  %v3363 = vpop.permute.xlu0 %3362
  %3364 = vrot.lane.b32.xlu0 %v2733, 13
  %v3365 = vpop.permute.xlu0 %3364
  %3366 = vrot.lane.b32.xlu0 %v2734, 13
  %v3367 = vpop.permute.xlu0 %3366
  %3368 = vrot.lane.b32.xlu0 %v2735, 13
  %v3369 = vpop.permute.xlu0 %3368
  %3370 = vrot.lane.b32.xlu0 %v2736, 13
  %v3371 = vpop.permute.xlu0 %3370
  %3372 = vrot.lane.b32.xlu0 %v2737, 13
  %v3373 = vpop.permute.xlu0 %3372
  %3374 = vrot.lane.b32.xlu0 %v2738, 13
  %v3375 = vpop.permute.xlu0 %3374
  %3376 = vrot.lane.b32.xlu0 %v2739, 13
  %v3377 = vpop.permute.xlu0 %3376
  %3378 = vrot.lane.b32.xlu0 %v2740, 13
  %v3379 = vpop.permute.xlu0 %3378
  %3380 = vrot.lane.b32.xlu0 %v2741, 13
  %v3381 = vpop.permute.xlu0 %3380
  %3382 = vrot.lane.b32.xlu0 %v2742, 13
  %v3383 = vpop.permute.xlu0 %3382
  %3384 = vrot.lane.b32.xlu0 %v2743, 13
  %v3385 = vpop.permute.xlu0 %3384
  %3386 = vrot.lane.b32.xlu0 %v2744, 13
  %v3387 = vpop.permute.xlu0 %3386
  %3388 = vrot.lane.b32.xlu0 %v2745, 13
  %v3389 = vpop.permute.xlu0 %3388
  %3390 = vrot.lane.b32.xlu0 %v2746, 13
  %v3391 = vpop.permute.xlu0 %3390
  %3392 = vrot.lane.b32.xlu0 %v2747, 13
  %v3393 = vpop.permute.xlu0 %3392
  %3394 = vrot.lane.b32.xlu0 %v2748, 13
  %v3395 = vpop.permute.xlu0 %3394
  %3396 = vrot.lane.b32.xlu0 %v2749, 13
  %v3397 = vpop.permute.xlu0 %3396
  %3398 = vrot.lane.b32.xlu0 %v2750, 13
  %v3399 = vpop.permute.xlu0 %3398
  %3400 = vrot.lane.b32.xlu0 %v2751, 13
  %v3401 = vpop.permute.xlu0 %3400
  %3402 = vrot.lane.b32.xlu0 %v2752, 13
  %v3403 = vpop.permute.xlu0 %3402
  %3404 = vrot.lane.b32.xlu0 %v2753, 13
  %v3405 = vpop.permute.xlu0 %3404
  %3406 = vrot.lane.b32.xlu0 %v2754, 13
  %v3407 = vpop.permute.xlu0 %3406
  %3408 = vrot.lane.b32.xlu0 %v2755, 13
  %v3409 = vpop.permute.xlu0 %3408
  %3410 = vrot.lane.b32.xlu0 %v2756, 13
  %v3411 = vpop.permute.xlu0 %3410
  %3412 = vrot.lane.b32.xlu0 %v2757, 13
  %v3413 = vpop.permute.xlu0 %3412
  %3414 = vrot.lane.b32.xlu0 %v2758, 13
  %v3415 = vpop.permute.xlu0 %3414
  %3416 = vrot.lane.b32.xlu0 %v2759, 13
  %v3417 = vpop.permute.xlu0 %3416
  %3418 = vrot.lane.b32.xlu0 %v2760, 13
  %v3419 = vpop.permute.xlu0 %3418
  %3420 = vrot.lane.b32.xlu0 %v2761, 13
  %v3421 = vpop.permute.xlu0 %3420
  %3422 = vrot.lane.b32.xlu0 %v2762, 13
  %v3423 = vpop.permute.xlu0 %3422
  %3424 = vrot.lane.b32.xlu0 %v2763, 13
  %v3425 = vpop.permute.xlu0 %3424
  %3426 = vrot.lane.b32.xlu0 %v2764, 13
  %v3427 = vpop.permute.xlu0 %3426
  %3428 = vrot.lane.b32.xlu0 %v2765, 13
  %v3429 = vpop.permute.xlu0 %3428
  %3430 = vrot.lane.b32.xlu0 %v2766, 13
  %v3431 = vpop.permute.xlu0 %3430
  %3432 = vrot.lane.b32.xlu0 %v2767, 13
  %v3433 = vpop.permute.xlu0 %3432
  %3434 = vrot.lane.b32.xlu0 %v2768, 13
  %v3435 = vpop.permute.xlu0 %3434
  %3436 = vrot.lane.b32.xlu0 %v2769, 13
  %v3437 = vpop.permute.xlu0 %3436
  %3438 = vrot.lane.b32.xlu0 %v2770, 13
  %v3439 = vpop.permute.xlu0 %3438
  %3440 = vrot.lane.b32.xlu0 %v2771, 13
  %v3441 = vpop.permute.xlu0 %3440
  %3442 = vrot.lane.b32.xlu0 %v2772, 13
  %v3443 = vpop.permute.xlu0 %3442
  %3444 = vrot.lane.b32.xlu0 %v2773, 13
  %v3445 = vpop.permute.xlu0 %3444
  %3446 = vrot.lane.b32.xlu0 %v2774, 13
  %v3447 = vpop.permute.xlu0 %3446
  %3448 = vrot.lane.b32.xlu0 %v2775, 13
  %v3449 = vpop.permute.xlu0 %3448
  %3450 = vrot.lane.b32.xlu0 %v2776, 13
  %v3451 = vpop.permute.xlu0 %3450
  %3452 = vrot.lane.b32.xlu0 %v2777, 13
  %v3453 = vpop.permute.xlu0 %3452
  %3454 = vrot.lane.b32.xlu0 %v2778, 13
  %v3455 = vpop.permute.xlu0 %3454
  %3456 = vrot.lane.b32.xlu0 %v2779, 13
  %v3457 = vpop.permute.xlu0 %3456
  %3458 = vrot.lane.b32.xlu0 %v2780, 13
  %v3459 = vpop.permute.xlu0 %3458
  %3460 = vrot.lane.b32.xlu0 %v2781, 13
  %v3461 = vpop.permute.xlu0 %3460
  %3462 = vrot.lane.b32.xlu0 %v2782, 13
  %v3463 = vpop.permute.xlu0 %3462
  %3464 = vrot.lane.b32.xlu0 %v2783, 13
  %v3465 = vpop.permute.xlu0 %3464
  %3466 = vrot.lane.b32.xlu0 %v2784, 13
  %v3467 = vpop.permute.xlu0 %3466
  %3468 = vrot.lane.b32.xlu0 %v2785, 13
  %v3469 = vpop.permute.xlu0 %3468
  %3470 = vrot.lane.b32.xlu0 %v2786, 13
  %v3471 = vpop.permute.xlu0 %3470
  %3472 = vrot.lane.b32.xlu0 %v2787, 13
  %v3473 = vpop.permute.xlu0 %3472
  %3474 = vrot.lane.b32.xlu0 %v2788, 13
  %v3475 = vpop.permute.xlu0 %3474
  %3476 = vrot.lane.b32.xlu0 %v2789, 13
  %v3477 = vpop.permute.xlu0 %3476
  %3478 = vrot.lane.b32.xlu0 %v2790, 13
  %v3479 = vpop.permute.xlu0 %3478
  %3480 = vrot.lane.b32.xlu0 %v2791, 13
  %v3481 = vpop.permute.xlu0 %3480
  %3482 = vrot.lane.b32.xlu0 %v2792, 13
  %v3483 = vpop.permute.xlu0 %3482
  %3484 = vrot.lane.b32.xlu0 %v2793, 13
  %v3485 = vpop.permute.xlu0 %3484
  %3486 = vrot.lane.b32.xlu0 %v2794, 13
  %v3487 = vpop.permute.xlu0 %3486
  %3488 = vrot.lane.b32.xlu0 %v2795, 13
  %v3489 = vpop.permute.xlu0 %3488
  %3490 = vrot.lane.b32.xlu0 %v2796, 13
  %v3491 = vpop.permute.xlu0 %3490
  %3492 = vrot.lane.b32.xlu0 %v2797, 13
  %v3493 = vpop.permute.xlu0 %3492
  %3494 = vrot.lane.b32.xlu0 %v2798, 13
  %v3495 = vpop.permute.xlu0 %3494
  %3496 = vrot.lane.b32.xlu0 %v2799, 13
  %v3497 = vpop.permute.xlu0 %3496
  %3498 = vrot.lane.b32.xlu0 %v2800, 13
  %v3499 = vpop.permute.xlu0 %3498
  %3500 = vrot.lane.b32.xlu0 %v2801, 13
  %v3501 = vpop.permute.xlu0 %3500
  %3502 = vrot.lane.b32.xlu0 %v2802, 13
  %v3503 = vpop.permute.xlu0 %3502
  %3504 = vrot.lane.b32.xlu0 %v2803, 13
  %v3505 = vpop.permute.xlu0 %3504
  %3506 = vrot.lane.b32.xlu0 %v2804, 13
  %v3507 = vpop.permute.xlu0 %3506
  %3508 = vrot.lane.b32.xlu0 %v2805, 13
  %v3509 = vpop.permute.xlu0 %3508
  %3510 = vrot.lane.b32.xlu0 %v2806, 13
  %v3511 = vpop.permute.xlu0 %3510
  %3512 = vrot.lane.b32.xlu0 %v2807, 13
  %v3513 = vpop.permute.xlu0 %3512
  %3514 = vrot.lane.b32.xlu0 %v2808, 13
  %v3515 = vpop.permute.xlu0 %3514
  %3516 = vrot.lane.b32.xlu0 %v2809, 13
  %v3517 = vpop.permute.xlu0 %3516
  %3518 = vrot.lane.b32.xlu0 %v2810, 13
  %v3519 = vpop.permute.xlu0 %3518
  %3520 = vrot.lane.b32.xlu0 %v2811, 13
  %v3521 = vpop.permute.xlu0 %3520
  %3522 = vrot.lane.b32.xlu0 %v2812, 13
  %v3523 = vpop.permute.xlu0 %3522
  %3524 = vrot.lane.b32.xlu0 %v2813, 13
  %v3525 = vpop.permute.xlu0 %3524
  %3526 = vrot.lane.b32.xlu0 %v2814, 13
  %v3527 = vpop.permute.xlu0 %3526
  %3528 = vrot.lane.b32.xlu0 %v2815, 13
  %v3529 = vpop.permute.xlu0 %3528
  %3530 = vrot.lane.b32.xlu0 %v2816, 13
  %v3531 = vpop.permute.xlu0 %3530
  %3532 = vrot.lane.b32.xlu0 %v2817, 13
  %v3533 = vpop.permute.xlu0 %3532
  %3534 = vrot.lane.b32.xlu0 %v2818, 13
  %v3535 = vpop.permute.xlu0 %3534
  %3536 = vrot.lane.b32.xlu0 %v2819, 13
  %v3537 = vpop.permute.xlu0 %3536
  %3538 = vrot.lane.b32.xlu0 %v2820, 13
  %v3539 = vpop.permute.xlu0 %3538
  %3540 = vrot.lane.b32.xlu0 %v2821, 13
  %v3541 = vpop.permute.xlu0 %3540
  %3542 = vrot.lane.b32.xlu0 %v2822, 13
  %v3543 = vpop.permute.xlu0 %3542
  %3544 = vrot.lane.b32.xlu0 %v2823, 13
  %v3545 = vpop.permute.xlu0 %3544
  %3546 = vrot.lane.b32.xlu0 %v2824, 13
  %v3547 = vpop.permute.xlu0 %3546
  %3548 = vrot.lane.b32.xlu0 %v2825, 13
  %v3549 = vpop.permute.xlu0 %3548
  %3550 = vrot.lane.b32.xlu0 %v2826, 13
  %v3551 = vpop.permute.xlu0 %3550
  %3552 = vrot.lane.b32.xlu0 %v2827, 13
  %v3553 = vpop.permute.xlu0 %3552
  %3554 = vrot.lane.b32.xlu0 %v2828, 13
  %v3555 = vpop.permute.xlu0 %3554
  %3556 = vrot.lane.b32.xlu0 %v2829, 13
  %v3557 = vpop.permute.xlu0 %3556
  %3558 = vrot.lane.b32.xlu0 %v2830, 13
  %v3559 = vpop.permute.xlu0 %3558
  %3560 = vrot.lane.b32.xlu0 %v2831, 13
  %v3561 = vpop.permute.xlu0 %3560
  %3562 = vrot.lane.b32.xlu0 %v2832, 13
  %v3563 = vpop.permute.xlu0 %3562
  %3564 = vrot.lane.b32.xlu0 %v2833, 13
  %v3565 = vpop.permute.xlu0 %3564
  %3566 = vrot.lane.b32.xlu0 %v2834, 13
  %v3567 = vpop.permute.xlu0 %3566
  %3568 = vrot.lane.b32.xlu0 %v2835, 13
  %v3569 = vpop.permute.xlu0 %3568
  %3570 = vrot.lane.b32.xlu0 %v2836, 13
  %v3571 = vpop.permute.xlu0 %3570
  %3572 = vrot.lane.b32.xlu0 %v2837, 13
  %v3573 = vpop.permute.xlu0 %3572
  %3574 = vrot.lane.b32.xlu0 %v2838, 13
  %v3575 = vpop.permute.xlu0 %3574
  %3576 = vrot.lane.b32.xlu0 %v2839, 13
  %v3577 = vpop.permute.xlu0 %3576
  %3578 = vrot.lane.b32.xlu0 %v2840, 13
  %v3579 = vpop.permute.xlu0 %3578
  %3580 = vrot.lane.b32.xlu0 %v2841, 13
  %v3581 = vpop.permute.xlu0 %3580
  %3582 = vrot.lane.b32.xlu0 %v2842, 13
  %v3583 = vpop.permute.xlu0 %3582
  %3584 = vrot.lane.b32.xlu0 %v2843, 13
  %v3585 = vpop.permute.xlu0 %3584
  %3586 = vrot.lane.b32.xlu0 %v2844, 13
  %v3587 = vpop.permute.xlu0 %3586
  %3588 = vrot.lane.b32.xlu0 %v2845, 13
  %v3589 = vpop.permute.xlu0 %3588
  %3590 = vrot.lane.b32.xlu0 %v2846, 13
  %v3591 = vpop.permute.xlu0 %3590
  %3592 = vrot.lane.b32.xlu0 %v2847, 13
  %v3593 = vpop.permute.xlu0 %3592
  %3594 = vrot.lane.b32.xlu0 %v2848, 13
  %v3595 = vpop.permute.xlu0 %3594
  %3596 = vrot.lane.b32.xlu0 %v2849, 13
  %v3597 = vpop.permute.xlu0 %3596
  %3598 = vrot.lane.b32.xlu0 %v2850, 13
  %v3599 = vpop.permute.xlu0 %3598
  %3600 = vrot.lane.b32.xlu0 %v2851, 13
  %v3601 = vpop.permute.xlu0 %3600
  %3602 = vrot.lane.b32.xlu0 %v2852, 13
  %v3603 = vpop.permute.xlu0 %3602
  %3604 = vrot.lane.b32.xlu0 %v2853, 13
  %v3605 = vpop.permute.xlu0 %3604
  %3606 = vrot.lane.b32.xlu0 %v2854, 13
  %v3607 = vpop.permute.xlu0 %3606
  %3608 = vrot.lane.b32.xlu0 %v2855, 13
  %v3609 = vpop.permute.xlu0 %3608
  %3610 = vrot.lane.b32.xlu0 %v2856, 13
  %v3611 = vpop.permute.xlu0 %3610
  %3612 = vrot.lane.b32.xlu0 %v2857, 13
  %v3613 = vpop.permute.xlu0 %3612
  %3614 = vrot.lane.b32.xlu0 %v2858, 13
  %v3615 = vpop.permute.xlu0 %3614
  %3616 = vrot.lane.b32.xlu0 %v2859, 13
  %v3617 = vpop.permute.xlu0 %3616
  %3618 = vrot.lane.b32.xlu0 %v2860, 13
  %v3619 = vpop.permute.xlu0 %3618
  %3620 = vrot.lane.b32.xlu0 %v2861, 13
  %v3621 = vpop.permute.xlu0 %3620
  %3622 = vrot.lane.b32.xlu0 %v2862, 13
  %v3623 = vpop.permute.xlu0 %3622
  %3624 = vrot.lane.b32.xlu0 %v2863, 13
  %v3625 = vpop.permute.xlu0 %3624
  %3626 = vrot.lane.b32.xlu0 %v2864, 13
  %v3627 = vpop.permute.xlu0 %3626
  %3628 = vrot.lane.b32.xlu0 %v2865, 13
  %v3629 = vpop.permute.xlu0 %3628
  %3630 = vrot.lane.b32.xlu0 %v2866, 13
  %v3631 = vpop.permute.xlu0 %3630
  %3632 = vrot.lane.b32.xlu0 %v2867, 13
  %v3633 = vpop.permute.xlu0 %3632
  %3634 = vrot.lane.b32.xlu0 %v2868, 13
  %v3635 = vpop.permute.xlu0 %3634
  %3636 = vrot.lane.b32.xlu0 %v2869, 13
  %v3637 = vpop.permute.xlu0 %3636
  %v3894 = vsel %vm1056, %v794, %v3127
  %v3895 = vsel %vm1056, %v795, %v3129
  %v3896 = vsel %vm1056, %v796, %v3131
  %v3897 = vsel %vm1056, %v797, %v3133
  %v3898 = vsel %vm1056, %v798, %v3135
  %v3899 = vsel %vm1056, %v799, %v3137
  %v3900 = vsel %vm1056, %v800, %v3139
  %v3901 = vsel %vm1056, %v801, %v3141
  %v3902 = vsel %vm1056, %v802, %v3143
  %v3903 = vsel %vm1056, %v803, %v3145
  %v3904 = vsel %vm1056, %v804, %v3147
  %v3905 = vsel %vm1056, %v805, %v3149
  %v3906 = vsel %vm1056, %v806, %v3151
  %v3907 = vsel %vm1056, %v807, %v3153
  %v3908 = vsel %vm1056, %v808, %v3155
  %v3909 = vsel %vm1056, %v809, %v3157
  %v3910 = vsel %vm1056, %v810, %v3159
  %v3911 = vsel %vm1056, %v811, %v3161
  %v3912 = vsel %vm1056, %v812, %v3163
  %v3913 = vsel %vm1056, %v813, %v3165
  %v3914 = vsel %vm1056, %v814, %v3167
  %v3915 = vsel %vm1056, %v815, %v3169
  %v3916 = vsel %vm1056, %v816, %v3171
  %v3917 = vsel %vm1056, %v817, %v3173
  %v3918 = vsel %vm1056, %v818, %v3175
  %v3919 = vsel %vm1056, %v819, %v3177
  %v3920 = vsel %vm1056, %v820, %v3179
  %v3921 = vsel %vm1056, %v821, %v3181
  %v3922 = vsel %vm1056, %v822, %v3183
  %v3923 = vsel %vm1056, %v823, %v3185
  %v3924 = vsel %vm1056, %v824, %v3187
  %v3925 = vsel %vm1056, %v825, %v3189
  %v3926 = vsel %vm1056, %v826, %v3191
  %v3927 = vsel %vm1056, %v827, %v3193
  %v3928 = vsel %vm1056, %v828, %v3195
  %v3929 = vsel %vm1056, %v829, %v3197
  %v3930 = vsel %vm1056, %v830, %v3199
  %v3931 = vsel %vm1056, %v831, %v3201
  %v3932 = vsel %vm1056, %v832, %v3203
  %v3933 = vsel %vm1056, %v833, %v3205
  %v3934 = vsel %vm1056, %v834, %v3207
  %v3935 = vsel %vm1056, %v835, %v3209
  %v3936 = vsel %vm1056, %v836, %v3211
  %v3937 = vsel %vm1056, %v837, %v3213
  %v3938 = vsel %vm1056, %v838, %v3215
  %v3939 = vsel %vm1056, %v839, %v3217
  %v3940 = vsel %vm1056, %v840, %v3219
  %v3941 = vsel %vm1056, %v841, %v3221
  %v3942 = vsel %vm1056, %v842, %v3223
  %v3943 = vsel %vm1056, %v843, %v3225
  %v3944 = vsel %vm1056, %v844, %v3227
  %v3945 = vsel %vm1056, %v845, %v3229
  %v3946 = vsel %vm1056, %v846, %v3231
  %v3947 = vsel %vm1056, %v847, %v3233
  %v3948 = vsel %vm1056, %v848, %v3235
  %v3949 = vsel %vm1056, %v849, %v3237
  %v3950 = vsel %vm1056, %v850, %v3239
  %v3951 = vsel %vm1056, %v851, %v3241
  %v3952 = vsel %vm1056, %v852, %v3243
  %v3953 = vsel %vm1056, %v853, %v3245
  %v3954 = vsel %vm1056, %v854, %v3247
  %v3955 = vsel %vm1056, %v855, %v3249
  %v3956 = vsel %vm1056, %v856, %v3251
  %v3957 = vsel %vm1056, %v857, %v3253
  %v3958 = vsel %vm1056, %v858, %v3255
  %v3959 = vsel %vm1056, %v859, %v3257
  %v3960 = vsel %vm1056, %v860, %v3259
  %v3961 = vsel %vm1056, %v861, %v3261
  %v3962 = vsel %vm1056, %v862, %v3263
  %v3963 = vsel %vm1056, %v863, %v3265
  %v3964 = vsel %vm1056, %v864, %v3267
  %v3965 = vsel %vm1056, %v865, %v3269
  %v3966 = vsel %vm1056, %v866, %v3271
  %v3967 = vsel %vm1056, %v867, %v3273
  %v3968 = vsel %vm1056, %v868, %v3275
  %v3969 = vsel %vm1056, %v869, %v3277
  %v3970 = vsel %vm1056, %v870, %v3279
  %v3971 = vsel %vm1056, %v871, %v3281
  %v3972 = vsel %vm1056, %v872, %v3283
  %v3973 = vsel %vm1056, %v873, %v3285
  %v3974 = vsel %vm1056, %v874, %v3287
  %v3975 = vsel %vm1056, %v875, %v3289
  %v3976 = vsel %vm1056, %v876, %v3291
  %v3977 = vsel %vm1056, %v877, %v3293
  %v3978 = vsel %vm1056, %v878, %v3295
  %v3979 = vsel %vm1056, %v879, %v3297
  %v3980 = vsel %vm1056, %v880, %v3299
  %v3981 = vsel %vm1056, %v881, %v3301
  %v3982 = vsel %vm1056, %v882, %v3303
  %v3983 = vsel %vm1056, %v883, %v3305
  %v3984 = vsel %vm1056, %v884, %v3307
  %v3985 = vsel %vm1056, %v885, %v3309
  %v3986 = vsel %vm1056, %v886, %v3311
  %v3987 = vsel %vm1056, %v887, %v3313
  %v3988 = vsel %vm1056, %v888, %v3315
  %v3989 = vsel %vm1056, %v889, %v3317
  %v3990 = vsel %vm1056, %v890, %v3319
  %v3991 = vsel %vm1056, %v891, %v3321
  %v3992 = vsel %vm1056, %v892, %v3323
  %v3993 = vsel %vm1056, %v893, %v3325
  %v3994 = vsel %vm1056, %v894, %v3327
  %v3995 = vsel %vm1056, %v895, %v3329
  %v3996 = vsel %vm1056, %v896, %v3331
  %v3997 = vsel %vm1056, %v897, %v3333
  %v3998 = vsel %vm1056, %v898, %v3335
  %v3999 = vsel %vm1056, %v899, %v3337
  %v4000 = vsel %vm1056, %v900, %v3339
  %v4001 = vsel %vm1056, %v901, %v3341
  %v4002 = vsel %vm1056, %v902, %v3343
  %v4003 = vsel %vm1056, %v903, %v3345
  %v4004 = vsel %vm1056, %v904, %v3347
  %v4005 = vsel %vm1056, %v905, %v3349
  %v4006 = vsel %vm1056, %v906, %v3351
  %v4007 = vsel %vm1056, %v907, %v3353
  %v4008 = vsel %vm1056, %v908, %v3355
  %v4009 = vsel %vm1056, %v909, %v3357
  %v4010 = vsel %vm1056, %v910, %v3359
  %v4011 = vsel %vm1056, %v911, %v3361
  %v4012 = vsel %vm1056, %v912, %v3363
  %v4013 = vsel %vm1056, %v913, %v3365
  %v4014 = vsel %vm1056, %v914, %v3367
  %v4015 = vsel %vm1056, %v915, %v3369
  %v4016 = vsel %vm1056, %v916, %v3371
  %v4017 = vsel %vm1056, %v917, %v3373
  %v4018 = vsel %vm1056, %v918, %v3375
  %v4019 = vsel %vm1056, %v919, %v3377
  %v4020 = vsel %vm1056, %v920, %v3379
  %v4021 = vsel %vm1056, %v921, %v3381
  %v4022 = vsel %vm1056, %v922, %v3383
  %v4023 = vsel %vm1056, %v923, %v3385
  %v4024 = vsel %vm1056, %v924, %v3387
  %v4025 = vsel %vm1056, %v925, %v3389
  %v4026 = vsel %vm1056, %v926, %v3391
  %v4027 = vsel %vm1056, %v927, %v3393
  %v4028 = vsel %vm1056, %v928, %v3395
  %v4029 = vsel %vm1056, %v929, %v3397
  %v4030 = vsel %vm1056, %v930, %v3399
  %v4031 = vsel %vm1056, %v931, %v3401
  %v4032 = vsel %vm1056, %v932, %v3403
  %v4033 = vsel %vm1056, %v933, %v3405
  %v4034 = vsel %vm1056, %v934, %v3407
  %v4035 = vsel %vm1056, %v935, %v3409
  %v4036 = vsel %vm1056, %v936, %v3411
  %v4037 = vsel %vm1056, %v937, %v3413
  %v4038 = vsel %vm1056, %v938, %v3415
  %v4039 = vsel %vm1056, %v939, %v3417
  %v4040 = vsel %vm1056, %v940, %v3419
  %v4041 = vsel %vm1056, %v941, %v3421
  %v4042 = vsel %vm1056, %v942, %v3423
  %v4043 = vsel %vm1056, %v943, %v3425
  %v4044 = vsel %vm1056, %v944, %v3427
  %v4045 = vsel %vm1056, %v945, %v3429
  %v4046 = vsel %vm1056, %v946, %v3431
  %v4047 = vsel %vm1056, %v947, %v3433
  %v4048 = vsel %vm1056, %v948, %v3435
  %v4049 = vsel %vm1056, %v949, %v3437
  %v4050 = vsel %vm1056, %v950, %v3439
  %v4051 = vsel %vm1056, %v951, %v3441
  %v4052 = vsel %vm1056, %v952, %v3443
  %v4053 = vsel %vm1056, %v953, %v3445
  %v4054 = vsel %vm1056, %v954, %v3447
  %v4055 = vsel %vm1056, %v955, %v3449
  %v4056 = vsel %vm1056, %v956, %v3451
  %v4057 = vsel %vm1056, %v957, %v3453
  %v4058 = vsel %vm1056, %v958, %v3455
  %v4059 = vsel %vm1056, %v959, %v3457
  %v4060 = vsel %vm1056, %v960, %v3459
  %v4061 = vsel %vm1056, %v961, %v3461
  %v4062 = vsel %vm1056, %v962, %v3463
  %v4063 = vsel %vm1056, %v963, %v3465
  %v4064 = vsel %vm1056, %v964, %v3467
  %v4065 = vsel %vm1056, %v965, %v3469
  %v4066 = vsel %vm1056, %v966, %v3471
  %v4067 = vsel %vm1056, %v967, %v3473
  %v4068 = vsel %vm1056, %v968, %v3475
  %v4069 = vsel %vm1056, %v969, %v3477
  %v4070 = vsel %vm1056, %v970, %v3479
  %v4071 = vsel %vm1056, %v971, %v3481
  %v4072 = vsel %vm1056, %v972, %v3483
  %v4073 = vsel %vm1056, %v973, %v3485
  %v4074 = vsel %vm1056, %v974, %v3487
  %v4075 = vsel %vm1056, %v975, %v3489
  %v4076 = vsel %vm1056, %v976, %v3491
  %v4077 = vsel %vm1056, %v977, %v3493
  %v4078 = vsel %vm1056, %v978, %v3495
  %v4079 = vsel %vm1056, %v979, %v3497
  %v4080 = vsel %vm1056, %v980, %v3499
  %v4081 = vsel %vm1056, %v981, %v3501
  %v4082 = vsel %vm1056, %v982, %v3503
  %v4083 = vsel %vm1056, %v983, %v3505
  %v4084 = vsel %vm1056, %v984, %v3507
  %v4085 = vsel %vm1056, %v985, %v3509
  %v4086 = vsel %vm1056, %v986, %v3511
  %v4087 = vsel %vm1056, %v987, %v3513
  %v4088 = vsel %vm1056, %v988, %v3515
  %v4089 = vsel %vm1056, %v989, %v3517
  %v4090 = vsel %vm1056, %v990, %v3519
  %v4091 = vsel %vm1056, %v991, %v3521
  %v4092 = vsel %vm1056, %v992, %v3523
  %v4093 = vsel %vm1056, %v993, %v3525
  %v4094 = vsel %vm1056, %v994, %v3527
  %v4095 = vsel %vm1056, %v995, %v3529
  %v4096 = vsel %vm1056, %v996, %v3531
  %v4097 = vsel %vm1056, %v997, %v3533
  %v4098 = vsel %vm1056, %v998, %v3535
  %v4099 = vsel %vm1056, %v999, %v3537
  %v4100 = vsel %vm1056, %v1000, %v3539
  %v4101 = vsel %vm1056, %v1001, %v3541
  %v4102 = vsel %vm1056, %v1002, %v3543
  %v4103 = vsel %vm1056, %v1003, %v3545
  %v4104 = vsel %vm1056, %v1004, %v3547
  %v4105 = vsel %vm1056, %v1005, %v3549
  %v4106 = vsel %vm1056, %v1006, %v3551
  %v4107 = vsel %vm1056, %v1007, %v3553
  %v4108 = vsel %vm1056, %v1008, %v3555
  %v4109 = vsel %vm1056, %v1009, %v3557
  %v4110 = vsel %vm1056, %v1010, %v3559
  %v4111 = vsel %vm1056, %v1011, %v3561
  %v4112 = vsel %vm1056, %v1012, %v3563
  %v4113 = vsel %vm1056, %v1013, %v3565
  %v4114 = vsel %vm1056, %v1014, %v3567
  %v4115 = vsel %vm1056, %v1015, %v3569
  %v4116 = vsel %vm1056, %v1016, %v3571
  %v4117 = vsel %vm1056, %v1017, %v3573
  %v4118 = vsel %vm1056, %v1018, %v3575
  %v4119 = vsel %vm1056, %v1019, %v3577
  %v4120 = vsel %vm1056, %v1020, %v3579
  %v4121 = vsel %vm1056, %v1021, %v3581
  %v4122 = vsel %vm1056, %v1022, %v3583
  %v4123 = vsel %vm1056, %v1023, %v3585
  %v4124 = vsel %vm1056, %v1024, %v3587
  %v4125 = vsel %vm1056, %v1025, %v3589
  %v4126 = vsel %vm1056, %v1026, %v3591
  %v4127 = vsel %vm1056, %v1027, %v3593
  %v4128 = vsel %vm1056, %v1028, %v3595
  %v4129 = vsel %vm1056, %v1029, %v3597
  %v4130 = vsel %vm1056, %v1030, %v3599
  %v4131 = vsel %vm1056, %v1031, %v3601
  %v4132 = vsel %vm1056, %v1032, %v3603
  %v4133 = vsel %vm1056, %v1033, %v3605
  %v4134 = vsel %vm1056, %v1034, %v3607
  %v4135 = vsel %vm1056, %v1035, %v3609
  %v4136 = vsel %vm1056, %v1036, %v3611
  %v4137 = vsel %vm1056, %v1037, %v3613
  %v4138 = vsel %vm1056, %v1038, %v3615
  %v4139 = vsel %vm1056, %v1039, %v3617
  %v4140 = vsel %vm1056, %v1040, %v3619
  %v4141 = vsel %vm1056, %v1041, %v3621
  %v4142 = vsel %vm1056, %v1042, %v3623
  %v4143 = vsel %vm1056, %v1043, %v3625
  %v4144 = vsel %vm1056, %v1044, %v3627
  %v4145 = vsel %vm1056, %v1045, %v3629
  %v4146 = vsel %vm1056, %v1046, %v3631
  %v4147 = vsel %vm1056, %v1047, %v3633
  %v4148 = vsel %vm1056, %v1048, %v3635
  %v4149 = vsel %vm1056, %v1049, %v3637
  %v4150 = vld [vmem:[%s3] sm:$0xff]
  %v4151 = vld [vmem:[%s3 + $0x8] sm:$0xff]
  %v4152 = vld [vmem:[%s3 + $0x10] sm:$0xff]
  %v4153 = vld [vmem:[%s3 + $0x18] sm:$0xff]
  %v4154 = vld [vmem:[%s3 + $0x20] sm:$0xff]
  %v4155 = vld [vmem:[%s3 + $0x28] sm:$0xff]
  %v4156 = vld [vmem:[%s3 + $0x30] sm:$0xff]
  %v4157 = vld [vmem:[%s3 + $0x38] sm:$0xff]
  %v4158 = vld [vmem:[%s3 + $0x40] sm:$0xff]
  %v4159 = vld [vmem:[%s3 + $0x48] sm:$0xff]
  %v4160 = vld [vmem:[%s3 + $0x50] sm:$0xff]
  %v4161 = vld [vmem:[%s3 + $0x58] sm:$0xff]
  %v4162 = vld [vmem:[%s3 + $0x60] sm:$0xff]
  %v4163 = vld [vmem:[%s3 + $0x68] sm:$0xff]
  %v4164 = vld [vmem:[%s3 + $0x70] sm:$0xff]
  %v4165 = vld [vmem:[%s3 + $0x78] sm:$0xff]
  %v4166 = vld [vmem:[%s3 + $0x80] sm:$0xff]
  %v4167 = vld [vmem:[%s3 + $0x88] sm:$0xff]
  %v4168 = vld [vmem:[%s3 + $0x90] sm:$0xff]
  %v4169 = vld [vmem:[%s3 + $0x98] sm:$0xff]
  %v4170 = vld [vmem:[%s3 + $0xa0] sm:$0xff]
  %v4171 = vld [vmem:[%s3 + $0xa8] sm:$0xff]
  %v4172 = vld [vmem:[%s3 + $0xb0] sm:$0xff]
  %v4173 = vld [vmem:[%s3 + $0xb8] sm:$0xff]
  %v4174 = vld [vmem:[%s3 + $0xc0] sm:$0xff]
  %v4175 = vld [vmem:[%s3 + $0xc8] sm:$0xff]
  %v4176 = vld [vmem:[%s3 + $0xd0] sm:$0xff]
  %v4177 = vld [vmem:[%s3 + $0xd8] sm:$0xff]
  %v4178 = vld [vmem:[%s3 + $0xe0] sm:$0xff]
  %v4179 = vld [vmem:[%s3 + $0xe8] sm:$0xff]
  %v4180 = vld [vmem:[%s3 + $0xf0] sm:$0xf]
  %v4181 = vld [vmem:[%s4] sm:$0xff]
  %v4182 = vld [vmem:[%s4 + $0x8] sm:$0xff]
  %v4183 = vld [vmem:[%s4 + $0x10] sm:$0xff]
  %v4184 = vld [vmem:[%s4 + $0x18] sm:$0xff]
  %vm4185 = vcmask 236544
  %v4186 = vsel %vm4185, %v3894, 0.0
  %v4187 = vsel %vm4185, %v3895, 0.0
  %v4188 = vadd.f32 %v4186, %v4187
  %v4189 = vsel %vm4185, %v3896, 0.0
  %v4190 = vadd.f32 %v4188, %v4189
  %v4191 = vsel %vm4185, %v3897, 0.0
  %v4192 = vadd.f32 %v4190, %v4191
  %v4193 = vsel %vm4185, %v3898, 0.0
  %v4194 = vadd.f32 %v4192, %v4193
  %v4195 = vsel %vm4185, %v3899, 0.0
  %v4196 = vadd.f32 %v4194, %v4195
  %v4197 = vsel %vm4185, %v3900, 0.0
  %v4198 = vadd.f32 %v4196, %v4197
  %v4199 = vsel %vm4185, %v3901, 0.0
  %v4200 = vadd.f32 %v4198, %v4199
  %v4201 = vsel %vm4185, %v3902, 0.0
  %v4202 = vsel %vm4185, %v3903, 0.0
  %v4203 = vadd.f32 %v4201, %v4202
  %v4204 = vsel %vm4185, %v3904, 0.0
  %v4205 = vadd.f32 %v4203, %v4204
  %v4206 = vsel %vm4185, %v3905, 0.0
  %v4207 = vadd.f32 %v4205, %v4206
  %v4208 = vsel %vm4185, %v3906, 0.0
  %v4209 = vadd.f32 %v4207, %v4208
  %v4210 = vsel %vm4185, %v3907, 0.0
  %v4211 = vadd.f32 %v4209, %v4210
  %v4212 = vsel %vm4185, %v3908, 0.0
  %v4213 = vadd.f32 %v4211, %v4212
  %v4214 = vsel %vm4185, %v3909, 0.0
  %v4215 = vadd.f32 %v4213, %v4214
  %v4216 = vsel %vm4185, %v3910, 0.0
  %v4217 = vsel %vm4185, %v3911, 0.0
  %v4218 = vadd.f32 %v4216, %v4217
  %v4219 = vsel %vm4185, %v3912, 0.0
  %v4220 = vadd.f32 %v4218, %v4219
  %v4221 = vsel %vm4185, %v3913, 0.0
  %v4222 = vadd.f32 %v4220, %v4221
  %v4223 = vsel %vm4185, %v3914, 0.0
  %v4224 = vadd.f32 %v4222, %v4223
  %v4225 = vsel %vm4185, %v3915, 0.0
  %v4226 = vadd.f32 %v4224, %v4225
  %v4227 = vsel %vm4185, %v3916, 0.0
  %v4228 = vadd.f32 %v4226, %v4227
  %v4229 = vsel %vm4185, %v3917, 0.0
  %v4230 = vadd.f32 %v4228, %v4229
  %v4231 = vsel %vm4185, %v3918, 0.0
  %v4232 = vsel %vm4185, %v3919, 0.0
  %v4233 = vadd.f32 %v4231, %v4232
  %v4234 = vsel %vm4185, %v3920, 0.0
  %v4235 = vadd.f32 %v4233, %v4234
  %v4236 = vsel %vm4185, %v3921, 0.0
  %v4237 = vadd.f32 %v4235, %v4236
  %v4238 = vsel %vm4185, %v3922, 0.0
  %v4239 = vadd.f32 %v4237, %v4238
  %v4240 = vsel %vm4185, %v3923, 0.0
  %v4241 = vadd.f32 %v4239, %v4240
  %v4242 = vsel %vm4185, %v3924, 0.0
  %v4243 = vadd.f32 %v4241, %v4242
  %v4244 = vsel %vm4185, %v3925, 0.0
  %v4245 = vadd.f32 %v4243, %v4244
  %v4246 = vsel %vm4185, %v3926, 0.0
  %v4247 = vsel %vm4185, %v3927, 0.0
  %v4248 = vadd.f32 %v4246, %v4247
  %v4249 = vsel %vm4185, %v3928, 0.0
  %v4250 = vadd.f32 %v4248, %v4249
  %v4251 = vsel %vm4185, %v3929, 0.0
  %v4252 = vadd.f32 %v4250, %v4251
  %v4253 = vsel %vm4185, %v3930, 0.0
  %v4254 = vadd.f32 %v4252, %v4253
  %v4255 = vsel %vm4185, %v3931, 0.0
  %v4256 = vadd.f32 %v4254, %v4255
  %v4257 = vsel %vm4185, %v3932, 0.0
  %v4258 = vadd.f32 %v4256, %v4257
  %v4259 = vsel %vm4185, %v3933, 0.0
  %v4260 = vadd.f32 %v4258, %v4259
  %v4261 = vsel %vm4185, %v3934, 0.0
  %v4262 = vsel %vm4185, %v3935, 0.0
  %v4263 = vadd.f32 %v4261, %v4262
  %v4264 = vsel %vm4185, %v3936, 0.0
  %v4265 = vadd.f32 %v4263, %v4264
  %v4266 = vsel %vm4185, %v3937, 0.0
  %v4267 = vadd.f32 %v4265, %v4266
  %v4268 = vsel %vm4185, %v3938, 0.0
  %v4269 = vadd.f32 %v4267, %v4268
  %v4270 = vsel %vm4185, %v3939, 0.0
  %v4271 = vadd.f32 %v4269, %v4270
  %v4272 = vsel %vm4185, %v3940, 0.0
  %v4273 = vadd.f32 %v4271, %v4272
  %v4274 = vsel %vm4185, %v3941, 0.0
  %v4275 = vadd.f32 %v4273, %v4274
  %v4276 = vsel %vm4185, %v3942, 0.0
  %v4277 = vsel %vm4185, %v3943, 0.0
  %v4278 = vadd.f32 %v4276, %v4277
  %v4279 = vsel %vm4185, %v3944, 0.0
  %v4280 = vadd.f32 %v4278, %v4279
  %v4281 = vsel %vm4185, %v3945, 0.0
  %v4282 = vadd.f32 %v4280, %v4281
  %v4283 = vsel %vm4185, %v3946, 0.0
  %v4284 = vadd.f32 %v4282, %v4283
  %v4285 = vsel %vm4185, %v3947, 0.0
  %v4286 = vadd.f32 %v4284, %v4285
  %v4287 = vsel %vm4185, %v3948, 0.0
  %v4288 = vadd.f32 %v4286, %v4287
  %v4289 = vsel %vm4185, %v3949, 0.0
  %v4290 = vadd.f32 %v4288, %v4289
  %v4291 = vsel %vm4185, %v3950, 0.0
  %v4292 = vsel %vm4185, %v3951, 0.0
  %v4293 = vadd.f32 %v4291, %v4292
  %v4294 = vsel %vm4185, %v3952, 0.0
  %v4295 = vadd.f32 %v4293, %v4294
  %v4296 = vsel %vm4185, %v3953, 0.0
  %v4297 = vadd.f32 %v4295, %v4296
  %v4298 = vsel %vm4185, %v3954, 0.0
  %v4299 = vadd.f32 %v4297, %v4298
  %v4300 = vsel %vm4185, %v3955, 0.0
  %v4301 = vadd.f32 %v4299, %v4300
  %v4302 = vsel %vm4185, %v3956, 0.0
  %v4303 = vadd.f32 %v4301, %v4302
  %v4304 = vsel %vm4185, %v3957, 0.0
  %v4305 = vadd.f32 %v4303, %v4304
  %v4306 = vsel %vm4185, %v3958, 0.0
  %v4307 = vsel %vm4185, %v3959, 0.0
  %v4308 = vadd.f32 %v4306, %v4307
  %v4309 = vsel %vm4185, %v3960, 0.0
  %v4310 = vadd.f32 %v4308, %v4309
  %v4311 = vsel %vm4185, %v3961, 0.0
  %v4312 = vadd.f32 %v4310, %v4311
  %v4313 = vsel %vm4185, %v3962, 0.0
  %v4314 = vadd.f32 %v4312, %v4313
  %v4315 = vsel %vm4185, %v3963, 0.0
  %v4316 = vadd.f32 %v4314, %v4315
  %v4317 = vsel %vm4185, %v3964, 0.0
  %v4318 = vadd.f32 %v4316, %v4317
  %v4319 = vsel %vm4185, %v3965, 0.0
  %v4320 = vadd.f32 %v4318, %v4319
  %v4321 = vsel %vm4185, %v3966, 0.0
  %v4322 = vsel %vm4185, %v3967, 0.0
  %v4323 = vadd.f32 %v4321, %v4322
  %v4324 = vsel %vm4185, %v3968, 0.0
  %v4325 = vadd.f32 %v4323, %v4324
  %v4326 = vsel %vm4185, %v3969, 0.0
  %v4327 = vadd.f32 %v4325, %v4326
  %v4328 = vsel %vm4185, %v3970, 0.0
  %v4329 = vadd.f32 %v4327, %v4328
  %v4330 = vsel %vm4185, %v3971, 0.0
  %v4331 = vadd.f32 %v4329, %v4330
  %v4332 = vsel %vm4185, %v3972, 0.0
  %v4333 = vadd.f32 %v4331, %v4332
  %v4334 = vsel %vm4185, %v3973, 0.0
  %v4335 = vadd.f32 %v4333, %v4334
  %v4336 = vsel %vm4185, %v3974, 0.0
  %v4337 = vsel %vm4185, %v3975, 0.0
  %v4338 = vadd.f32 %v4336, %v4337
  %v4339 = vsel %vm4185, %v3976, 0.0
  %v4340 = vadd.f32 %v4338, %v4339
  %v4341 = vsel %vm4185, %v3977, 0.0
  %v4342 = vadd.f32 %v4340, %v4341
  %v4343 = vsel %vm4185, %v3978, 0.0
  %v4344 = vadd.f32 %v4342, %v4343
  %v4345 = vsel %vm4185, %v3979, 0.0
  %v4346 = vadd.f32 %v4344, %v4345
  %v4347 = vsel %vm4185, %v3980, 0.0
  %v4348 = vadd.f32 %v4346, %v4347
  %v4349 = vsel %vm4185, %v3981, 0.0
  %v4350 = vadd.f32 %v4348, %v4349
  %v4351 = vsel %vm4185, %v3982, 0.0
  %v4352 = vsel %vm4185, %v3983, 0.0
  %v4353 = vadd.f32 %v4351, %v4352
  %v4354 = vsel %vm4185, %v3984, 0.0
  %v4355 = vadd.f32 %v4353, %v4354
  %v4356 = vsel %vm4185, %v3985, 0.0
  %v4357 = vadd.f32 %v4355, %v4356
  %v4358 = vsel %vm4185, %v3986, 0.0
  %v4359 = vadd.f32 %v4357, %v4358
  %v4360 = vsel %vm4185, %v3987, 0.0
  %v4361 = vadd.f32 %v4359, %v4360
  %v4362 = vsel %vm4185, %v3988, 0.0
  %v4363 = vadd.f32 %v4361, %v4362
  %v4364 = vsel %vm4185, %v3989, 0.0
  %v4365 = vadd.f32 %v4363, %v4364
  %v4366 = vsel %vm4185, %v3990, 0.0
  %v4367 = vsel %vm4185, %v3991, 0.0
  %v4368 = vadd.f32 %v4366, %v4367
  %v4369 = vsel %vm4185, %v3992, 0.0
  %v4370 = vadd.f32 %v4368, %v4369
  %v4371 = vsel %vm4185, %v3993, 0.0
  %v4372 = vadd.f32 %v4370, %v4371
  %v4373 = vsel %vm4185, %v3994, 0.0
  %v4374 = vadd.f32 %v4372, %v4373
  %v4375 = vsel %vm4185, %v3995, 0.0
  %v4376 = vadd.f32 %v4374, %v4375
  %v4377 = vsel %vm4185, %v3996, 0.0
  %v4378 = vadd.f32 %v4376, %v4377
  %v4379 = vsel %vm4185, %v3997, 0.0
  %v4380 = vadd.f32 %v4378, %v4379
  %v4381 = vsel %vm4185, %v3998, 0.0
  %v4382 = vsel %vm4185, %v3999, 0.0
  %v4383 = vadd.f32 %v4381, %v4382
  %v4384 = vsel %vm4185, %v4000, 0.0
  %v4385 = vadd.f32 %v4383, %v4384
  %v4386 = vsel %vm4185, %v4001, 0.0
  %v4387 = vadd.f32 %v4385, %v4386
  %v4388 = vsel %vm4185, %v4002, 0.0
  %v4389 = vadd.f32 %v4387, %v4388
  %v4390 = vsel %vm4185, %v4003, 0.0
  %v4391 = vadd.f32 %v4389, %v4390
  %v4392 = vsel %vm4185, %v4004, 0.0
  %v4393 = vadd.f32 %v4391, %v4392
  %v4394 = vsel %vm4185, %v4005, 0.0
  %v4395 = vadd.f32 %v4393, %v4394
  %v4396 = vsel %vm4185, %v4006, 0.0
  %v4397 = vsel %vm4185, %v4007, 0.0
  %v4398 = vadd.f32 %v4396, %v4397
  %v4399 = vsel %vm4185, %v4008, 0.0
  %v4400 = vadd.f32 %v4398, %v4399
  %v4401 = vsel %vm4185, %v4009, 0.0
  %v4402 = vadd.f32 %v4400, %v4401
  %v4403 = vsel %vm4185, %v4010, 0.0
  %v4404 = vadd.f32 %v4402, %v4403
  %v4405 = vsel %vm4185, %v4011, 0.0
  %v4406 = vadd.f32 %v4404, %v4405
  %v4407 = vsel %vm4185, %v4012, 0.0
  %v4408 = vadd.f32 %v4406, %v4407
  %v4409 = vsel %vm4185, %v4013, 0.0
  %v4410 = vadd.f32 %v4408, %v4409
  %v4411 = vsel %vm4185, %v4014, 0.0
  %v4412 = vsel %vm4185, %v4015, 0.0
  %v4413 = vadd.f32 %v4411, %v4412
  %v4414 = vsel %vm4185, %v4016, 0.0
  %v4415 = vadd.f32 %v4413, %v4414
  %v4416 = vsel %vm4185, %v4017, 0.0
  %v4417 = vadd.f32 %v4415, %v4416
  %v4418 = vsel %vm4185, %v4018, 0.0
  %v4419 = vadd.f32 %v4417, %v4418
  %v4420 = vsel %vm4185, %v4019, 0.0
  %v4421 = vadd.f32 %v4419, %v4420
  %v4422 = vsel %vm4185, %v4020, 0.0
  %v4423 = vadd.f32 %v4421, %v4422
  %v4424 = vsel %vm4185, %v4021, 0.0
  %v4425 = vadd.f32 %v4423, %v4424
  %v4426 = vsel %vm4185, %v4022, 0.0
  %v4427 = vsel %vm4185, %v4023, 0.0
  %v4428 = vadd.f32 %v4426, %v4427
  %v4429 = vsel %vm4185, %v4024, 0.0
  %v4430 = vadd.f32 %v4428, %v4429
  %v4431 = vsel %vm4185, %v4025, 0.0
  %v4432 = vadd.f32 %v4430, %v4431
  %v4433 = vsel %vm4185, %v4026, 0.0
  %v4434 = vadd.f32 %v4432, %v4433
  %v4435 = vsel %vm4185, %v4027, 0.0
  %v4436 = vadd.f32 %v4434, %v4435
  %v4437 = vsel %vm4185, %v4028, 0.0
  %v4438 = vadd.f32 %v4436, %v4437
  %v4439 = vsel %vm4185, %v4029, 0.0
  %v4440 = vadd.f32 %v4438, %v4439
  %v4441 = vsel %vm4185, %v4030, 0.0
  %v4442 = vsel %vm4185, %v4031, 0.0
  %v4443 = vadd.f32 %v4441, %v4442
  %v4444 = vsel %vm4185, %v4032, 0.0
  %v4445 = vadd.f32 %v4443, %v4444
  %v4446 = vsel %vm4185, %v4033, 0.0
  %v4447 = vadd.f32 %v4445, %v4446
  %v4448 = vsel %vm4185, %v4034, 0.0
  %v4449 = vadd.f32 %v4447, %v4448
  %v4450 = vsel %vm4185, %v4035, 0.0
  %v4451 = vadd.f32 %v4449, %v4450
  %v4452 = vsel %vm4185, %v4036, 0.0
  %v4453 = vadd.f32 %v4451, %v4452
  %v4454 = vsel %vm4185, %v4037, 0.0
  %v4455 = vadd.f32 %v4453, %v4454
  %v4456 = vsel %vm4185, %v4038, 0.0
  %v4457 = vsel %vm4185, %v4039, 0.0
  %v4458 = vadd.f32 %v4456, %v4457
  %v4459 = vsel %vm4185, %v4040, 0.0
  %v4460 = vadd.f32 %v4458, %v4459
  %v4461 = vsel %vm4185, %v4041, 0.0
  %v4462 = vadd.f32 %v4460, %v4461
  %v4463 = vsel %vm4185, %v4042, 0.0
  %v4464 = vadd.f32 %v4462, %v4463
  %v4465 = vsel %vm4185, %v4043, 0.0
  %v4466 = vadd.f32 %v4464, %v4465
  %v4467 = vsel %vm4185, %v4044, 0.0
  %v4468 = vadd.f32 %v4466, %v4467
  %v4469 = vsel %vm4185, %v4045, 0.0
  %v4470 = vadd.f32 %v4468, %v4469
  %v4471 = vsel %vm4185, %v4046, 0.0
  %v4472 = vsel %vm4185, %v4047, 0.0
  %v4473 = vadd.f32 %v4471, %v4472
  %v4474 = vsel %vm4185, %v4048, 0.0
  %v4475 = vadd.f32 %v4473, %v4474
  %v4476 = vsel %vm4185, %v4049, 0.0
  %v4477 = vadd.f32 %v4475, %v4476
  %v4478 = vsel %vm4185, %v4050, 0.0
  %v4479 = vadd.f32 %v4477, %v4478
  %v4480 = vsel %vm4185, %v4051, 0.0
  %v4481 = vadd.f32 %v4479, %v4480
  %v4482 = vsel %vm4185, %v4052, 0.0
  %v4483 = vadd.f32 %v4481, %v4482
  %v4484 = vsel %vm4185, %v4053, 0.0
  %v4485 = vadd.f32 %v4483, %v4484
  %v4486 = vsel %vm4185, %v4054, 0.0
  %v4487 = vsel %vm4185, %v4055, 0.0
  %v4488 = vadd.f32 %v4486, %v4487
  %v4489 = vsel %vm4185, %v4056, 0.0
  %v4490 = vadd.f32 %v4488, %v4489
  %v4491 = vsel %vm4185, %v4057, 0.0
  %v4492 = vadd.f32 %v4490, %v4491
  %v4493 = vsel %vm4185, %v4058, 0.0
  %v4494 = vadd.f32 %v4492, %v4493
  %v4495 = vsel %vm4185, %v4059, 0.0
  %v4496 = vadd.f32 %v4494, %v4495
  %v4497 = vsel %vm4185, %v4060, 0.0
  %v4498 = vadd.f32 %v4496, %v4497
  %v4499 = vsel %vm4185, %v4061, 0.0
  %v4500 = vadd.f32 %v4498, %v4499
  %v4501 = vsel %vm4185, %v4062, 0.0
  %v4502 = vsel %vm4185, %v4063, 0.0
  %v4503 = vadd.f32 %v4501, %v4502
  %v4504 = vsel %vm4185, %v4064, 0.0
  %v4505 = vadd.f32 %v4503, %v4504
  %v4506 = vsel %vm4185, %v4065, 0.0
  %v4507 = vadd.f32 %v4505, %v4506
  %v4508 = vsel %vm4185, %v4066, 0.0
  %v4509 = vadd.f32 %v4507, %v4508
  %v4510 = vsel %vm4185, %v4067, 0.0
  %v4511 = vadd.f32 %v4509, %v4510
  %v4512 = vsel %vm4185, %v4068, 0.0
  %v4513 = vadd.f32 %v4511, %v4512
  %v4514 = vsel %vm4185, %v4069, 0.0
  %v4515 = vadd.f32 %v4513, %v4514
  %v4516 = vsel %vm4185, %v4070, 0.0
  %v4517 = vsel %vm4185, %v4071, 0.0
  %v4518 = vadd.f32 %v4516, %v4517
  %v4519 = vsel %vm4185, %v4072, 0.0
  %v4520 = vadd.f32 %v4518, %v4519
  %v4521 = vsel %vm4185, %v4073, 0.0
  %v4522 = vadd.f32 %v4520, %v4521
  %v4523 = vsel %vm4185, %v4074, 0.0
  %v4524 = vadd.f32 %v4522, %v4523
  %v4525 = vsel %vm4185, %v4075, 0.0
  %v4526 = vadd.f32 %v4524, %v4525
  %v4527 = vsel %vm4185, %v4076, 0.0
  %v4528 = vadd.f32 %v4526, %v4527
  %v4529 = vsel %vm4185, %v4077, 0.0
  %v4530 = vadd.f32 %v4528, %v4529
  %v4531 = vsel %vm4185, %v4078, 0.0
  %v4532 = vsel %vm4185, %v4079, 0.0
  %v4533 = vadd.f32 %v4531, %v4532
  %v4534 = vsel %vm4185, %v4080, 0.0
  %v4535 = vadd.f32 %v4533, %v4534
  %v4536 = vsel %vm4185, %v4081, 0.0
  %v4537 = vadd.f32 %v4535, %v4536
  %v4538 = vsel %vm4185, %v4082, 0.0
  %v4539 = vadd.f32 %v4537, %v4538
  %v4540 = vsel %vm4185, %v4083, 0.0
  %v4541 = vadd.f32 %v4539, %v4540
  %v4542 = vsel %vm4185, %v4084, 0.0
  %v4543 = vadd.f32 %v4541, %v4542
  %v4544 = vsel %vm4185, %v4085, 0.0
  %v4545 = vadd.f32 %v4543, %v4544
  %v4546 = vsel %vm4185, %v4086, 0.0
  %v4547 = vsel %vm4185, %v4087, 0.0
  %v4548 = vadd.f32 %v4546, %v4547
  %v4549 = vsel %vm4185, %v4088, 0.0
  %v4550 = vadd.f32 %v4548, %v4549
  %v4551 = vsel %vm4185, %v4089, 0.0
  %v4552 = vadd.f32 %v4550, %v4551
  %v4553 = vsel %vm4185, %v4090, 0.0
  %v4554 = vadd.f32 %v4552, %v4553
  %v4555 = vsel %vm4185, %v4091, 0.0
  %v4556 = vadd.f32 %v4554, %v4555
  %v4557 = vsel %vm4185, %v4092, 0.0
  %v4558 = vadd.f32 %v4556, %v4557
  %v4559 = vsel %vm4185, %v4093, 0.0
  %v4560 = vadd.f32 %v4558, %v4559
  %v4561 = vsel %vm4185, %v4094, 0.0
  %v4562 = vsel %vm4185, %v4095, 0.0
  %v4563 = vadd.f32 %v4561, %v4562
  %v4564 = vsel %vm4185, %v4096, 0.0
  %v4565 = vadd.f32 %v4563, %v4564
  %v4566 = vsel %vm4185, %v4097, 0.0
  %v4567 = vadd.f32 %v4565, %v4566
  %v4568 = vsel %vm4185, %v4098, 0.0
  %v4569 = vadd.f32 %v4567, %v4568
  %v4570 = vsel %vm4185, %v4099, 0.0
  %v4571 = vadd.f32 %v4569, %v4570
  %v4572 = vsel %vm4185, %v4100, 0.0
  %v4573 = vadd.f32 %v4571, %v4572
  %v4574 = vsel %vm4185, %v4101, 0.0
  %v4575 = vadd.f32 %v4573, %v4574
  %v4576 = vsel %vm4185, %v4102, 0.0
  %v4577 = vsel %vm4185, %v4103, 0.0
  %v4578 = vadd.f32 %v4576, %v4577
  %v4579 = vsel %vm4185, %v4104, 0.0
  %v4580 = vadd.f32 %v4578, %v4579
  %v4581 = vsel %vm4185, %v4105, 0.0
  %v4582 = vadd.f32 %v4580, %v4581
  %v4583 = vsel %vm4185, %v4106, 0.0
  %v4584 = vadd.f32 %v4582, %v4583
  %v4585 = vsel %vm4185, %v4107, 0.0
  %v4586 = vadd.f32 %v4584, %v4585
  %v4587 = vsel %vm4185, %v4108, 0.0
  %v4588 = vadd.f32 %v4586, %v4587
  %v4589 = vsel %vm4185, %v4109, 0.0
  %v4590 = vadd.f32 %v4588, %v4589
  %v4591 = vsel %vm4185, %v4110, 0.0
  %v4592 = vsel %vm4185, %v4111, 0.0
  %v4593 = vadd.f32 %v4591, %v4592
  %v4594 = vsel %vm4185, %v4112, 0.0
  %v4595 = vadd.f32 %v4593, %v4594
  %v4596 = vsel %vm4185, %v4113, 0.0
  %v4597 = vadd.f32 %v4595, %v4596
  %v4598 = vsel %vm4185, %v4114, 0.0
  %v4599 = vadd.f32 %v4597, %v4598
  %v4600 = vsel %vm4185, %v4115, 0.0
  %v4601 = vadd.f32 %v4599, %v4600
  %v4602 = vsel %vm4185, %v4116, 0.0
  %v4603 = vadd.f32 %v4601, %v4602
  %v4604 = vsel %vm4185, %v4117, 0.0
  %v4605 = vadd.f32 %v4603, %v4604
  %v4606 = vsel %vm4185, %v4118, 0.0
  %v4607 = vsel %vm4185, %v4119, 0.0
  %v4608 = vadd.f32 %v4606, %v4607
  %v4609 = vsel %vm4185, %v4120, 0.0
  %v4610 = vadd.f32 %v4608, %v4609
  %v4611 = vsel %vm4185, %v4121, 0.0
  %v4612 = vadd.f32 %v4610, %v4611
  %v4613 = vsel %vm4185, %v4122, 0.0
  %v4614 = vadd.f32 %v4612, %v4613
  %v4615 = vsel %vm4185, %v4123, 0.0
  %v4616 = vadd.f32 %v4614, %v4615
  %v4617 = vsel %vm4185, %v4124, 0.0
  %v4618 = vadd.f32 %v4616, %v4617
  %v4619 = vsel %vm4185, %v4125, 0.0
  %v4620 = vadd.f32 %v4618, %v4619
  %v4621 = vsel %vm4185, %v4126, 0.0
  %v4622 = vsel %vm4185, %v4127, 0.0
  %v4623 = vadd.f32 %v4621, %v4622
  %v4624 = vsel %vm4185, %v4128, 0.0
  %v4625 = vadd.f32 %v4623, %v4624
  %v4626 = vsel %vm4185, %v4129, 0.0
  %v4627 = vadd.f32 %v4625, %v4626
  %v4628 = vsel %vm4185, %v4130, 0.0
  %v4629 = vadd.f32 %v4627, %v4628
  %v4630 = vsel %vm4185, %v4131, 0.0
  %v4631 = vadd.f32 %v4629, %v4630
  %v4632 = vsel %vm4185, %v4132, 0.0
  %v4633 = vadd.f32 %v4631, %v4632
  %v4634 = vsel %vm4185, %v4133, 0.0
  %v4635 = vadd.f32 %v4633, %v4634
  %v4636 = vsel %vm4185, %v4134, 0.0
  %v4637 = vsel %vm4185, %v4135, 0.0
  %v4638 = vadd.f32 %v4636, %v4637
  %v4639 = vsel %vm4185, %v4136, 0.0
  %v4640 = vadd.f32 %v4638, %v4639
  %v4641 = vsel %vm4185, %v4137, 0.0
  %v4642 = vadd.f32 %v4640, %v4641
  %v4643 = vsel %vm4185, %v4138, 0.0
  %v4644 = vadd.f32 %v4642, %v4643
  %v4645 = vsel %vm4185, %v4139, 0.0
  %v4646 = vadd.f32 %v4644, %v4645
  %v4647 = vsel %vm4185, %v4140, 0.0
  %v4648 = vadd.f32 %v4646, %v4647
  %v4649 = vsel %vm4185, %v4141, 0.0
  %v4650 = vadd.f32 %v4648, %v4649
  %v4651 = vsel %vm4185, %v4142, 0.0
  %v4652 = vsel %vm4185, %v4143, 0.0
  %v4653 = vadd.f32 %v4651, %v4652
  %v4654 = vsel %vm4185, %v4144, 0.0
  %v4655 = vadd.f32 %v4653, %v4654
  %v4656 = vsel %vm4185, %v4145, 0.0
  %v4657 = vadd.f32 %v4655, %v4656
  %v4658 = vsel %vm4185, %v4146, 0.0
  %v4659 = vadd.f32 %v4657, %v4658
  %v4660 = vsel %vm4185, %v4147, 0.0
  %v4661 = vadd.f32 %v4659, %v4660
  %v4662 = vsel %vm4185, %v4148, 0.0
  %v4663 = vadd.f32 %v4661, %v4662
  %v4664 = vsel %vm4185, %v4149, 0.0
  %v4665 = vadd.f32 %v4663, %v4664
  %v4666 = vrcp.pop 8.0
  %v4667 = vmul.f32 8.0, %v4666
  %v4668 = vsub.f32 1.0, %v4667
  %v4669 = vmul.f32 %v4666, %v4668
  %v4670 = vadd.f32 %v4666, %v4669
  %vm4671 = vweird.f32 %v4666
  %v4672 = vsel %vm4671, %v4666, %v4670
  %v4673 = vmul.f32 %v4200, %v4672
  %v4674 = vmul.f32 %v4215, %v4672
  %v4675 = vmul.f32 %v4230, %v4672
  %v4676 = vmul.f32 %v4245, %v4672
  %v4677 = vmul.f32 %v4260, %v4672
  %v4678 = vmul.f32 %v4275, %v4672
  %v4679 = vmul.f32 %v4290, %v4672
  %v4680 = vmul.f32 %v4305, %v4672
  %v4681 = vmul.f32 %v4320, %v4672
  %v4682 = vmul.f32 %v4335, %v4672
  %v4683 = vmul.f32 %v4350, %v4672
  %v4684 = vmul.f32 %v4365, %v4672
  %v4685 = vmul.f32 %v4380, %v4672
  %v4686 = vmul.f32 %v4395, %v4672
  %v4687 = vmul.f32 %v4410, %v4672
  %v4688 = vmul.f32 %v4425, %v4672
  %v4689 = vmul.f32 %v4440, %v4672
  %v4690 = vmul.f32 %v4455, %v4672
  %v4691 = vmul.f32 %v4470, %v4672
  %v4692 = vmul.f32 %v4485, %v4672
  %v4693 = vmul.f32 %v4500, %v4672
  %v4694 = vmul.f32 %v4515, %v4672
  %v4695 = vmul.f32 %v4530, %v4672
  %v4696 = vmul.f32 %v4545, %v4672
  %v4697 = vmul.f32 %v4560, %v4672
  %v4698 = vmul.f32 %v4575, %v4672
  %v4699 = vmul.f32 %v4590, %v4672
  %v4700 = vmul.f32 %v4605, %v4672
  %v4701 = vmul.f32 %v4620, %v4672
  %v4702 = vmul.f32 %v4635, %v4672
  %v4703 = vmul.f32 %v4650, %v4672
  %v4704 = vmul.f32 %v4665, %v4672
  %v4705 = vsub.f32 %v3894, %v4673
  %v4706 = vsub.f32 %v3895, %v4673
  %v4707 = vsub.f32 %v3896, %v4673
  %v4708 = vsub.f32 %v3897, %v4673
  %v4709 = vsub.f32 %v3898, %v4673
  %v4710 = vsub.f32 %v3899, %v4673
  %v4711 = vsub.f32 %v3900, %v4673
  %v4712 = vsub.f32 %v3901, %v4673
  %v4713 = vsub.f32 %v3902, %v4674
  %v4714 = vsub.f32 %v3903, %v4674
  %v4715 = vsub.f32 %v3904, %v4674
  %v4716 = vsub.f32 %v3905, %v4674
  %v4717 = vsub.f32 %v3906, %v4674
  %v4718 = vsub.f32 %v3907, %v4674
  %v4719 = vsub.f32 %v3908, %v4674
  %v4720 = vsub.f32 %v3909, %v4674
  %v4721 = vsub.f32 %v3910, %v4675
  %v4722 = vsub.f32 %v3911, %v4675
  %v4723 = vsub.f32 %v3912, %v4675
  %v4724 = vsub.f32 %v3913, %v4675
  %v4725 = vsub.f32 %v3914, %v4675
  %v4726 = vsub.f32 %v3915, %v4675
  %v4727 = vsub.f32 %v3916, %v4675
  %v4728 = vsub.f32 %v3917, %v4675
  %v4729 = vsub.f32 %v3918, %v4676
  %v4730 = vsub.f32 %v3919, %v4676
  %v4731 = vsub.f32 %v3920, %v4676
  %v4732 = vsub.f32 %v3921, %v4676
  %v4733 = vsub.f32 %v3922, %v4676
  %v4734 = vsub.f32 %v3923, %v4676
  %v4735 = vsub.f32 %v3924, %v4676
  %v4736 = vsub.f32 %v3925, %v4676
  %v4737 = vsub.f32 %v3926, %v4677
  %v4738 = vsub.f32 %v3927, %v4677
  %v4739 = vsub.f32 %v3928, %v4677
  %v4740 = vsub.f32 %v3929, %v4677
  %v4741 = vsub.f32 %v3930, %v4677
  %v4742 = vsub.f32 %v3931, %v4677
  %v4743 = vsub.f32 %v3932, %v4677
  %v4744 = vsub.f32 %v3933, %v4677
  %v4745 = vsub.f32 %v3934, %v4678
  %v4746 = vsub.f32 %v3935, %v4678
  %v4747 = vsub.f32 %v3936, %v4678
  %v4748 = vsub.f32 %v3937, %v4678
  %v4749 = vsub.f32 %v3938, %v4678
  %v4750 = vsub.f32 %v3939, %v4678
  %v4751 = vsub.f32 %v3940, %v4678
  %v4752 = vsub.f32 %v3941, %v4678
  %v4753 = vsub.f32 %v3942, %v4679
  %v4754 = vsub.f32 %v3943, %v4679
  %v4755 = vsub.f32 %v3944, %v4679
  %v4756 = vsub.f32 %v3945, %v4679
  %v4757 = vsub.f32 %v3946, %v4679
  %v4758 = vsub.f32 %v3947, %v4679
  %v4759 = vsub.f32 %v3948, %v4679
  %v4760 = vsub.f32 %v3949, %v4679
  %v4761 = vsub.f32 %v3950, %v4680
  %v4762 = vsub.f32 %v3951, %v4680
  %v4763 = vsub.f32 %v3952, %v4680
  %v4764 = vsub.f32 %v3953, %v4680
  %v4765 = vsub.f32 %v3954, %v4680
  %v4766 = vsub.f32 %v3955, %v4680
  %v4767 = vsub.f32 %v3956, %v4680
  %v4768 = vsub.f32 %v3957, %v4680
  %v4769 = vsub.f32 %v3958, %v4681
  %v4770 = vsub.f32 %v3959, %v4681
  %v4771 = vsub.f32 %v3960, %v4681
  %v4772 = vsub.f32 %v3961, %v4681
  %v4773 = vsub.f32 %v3962, %v4681
  %v4774 = vsub.f32 %v3963, %v4681
  %v4775 = vsub.f32 %v3964, %v4681
  %v4776 = vsub.f32 %v3965, %v4681
  %v4777 = vsub.f32 %v3966, %v4682
  %v4778 = vsub.f32 %v3967, %v4682
  %v4779 = vsub.f32 %v3968, %v4682
  %v4780 = vsub.f32 %v3969, %v4682
  %v4781 = vsub.f32 %v3970, %v4682
  %v4782 = vsub.f32 %v3971, %v4682
  %v4783 = vsub.f32 %v3972, %v4682
  %v4784 = vsub.f32 %v3973, %v4682
  %v4785 = vsub.f32 %v3974, %v4683
  %v4786 = vsub.f32 %v3975, %v4683
  %v4787 = vsub.f32 %v3976, %v4683
  %v4788 = vsub.f32 %v3977, %v4683
  %v4789 = vsub.f32 %v3978, %v4683
  %v4790 = vsub.f32 %v3979, %v4683
  %v4791 = vsub.f32 %v3980, %v4683
  %v4792 = vsub.f32 %v3981, %v4683
  %v4793 = vsub.f32 %v3982, %v4684
  %v4794 = vsub.f32 %v3983, %v4684
  %v4795 = vsub.f32 %v3984, %v4684
  %v4796 = vsub.f32 %v3985, %v4684
  %v4797 = vsub.f32 %v3986, %v4684
  %v4798 = vsub.f32 %v3987, %v4684
  %v4799 = vsub.f32 %v3988, %v4684
  %v4800 = vsub.f32 %v3989, %v4684
  %v4801 = vsub.f32 %v3990, %v4685
  %v4802 = vsub.f32 %v3991, %v4685
  %v4803 = vsub.f32 %v3992, %v4685
  %v4804 = vsub.f32 %v3993, %v4685
  %v4805 = vsub.f32 %v3994, %v4685
  %v4806 = vsub.f32 %v3995, %v4685
  %v4807 = vsub.f32 %v3996, %v4685
  %v4808 = vsub.f32 %v3997, %v4685
  %v4809 = vsub.f32 %v3998, %v4686
  %v4810 = vsub.f32 %v3999, %v4686
  %v4811 = vsub.f32 %v4000, %v4686
  %v4812 = vsub.f32 %v4001, %v4686
  %v4813 = vsub.f32 %v4002, %v4686
  %v4814 = vsub.f32 %v4003, %v4686
  %v4815 = vsub.f32 %v4004, %v4686
  %v4816 = vsub.f32 %v4005, %v4686
  %v4817 = vsub.f32 %v4006, %v4687
  %v4818 = vsub.f32 %v4007, %v4687
  %v4819 = vsub.f32 %v4008, %v4687
  %v4820 = vsub.f32 %v4009, %v4687
  %v4821 = vsub.f32 %v4010, %v4687
  %v4822 = vsub.f32 %v4011, %v4687
  %v4823 = vsub.f32 %v4012, %v4687
  %v4824 = vsub.f32 %v4013, %v4687
  %v4825 = vsub.f32 %v4014, %v4688
  %v4826 = vsub.f32 %v4015, %v4688
  %v4827 = vsub.f32 %v4016, %v4688
  %v4828 = vsub.f32 %v4017, %v4688
  %v4829 = vsub.f32 %v4018, %v4688
  %v4830 = vsub.f32 %v4019, %v4688
  %v4831 = vsub.f32 %v4020, %v4688
  %v4832 = vsub.f32 %v4021, %v4688
  %v4833 = vsub.f32 %v4022, %v4689
  %v4834 = vsub.f32 %v4023, %v4689
  %v4835 = vsub.f32 %v4024, %v4689
  %v4836 = vsub.f32 %v4025, %v4689
  %v4837 = vsub.f32 %v4026, %v4689
  %v4838 = vsub.f32 %v4027, %v4689
  %v4839 = vsub.f32 %v4028, %v4689
  %v4840 = vsub.f32 %v4029, %v4689
  %v4841 = vsub.f32 %v4030, %v4690
  %v4842 = vsub.f32 %v4031, %v4690
  %v4843 = vsub.f32 %v4032, %v4690
  %v4844 = vsub.f32 %v4033, %v4690
  %v4845 = vsub.f32 %v4034, %v4690
  %v4846 = vsub.f32 %v4035, %v4690
  %v4847 = vsub.f32 %v4036, %v4690
  %v4848 = vsub.f32 %v4037, %v4690
  %v4849 = vsub.f32 %v4038, %v4691
  %v4850 = vsub.f32 %v4039, %v4691
  %v4851 = vsub.f32 %v4040, %v4691
  %v4852 = vsub.f32 %v4041, %v4691
  %v4853 = vsub.f32 %v4042, %v4691
  %v4854 = vsub.f32 %v4043, %v4691
  %v4855 = vsub.f32 %v4044, %v4691
  %v4856 = vsub.f32 %v4045, %v4691
  %v4857 = vsub.f32 %v4046, %v4692
  %v4858 = vsub.f32 %v4047, %v4692
  %v4859 = vsub.f32 %v4048, %v4692
  %v4860 = vsub.f32 %v4049, %v4692
  %v4861 = vsub.f32 %v4050, %v4692
  %v4862 = vsub.f32 %v4051, %v4692
  %v4863 = vsub.f32 %v4052, %v4692
  %v4864 = vsub.f32 %v4053, %v4692
  %v4865 = vsub.f32 %v4054, %v4693
  %v4866 = vsub.f32 %v4055, %v4693
  %v4867 = vsub.f32 %v4056, %v4693
  %v4868 = vsub.f32 %v4057, %v4693
  %v4869 = vsub.f32 %v4058, %v4693
  %v4870 = vsub.f32 %v4059, %v4693
  %v4871 = vsub.f32 %v4060, %v4693
  %v4872 = vsub.f32 %v4061, %v4693
  %v4873 = vsub.f32 %v4062, %v4694
  %v4874 = vsub.f32 %v4063, %v4694
  %v4875 = vsub.f32 %v4064, %v4694
  %v4876 = vsub.f32 %v4065, %v4694
  %v4877 = vsub.f32 %v4066, %v4694
  %v4878 = vsub.f32 %v4067, %v4694
  %v4879 = vsub.f32 %v4068, %v4694
  %v4880 = vsub.f32 %v4069, %v4694
  %v4881 = vsub.f32 %v4070, %v4695
  %v4882 = vsub.f32 %v4071, %v4695
  %v4883 = vsub.f32 %v4072, %v4695
  %v4884 = vsub.f32 %v4073, %v4695
  %v4885 = vsub.f32 %v4074, %v4695
  %v4886 = vsub.f32 %v4075, %v4695
  %v4887 = vsub.f32 %v4076, %v4695
  %v4888 = vsub.f32 %v4077, %v4695
  %v4889 = vsub.f32 %v4078, %v4696
  %v4890 = vsub.f32 %v4079, %v4696
  %v4891 = vsub.f32 %v4080, %v4696
  %v4892 = vsub.f32 %v4081, %v4696
  %v4893 = vsub.f32 %v4082, %v4696
  %v4894 = vsub.f32 %v4083, %v4696
  %v4895 = vsub.f32 %v4084, %v4696
  %v4896 = vsub.f32 %v4085, %v4696
  %v4897 = vsub.f32 %v4086, %v4697
  %v4898 = vsub.f32 %v4087, %v4697
  %v4899 = vsub.f32 %v4088, %v4697
  %v4900 = vsub.f32 %v4089, %v4697
  %v4901 = vsub.f32 %v4090, %v4697
  %v4902 = vsub.f32 %v4091, %v4697
  %v4903 = vsub.f32 %v4092, %v4697
  %v4904 = vsub.f32 %v4093, %v4697
  %v4905 = vsub.f32 %v4094, %v4698
  %v4906 = vsub.f32 %v4095, %v4698
  %v4907 = vsub.f32 %v4096, %v4698
  %v4908 = vsub.f32 %v4097, %v4698
  %v4909 = vsub.f32 %v4098, %v4698
  %v4910 = vsub.f32 %v4099, %v4698
  %v4911 = vsub.f32 %v4100, %v4698
  %v4912 = vsub.f32 %v4101, %v4698
  %v4913 = vsub.f32 %v4102, %v4699
  %v4914 = vsub.f32 %v4103, %v4699
  %v4915 = vsub.f32 %v4104, %v4699
  %v4916 = vsub.f32 %v4105, %v4699
  %v4917 = vsub.f32 %v4106, %v4699
  %v4918 = vsub.f32 %v4107, %v4699
  %v4919 = vsub.f32 %v4108, %v4699
  %v4920 = vsub.f32 %v4109, %v4699
  %v4921 = vsub.f32 %v4110, %v4700
  %v4922 = vsub.f32 %v4111, %v4700
  %v4923 = vsub.f32 %v4112, %v4700
  %v4924 = vsub.f32 %v4113, %v4700
  %v4925 = vsub.f32 %v4114, %v4700
  %v4926 = vsub.f32 %v4115, %v4700
  %v4927 = vsub.f32 %v4116, %v4700
  %v4928 = vsub.f32 %v4117, %v4700
  %v4929 = vsub.f32 %v4118, %v4701
  %v4930 = vsub.f32 %v4119, %v4701
  %v4931 = vsub.f32 %v4120, %v4701
  %v4932 = vsub.f32 %v4121, %v4701
  %v4933 = vsub.f32 %v4122, %v4701
  %v4934 = vsub.f32 %v4123, %v4701
  %v4935 = vsub.f32 %v4124, %v4701
  %v4936 = vsub.f32 %v4125, %v4701
  %v4937 = vsub.f32 %v4126, %v4702
  %v4938 = vsub.f32 %v4127, %v4702
  %v4939 = vsub.f32 %v4128, %v4702
  %v4940 = vsub.f32 %v4129, %v4702
  %v4941 = vsub.f32 %v4130, %v4702
  %v4942 = vsub.f32 %v4131, %v4702
  %v4943 = vsub.f32 %v4132, %v4702
  %v4944 = vsub.f32 %v4133, %v4702
  %v4945 = vsub.f32 %v4134, %v4703
  %v4946 = vsub.f32 %v4135, %v4703
  %v4947 = vsub.f32 %v4136, %v4703
  %v4948 = vsub.f32 %v4137, %v4703
  %v4949 = vsub.f32 %v4138, %v4703
  %v4950 = vsub.f32 %v4139, %v4703
  %v4951 = vsub.f32 %v4140, %v4703
  %v4952 = vsub.f32 %v4141, %v4703
  %v4953 = vsub.f32 %v4142, %v4704
  %v4954 = vsub.f32 %v4143, %v4704
  %v4955 = vsub.f32 %v4144, %v4704
  %v4956 = vsub.f32 %v4145, %v4704
  %v4957 = vsub.f32 %v4146, %v4704
  %v4958 = vsub.f32 %v4147, %v4704
  %v4959 = vsub.f32 %v4148, %v4704
  %v4960 = vsub.f32 %v4149, %v4704
  %v4961 = vmul.f32 %v4705, %v4705
  %v4962 = vmul.f32 %v4706, %v4706
  %v4963 = vmul.f32 %v4707, %v4707
  %v4964 = vmul.f32 %v4708, %v4708
  %v4965 = vmul.f32 %v4709, %v4709
  %v4966 = vmul.f32 %v4710, %v4710
  %v4967 = vmul.f32 %v4711, %v4711
  %v4968 = vmul.f32 %v4712, %v4712
  %v4969 = vmul.f32 %v4713, %v4713
  %v4970 = vmul.f32 %v4714, %v4714
  %v4971 = vmul.f32 %v4715, %v4715
  %v4972 = vmul.f32 %v4716, %v4716
  %v4973 = vmul.f32 %v4717, %v4717
  %v4974 = vmul.f32 %v4718, %v4718
  %v4975 = vmul.f32 %v4719, %v4719
  %v4976 = vmul.f32 %v4720, %v4720
  %v4977 = vmul.f32 %v4721, %v4721
  %v4978 = vmul.f32 %v4722, %v4722
  %v4979 = vmul.f32 %v4723, %v4723
  %v4980 = vmul.f32 %v4724, %v4724
  %v4981 = vmul.f32 %v4725, %v4725
  %v4982 = vmul.f32 %v4726, %v4726
  %v4983 = vmul.f32 %v4727, %v4727
  %v4984 = vmul.f32 %v4728, %v4728
  %v4985 = vmul.f32 %v4729, %v4729
  %v4986 = vmul.f32 %v4730, %v4730
  %v4987 = vmul.f32 %v4731, %v4731
  %v4988 = vmul.f32 %v4732, %v4732
  %v4989 = vmul.f32 %v4733, %v4733
  %v4990 = vmul.f32 %v4734, %v4734
  %v4991 = vmul.f32 %v4735, %v4735
  %v4992 = vmul.f32 %v4736, %v4736
  %v4993 = vmul.f32 %v4737, %v4737
  %v4994 = vmul.f32 %v4738, %v4738
  %v4995 = vmul.f32 %v4739, %v4739
  %v4996 = vmul.f32 %v4740, %v4740
  %v4997 = vmul.f32 %v4741, %v4741
  %v4998 = vmul.f32 %v4742, %v4742
  %v4999 = vmul.f32 %v4743, %v4743
  %v5000 = vmul.f32 %v4744, %v4744
  %v5001 = vmul.f32 %v4745, %v4745
  %v5002 = vmul.f32 %v4746, %v4746
  %v5003 = vmul.f32 %v4747, %v4747
  %v5004 = vmul.f32 %v4748, %v4748
  %v5005 = vmul.f32 %v4749, %v4749
  %v5006 = vmul.f32 %v4750, %v4750
  %v5007 = vmul.f32 %v4751, %v4751
  %v5008 = vmul.f32 %v4752, %v4752
  %v5009 = vmul.f32 %v4753, %v4753
  %v5010 = vmul.f32 %v4754, %v4754
  %v5011 = vmul.f32 %v4755, %v4755
  %v5012 = vmul.f32 %v4756, %v4756
  %v5013 = vmul.f32 %v4757, %v4757
  %v5014 = vmul.f32 %v4758, %v4758
  %v5015 = vmul.f32 %v4759, %v4759
  %v5016 = vmul.f32 %v4760, %v4760
  %v5017 = vmul.f32 %v4761, %v4761
  %v5018 = vmul.f32 %v4762, %v4762
  %v5019 = vmul.f32 %v4763, %v4763
  %v5020 = vmul.f32 %v4764, %v4764
  %v5021 = vmul.f32 %v4765, %v4765
  %v5022 = vmul.f32 %v4766, %v4766
  %v5023 = vmul.f32 %v4767, %v4767
  %v5024 = vmul.f32 %v4768, %v4768
  %v5025 = vmul.f32 %v4769, %v4769
  %v5026 = vmul.f32 %v4770, %v4770
  %v5027 = vmul.f32 %v4771, %v4771
  %v5028 = vmul.f32 %v4772, %v4772
  %v5029 = vmul.f32 %v4773, %v4773
  %v5030 = vmul.f32 %v4774, %v4774
  %v5031 = vmul.f32 %v4775, %v4775
  %v5032 = vmul.f32 %v4776, %v4776
  %v5033 = vmul.f32 %v4777, %v4777
  %v5034 = vmul.f32 %v4778, %v4778
  %v5035 = vmul.f32 %v4779, %v4779
  %v5036 = vmul.f32 %v4780, %v4780
  %v5037 = vmul.f32 %v4781, %v4781
  %v5038 = vmul.f32 %v4782, %v4782
  %v5039 = vmul.f32 %v4783, %v4783
  %v5040 = vmul.f32 %v4784, %v4784
  %v5041 = vmul.f32 %v4785, %v4785
  %v5042 = vmul.f32 %v4786, %v4786
  %v5043 = vmul.f32 %v4787, %v4787
  %v5044 = vmul.f32 %v4788, %v4788
  %v5045 = vmul.f32 %v4789, %v4789
  %v5046 = vmul.f32 %v4790, %v4790
  %v5047 = vmul.f32 %v4791, %v4791
  %v5048 = vmul.f32 %v4792, %v4792
  %v5049 = vmul.f32 %v4793, %v4793
  %v5050 = vmul.f32 %v4794, %v4794
  %v5051 = vmul.f32 %v4795, %v4795
  %v5052 = vmul.f32 %v4796, %v4796
  %v5053 = vmul.f32 %v4797, %v4797
  %v5054 = vmul.f32 %v4798, %v4798
  %v5055 = vmul.f32 %v4799, %v4799
  %v5056 = vmul.f32 %v4800, %v4800
  %v5057 = vmul.f32 %v4801, %v4801
  %v5058 = vmul.f32 %v4802, %v4802
  %v5059 = vmul.f32 %v4803, %v4803
  %v5060 = vmul.f32 %v4804, %v4804
  %v5061 = vmul.f32 %v4805, %v4805
  %v5062 = vmul.f32 %v4806, %v4806
  %v5063 = vmul.f32 %v4807, %v4807
  %v5064 = vmul.f32 %v4808, %v4808
  %v5065 = vmul.f32 %v4809, %v4809
  %v5066 = vmul.f32 %v4810, %v4810
  %v5067 = vmul.f32 %v4811, %v4811
  %v5068 = vmul.f32 %v4812, %v4812
  %v5069 = vmul.f32 %v4813, %v4813
  %v5070 = vmul.f32 %v4814, %v4814
  %v5071 = vmul.f32 %v4815, %v4815
  %v5072 = vmul.f32 %v4816, %v4816
  %v5073 = vmul.f32 %v4817, %v4817
  %v5074 = vmul.f32 %v4818, %v4818
  %v5075 = vmul.f32 %v4819, %v4819
  %v5076 = vmul.f32 %v4820, %v4820
  %v5077 = vmul.f32 %v4821, %v4821
  %v5078 = vmul.f32 %v4822, %v4822
  %v5079 = vmul.f32 %v4823, %v4823
  %v5080 = vmul.f32 %v4824, %v4824
  %v5081 = vmul.f32 %v4825, %v4825
  %v5082 = vmul.f32 %v4826, %v4826
  %v5083 = vmul.f32 %v4827, %v4827
  %v5084 = vmul.f32 %v4828, %v4828
  %v5085 = vmul.f32 %v4829, %v4829
  %v5086 = vmul.f32 %v4830, %v4830
  %v5087 = vmul.f32 %v4831, %v4831
  %v5088 = vmul.f32 %v4832, %v4832
  %v5089 = vmul.f32 %v4833, %v4833
  %v5090 = vmul.f32 %v4834, %v4834
  %v5091 = vmul.f32 %v4835, %v4835
  %v5092 = vmul.f32 %v4836, %v4836
  %v5093 = vmul.f32 %v4837, %v4837
  %v5094 = vmul.f32 %v4838, %v4838
  %v5095 = vmul.f32 %v4839, %v4839
  %v5096 = vmul.f32 %v4840, %v4840
  %v5097 = vmul.f32 %v4841, %v4841
  %v5098 = vmul.f32 %v4842, %v4842
  %v5099 = vmul.f32 %v4843, %v4843
  %v5100 = vmul.f32 %v4844, %v4844
  %v5101 = vmul.f32 %v4845, %v4845
  %v5102 = vmul.f32 %v4846, %v4846
  %v5103 = vmul.f32 %v4847, %v4847
  %v5104 = vmul.f32 %v4848, %v4848
  %v5105 = vmul.f32 %v4849, %v4849
  %v5106 = vmul.f32 %v4850, %v4850
  %v5107 = vmul.f32 %v4851, %v4851
  %v5108 = vmul.f32 %v4852, %v4852
  %v5109 = vmul.f32 %v4853, %v4853
  %v5110 = vmul.f32 %v4854, %v4854
  %v5111 = vmul.f32 %v4855, %v4855
  %v5112 = vmul.f32 %v4856, %v4856
  %v5113 = vmul.f32 %v4857, %v4857
  %v5114 = vmul.f32 %v4858, %v4858
  %v5115 = vmul.f32 %v4859, %v4859
  %v5116 = vmul.f32 %v4860, %v4860
  %v5117 = vmul.f32 %v4861, %v4861
  %v5118 = vmul.f32 %v4862, %v4862
  %v5119 = vmul.f32 %v4863, %v4863
  %v5120 = vmul.f32 %v4864, %v4864
  %v5121 = vmul.f32 %v4865, %v4865
  %v5122 = vmul.f32 %v4866, %v4866
  %v5123 = vmul.f32 %v4867, %v4867
  %v5124 = vmul.f32 %v4868, %v4868
  %v5125 = vmul.f32 %v4869, %v4869
  %v5126 = vmul.f32 %v4870, %v4870
  %v5127 = vmul.f32 %v4871, %v4871
  %v5128 = vmul.f32 %v4872, %v4872
  %v5129 = vmul.f32 %v4873, %v4873
  %v5130 = vmul.f32 %v4874, %v4874
  %v5131 = vmul.f32 %v4875, %v4875
  %v5132 = vmul.f32 %v4876, %v4876
  %v5133 = vmul.f32 %v4877, %v4877
  %v5134 = vmul.f32 %v4878, %v4878
  %v5135 = vmul.f32 %v4879, %v4879
  %v5136 = vmul.f32 %v4880, %v4880
  %v5137 = vmul.f32 %v4881, %v4881
  %v5138 = vmul.f32 %v4882, %v4882
  %v5139 = vmul.f32 %v4883, %v4883
  %v5140 = vmul.f32 %v4884, %v4884
  %v5141 = vmul.f32 %v4885, %v4885
  %v5142 = vmul.f32 %v4886, %v4886
  %v5143 = vmul.f32 %v4887, %v4887
  %v5144 = vmul.f32 %v4888, %v4888
  %v5145 = vmul.f32 %v4889, %v4889
  %v5146 = vmul.f32 %v4890, %v4890
  %v5147 = vmul.f32 %v4891, %v4891
  %v5148 = vmul.f32 %v4892, %v4892
  %v5149 = vmul.f32 %v4893, %v4893
  %v5150 = vmul.f32 %v4894, %v4894
  %v5151 = vmul.f32 %v4895, %v4895
  %v5152 = vmul.f32 %v4896, %v4896
  %v5153 = vmul.f32 %v4897, %v4897
  %v5154 = vmul.f32 %v4898, %v4898
  %v5155 = vmul.f32 %v4899, %v4899
  %v5156 = vmul.f32 %v4900, %v4900
  %v5157 = vmul.f32 %v4901, %v4901
  %v5158 = vmul.f32 %v4902, %v4902
  %v5159 = vmul.f32 %v4903, %v4903
  %v5160 = vmul.f32 %v4904, %v4904
  %v5161 = vmul.f32 %v4905, %v4905
  %v5162 = vmul.f32 %v4906, %v4906
  %v5163 = vmul.f32 %v4907, %v4907
  %v5164 = vmul.f32 %v4908, %v4908
  %v5165 = vmul.f32 %v4909, %v4909
  %v5166 = vmul.f32 %v4910, %v4910
  %v5167 = vmul.f32 %v4911, %v4911
  %v5168 = vmul.f32 %v4912, %v4912
  %v5169 = vmul.f32 %v4913, %v4913
  %v5170 = vmul.f32 %v4914, %v4914
  %v5171 = vmul.f32 %v4915, %v4915
  %v5172 = vmul.f32 %v4916, %v4916
  %v5173 = vmul.f32 %v4917, %v4917
  %v5174 = vmul.f32 %v4918, %v4918
  %v5175 = vmul.f32 %v4919, %v4919
  %v5176 = vmul.f32 %v4920, %v4920
  %v5177 = vmul.f32 %v4921, %v4921
  %v5178 = vmul.f32 %v4922, %v4922
  %v5179 = vmul.f32 %v4923, %v4923
  %v5180 = vmul.f32 %v4924, %v4924
  %v5181 = vmul.f32 %v4925, %v4925
  %v5182 = vmul.f32 %v4926, %v4926
  %v5183 = vmul.f32 %v4927, %v4927
  %v5184 = vmul.f32 %v4928, %v4928
  %v5185 = vmul.f32 %v4929, %v4929
  %v5186 = vmul.f32 %v4930, %v4930
  %v5187 = vmul.f32 %v4931, %v4931
  %v5188 = vmul.f32 %v4932, %v4932
  %v5189 = vmul.f32 %v4933, %v4933
  %v5190 = vmul.f32 %v4934, %v4934
  %v5191 = vmul.f32 %v4935, %v4935
  %v5192 = vmul.f32 %v4936, %v4936
  %v5193 = vmul.f32 %v4937, %v4937
  %v5194 = vmul.f32 %v4938, %v4938
  %v5195 = vmul.f32 %v4939, %v4939
  %v5196 = vmul.f32 %v4940, %v4940
  %v5197 = vmul.f32 %v4941, %v4941
  %v5198 = vmul.f32 %v4942, %v4942
  %v5199 = vmul.f32 %v4943, %v4943
  %v5200 = vmul.f32 %v4944, %v4944
  %v5201 = vmul.f32 %v4945, %v4945
  %v5202 = vmul.f32 %v4946, %v4946
  %v5203 = vmul.f32 %v4947, %v4947
  %v5204 = vmul.f32 %v4948, %v4948
  %v5205 = vmul.f32 %v4949, %v4949
  %v5206 = vmul.f32 %v4950, %v4950
  %v5207 = vmul.f32 %v4951, %v4951
  %v5208 = vmul.f32 %v4952, %v4952
  %v5209 = vmul.f32 %v4953, %v4953
  %v5210 = vmul.f32 %v4954, %v4954
  %v5211 = vmul.f32 %v4955, %v4955
  %v5212 = vmul.f32 %v4956, %v4956
  %v5213 = vmul.f32 %v4957, %v4957
  %v5214 = vmul.f32 %v4958, %v4958
  %v5215 = vmul.f32 %v4959, %v4959
  %v5216 = vmul.f32 %v4960, %v4960
  %v5217 = vsel %vm4185, %v4961, 0.0
  %v5218 = vsel %vm4185, %v4962, 0.0
  %v5219 = vadd.f32 %v5217, %v5218
  %v5220 = vsel %vm4185, %v4963, 0.0
  %v5221 = vadd.f32 %v5219, %v5220
  %v5222 = vsel %vm4185, %v4964, 0.0
  %v5223 = vadd.f32 %v5221, %v5222
  %v5224 = vsel %vm4185, %v4965, 0.0
  %v5225 = vadd.f32 %v5223, %v5224
  %v5226 = vsel %vm4185, %v4966, 0.0
  %v5227 = vadd.f32 %v5225, %v5226
  %v5228 = vsel %vm4185, %v4967, 0.0
  %v5229 = vadd.f32 %v5227, %v5228
  %v5230 = vsel %vm4185, %v4968, 0.0
  %v5231 = vadd.f32 %v5229, %v5230
  %v5232 = vsel %vm4185, %v4969, 0.0
  %v5233 = vsel %vm4185, %v4970, 0.0
  %v5234 = vadd.f32 %v5232, %v5233
  %v5235 = vsel %vm4185, %v4971, 0.0
  %v5236 = vadd.f32 %v5234, %v5235
  %v5237 = vsel %vm4185, %v4972, 0.0
  %v5238 = vadd.f32 %v5236, %v5237
  %v5239 = vsel %vm4185, %v4973, 0.0
  %v5240 = vadd.f32 %v5238, %v5239
  %v5241 = vsel %vm4185, %v4974, 0.0
  %v5242 = vadd.f32 %v5240, %v5241
  %v5243 = vsel %vm4185, %v4975, 0.0
  %v5244 = vadd.f32 %v5242, %v5243
  %v5245 = vsel %vm4185, %v4976, 0.0
  %v5246 = vadd.f32 %v5244, %v5245
  %v5247 = vsel %vm4185, %v4977, 0.0
  %v5248 = vsel %vm4185, %v4978, 0.0
  %v5249 = vadd.f32 %v5247, %v5248
  %v5250 = vsel %vm4185, %v4979, 0.0
  %v5251 = vadd.f32 %v5249, %v5250
  %v5252 = vsel %vm4185, %v4980, 0.0
  %v5253 = vadd.f32 %v5251, %v5252
  %v5254 = vsel %vm4185, %v4981, 0.0
  %v5255 = vadd.f32 %v5253, %v5254
  %v5256 = vsel %vm4185, %v4982, 0.0
  %v5257 = vadd.f32 %v5255, %v5256
  %v5258 = vsel %vm4185, %v4983, 0.0
  %v5259 = vadd.f32 %v5257, %v5258
  %v5260 = vsel %vm4185, %v4984, 0.0
  %v5261 = vadd.f32 %v5259, %v5260
  %v5262 = vsel %vm4185, %v4985, 0.0
  %v5263 = vsel %vm4185, %v4986, 0.0
  %v5264 = vadd.f32 %v5262, %v5263
  %v5265 = vsel %vm4185, %v4987, 0.0
  %v5266 = vadd.f32 %v5264, %v5265
  %v5267 = vsel %vm4185, %v4988, 0.0
  %v5268 = vadd.f32 %v5266, %v5267
  %v5269 = vsel %vm4185, %v4989, 0.0
  %v5270 = vadd.f32 %v5268, %v5269
  %v5271 = vsel %vm4185, %v4990, 0.0
  %v5272 = vadd.f32 %v5270, %v5271
  %v5273 = vsel %vm4185, %v4991, 0.0
  %v5274 = vadd.f32 %v5272, %v5273
  %v5275 = vsel %vm4185, %v4992, 0.0
  %v5276 = vadd.f32 %v5274, %v5275
  %v5277 = vsel %vm4185, %v4993, 0.0
  %v5278 = vsel %vm4185, %v4994, 0.0
  %v5279 = vadd.f32 %v5277, %v5278
  %v5280 = vsel %vm4185, %v4995, 0.0
  %v5281 = vadd.f32 %v5279, %v5280
  %v5282 = vsel %vm4185, %v4996, 0.0
  %v5283 = vadd.f32 %v5281, %v5282
  %v5284 = vsel %vm4185, %v4997, 0.0
  %v5285 = vadd.f32 %v5283, %v5284
  %v5286 = vsel %vm4185, %v4998, 0.0
  %v5287 = vadd.f32 %v5285, %v5286
  %v5288 = vsel %vm4185, %v4999, 0.0
  %v5289 = vadd.f32 %v5287, %v5288
  %v5290 = vsel %vm4185, %v5000, 0.0
  %v5291 = vadd.f32 %v5289, %v5290
  %v5292 = vsel %vm4185, %v5001, 0.0
  %v5293 = vsel %vm4185, %v5002, 0.0
  %v5294 = vadd.f32 %v5292, %v5293
  %v5295 = vsel %vm4185, %v5003, 0.0
  %v5296 = vadd.f32 %v5294, %v5295
  %v5297 = vsel %vm4185, %v5004, 0.0
  %v5298 = vadd.f32 %v5296, %v5297
  %v5299 = vsel %vm4185, %v5005, 0.0
  %v5300 = vadd.f32 %v5298, %v5299
  %v5301 = vsel %vm4185, %v5006, 0.0
  %v5302 = vadd.f32 %v5300, %v5301
  %v5303 = vsel %vm4185, %v5007, 0.0
  %v5304 = vadd.f32 %v5302, %v5303
  %v5305 = vsel %vm4185, %v5008, 0.0
  %v5306 = vadd.f32 %v5304, %v5305
  %v5307 = vsel %vm4185, %v5009, 0.0
  %v5308 = vsel %vm4185, %v5010, 0.0
  %v5309 = vadd.f32 %v5307, %v5308
  %v5310 = vsel %vm4185, %v5011, 0.0
  %v5311 = vadd.f32 %v5309, %v5310
  %v5312 = vsel %vm4185, %v5012, 0.0
  %v5313 = vadd.f32 %v5311, %v5312
  %v5314 = vsel %vm4185, %v5013, 0.0
  %v5315 = vadd.f32 %v5313, %v5314
  %v5316 = vsel %vm4185, %v5014, 0.0
  %v5317 = vadd.f32 %v5315, %v5316
  %v5318 = vsel %vm4185, %v5015, 0.0
  %v5319 = vadd.f32 %v5317, %v5318
  %v5320 = vsel %vm4185, %v5016, 0.0
  %v5321 = vadd.f32 %v5319, %v5320
  %v5322 = vsel %vm4185, %v5017, 0.0
  %v5323 = vsel %vm4185, %v5018, 0.0
  %v5324 = vadd.f32 %v5322, %v5323
  %v5325 = vsel %vm4185, %v5019, 0.0
  %v5326 = vadd.f32 %v5324, %v5325
  %v5327 = vsel %vm4185, %v5020, 0.0
  %v5328 = vadd.f32 %v5326, %v5327
  %v5329 = vsel %vm4185, %v5021, 0.0
  %v5330 = vadd.f32 %v5328, %v5329
  %v5331 = vsel %vm4185, %v5022, 0.0
  %v5332 = vadd.f32 %v5330, %v5331
  %v5333 = vsel %vm4185, %v5023, 0.0
  %v5334 = vadd.f32 %v5332, %v5333
  %v5335 = vsel %vm4185, %v5024, 0.0
  %v5336 = vadd.f32 %v5334, %v5335
  %v5337 = vsel %vm4185, %v5025, 0.0
  %v5338 = vsel %vm4185, %v5026, 0.0
  %v5339 = vadd.f32 %v5337, %v5338
  %v5340 = vsel %vm4185, %v5027, 0.0
  %v5341 = vadd.f32 %v5339, %v5340
  %v5342 = vsel %vm4185, %v5028, 0.0
  %v5343 = vadd.f32 %v5341, %v5342
  %v5344 = vsel %vm4185, %v5029, 0.0
  %v5345 = vadd.f32 %v5343, %v5344
  %v5346 = vsel %vm4185, %v5030, 0.0
  %v5347 = vadd.f32 %v5345, %v5346
  %v5348 = vsel %vm4185, %v5031, 0.0
  %v5349 = vadd.f32 %v5347, %v5348
  %v5350 = vsel %vm4185, %v5032, 0.0
  %v5351 = vadd.f32 %v5349, %v5350
  %v5352 = vsel %vm4185, %v5033, 0.0
  %v5353 = vsel %vm4185, %v5034, 0.0
  %v5354 = vadd.f32 %v5352, %v5353
  %v5355 = vsel %vm4185, %v5035, 0.0
  %v5356 = vadd.f32 %v5354, %v5355
  %v5357 = vsel %vm4185, %v5036, 0.0
  %v5358 = vadd.f32 %v5356, %v5357
  %v5359 = vsel %vm4185, %v5037, 0.0
  %v5360 = vadd.f32 %v5358, %v5359
  %v5361 = vsel %vm4185, %v5038, 0.0
  %v5362 = vadd.f32 %v5360, %v5361
  %v5363 = vsel %vm4185, %v5039, 0.0
  %v5364 = vadd.f32 %v5362, %v5363
  %v5365 = vsel %vm4185, %v5040, 0.0
  %v5366 = vadd.f32 %v5364, %v5365
  %v5367 = vsel %vm4185, %v5041, 0.0
  %v5368 = vsel %vm4185, %v5042, 0.0
  %v5369 = vadd.f32 %v5367, %v5368
  %v5370 = vsel %vm4185, %v5043, 0.0
  %v5371 = vadd.f32 %v5369, %v5370
  %v5372 = vsel %vm4185, %v5044, 0.0
  %v5373 = vadd.f32 %v5371, %v5372
  %v5374 = vsel %vm4185, %v5045, 0.0
  %v5375 = vadd.f32 %v5373, %v5374
  %v5376 = vsel %vm4185, %v5046, 0.0
  %v5377 = vadd.f32 %v5375, %v5376
  %v5378 = vsel %vm4185, %v5047, 0.0
  %v5379 = vadd.f32 %v5377, %v5378
  %v5380 = vsel %vm4185, %v5048, 0.0
  %v5381 = vadd.f32 %v5379, %v5380
  %v5382 = vsel %vm4185, %v5049, 0.0
  %v5383 = vsel %vm4185, %v5050, 0.0
  %v5384 = vadd.f32 %v5382, %v5383
  %v5385 = vsel %vm4185, %v5051, 0.0
  %v5386 = vadd.f32 %v5384, %v5385
  %v5387 = vsel %vm4185, %v5052, 0.0
  %v5388 = vadd.f32 %v5386, %v5387
  %v5389 = vsel %vm4185, %v5053, 0.0
  %v5390 = vadd.f32 %v5388, %v5389
  %v5391 = vsel %vm4185, %v5054, 0.0
  %v5392 = vadd.f32 %v5390, %v5391
  %v5393 = vsel %vm4185, %v5055, 0.0
  %v5394 = vadd.f32 %v5392, %v5393
  %v5395 = vsel %vm4185, %v5056, 0.0
  %v5396 = vadd.f32 %v5394, %v5395
  %v5397 = vsel %vm4185, %v5057, 0.0
  %v5398 = vsel %vm4185, %v5058, 0.0
  %v5399 = vadd.f32 %v5397, %v5398
  %v5400 = vsel %vm4185, %v5059, 0.0
  %v5401 = vadd.f32 %v5399, %v5400
  %v5402 = vsel %vm4185, %v5060, 0.0
  %v5403 = vadd.f32 %v5401, %v5402
  %v5404 = vsel %vm4185, %v5061, 0.0
  %v5405 = vadd.f32 %v5403, %v5404
  %v5406 = vsel %vm4185, %v5062, 0.0
  %v5407 = vadd.f32 %v5405, %v5406
  %v5408 = vsel %vm4185, %v5063, 0.0
  %v5409 = vadd.f32 %v5407, %v5408
  %v5410 = vsel %vm4185, %v5064, 0.0
  %v5411 = vadd.f32 %v5409, %v5410
  %v5412 = vsel %vm4185, %v5065, 0.0
  %v5413 = vsel %vm4185, %v5066, 0.0
  %v5414 = vadd.f32 %v5412, %v5413
  %v5415 = vsel %vm4185, %v5067, 0.0
  %v5416 = vadd.f32 %v5414, %v5415
  %v5417 = vsel %vm4185, %v5068, 0.0
  %v5418 = vadd.f32 %v5416, %v5417
  %v5419 = vsel %vm4185, %v5069, 0.0
  %v5420 = vadd.f32 %v5418, %v5419
  %v5421 = vsel %vm4185, %v5070, 0.0
  %v5422 = vadd.f32 %v5420, %v5421
  %v5423 = vsel %vm4185, %v5071, 0.0
  %v5424 = vadd.f32 %v5422, %v5423
  %v5425 = vsel %vm4185, %v5072, 0.0
  %v5426 = vadd.f32 %v5424, %v5425
  %v5427 = vsel %vm4185, %v5073, 0.0
  %v5428 = vsel %vm4185, %v5074, 0.0
  %v5429 = vadd.f32 %v5427, %v5428
  %v5430 = vsel %vm4185, %v5075, 0.0
  %v5431 = vadd.f32 %v5429, %v5430
  %v5432 = vsel %vm4185, %v5076, 0.0
  %v5433 = vadd.f32 %v5431, %v5432
  %v5434 = vsel %vm4185, %v5077, 0.0
  %v5435 = vadd.f32 %v5433, %v5434
  %v5436 = vsel %vm4185, %v5078, 0.0
  %v5437 = vadd.f32 %v5435, %v5436
  %v5438 = vsel %vm4185, %v5079, 0.0
  %v5439 = vadd.f32 %v5437, %v5438
  %v5440 = vsel %vm4185, %v5080, 0.0
  %v5441 = vadd.f32 %v5439, %v5440
  %v5442 = vsel %vm4185, %v5081, 0.0
  %v5443 = vsel %vm4185, %v5082, 0.0
  %v5444 = vadd.f32 %v5442, %v5443
  %v5445 = vsel %vm4185, %v5083, 0.0
  %v5446 = vadd.f32 %v5444, %v5445
  %v5447 = vsel %vm4185, %v5084, 0.0
  %v5448 = vadd.f32 %v5446, %v5447
  %v5449 = vsel %vm4185, %v5085, 0.0
  %v5450 = vadd.f32 %v5448, %v5449
  %v5451 = vsel %vm4185, %v5086, 0.0
  %v5452 = vadd.f32 %v5450, %v5451
  %v5453 = vsel %vm4185, %v5087, 0.0
  %v5454 = vadd.f32 %v5452, %v5453
  %v5455 = vsel %vm4185, %v5088, 0.0
  %v5456 = vadd.f32 %v5454, %v5455
  %v5457 = vsel %vm4185, %v5089, 0.0
  %v5458 = vsel %vm4185, %v5090, 0.0
  %v5459 = vadd.f32 %v5457, %v5458
  %v5460 = vsel %vm4185, %v5091, 0.0
  %v5461 = vadd.f32 %v5459, %v5460
  %v5462 = vsel %vm4185, %v5092, 0.0
  %v5463 = vadd.f32 %v5461, %v5462
  %v5464 = vsel %vm4185, %v5093, 0.0
  %v5465 = vadd.f32 %v5463, %v5464
  %v5466 = vsel %vm4185, %v5094, 0.0
  %v5467 = vadd.f32 %v5465, %v5466
  %v5468 = vsel %vm4185, %v5095, 0.0
  %v5469 = vadd.f32 %v5467, %v5468
  %v5470 = vsel %vm4185, %v5096, 0.0
  %v5471 = vadd.f32 %v5469, %v5470
  %v5472 = vsel %vm4185, %v5097, 0.0
  %v5473 = vsel %vm4185, %v5098, 0.0
  %v5474 = vadd.f32 %v5472, %v5473
  %v5475 = vsel %vm4185, %v5099, 0.0
  %v5476 = vadd.f32 %v5474, %v5475
  %v5477 = vsel %vm4185, %v5100, 0.0
  %v5478 = vadd.f32 %v5476, %v5477
  %v5479 = vsel %vm4185, %v5101, 0.0
  %v5480 = vadd.f32 %v5478, %v5479
  %v5481 = vsel %vm4185, %v5102, 0.0
  %v5482 = vadd.f32 %v5480, %v5481
  %v5483 = vsel %vm4185, %v5103, 0.0
  %v5484 = vadd.f32 %v5482, %v5483
  %v5485 = vsel %vm4185, %v5104, 0.0
  %v5486 = vadd.f32 %v5484, %v5485
  %v5487 = vsel %vm4185, %v5105, 0.0
  %v5488 = vsel %vm4185, %v5106, 0.0
  %v5489 = vadd.f32 %v5487, %v5488
  %v5490 = vsel %vm4185, %v5107, 0.0
  %v5491 = vadd.f32 %v5489, %v5490
  %v5492 = vsel %vm4185, %v5108, 0.0
  %v5493 = vadd.f32 %v5491, %v5492
  %v5494 = vsel %vm4185, %v5109, 0.0
  %v5495 = vadd.f32 %v5493, %v5494
  %v5496 = vsel %vm4185, %v5110, 0.0
  %v5497 = vadd.f32 %v5495, %v5496
  %v5498 = vsel %vm4185, %v5111, 0.0
  %v5499 = vadd.f32 %v5497, %v5498
  %v5500 = vsel %vm4185, %v5112, 0.0
  %v5501 = vadd.f32 %v5499, %v5500
  %v5502 = vsel %vm4185, %v5113, 0.0
  %v5503 = vsel %vm4185, %v5114, 0.0
  %v5504 = vadd.f32 %v5502, %v5503
  %v5505 = vsel %vm4185, %v5115, 0.0
  %v5506 = vadd.f32 %v5504, %v5505
  %v5507 = vsel %vm4185, %v5116, 0.0
  %v5508 = vadd.f32 %v5506, %v5507
  %v5509 = vsel %vm4185, %v5117, 0.0
  %v5510 = vadd.f32 %v5508, %v5509
  %v5511 = vsel %vm4185, %v5118, 0.0
  %v5512 = vadd.f32 %v5510, %v5511
  %v5513 = vsel %vm4185, %v5119, 0.0
  %v5514 = vadd.f32 %v5512, %v5513
  %v5515 = vsel %vm4185, %v5120, 0.0
  %v5516 = vadd.f32 %v5514, %v5515
  %v5517 = vsel %vm4185, %v5121, 0.0
  %v5518 = vsel %vm4185, %v5122, 0.0
  %v5519 = vadd.f32 %v5517, %v5518
  %v5520 = vsel %vm4185, %v5123, 0.0
  %v5521 = vadd.f32 %v5519, %v5520
  %v5522 = vsel %vm4185, %v5124, 0.0
  %v5523 = vadd.f32 %v5521, %v5522
  %v5524 = vsel %vm4185, %v5125, 0.0
  %v5525 = vadd.f32 %v5523, %v5524
  %v5526 = vsel %vm4185, %v5126, 0.0
  %v5527 = vadd.f32 %v5525, %v5526
  %v5528 = vsel %vm4185, %v5127, 0.0
  %v5529 = vadd.f32 %v5527, %v5528
  %v5530 = vsel %vm4185, %v5128, 0.0
  %v5531 = vadd.f32 %v5529, %v5530
  %v5532 = vsel %vm4185, %v5129, 0.0
  %v5533 = vsel %vm4185, %v5130, 0.0
  %v5534 = vadd.f32 %v5532, %v5533
  %v5535 = vsel %vm4185, %v5131, 0.0
  %v5536 = vadd.f32 %v5534, %v5535
  %v5537 = vsel %vm4185, %v5132, 0.0
  %v5538 = vadd.f32 %v5536, %v5537
  %v5539 = vsel %vm4185, %v5133, 0.0
  %v5540 = vadd.f32 %v5538, %v5539
  %v5541 = vsel %vm4185, %v5134, 0.0
  %v5542 = vadd.f32 %v5540, %v5541
  %v5543 = vsel %vm4185, %v5135, 0.0
  %v5544 = vadd.f32 %v5542, %v5543
  %v5545 = vsel %vm4185, %v5136, 0.0
  %v5546 = vadd.f32 %v5544, %v5545
  %v5547 = vsel %vm4185, %v5137, 0.0
  %v5548 = vsel %vm4185, %v5138, 0.0
  %v5549 = vadd.f32 %v5547, %v5548
  %v5550 = vsel %vm4185, %v5139, 0.0
  %v5551 = vadd.f32 %v5549, %v5550
  %v5552 = vsel %vm4185, %v5140, 0.0
  %v5553 = vadd.f32 %v5551, %v5552
  %v5554 = vsel %vm4185, %v5141, 0.0
  %v5555 = vadd.f32 %v5553, %v5554
  %v5556 = vsel %vm4185, %v5142, 0.0
  %v5557 = vadd.f32 %v5555, %v5556
  %v5558 = vsel %vm4185, %v5143, 0.0
  %v5559 = vadd.f32 %v5557, %v5558
  %v5560 = vsel %vm4185, %v5144, 0.0
  %v5561 = vadd.f32 %v5559, %v5560
  %v5562 = vsel %vm4185, %v5145, 0.0
  %v5563 = vsel %vm4185, %v5146, 0.0
  %v5564 = vadd.f32 %v5562, %v5563
  %v5565 = vsel %vm4185, %v5147, 0.0
  %v5566 = vadd.f32 %v5564, %v5565
  %v5567 = vsel %vm4185, %v5148, 0.0
  %v5568 = vadd.f32 %v5566, %v5567
  %v5569 = vsel %vm4185, %v5149, 0.0
  %v5570 = vadd.f32 %v5568, %v5569
  %v5571 = vsel %vm4185, %v5150, 0.0
  %v5572 = vadd.f32 %v5570, %v5571
  %v5573 = vsel %vm4185, %v5151, 0.0
  %v5574 = vadd.f32 %v5572, %v5573
  %v5575 = vsel %vm4185, %v5152, 0.0
  %v5576 = vadd.f32 %v5574, %v5575
  %v5577 = vsel %vm4185, %v5153, 0.0
  %v5578 = vsel %vm4185, %v5154, 0.0
  %v5579 = vadd.f32 %v5577, %v5578
  %v5580 = vsel %vm4185, %v5155, 0.0
  %v5581 = vadd.f32 %v5579, %v5580
  %v5582 = vsel %vm4185, %v5156, 0.0
  %v5583 = vadd.f32 %v5581, %v5582
  %v5584 = vsel %vm4185, %v5157, 0.0
  %v5585 = vadd.f32 %v5583, %v5584
  %v5586 = vsel %vm4185, %v5158, 0.0
  %v5587 = vadd.f32 %v5585, %v5586
  %v5588 = vsel %vm4185, %v5159, 0.0
  %v5589 = vadd.f32 %v5587, %v5588
  %v5590 = vsel %vm4185, %v5160, 0.0
  %v5591 = vadd.f32 %v5589, %v5590
  %v5592 = vsel %vm4185, %v5161, 0.0
  %v5593 = vsel %vm4185, %v5162, 0.0
  %v5594 = vadd.f32 %v5592, %v5593
  %v5595 = vsel %vm4185, %v5163, 0.0
  %v5596 = vadd.f32 %v5594, %v5595
  %v5597 = vsel %vm4185, %v5164, 0.0
  %v5598 = vadd.f32 %v5596, %v5597
  %v5599 = vsel %vm4185, %v5165, 0.0
  %v5600 = vadd.f32 %v5598, %v5599
  %v5601 = vsel %vm4185, %v5166, 0.0
  %v5602 = vadd.f32 %v5600, %v5601
  %v5603 = vsel %vm4185, %v5167, 0.0
  %v5604 = vadd.f32 %v5602, %v5603
  %v5605 = vsel %vm4185, %v5168, 0.0
  %v5606 = vadd.f32 %v5604, %v5605
  %v5607 = vsel %vm4185, %v5169, 0.0
  %v5608 = vsel %vm4185, %v5170, 0.0
  %v5609 = vadd.f32 %v5607, %v5608
  %v5610 = vsel %vm4185, %v5171, 0.0
  %v5611 = vadd.f32 %v5609, %v5610
  %v5612 = vsel %vm4185, %v5172, 0.0
  %v5613 = vadd.f32 %v5611, %v5612
  %v5614 = vsel %vm4185, %v5173, 0.0
  %v5615 = vadd.f32 %v5613, %v5614
  %v5616 = vsel %vm4185, %v5174, 0.0
  %v5617 = vadd.f32 %v5615, %v5616
  %v5618 = vsel %vm4185, %v5175, 0.0
  %v5619 = vadd.f32 %v5617, %v5618
  %v5620 = vsel %vm4185, %v5176, 0.0
  %v5621 = vadd.f32 %v5619, %v5620
  %v5622 = vsel %vm4185, %v5177, 0.0
  %v5623 = vsel %vm4185, %v5178, 0.0
  %v5624 = vadd.f32 %v5622, %v5623
  %v5625 = vsel %vm4185, %v5179, 0.0
  %v5626 = vadd.f32 %v5624, %v5625
  %v5627 = vsel %vm4185, %v5180, 0.0
  %v5628 = vadd.f32 %v5626, %v5627
  %v5629 = vsel %vm4185, %v5181, 0.0
  %v5630 = vadd.f32 %v5628, %v5629
  %v5631 = vsel %vm4185, %v5182, 0.0
  %v5632 = vadd.f32 %v5630, %v5631
  %v5633 = vsel %vm4185, %v5183, 0.0
  %v5634 = vadd.f32 %v5632, %v5633
  %v5635 = vsel %vm4185, %v5184, 0.0
  %v5636 = vadd.f32 %v5634, %v5635
  %v5637 = vsel %vm4185, %v5185, 0.0
  %v5638 = vsel %vm4185, %v5186, 0.0
  %v5639 = vadd.f32 %v5637, %v5638
  %v5640 = vsel %vm4185, %v5187, 0.0
  %v5641 = vadd.f32 %v5639, %v5640
  %v5642 = vsel %vm4185, %v5188, 0.0
  %v5643 = vadd.f32 %v5641, %v5642
  %v5644 = vsel %vm4185, %v5189, 0.0
  %v5645 = vadd.f32 %v5643, %v5644
  %v5646 = vsel %vm4185, %v5190, 0.0
  %v5647 = vadd.f32 %v5645, %v5646
  %v5648 = vsel %vm4185, %v5191, 0.0
  %v5649 = vadd.f32 %v5647, %v5648
  %v5650 = vsel %vm4185, %v5192, 0.0
  %v5651 = vadd.f32 %v5649, %v5650
  %v5652 = vsel %vm4185, %v5193, 0.0
  %v5653 = vsel %vm4185, %v5194, 0.0
  %v5654 = vadd.f32 %v5652, %v5653
  %v5655 = vsel %vm4185, %v5195, 0.0
  %v5656 = vadd.f32 %v5654, %v5655
  %v5657 = vsel %vm4185, %v5196, 0.0
  %v5658 = vadd.f32 %v5656, %v5657
  %v5659 = vsel %vm4185, %v5197, 0.0
  %v5660 = vadd.f32 %v5658, %v5659
  %v5661 = vsel %vm4185, %v5198, 0.0
  %v5662 = vadd.f32 %v5660, %v5661
  %v5663 = vsel %vm4185, %v5199, 0.0
  %v5664 = vadd.f32 %v5662, %v5663
  %v5665 = vsel %vm4185, %v5200, 0.0
  %v5666 = vadd.f32 %v5664, %v5665
  %v5667 = vsel %vm4185, %v5201, 0.0
  %v5668 = vsel %vm4185, %v5202, 0.0
  %v5669 = vadd.f32 %v5667, %v5668
  %v5670 = vsel %vm4185, %v5203, 0.0
  %v5671 = vadd.f32 %v5669, %v5670
  %v5672 = vsel %vm4185, %v5204, 0.0
  %v5673 = vadd.f32 %v5671, %v5672
  %v5674 = vsel %vm4185, %v5205, 0.0
  %v5675 = vadd.f32 %v5673, %v5674
  %v5676 = vsel %vm4185, %v5206, 0.0
  %v5677 = vadd.f32 %v5675, %v5676
  %v5678 = vsel %vm4185, %v5207, 0.0
  %v5679 = vadd.f32 %v5677, %v5678
  %v5680 = vsel %vm4185, %v5208, 0.0
  %v5681 = vadd.f32 %v5679, %v5680
  %v5682 = vsel %vm4185, %v5209, 0.0
  %v5683 = vsel %vm4185, %v5210, 0.0
  %v5684 = vadd.f32 %v5682, %v5683
  %v5685 = vsel %vm4185, %v5211, 0.0
  %v5686 = vadd.f32 %v5684, %v5685
  %v5687 = vsel %vm4185, %v5212, 0.0
  %v5688 = vadd.f32 %v5686, %v5687
  %v5689 = vsel %vm4185, %v5213, 0.0
  %v5690 = vadd.f32 %v5688, %v5689
  %v5691 = vsel %vm4185, %v5214, 0.0
  %v5692 = vadd.f32 %v5690, %v5691
  %v5693 = vsel %vm4185, %v5215, 0.0
  %v5694 = vadd.f32 %v5692, %v5693
  %v5695 = vsel %vm4185, %v5216, 0.0
  %v5696 = vadd.f32 %v5694, %v5695
  %v5697 = vmul.f32 %v5231, 0.14285715
  %v5698 = vmul.f32 %v5246, 0.14285715
  %v5699 = vmul.f32 %v5261, 0.14285715
  %v5700 = vmul.f32 %v5276, 0.14285715
  %v5701 = vmul.f32 %v5291, 0.14285715
  %v5702 = vmul.f32 %v5306, 0.14285715
  %v5703 = vmul.f32 %v5321, 0.14285715
  %v5704 = vmul.f32 %v5336, 0.14285715
  %v5705 = vmul.f32 %v5351, 0.14285715
  %v5706 = vmul.f32 %v5366, 0.14285715
  %v5707 = vmul.f32 %v5381, 0.14285715
  %v5708 = vmul.f32 %v5396, 0.14285715
  %v5709 = vmul.f32 %v5411, 0.14285715
  %v5710 = vmul.f32 %v5426, 0.14285715
  %v5711 = vmul.f32 %v5441, 0.14285715
  %v5712 = vmul.f32 %v5456, 0.14285715
  %v5713 = vmul.f32 %v5471, 0.14285715
  %v5714 = vmul.f32 %v5486, 0.14285715
  %v5715 = vmul.f32 %v5501, 0.14285715
  %v5716 = vmul.f32 %v5516, 0.14285715
  %v5717 = vmul.f32 %v5531, 0.14285715
  %v5718 = vmul.f32 %v5546, 0.14285715
  %v5719 = vmul.f32 %v5561, 0.14285715
  %v5720 = vmul.f32 %v5576, 0.14285715
  %v5721 = vmul.f32 %v5591, 0.14285715
  %v5722 = vmul.f32 %v5606, 0.14285715
  %v5723 = vmul.f32 %v5621, 0.14285715
  %v5724 = vmul.f32 %v5636, 0.14285715
  %v5725 = vmul.f32 %v5651, 0.14285715
  %v5726 = vmul.f32 %v5666, 0.14285715
  %v5727 = vmul.f32 %v5681, 0.14285715
  %v5728 = vmul.f32 %v5696, 0.14285715
  %v5729 = vrsqrt.pop %v5697
  %v5730 = vmul.f32 %v5729, %v5697
  %v5731 = vmul.f32 %v5730, %v5729
  %v5732 = vmul.f32 0.5, %v5731
  %v5733 = vsub.f32 1.5, %v5732
  %v5734 = vmul.f32 %v5729, %v5733
  %v5735 = vmul.f32 %v5697, %v5734
  %vm5736 = vcmp.eq.f32.partialorder %v5697, inf
  %v5737 = vsel %vm5736, %v5697, %v5735
  %vm5738 = vcmp.eq.f32.partialorder %v5697, 0.0
  %v5739 = vand.u32 %v5697, 2147483648
  %v5740 = vsel %vm5738, %v5739, %v5737
  %v5741 = vrsqrt.pop %v5698
  %v5742 = vmul.f32 %v5741, %v5698
  %v5743 = vmul.f32 %v5742, %v5741
  %v5744 = vmul.f32 0.5, %v5743
  %v5745 = vsub.f32 1.5, %v5744
  %v5746 = vmul.f32 %v5741, %v5745
  %v5747 = vmul.f32 %v5698, %v5746
  %vm5748 = vcmp.eq.f32.partialorder %v5698, inf
  %v5749 = vsel %vm5748, %v5698, %v5747
  %vm5750 = vcmp.eq.f32.partialorder %v5698, 0.0
  %v5751 = vand.u32 %v5698, 2147483648
  %v5752 = vsel %vm5750, %v5751, %v5749
  %v5753 = vrsqrt.pop %v5699
  %v5754 = vmul.f32 %v5753, %v5699
  %v5755 = vmul.f32 %v5754, %v5753
  %v5756 = vmul.f32 0.5, %v5755
  %v5757 = vsub.f32 1.5, %v5756
  %v5758 = vmul.f32 %v5753, %v5757
  %v5759 = vmul.f32 %v5699, %v5758
  %vm5760 = vcmp.eq.f32.partialorder %v5699, inf
  %v5761 = vsel %vm5760, %v5699, %v5759
  %vm5762 = vcmp.eq.f32.partialorder %v5699, 0.0
  %v5763 = vand.u32 %v5699, 2147483648
  %v5764 = vsel %vm5762, %v5763, %v5761
  %v5765 = vrsqrt.pop %v5700
  %v5766 = vmul.f32 %v5765, %v5700
  %v5767 = vmul.f32 %v5766, %v5765
  %v5768 = vmul.f32 0.5, %v5767
  %v5769 = vsub.f32 1.5, %v5768
  %v5770 = vmul.f32 %v5765, %v5769
  %v5771 = vmul.f32 %v5700, %v5770
  %vm5772 = vcmp.eq.f32.partialorder %v5700, inf
  %v5773 = vsel %vm5772, %v5700, %v5771
  %vm5774 = vcmp.eq.f32.partialorder %v5700, 0.0
  %v5775 = vand.u32 %v5700, 2147483648
  %v5776 = vsel %vm5774, %v5775, %v5773
  %v5777 = vrsqrt.pop %v5701
  %v5778 = vmul.f32 %v5777, %v5701
  %v5779 = vmul.f32 %v5778, %v5777
  %v5780 = vmul.f32 0.5, %v5779
  %v5781 = vsub.f32 1.5, %v5780
  %v5782 = vmul.f32 %v5777, %v5781
  %v5783 = vmul.f32 %v5701, %v5782
  %vm5784 = vcmp.eq.f32.partialorder %v5701, inf
  %v5785 = vsel %vm5784, %v5701, %v5783
  %vm5786 = vcmp.eq.f32.partialorder %v5701, 0.0
  %v5787 = vand.u32 %v5701, 2147483648
  %v5788 = vsel %vm5786, %v5787, %v5785
  %v5789 = vrsqrt.pop %v5702
  %v5790 = vmul.f32 %v5789, %v5702
  %v5791 = vmul.f32 %v5790, %v5789
  %v5792 = vmul.f32 0.5, %v5791
  %v5793 = vsub.f32 1.5, %v5792
  %v5794 = vmul.f32 %v5789, %v5793
  %v5795 = vmul.f32 %v5702, %v5794
  %vm5796 = vcmp.eq.f32.partialorder %v5702, inf
  %v5797 = vsel %vm5796, %v5702, %v5795
  %vm5798 = vcmp.eq.f32.partialorder %v5702, 0.0
  %v5799 = vand.u32 %v5702, 2147483648
  %v5800 = vsel %vm5798, %v5799, %v5797
  %v5801 = vrsqrt.pop %v5703
  %v5802 = vmul.f32 %v5801, %v5703
  %v5803 = vmul.f32 %v5802, %v5801
  %v5804 = vmul.f32 0.5, %v5803
  %v5805 = vsub.f32 1.5, %v5804
  %v5806 = vmul.f32 %v5801, %v5805
  %v5807 = vmul.f32 %v5703, %v5806
  %vm5808 = vcmp.eq.f32.partialorder %v5703, inf
  %v5809 = vsel %vm5808, %v5703, %v5807
  %vm5810 = vcmp.eq.f32.partialorder %v5703, 0.0
  %v5811 = vand.u32 %v5703, 2147483648
  %v5812 = vsel %vm5810, %v5811, %v5809
  %v5813 = vrsqrt.pop %v5704
  %v5814 = vmul.f32 %v5813, %v5704
  %v5815 = vmul.f32 %v5814, %v5813
  %v5816 = vmul.f32 0.5, %v5815
  %v5817 = vsub.f32 1.5, %v5816
  %v5818 = vmul.f32 %v5813, %v5817
  %v5819 = vmul.f32 %v5704, %v5818
  %vm5820 = vcmp.eq.f32.partialorder %v5704, inf
  %v5821 = vsel %vm5820, %v5704, %v5819
  %vm5822 = vcmp.eq.f32.partialorder %v5704, 0.0
  %v5823 = vand.u32 %v5704, 2147483648
  %v5824 = vsel %vm5822, %v5823, %v5821
  %v5825 = vrsqrt.pop %v5705
  %v5826 = vmul.f32 %v5825, %v5705
  %v5827 = vmul.f32 %v5826, %v5825
  %v5828 = vmul.f32 0.5, %v5827
  %v5829 = vsub.f32 1.5, %v5828
  %v5830 = vmul.f32 %v5825, %v5829
  %v5831 = vmul.f32 %v5705, %v5830
  %vm5832 = vcmp.eq.f32.partialorder %v5705, inf
  %v5833 = vsel %vm5832, %v5705, %v5831
  %vm5834 = vcmp.eq.f32.partialorder %v5705, 0.0
  %v5835 = vand.u32 %v5705, 2147483648
  %v5836 = vsel %vm5834, %v5835, %v5833
  %v5837 = vrsqrt.pop %v5706
  %v5838 = vmul.f32 %v5837, %v5706
  %v5839 = vmul.f32 %v5838, %v5837
  %v5840 = vmul.f32 0.5, %v5839
  %v5841 = vsub.f32 1.5, %v5840
  %v5842 = vmul.f32 %v5837, %v5841
  %v5843 = vmul.f32 %v5706, %v5842
  %vm5844 = vcmp.eq.f32.partialorder %v5706, inf
  %v5845 = vsel %vm5844, %v5706, %v5843
  %vm5846 = vcmp.eq.f32.partialorder %v5706, 0.0
  %v5847 = vand.u32 %v5706, 2147483648
  %v5848 = vsel %vm5846, %v5847, %v5845
  %v5849 = vrsqrt.pop %v5707
  %v5850 = vmul.f32 %v5849, %v5707
  %v5851 = vmul.f32 %v5850, %v5849
  %v5852 = vmul.f32 0.5, %v5851
  %v5853 = vsub.f32 1.5, %v5852
  %v5854 = vmul.f32 %v5849, %v5853
  %v5855 = vmul.f32 %v5707, %v5854
  %vm5856 = vcmp.eq.f32.partialorder %v5707, inf
  %v5857 = vsel %vm5856, %v5707, %v5855
  %vm5858 = vcmp.eq.f32.partialorder %v5707, 0.0
  %v5859 = vand.u32 %v5707, 2147483648
  %v5860 = vsel %vm5858, %v5859, %v5857
  %v5861 = vrsqrt.pop %v5708
  %v5862 = vmul.f32 %v5861, %v5708
  %v5863 = vmul.f32 %v5862, %v5861
  %v5864 = vmul.f32 0.5, %v5863
  %v5865 = vsub.f32 1.5, %v5864
  %v5866 = vmul.f32 %v5861, %v5865
  %v5867 = vmul.f32 %v5708, %v5866
  %vm5868 = vcmp.eq.f32.partialorder %v5708, inf
  %v5869 = vsel %vm5868, %v5708, %v5867
  %vm5870 = vcmp.eq.f32.partialorder %v5708, 0.0
  %v5871 = vand.u32 %v5708, 2147483648
  %v5872 = vsel %vm5870, %v5871, %v5869
  %v5873 = vrsqrt.pop %v5709
  %v5874 = vmul.f32 %v5873, %v5709
  %v5875 = vmul.f32 %v5874, %v5873
  %v5876 = vmul.f32 0.5, %v5875
  %v5877 = vsub.f32 1.5, %v5876
  %v5878 = vmul.f32 %v5873, %v5877
  %v5879 = vmul.f32 %v5709, %v5878
  %vm5880 = vcmp.eq.f32.partialorder %v5709, inf
  %v5881 = vsel %vm5880, %v5709, %v5879
  %vm5882 = vcmp.eq.f32.partialorder %v5709, 0.0
  %v5883 = vand.u32 %v5709, 2147483648
  %v5884 = vsel %vm5882, %v5883, %v5881
  %v5885 = vrsqrt.pop %v5710
  %v5886 = vmul.f32 %v5885, %v5710
  %v5887 = vmul.f32 %v5886, %v5885
  %v5888 = vmul.f32 0.5, %v5887
  %v5889 = vsub.f32 1.5, %v5888
  %v5890 = vmul.f32 %v5885, %v5889
  %v5891 = vmul.f32 %v5710, %v5890
  %vm5892 = vcmp.eq.f32.partialorder %v5710, inf
  %v5893 = vsel %vm5892, %v5710, %v5891
  %vm5894 = vcmp.eq.f32.partialorder %v5710, 0.0
  %v5895 = vand.u32 %v5710, 2147483648
  %v5896 = vsel %vm5894, %v5895, %v5893
  %v5897 = vrsqrt.pop %v5711
  %v5898 = vmul.f32 %v5897, %v5711
  %v5899 = vmul.f32 %v5898, %v5897
  %v5900 = vmul.f32 0.5, %v5899
  %v5901 = vsub.f32 1.5, %v5900
  %v5902 = vmul.f32 %v5897, %v5901
  %v5903 = vmul.f32 %v5711, %v5902
  %vm5904 = vcmp.eq.f32.partialorder %v5711, inf
  %v5905 = vsel %vm5904, %v5711, %v5903
  %vm5906 = vcmp.eq.f32.partialorder %v5711, 0.0
  %v5907 = vand.u32 %v5711, 2147483648
  %v5908 = vsel %vm5906, %v5907, %v5905
  %v5909 = vrsqrt.pop %v5712
  %v5910 = vmul.f32 %v5909, %v5712
  %v5911 = vmul.f32 %v5910, %v5909
  %v5912 = vmul.f32 0.5, %v5911
  %v5913 = vsub.f32 1.5, %v5912
  %v5914 = vmul.f32 %v5909, %v5913
  %v5915 = vmul.f32 %v5712, %v5914
  %vm5916 = vcmp.eq.f32.partialorder %v5712, inf
  %v5917 = vsel %vm5916, %v5712, %v5915
  %vm5918 = vcmp.eq.f32.partialorder %v5712, 0.0
  %v5919 = vand.u32 %v5712, 2147483648
  %v5920 = vsel %vm5918, %v5919, %v5917
  %v5921 = vrsqrt.pop %v5713
  %v5922 = vmul.f32 %v5921, %v5713
  %v5923 = vmul.f32 %v5922, %v5921
  %v5924 = vmul.f32 0.5, %v5923
  %v5925 = vsub.f32 1.5, %v5924
  %v5926 = vmul.f32 %v5921, %v5925
  %v5927 = vmul.f32 %v5713, %v5926
  %vm5928 = vcmp.eq.f32.partialorder %v5713, inf
  %v5929 = vsel %vm5928, %v5713, %v5927
  %vm5930 = vcmp.eq.f32.partialorder %v5713, 0.0
  %v5931 = vand.u32 %v5713, 2147483648
  %v5932 = vsel %vm5930, %v5931, %v5929
  %v5933 = vrsqrt.pop %v5714
  %v5934 = vmul.f32 %v5933, %v5714
  %v5935 = vmul.f32 %v5934, %v5933
  %v5936 = vmul.f32 0.5, %v5935
  %v5937 = vsub.f32 1.5, %v5936
  %v5938 = vmul.f32 %v5933, %v5937
  %v5939 = vmul.f32 %v5714, %v5938
  %vm5940 = vcmp.eq.f32.partialorder %v5714, inf
  %v5941 = vsel %vm5940, %v5714, %v5939
  %vm5942 = vcmp.eq.f32.partialorder %v5714, 0.0
  %v5943 = vand.u32 %v5714, 2147483648
  %v5944 = vsel %vm5942, %v5943, %v5941
  %v5945 = vrsqrt.pop %v5715
  %v5946 = vmul.f32 %v5945, %v5715
  %v5947 = vmul.f32 %v5946, %v5945
  %v5948 = vmul.f32 0.5, %v5947
  %v5949 = vsub.f32 1.5, %v5948
  %v5950 = vmul.f32 %v5945, %v5949
  %v5951 = vmul.f32 %v5715, %v5950
  %vm5952 = vcmp.eq.f32.partialorder %v5715, inf
  %v5953 = vsel %vm5952, %v5715, %v5951
  %vm5954 = vcmp.eq.f32.partialorder %v5715, 0.0
  %v5955 = vand.u32 %v5715, 2147483648
  %v5956 = vsel %vm5954, %v5955, %v5953
  %v5957 = vrsqrt.pop %v5716
  %v5958 = vmul.f32 %v5957, %v5716
  %v5959 = vmul.f32 %v5958, %v5957
  %v5960 = vmul.f32 0.5, %v5959
  %v5961 = vsub.f32 1.5, %v5960
  %v5962 = vmul.f32 %v5957, %v5961
  %v5963 = vmul.f32 %v5716, %v5962
  %vm5964 = vcmp.eq.f32.partialorder %v5716, inf
  %v5965 = vsel %vm5964, %v5716, %v5963
  %vm5966 = vcmp.eq.f32.partialorder %v5716, 0.0
  %v5967 = vand.u32 %v5716, 2147483648
  %v5968 = vsel %vm5966, %v5967, %v5965
  %v5969 = vrsqrt.pop %v5717
  %v5970 = vmul.f32 %v5969, %v5717
  %v5971 = vmul.f32 %v5970, %v5969
  %v5972 = vmul.f32 0.5, %v5971
  %v5973 = vsub.f32 1.5, %v5972
  %v5974 = vmul.f32 %v5969, %v5973
  %v5975 = vmul.f32 %v5717, %v5974
  %vm5976 = vcmp.eq.f32.partialorder %v5717, inf
  %v5977 = vsel %vm5976, %v5717, %v5975
  %vm5978 = vcmp.eq.f32.partialorder %v5717, 0.0
  %v5979 = vand.u32 %v5717, 2147483648
  %v5980 = vsel %vm5978, %v5979, %v5977
  %v5981 = vrsqrt.pop %v5718
  %v5982 = vmul.f32 %v5981, %v5718
  %v5983 = vmul.f32 %v5982, %v5981
  %v5984 = vmul.f32 0.5, %v5983
  %v5985 = vsub.f32 1.5, %v5984
  %v5986 = vmul.f32 %v5981, %v5985
  %v5987 = vmul.f32 %v5718, %v5986
  %vm5988 = vcmp.eq.f32.partialorder %v5718, inf
  %v5989 = vsel %vm5988, %v5718, %v5987
  %vm5990 = vcmp.eq.f32.partialorder %v5718, 0.0
  %v5991 = vand.u32 %v5718, 2147483648
  %v5992 = vsel %vm5990, %v5991, %v5989
  %v5993 = vrsqrt.pop %v5719
  %v5994 = vmul.f32 %v5993, %v5719
  %v5995 = vmul.f32 %v5994, %v5993
  %v5996 = vmul.f32 0.5, %v5995
  %v5997 = vsub.f32 1.5, %v5996
  %v5998 = vmul.f32 %v5993, %v5997
  %v5999 = vmul.f32 %v5719, %v5998
  %vm6000 = vcmp.eq.f32.partialorder %v5719, inf
  %v6001 = vsel %vm6000, %v5719, %v5999
  %vm6002 = vcmp.eq.f32.partialorder %v5719, 0.0
  %v6003 = vand.u32 %v5719, 2147483648
  %v6004 = vsel %vm6002, %v6003, %v6001
  %v6005 = vrsqrt.pop %v5720
  %v6006 = vmul.f32 %v6005, %v5720
  %v6007 = vmul.f32 %v6006, %v6005
  %v6008 = vmul.f32 0.5, %v6007
  %v6009 = vsub.f32 1.5, %v6008
  %v6010 = vmul.f32 %v6005, %v6009
  %v6011 = vmul.f32 %v5720, %v6010
  %vm6012 = vcmp.eq.f32.partialorder %v5720, inf
  %v6013 = vsel %vm6012, %v5720, %v6011
  %vm6014 = vcmp.eq.f32.partialorder %v5720, 0.0
  %v6015 = vand.u32 %v5720, 2147483648
  %v6016 = vsel %vm6014, %v6015, %v6013
  %v6017 = vrsqrt.pop %v5721
  %v6018 = vmul.f32 %v6017, %v5721
  %v6019 = vmul.f32 %v6018, %v6017
  %v6020 = vmul.f32 0.5, %v6019
  %v6021 = vsub.f32 1.5, %v6020
  %v6022 = vmul.f32 %v6017, %v6021
  %v6023 = vmul.f32 %v5721, %v6022
  %vm6024 = vcmp.eq.f32.partialorder %v5721, inf
  %v6025 = vsel %vm6024, %v5721, %v6023
  %vm6026 = vcmp.eq.f32.partialorder %v5721, 0.0
  %v6027 = vand.u32 %v5721, 2147483648
  %v6028 = vsel %vm6026, %v6027, %v6025
  %v6029 = vrsqrt.pop %v5722
  %v6030 = vmul.f32 %v6029, %v5722
  %v6031 = vmul.f32 %v6030, %v6029
  %v6032 = vmul.f32 0.5, %v6031
  %v6033 = vsub.f32 1.5, %v6032
  %v6034 = vmul.f32 %v6029, %v6033
  %v6035 = vmul.f32 %v5722, %v6034
  %vm6036 = vcmp.eq.f32.partialorder %v5722, inf
  %v6037 = vsel %vm6036, %v5722, %v6035
  %vm6038 = vcmp.eq.f32.partialorder %v5722, 0.0
  %v6039 = vand.u32 %v5722, 2147483648
  %v6040 = vsel %vm6038, %v6039, %v6037
  %v6041 = vrsqrt.pop %v5723
  %v6042 = vmul.f32 %v6041, %v5723
  %v6043 = vmul.f32 %v6042, %v6041
  %v6044 = vmul.f32 0.5, %v6043
  %v6045 = vsub.f32 1.5, %v6044
  %v6046 = vmul.f32 %v6041, %v6045
  %v6047 = vmul.f32 %v5723, %v6046
  %vm6048 = vcmp.eq.f32.partialorder %v5723, inf
  %v6049 = vsel %vm6048, %v5723, %v6047
  %vm6050 = vcmp.eq.f32.partialorder %v5723, 0.0
  %v6051 = vand.u32 %v5723, 2147483648
  %v6052 = vsel %vm6050, %v6051, %v6049
  %v6053 = vrsqrt.pop %v5724
  %v6054 = vmul.f32 %v6053, %v5724
  %v6055 = vmul.f32 %v6054, %v6053
  %v6056 = vmul.f32 0.5, %v6055
  %v6057 = vsub.f32 1.5, %v6056
  %v6058 = vmul.f32 %v6053, %v6057
  %v6059 = vmul.f32 %v5724, %v6058
  %vm6060 = vcmp.eq.f32.partialorder %v5724, inf
  %v6061 = vsel %vm6060, %v5724, %v6059
  %vm6062 = vcmp.eq.f32.partialorder %v5724, 0.0
  %v6063 = vand.u32 %v5724, 2147483648
  %v6064 = vsel %vm6062, %v6063, %v6061
  %v6065 = vrsqrt.pop %v5725
  %v6066 = vmul.f32 %v6065, %v5725
  %v6067 = vmul.f32 %v6066, %v6065
  %v6068 = vmul.f32 0.5, %v6067
  %v6069 = vsub.f32 1.5, %v6068
  %v6070 = vmul.f32 %v6065, %v6069
  %v6071 = vmul.f32 %v5725, %v6070
  %vm6072 = vcmp.eq.f32.partialorder %v5725, inf
  %v6073 = vsel %vm6072, %v5725, %v6071
  %vm6074 = vcmp.eq.f32.partialorder %v5725, 0.0
  %v6075 = vand.u32 %v5725, 2147483648
  %v6076 = vsel %vm6074, %v6075, %v6073
  %v6077 = vrsqrt.pop %v5726
  %v6078 = vmul.f32 %v6077, %v5726
  %v6079 = vmul.f32 %v6078, %v6077
  %v6080 = vmul.f32 0.5, %v6079
  %v6081 = vsub.f32 1.5, %v6080
  %v6082 = vmul.f32 %v6077, %v6081
  %v6083 = vmul.f32 %v5726, %v6082
  %vm6084 = vcmp.eq.f32.partialorder %v5726, inf
  %v6085 = vsel %vm6084, %v5726, %v6083
  %vm6086 = vcmp.eq.f32.partialorder %v5726, 0.0
  %v6087 = vand.u32 %v5726, 2147483648
  %v6088 = vsel %vm6086, %v6087, %v6085
  %v6089 = vrsqrt.pop %v5727
  %v6090 = vmul.f32 %v6089, %v5727
  %v6091 = vmul.f32 %v6090, %v6089
  %v6092 = vmul.f32 0.5, %v6091
  %v6093 = vsub.f32 1.5, %v6092
  %v6094 = vmul.f32 %v6089, %v6093
  %v6095 = vmul.f32 %v5727, %v6094
  %vm6096 = vcmp.eq.f32.partialorder %v5727, inf
  %v6097 = vsel %vm6096, %v5727, %v6095
  %vm6098 = vcmp.eq.f32.partialorder %v5727, 0.0
  %v6099 = vand.u32 %v5727, 2147483648
  %v6100 = vsel %vm6098, %v6099, %v6097
  %v6101 = vrsqrt.pop %v5728
  %v6102 = vmul.f32 %v6101, %v5728
  %v6103 = vmul.f32 %v6102, %v6101
  %v6104 = vmul.f32 0.5, %v6103
  %v6105 = vsub.f32 1.5, %v6104
  %v6106 = vmul.f32 %v6101, %v6105
  %v6107 = vmul.f32 %v5728, %v6106
  %vm6108 = vcmp.eq.f32.partialorder %v5728, inf
  %v6109 = vsel %vm6108, %v5728, %v6107
  %vm6110 = vcmp.eq.f32.partialorder %v5728, 0.0
  %v6111 = vand.u32 %v5728, 2147483648
  %v6112 = vsel %vm6110, %v6111, %v6109
  %v6113 = vsel %vm4185, %v3894, -inf
  %v6114 = vsel %vm4185, %v3895, -inf
  %v6115 = vmax.f32 %v6113, %v6114
  %v6116 = vsel %vm4185, %v3896, -inf
  %v6117 = vmax.f32 %v6115, %v6116
  %v6118 = vsel %vm4185, %v3897, -inf
  %v6119 = vmax.f32 %v6117, %v6118
  %v6120 = vsel %vm4185, %v3898, -inf
  %v6121 = vmax.f32 %v6119, %v6120
  %v6122 = vsel %vm4185, %v3899, -inf
  %v6123 = vmax.f32 %v6121, %v6122
  %v6124 = vsel %vm4185, %v3900, -inf
  %v6125 = vmax.f32 %v6123, %v6124
  %v6126 = vsel %vm4185, %v3901, -inf
  %v6127 = vmax.f32 %v6125, %v6126
  %v6128 = vsel %vm4185, %v3902, -inf
  %v6129 = vsel %vm4185, %v3903, -inf
  %v6130 = vmax.f32 %v6128, %v6129
  %v6131 = vsel %vm4185, %v3904, -inf
  %v6132 = vmax.f32 %v6130, %v6131
  %v6133 = vsel %vm4185, %v3905, -inf
  %v6134 = vmax.f32 %v6132, %v6133
  %v6135 = vsel %vm4185, %v3906, -inf
  %v6136 = vmax.f32 %v6134, %v6135
  %v6137 = vsel %vm4185, %v3907, -inf
  %v6138 = vmax.f32 %v6136, %v6137
  %v6139 = vsel %vm4185, %v3908, -inf
  %v6140 = vmax.f32 %v6138, %v6139
  %v6141 = vsel %vm4185, %v3909, -inf
  %v6142 = vmax.f32 %v6140, %v6141
  %v6143 = vsel %vm4185, %v3910, -inf
  %v6144 = vsel %vm4185, %v3911, -inf
  %v6145 = vmax.f32 %v6143, %v6144
  %v6146 = vsel %vm4185, %v3912, -inf
  %v6147 = vmax.f32 %v6145, %v6146
  %v6148 = vsel %vm4185, %v3913, -inf
  %v6149 = vmax.f32 %v6147, %v6148
  %v6150 = vsel %vm4185, %v3914, -inf
  %v6151 = vmax.f32 %v6149, %v6150
  %v6152 = vsel %vm4185, %v3915, -inf
  %v6153 = vmax.f32 %v6151, %v6152
  %v6154 = vsel %vm4185, %v3916, -inf
  %v6155 = vmax.f32 %v6153, %v6154
  %v6156 = vsel %vm4185, %v3917, -inf
  %v6157 = vmax.f32 %v6155, %v6156
  %v6158 = vsel %vm4185, %v3918, -inf
  %v6159 = vsel %vm4185, %v3919, -inf
  %v6160 = vmax.f32 %v6158, %v6159
  %v6161 = vsel %vm4185, %v3920, -inf
  %v6162 = vmax.f32 %v6160, %v6161
  %v6163 = vsel %vm4185, %v3921, -inf
  %v6164 = vmax.f32 %v6162, %v6163
  %v6165 = vsel %vm4185, %v3922, -inf
  %v6166 = vmax.f32 %v6164, %v6165
  %v6167 = vsel %vm4185, %v3923, -inf
  %v6168 = vmax.f32 %v6166, %v6167
  %v6169 = vsel %vm4185, %v3924, -inf
  %v6170 = vmax.f32 %v6168, %v6169
  %v6171 = vsel %vm4185, %v3925, -inf
  %v6172 = vmax.f32 %v6170, %v6171
  %v6173 = vsel %vm4185, %v3926, -inf
  %v6174 = vsel %vm4185, %v3927, -inf
  %v6175 = vmax.f32 %v6173, %v6174
  %v6176 = vsel %vm4185, %v3928, -inf
  %v6177 = vmax.f32 %v6175, %v6176
  %v6178 = vsel %vm4185, %v3929, -inf
  %v6179 = vmax.f32 %v6177, %v6178
  %v6180 = vsel %vm4185, %v3930, -inf
  %v6181 = vmax.f32 %v6179, %v6180
  %v6182 = vsel %vm4185, %v3931, -inf
  %v6183 = vmax.f32 %v6181, %v6182
  %v6184 = vsel %vm4185, %v3932, -inf
  %v6185 = vmax.f32 %v6183, %v6184
  %v6186 = vsel %vm4185, %v3933, -inf
  %v6187 = vmax.f32 %v6185, %v6186
  %v6188 = vsel %vm4185, %v3934, -inf
  %v6189 = vsel %vm4185, %v3935, -inf
  %v6190 = vmax.f32 %v6188, %v6189
  %v6191 = vsel %vm4185, %v3936, -inf
  %v6192 = vmax.f32 %v6190, %v6191
  %v6193 = vsel %vm4185, %v3937, -inf
  %v6194 = vmax.f32 %v6192, %v6193
  %v6195 = vsel %vm4185, %v3938, -inf
  %v6196 = vmax.f32 %v6194, %v6195
  %v6197 = vsel %vm4185, %v3939, -inf
  %v6198 = vmax.f32 %v6196, %v6197
  %v6199 = vsel %vm4185, %v3940, -inf
  %v6200 = vmax.f32 %v6198, %v6199
  %v6201 = vsel %vm4185, %v3941, -inf
  %v6202 = vmax.f32 %v6200, %v6201
  %v6203 = vsel %vm4185, %v3942, -inf
  %v6204 = vsel %vm4185, %v3943, -inf
  %v6205 = vmax.f32 %v6203, %v6204
  %v6206 = vsel %vm4185, %v3944, -inf
  %v6207 = vmax.f32 %v6205, %v6206
  %v6208 = vsel %vm4185, %v3945, -inf
  %v6209 = vmax.f32 %v6207, %v6208
  %v6210 = vsel %vm4185, %v3946, -inf
  %v6211 = vmax.f32 %v6209, %v6210
  %v6212 = vsel %vm4185, %v3947, -inf
  %v6213 = vmax.f32 %v6211, %v6212
  %v6214 = vsel %vm4185, %v3948, -inf
  %v6215 = vmax.f32 %v6213, %v6214
  %v6216 = vsel %vm4185, %v3949, -inf
  %v6217 = vmax.f32 %v6215, %v6216
  %v6218 = vsel %vm4185, %v3950, -inf
  %v6219 = vsel %vm4185, %v3951, -inf
  %v6220 = vmax.f32 %v6218, %v6219
  %v6221 = vsel %vm4185, %v3952, -inf
  %v6222 = vmax.f32 %v6220, %v6221
  %v6223 = vsel %vm4185, %v3953, -inf
  %v6224 = vmax.f32 %v6222, %v6223
  %v6225 = vsel %vm4185, %v3954, -inf
  %v6226 = vmax.f32 %v6224, %v6225
  %v6227 = vsel %vm4185, %v3955, -inf
  %v6228 = vmax.f32 %v6226, %v6227
  %v6229 = vsel %vm4185, %v3956, -inf
  %v6230 = vmax.f32 %v6228, %v6229
  %v6231 = vsel %vm4185, %v3957, -inf
  %v6232 = vmax.f32 %v6230, %v6231
  %v6233 = vsel %vm4185, %v3958, -inf
  %v6234 = vsel %vm4185, %v3959, -inf
  %v6235 = vmax.f32 %v6233, %v6234
  %v6236 = vsel %vm4185, %v3960, -inf
  %v6237 = vmax.f32 %v6235, %v6236
  %v6238 = vsel %vm4185, %v3961, -inf
  %v6239 = vmax.f32 %v6237, %v6238
  %v6240 = vsel %vm4185, %v3962, -inf
  %v6241 = vmax.f32 %v6239, %v6240
  %v6242 = vsel %vm4185, %v3963, -inf
  %v6243 = vmax.f32 %v6241, %v6242
  %v6244 = vsel %vm4185, %v3964, -inf
  %v6245 = vmax.f32 %v6243, %v6244
  %v6246 = vsel %vm4185, %v3965, -inf
  %v6247 = vmax.f32 %v6245, %v6246
  %v6248 = vsel %vm4185, %v3966, -inf
  %v6249 = vsel %vm4185, %v3967, -inf
  %v6250 = vmax.f32 %v6248, %v6249
  %v6251 = vsel %vm4185, %v3968, -inf
  %v6252 = vmax.f32 %v6250, %v6251
  %v6253 = vsel %vm4185, %v3969, -inf
  %v6254 = vmax.f32 %v6252, %v6253
  %v6255 = vsel %vm4185, %v3970, -inf
  %v6256 = vmax.f32 %v6254, %v6255
  %v6257 = vsel %vm4185, %v3971, -inf
  %v6258 = vmax.f32 %v6256, %v6257
  %v6259 = vsel %vm4185, %v3972, -inf
  %v6260 = vmax.f32 %v6258, %v6259
  %v6261 = vsel %vm4185, %v3973, -inf
  %v6262 = vmax.f32 %v6260, %v6261
  %v6263 = vsel %vm4185, %v3974, -inf
  %v6264 = vsel %vm4185, %v3975, -inf
  %v6265 = vmax.f32 %v6263, %v6264
  %v6266 = vsel %vm4185, %v3976, -inf
  %v6267 = vmax.f32 %v6265, %v6266
  %v6268 = vsel %vm4185, %v3977, -inf
  %v6269 = vmax.f32 %v6267, %v6268
  %v6270 = vsel %vm4185, %v3978, -inf
  %v6271 = vmax.f32 %v6269, %v6270
  %v6272 = vsel %vm4185, %v3979, -inf
  %v6273 = vmax.f32 %v6271, %v6272
  %v6274 = vsel %vm4185, %v3980, -inf
  %v6275 = vmax.f32 %v6273, %v6274
  %v6276 = vsel %vm4185, %v3981, -inf
  %v6277 = vmax.f32 %v6275, %v6276
  %v6278 = vsel %vm4185, %v3982, -inf
  %v6279 = vsel %vm4185, %v3983, -inf
  %v6280 = vmax.f32 %v6278, %v6279
  %v6281 = vsel %vm4185, %v3984, -inf
  %v6282 = vmax.f32 %v6280, %v6281
  %v6283 = vsel %vm4185, %v3985, -inf
  %v6284 = vmax.f32 %v6282, %v6283
  %v6285 = vsel %vm4185, %v3986, -inf
  %v6286 = vmax.f32 %v6284, %v6285
  %v6287 = vsel %vm4185, %v3987, -inf
  %v6288 = vmax.f32 %v6286, %v6287
  %v6289 = vsel %vm4185, %v3988, -inf
  %v6290 = vmax.f32 %v6288, %v6289
  %v6291 = vsel %vm4185, %v3989, -inf
  %v6292 = vmax.f32 %v6290, %v6291
  %v6293 = vsel %vm4185, %v3990, -inf
  %v6294 = vsel %vm4185, %v3991, -inf
  %v6295 = vmax.f32 %v6293, %v6294
  %v6296 = vsel %vm4185, %v3992, -inf
  %v6297 = vmax.f32 %v6295, %v6296
  %v6298 = vsel %vm4185, %v3993, -inf
  %v6299 = vmax.f32 %v6297, %v6298
  %v6300 = vsel %vm4185, %v3994, -inf
  %v6301 = vmax.f32 %v6299, %v6300
  %v6302 = vsel %vm4185, %v3995, -inf
  %v6303 = vmax.f32 %v6301, %v6302
  %v6304 = vsel %vm4185, %v3996, -inf
  %v6305 = vmax.f32 %v6303, %v6304
  %v6306 = vsel %vm4185, %v3997, -inf
  %v6307 = vmax.f32 %v6305, %v6306
  %v6308 = vsel %vm4185, %v3998, -inf
  %v6309 = vsel %vm4185, %v3999, -inf
  %v6310 = vmax.f32 %v6308, %v6309
  %v6311 = vsel %vm4185, %v4000, -inf
  %v6312 = vmax.f32 %v6310, %v6311
  %v6313 = vsel %vm4185, %v4001, -inf
  %v6314 = vmax.f32 %v6312, %v6313
  %v6315 = vsel %vm4185, %v4002, -inf
  %v6316 = vmax.f32 %v6314, %v6315
  %v6317 = vsel %vm4185, %v4003, -inf
  %v6318 = vmax.f32 %v6316, %v6317
  %v6319 = vsel %vm4185, %v4004, -inf
  %v6320 = vmax.f32 %v6318, %v6319
  %v6321 = vsel %vm4185, %v4005, -inf
  %v6322 = vmax.f32 %v6320, %v6321
  %v6323 = vsel %vm4185, %v4006, -inf
  %v6324 = vsel %vm4185, %v4007, -inf
  %v6325 = vmax.f32 %v6323, %v6324
  %v6326 = vsel %vm4185, %v4008, -inf
  %v6327 = vmax.f32 %v6325, %v6326
  %v6328 = vsel %vm4185, %v4009, -inf
  %v6329 = vmax.f32 %v6327, %v6328
  %v6330 = vsel %vm4185, %v4010, -inf
  %v6331 = vmax.f32 %v6329, %v6330
  %v6332 = vsel %vm4185, %v4011, -inf
  %v6333 = vmax.f32 %v6331, %v6332
  %v6334 = vsel %vm4185, %v4012, -inf
  %v6335 = vmax.f32 %v6333, %v6334
  %v6336 = vsel %vm4185, %v4013, -inf
  %v6337 = vmax.f32 %v6335, %v6336
  %v6338 = vsel %vm4185, %v4014, -inf
  %v6339 = vsel %vm4185, %v4015, -inf
  %v6340 = vmax.f32 %v6338, %v6339
  %v6341 = vsel %vm4185, %v4016, -inf
  %v6342 = vmax.f32 %v6340, %v6341
  %v6343 = vsel %vm4185, %v4017, -inf
  %v6344 = vmax.f32 %v6342, %v6343
  %v6345 = vsel %vm4185, %v4018, -inf
  %v6346 = vmax.f32 %v6344, %v6345
  %v6347 = vsel %vm4185, %v4019, -inf
  %v6348 = vmax.f32 %v6346, %v6347
  %v6349 = vsel %vm4185, %v4020, -inf
  %v6350 = vmax.f32 %v6348, %v6349
  %v6351 = vsel %vm4185, %v4021, -inf
  %v6352 = vmax.f32 %v6350, %v6351
  %v6353 = vsel %vm4185, %v4022, -inf
  %v6354 = vsel %vm4185, %v4023, -inf
  %v6355 = vmax.f32 %v6353, %v6354
  %v6356 = vsel %vm4185, %v4024, -inf
  %v6357 = vmax.f32 %v6355, %v6356
  %v6358 = vsel %vm4185, %v4025, -inf
  %v6359 = vmax.f32 %v6357, %v6358
  %v6360 = vsel %vm4185, %v4026, -inf
  %v6361 = vmax.f32 %v6359, %v6360
  %v6362 = vsel %vm4185, %v4027, -inf
  %v6363 = vmax.f32 %v6361, %v6362
  %v6364 = vsel %vm4185, %v4028, -inf
  %v6365 = vmax.f32 %v6363, %v6364
  %v6366 = vsel %vm4185, %v4029, -inf
  %v6367 = vmax.f32 %v6365, %v6366
  %v6368 = vsel %vm4185, %v4030, -inf
  %v6369 = vsel %vm4185, %v4031, -inf
  %v6370 = vmax.f32 %v6368, %v6369
  %v6371 = vsel %vm4185, %v4032, -inf
  %v6372 = vmax.f32 %v6370, %v6371
  %v6373 = vsel %vm4185, %v4033, -inf
  %v6374 = vmax.f32 %v6372, %v6373
  %v6375 = vsel %vm4185, %v4034, -inf
  %v6376 = vmax.f32 %v6374, %v6375
  %v6377 = vsel %vm4185, %v4035, -inf
  %v6378 = vmax.f32 %v6376, %v6377
  %v6379 = vsel %vm4185, %v4036, -inf
  %v6380 = vmax.f32 %v6378, %v6379
  %v6381 = vsel %vm4185, %v4037, -inf
  %v6382 = vmax.f32 %v6380, %v6381
  %v6383 = vsel %vm4185, %v4038, -inf
  %v6384 = vsel %vm4185, %v4039, -inf
  %v6385 = vmax.f32 %v6383, %v6384
  %v6386 = vsel %vm4185, %v4040, -inf
  %v6387 = vmax.f32 %v6385, %v6386
  %v6388 = vsel %vm4185, %v4041, -inf
  %v6389 = vmax.f32 %v6387, %v6388
  %v6390 = vsel %vm4185, %v4042, -inf
  %v6391 = vmax.f32 %v6389, %v6390
  %v6392 = vsel %vm4185, %v4043, -inf
  %v6393 = vmax.f32 %v6391, %v6392
  %v6394 = vsel %vm4185, %v4044, -inf
  %v6395 = vmax.f32 %v6393, %v6394
  %v6396 = vsel %vm4185, %v4045, -inf
  %v6397 = vmax.f32 %v6395, %v6396
  %v6398 = vsel %vm4185, %v4046, -inf
  %v6399 = vsel %vm4185, %v4047, -inf
  %v6400 = vmax.f32 %v6398, %v6399
  %v6401 = vsel %vm4185, %v4048, -inf
  %v6402 = vmax.f32 %v6400, %v6401
  %v6403 = vsel %vm4185, %v4049, -inf
  %v6404 = vmax.f32 %v6402, %v6403
  %v6405 = vsel %vm4185, %v4050, -inf
  %v6406 = vmax.f32 %v6404, %v6405
  %v6407 = vsel %vm4185, %v4051, -inf
  %v6408 = vmax.f32 %v6406, %v6407
  %v6409 = vsel %vm4185, %v4052, -inf
  %v6410 = vmax.f32 %v6408, %v6409
  %v6411 = vsel %vm4185, %v4053, -inf
  %v6412 = vmax.f32 %v6410, %v6411
  %v6413 = vsel %vm4185, %v4054, -inf
  %v6414 = vsel %vm4185, %v4055, -inf
  %v6415 = vmax.f32 %v6413, %v6414
  %v6416 = vsel %vm4185, %v4056, -inf
  %v6417 = vmax.f32 %v6415, %v6416
  %v6418 = vsel %vm4185, %v4057, -inf
  %v6419 = vmax.f32 %v6417, %v6418
  %v6420 = vsel %vm4185, %v4058, -inf
  %v6421 = vmax.f32 %v6419, %v6420
  %v6422 = vsel %vm4185, %v4059, -inf
  %v6423 = vmax.f32 %v6421, %v6422
  %v6424 = vsel %vm4185, %v4060, -inf
  %v6425 = vmax.f32 %v6423, %v6424
  %v6426 = vsel %vm4185, %v4061, -inf
  %v6427 = vmax.f32 %v6425, %v6426
  %v6428 = vsel %vm4185, %v4062, -inf
  %v6429 = vsel %vm4185, %v4063, -inf
  %v6430 = vmax.f32 %v6428, %v6429
  %v6431 = vsel %vm4185, %v4064, -inf
  %v6432 = vmax.f32 %v6430, %v6431
  %v6433 = vsel %vm4185, %v4065, -inf
  %v6434 = vmax.f32 %v6432, %v6433
  %v6435 = vsel %vm4185, %v4066, -inf
  %v6436 = vmax.f32 %v6434, %v6435
  %v6437 = vsel %vm4185, %v4067, -inf
  %v6438 = vmax.f32 %v6436, %v6437
  %v6439 = vsel %vm4185, %v4068, -inf
  %v6440 = vmax.f32 %v6438, %v6439
  %v6441 = vsel %vm4185, %v4069, -inf
  %v6442 = vmax.f32 %v6440, %v6441
  %v6443 = vsel %vm4185, %v4070, -inf
  %v6444 = vsel %vm4185, %v4071, -inf
  %v6445 = vmax.f32 %v6443, %v6444
  %v6446 = vsel %vm4185, %v4072, -inf
  %v6447 = vmax.f32 %v6445, %v6446
  %v6448 = vsel %vm4185, %v4073, -inf
  %v6449 = vmax.f32 %v6447, %v6448
  %v6450 = vsel %vm4185, %v4074, -inf
  %v6451 = vmax.f32 %v6449, %v6450
  %v6452 = vsel %vm4185, %v4075, -inf
  %v6453 = vmax.f32 %v6451, %v6452
  %v6454 = vsel %vm4185, %v4076, -inf
  %v6455 = vmax.f32 %v6453, %v6454
  %v6456 = vsel %vm4185, %v4077, -inf
  %v6457 = vmax.f32 %v6455, %v6456
  %v6458 = vsel %vm4185, %v4078, -inf
  %v6459 = vsel %vm4185, %v4079, -inf
  %v6460 = vmax.f32 %v6458, %v6459
  %v6461 = vsel %vm4185, %v4080, -inf
  %v6462 = vmax.f32 %v6460, %v6461
  %v6463 = vsel %vm4185, %v4081, -inf
  %v6464 = vmax.f32 %v6462, %v6463
  %v6465 = vsel %vm4185, %v4082, -inf
  %v6466 = vmax.f32 %v6464, %v6465
  %v6467 = vsel %vm4185, %v4083, -inf
  %v6468 = vmax.f32 %v6466, %v6467
  %v6469 = vsel %vm4185, %v4084, -inf
  %v6470 = vmax.f32 %v6468, %v6469
  %v6471 = vsel %vm4185, %v4085, -inf
  %v6472 = vmax.f32 %v6470, %v6471
  %v6473 = vsel %vm4185, %v4086, -inf
  %v6474 = vsel %vm4185, %v4087, -inf
  %v6475 = vmax.f32 %v6473, %v6474
  %v6476 = vsel %vm4185, %v4088, -inf
  %v6477 = vmax.f32 %v6475, %v6476
  %v6478 = vsel %vm4185, %v4089, -inf
  %v6479 = vmax.f32 %v6477, %v6478
  %v6480 = vsel %vm4185, %v4090, -inf
  %v6481 = vmax.f32 %v6479, %v6480
  %v6482 = vsel %vm4185, %v4091, -inf
  %v6483 = vmax.f32 %v6481, %v6482
  %v6484 = vsel %vm4185, %v4092, -inf
  %v6485 = vmax.f32 %v6483, %v6484
  %v6486 = vsel %vm4185, %v4093, -inf
  %v6487 = vmax.f32 %v6485, %v6486
  %v6488 = vsel %vm4185, %v4094, -inf
  %v6489 = vsel %vm4185, %v4095, -inf
  %v6490 = vmax.f32 %v6488, %v6489
  %v6491 = vsel %vm4185, %v4096, -inf
  %v6492 = vmax.f32 %v6490, %v6491
  %v6493 = vsel %vm4185, %v4097, -inf
  %v6494 = vmax.f32 %v6492, %v6493
  %v6495 = vsel %vm4185, %v4098, -inf
  %v6496 = vmax.f32 %v6494, %v6495
  %v6497 = vsel %vm4185, %v4099, -inf
  %v6498 = vmax.f32 %v6496, %v6497
  %v6499 = vsel %vm4185, %v4100, -inf
  %v6500 = vmax.f32 %v6498, %v6499
  %v6501 = vsel %vm4185, %v4101, -inf
  %v6502 = vmax.f32 %v6500, %v6501
  %v6503 = vsel %vm4185, %v4102, -inf
  %v6504 = vsel %vm4185, %v4103, -inf
  %v6505 = vmax.f32 %v6503, %v6504
  %v6506 = vsel %vm4185, %v4104, -inf
  %v6507 = vmax.f32 %v6505, %v6506
  %v6508 = vsel %vm4185, %v4105, -inf
  %v6509 = vmax.f32 %v6507, %v6508
  %v6510 = vsel %vm4185, %v4106, -inf
  %v6511 = vmax.f32 %v6509, %v6510
  %v6512 = vsel %vm4185, %v4107, -inf
  %v6513 = vmax.f32 %v6511, %v6512
  %v6514 = vsel %vm4185, %v4108, -inf
  %v6515 = vmax.f32 %v6513, %v6514
  %v6516 = vsel %vm4185, %v4109, -inf
  %v6517 = vmax.f32 %v6515, %v6516
  %v6518 = vsel %vm4185, %v4110, -inf
  %v6519 = vsel %vm4185, %v4111, -inf
  %v6520 = vmax.f32 %v6518, %v6519
  %v6521 = vsel %vm4185, %v4112, -inf
  %v6522 = vmax.f32 %v6520, %v6521
  %v6523 = vsel %vm4185, %v4113, -inf
  %v6524 = vmax.f32 %v6522, %v6523
  %v6525 = vsel %vm4185, %v4114, -inf
  %v6526 = vmax.f32 %v6524, %v6525
  %v6527 = vsel %vm4185, %v4115, -inf
  %v6528 = vmax.f32 %v6526, %v6527
  %v6529 = vsel %vm4185, %v4116, -inf
  %v6530 = vmax.f32 %v6528, %v6529
  %v6531 = vsel %vm4185, %v4117, -inf
  %v6532 = vmax.f32 %v6530, %v6531
  %v6533 = vsel %vm4185, %v4118, -inf
  %v6534 = vsel %vm4185, %v4119, -inf
  %v6535 = vmax.f32 %v6533, %v6534
  %v6536 = vsel %vm4185, %v4120, -inf
  %v6537 = vmax.f32 %v6535, %v6536
  %v6538 = vsel %vm4185, %v4121, -inf
  %v6539 = vmax.f32 %v6537, %v6538
  %v6540 = vsel %vm4185, %v4122, -inf
  %v6541 = vmax.f32 %v6539, %v6540
  %v6542 = vsel %vm4185, %v4123, -inf
  %v6543 = vmax.f32 %v6541, %v6542
  %v6544 = vsel %vm4185, %v4124, -inf
  %v6545 = vmax.f32 %v6543, %v6544
  %v6546 = vsel %vm4185, %v4125, -inf
  %v6547 = vmax.f32 %v6545, %v6546
  %v6548 = vsel %vm4185, %v4126, -inf
  %v6549 = vsel %vm4185, %v4127, -inf
  %v6550 = vmax.f32 %v6548, %v6549
  %v6551 = vsel %vm4185, %v4128, -inf
  %v6552 = vmax.f32 %v6550, %v6551
  %v6553 = vsel %vm4185, %v4129, -inf
  %v6554 = vmax.f32 %v6552, %v6553
  %v6555 = vsel %vm4185, %v4130, -inf
  %v6556 = vmax.f32 %v6554, %v6555
  %v6557 = vsel %vm4185, %v4131, -inf
  %v6558 = vmax.f32 %v6556, %v6557
  %v6559 = vsel %vm4185, %v4132, -inf
  %v6560 = vmax.f32 %v6558, %v6559
  %v6561 = vsel %vm4185, %v4133, -inf
  %v6562 = vmax.f32 %v6560, %v6561
  %v6563 = vsel %vm4185, %v4134, -inf
  %v6564 = vsel %vm4185, %v4135, -inf
  %v6565 = vmax.f32 %v6563, %v6564
  %v6566 = vsel %vm4185, %v4136, -inf
  %v6567 = vmax.f32 %v6565, %v6566
  %v6568 = vsel %vm4185, %v4137, -inf
  %v6569 = vmax.f32 %v6567, %v6568
  %v6570 = vsel %vm4185, %v4138, -inf
  %v6571 = vmax.f32 %v6569, %v6570
  %v6572 = vsel %vm4185, %v4139, -inf
  %v6573 = vmax.f32 %v6571, %v6572
  %v6574 = vsel %vm4185, %v4140, -inf
  %v6575 = vmax.f32 %v6573, %v6574
  %v6576 = vsel %vm4185, %v4141, -inf
  %v6577 = vmax.f32 %v6575, %v6576
  %v6578 = vsel %vm4185, %v4142, -inf
  %v6579 = vsel %vm4185, %v4143, -inf
  %v6580 = vmax.f32 %v6578, %v6579
  %v6581 = vsel %vm4185, %v4144, -inf
  %v6582 = vmax.f32 %v6580, %v6581
  %v6583 = vsel %vm4185, %v4145, -inf
  %v6584 = vmax.f32 %v6582, %v6583
  %v6585 = vsel %vm4185, %v4146, -inf
  %v6586 = vmax.f32 %v6584, %v6585
  %v6587 = vsel %vm4185, %v4147, -inf
  %v6588 = vmax.f32 %v6586, %v6587
  %v6589 = vsel %vm4185, %v4148, -inf
  %v6590 = vmax.f32 %v6588, %v6589
  %v6591 = vsel %vm4185, %v4149, -inf
  %v6592 = vmax.f32 %v6590, %v6591
  %v6593 = vsel %vm4185, %v3894, inf
  %v6594 = vsel %vm4185, %v3895, inf
  %v6595 = vmin.f32 %v6593, %v6594
  %v6596 = vsel %vm4185, %v3896, inf
  %v6597 = vmin.f32 %v6595, %v6596
  %v6598 = vsel %vm4185, %v3897, inf
  %v6599 = vmin.f32 %v6597, %v6598
  %v6600 = vsel %vm4185, %v3898, inf
  %v6601 = vmin.f32 %v6599, %v6600
  %v6602 = vsel %vm4185, %v3899, inf
  %v6603 = vmin.f32 %v6601, %v6602
  %v6604 = vsel %vm4185, %v3900, inf
  %v6605 = vmin.f32 %v6603, %v6604
  %v6606 = vsel %vm4185, %v3901, inf
  %v6607 = vmin.f32 %v6605, %v6606
  %v6608 = vsel %vm4185, %v3902, inf
  %v6609 = vsel %vm4185, %v3903, inf
  %v6610 = vmin.f32 %v6608, %v6609
  %v6611 = vsel %vm4185, %v3904, inf
  %v6612 = vmin.f32 %v6610, %v6611
  %v6613 = vsel %vm4185, %v3905, inf
  %v6614 = vmin.f32 %v6612, %v6613
  %v6615 = vsel %vm4185, %v3906, inf
  %v6616 = vmin.f32 %v6614, %v6615
  %v6617 = vsel %vm4185, %v3907, inf
  %v6618 = vmin.f32 %v6616, %v6617
  %v6619 = vsel %vm4185, %v3908, inf
  %v6620 = vmin.f32 %v6618, %v6619
  %v6621 = vsel %vm4185, %v3909, inf
  %v6622 = vmin.f32 %v6620, %v6621
  %v6623 = vsel %vm4185, %v3910, inf
  %v6624 = vsel %vm4185, %v3911, inf
  %v6625 = vmin.f32 %v6623, %v6624
  %v6626 = vsel %vm4185, %v3912, inf
  %v6627 = vmin.f32 %v6625, %v6626
  %v6628 = vsel %vm4185, %v3913, inf
  %v6629 = vmin.f32 %v6627, %v6628
  %v6630 = vsel %vm4185, %v3914, inf
  %v6631 = vmin.f32 %v6629, %v6630
  %v6632 = vsel %vm4185, %v3915, inf
  %v6633 = vmin.f32 %v6631, %v6632
  %v6634 = vsel %vm4185, %v3916, inf
  %v6635 = vmin.f32 %v6633, %v6634
  %v6636 = vsel %vm4185, %v3917, inf
  %v6637 = vmin.f32 %v6635, %v6636
  %v6638 = vsel %vm4185, %v3918, inf
  %v6639 = vsel %vm4185, %v3919, inf
  %v6640 = vmin.f32 %v6638, %v6639
  %v6641 = vsel %vm4185, %v3920, inf
  %v6642 = vmin.f32 %v6640, %v6641
  %v6643 = vsel %vm4185, %v3921, inf
  %v6644 = vmin.f32 %v6642, %v6643
  %v6645 = vsel %vm4185, %v3922, inf
  %v6646 = vmin.f32 %v6644, %v6645
  %v6647 = vsel %vm4185, %v3923, inf
  %v6648 = vmin.f32 %v6646, %v6647
  %v6649 = vsel %vm4185, %v3924, inf
  %v6650 = vmin.f32 %v6648, %v6649
  %v6651 = vsel %vm4185, %v3925, inf
  %v6652 = vmin.f32 %v6650, %v6651
  %v6653 = vsel %vm4185, %v3926, inf
  %v6654 = vsel %vm4185, %v3927, inf
  %v6655 = vmin.f32 %v6653, %v6654
  %v6656 = vsel %vm4185, %v3928, inf
  %v6657 = vmin.f32 %v6655, %v6656
  %v6658 = vsel %vm4185, %v3929, inf
  %v6659 = vmin.f32 %v6657, %v6658
  %v6660 = vsel %vm4185, %v3930, inf
  %v6661 = vmin.f32 %v6659, %v6660
  %v6662 = vsel %vm4185, %v3931, inf
  %v6663 = vmin.f32 %v6661, %v6662
  %v6664 = vsel %vm4185, %v3932, inf
  %v6665 = vmin.f32 %v6663, %v6664
  %v6666 = vsel %vm4185, %v3933, inf
  %v6667 = vmin.f32 %v6665, %v6666
  %v6668 = vsel %vm4185, %v3934, inf
  %v6669 = vsel %vm4185, %v3935, inf
  %v6670 = vmin.f32 %v6668, %v6669
  %v6671 = vsel %vm4185, %v3936, inf
  %v6672 = vmin.f32 %v6670, %v6671
  %v6673 = vsel %vm4185, %v3937, inf
  %v6674 = vmin.f32 %v6672, %v6673
  %v6675 = vsel %vm4185, %v3938, inf
  %v6676 = vmin.f32 %v6674, %v6675
  %v6677 = vsel %vm4185, %v3939, inf
  %v6678 = vmin.f32 %v6676, %v6677
  %v6679 = vsel %vm4185, %v3940, inf
  %v6680 = vmin.f32 %v6678, %v6679
  %v6681 = vsel %vm4185, %v3941, inf
  %v6682 = vmin.f32 %v6680, %v6681
  %v6683 = vsel %vm4185, %v3942, inf
  %v6684 = vsel %vm4185, %v3943, inf
  %v6685 = vmin.f32 %v6683, %v6684
  %v6686 = vsel %vm4185, %v3944, inf
  %v6687 = vmin.f32 %v6685, %v6686
  %v6688 = vsel %vm4185, %v3945, inf
  %v6689 = vmin.f32 %v6687, %v6688
  %v6690 = vsel %vm4185, %v3946, inf
  %v6691 = vmin.f32 %v6689, %v6690
  %v6692 = vsel %vm4185, %v3947, inf
  %v6693 = vmin.f32 %v6691, %v6692
  %v6694 = vsel %vm4185, %v3948, inf
  %v6695 = vmin.f32 %v6693, %v6694
  %v6696 = vsel %vm4185, %v3949, inf
  %v6697 = vmin.f32 %v6695, %v6696
  %v6698 = vsel %vm4185, %v3950, inf
  %v6699 = vsel %vm4185, %v3951, inf
  %v6700 = vmin.f32 %v6698, %v6699
  %v6701 = vsel %vm4185, %v3952, inf
  %v6702 = vmin.f32 %v6700, %v6701
  %v6703 = vsel %vm4185, %v3953, inf
  %v6704 = vmin.f32 %v6702, %v6703
  %v6705 = vsel %vm4185, %v3954, inf
  %v6706 = vmin.f32 %v6704, %v6705
  %v6707 = vsel %vm4185, %v3955, inf
  %v6708 = vmin.f32 %v6706, %v6707
  %v6709 = vsel %vm4185, %v3956, inf
  %v6710 = vmin.f32 %v6708, %v6709
  %v6711 = vsel %vm4185, %v3957, inf
  %v6712 = vmin.f32 %v6710, %v6711
  %v6713 = vsel %vm4185, %v3958, inf
  %v6714 = vsel %vm4185, %v3959, inf
  %v6715 = vmin.f32 %v6713, %v6714
  %v6716 = vsel %vm4185, %v3960, inf
  %v6717 = vmin.f32 %v6715, %v6716
  %v6718 = vsel %vm4185, %v3961, inf
  %v6719 = vmin.f32 %v6717, %v6718
  %v6720 = vsel %vm4185, %v3962, inf
  %v6721 = vmin.f32 %v6719, %v6720
  %v6722 = vsel %vm4185, %v3963, inf
  %v6723 = vmin.f32 %v6721, %v6722
  %v6724 = vsel %vm4185, %v3964, inf
  %v6725 = vmin.f32 %v6723, %v6724
  %v6726 = vsel %vm4185, %v3965, inf
  %v6727 = vmin.f32 %v6725, %v6726
  %v6728 = vsel %vm4185, %v3966, inf
  %v6729 = vsel %vm4185, %v3967, inf
  %v6730 = vmin.f32 %v6728, %v6729
  %v6731 = vsel %vm4185, %v3968, inf
  %v6732 = vmin.f32 %v6730, %v6731
  %v6733 = vsel %vm4185, %v3969, inf
  %v6734 = vmin.f32 %v6732, %v6733
  %v6735 = vsel %vm4185, %v3970, inf
  %v6736 = vmin.f32 %v6734, %v6735
  %v6737 = vsel %vm4185, %v3971, inf
  %v6738 = vmin.f32 %v6736, %v6737
  %v6739 = vsel %vm4185, %v3972, inf
  %v6740 = vmin.f32 %v6738, %v6739
  %v6741 = vsel %vm4185, %v3973, inf
  %v6742 = vmin.f32 %v6740, %v6741
  %v6743 = vsel %vm4185, %v3974, inf
  %v6744 = vsel %vm4185, %v3975, inf
  %v6745 = vmin.f32 %v6743, %v6744
  %v6746 = vsel %vm4185, %v3976, inf
  %v6747 = vmin.f32 %v6745, %v6746
  %v6748 = vsel %vm4185, %v3977, inf
  %v6749 = vmin.f32 %v6747, %v6748
  %v6750 = vsel %vm4185, %v3978, inf
  %v6751 = vmin.f32 %v6749, %v6750
  %v6752 = vsel %vm4185, %v3979, inf
  %v6753 = vmin.f32 %v6751, %v6752
  %v6754 = vsel %vm4185, %v3980, inf
  %v6755 = vmin.f32 %v6753, %v6754
  %v6756 = vsel %vm4185, %v3981, inf
  %v6757 = vmin.f32 %v6755, %v6756
  %v6758 = vsel %vm4185, %v3982, inf
  %v6759 = vsel %vm4185, %v3983, inf
  %v6760 = vmin.f32 %v6758, %v6759
  %v6761 = vsel %vm4185, %v3984, inf
  %v6762 = vmin.f32 %v6760, %v6761
  %v6763 = vsel %vm4185, %v3985, inf
  %v6764 = vmin.f32 %v6762, %v6763
  %v6765 = vsel %vm4185, %v3986, inf
  %v6766 = vmin.f32 %v6764, %v6765
  %v6767 = vsel %vm4185, %v3987, inf
  %v6768 = vmin.f32 %v6766, %v6767
  %v6769 = vsel %vm4185, %v3988, inf
  %v6770 = vmin.f32 %v6768, %v6769
  %v6771 = vsel %vm4185, %v3989, inf
  %v6772 = vmin.f32 %v6770, %v6771
  %v6773 = vsel %vm4185, %v3990, inf
  %v6774 = vsel %vm4185, %v3991, inf
  %v6775 = vmin.f32 %v6773, %v6774
  %v6776 = vsel %vm4185, %v3992, inf
  %v6777 = vmin.f32 %v6775, %v6776
  %v6778 = vsel %vm4185, %v3993, inf
  %v6779 = vmin.f32 %v6777, %v6778
  %v6780 = vsel %vm4185, %v3994, inf
  %v6781 = vmin.f32 %v6779, %v6780
  %v6782 = vsel %vm4185, %v3995, inf
  %v6783 = vmin.f32 %v6781, %v6782
  %v6784 = vsel %vm4185, %v3996, inf
  %v6785 = vmin.f32 %v6783, %v6784
  %v6786 = vsel %vm4185, %v3997, inf
  %v6787 = vmin.f32 %v6785, %v6786
  %v6788 = vsel %vm4185, %v3998, inf
  %v6789 = vsel %vm4185, %v3999, inf
  %v6790 = vmin.f32 %v6788, %v6789
  %v6791 = vsel %vm4185, %v4000, inf
  %v6792 = vmin.f32 %v6790, %v6791
  %v6793 = vsel %vm4185, %v4001, inf
  %v6794 = vmin.f32 %v6792, %v6793
  %v6795 = vsel %vm4185, %v4002, inf
  %v6796 = vmin.f32 %v6794, %v6795
  %v6797 = vsel %vm4185, %v4003, inf
  %v6798 = vmin.f32 %v6796, %v6797
  %v6799 = vsel %vm4185, %v4004, inf
  %v6800 = vmin.f32 %v6798, %v6799
  %v6801 = vsel %vm4185, %v4005, inf
  %v6802 = vmin.f32 %v6800, %v6801
  %v6803 = vsel %vm4185, %v4006, inf
  %v6804 = vsel %vm4185, %v4007, inf
  %v6805 = vmin.f32 %v6803, %v6804
  %v6806 = vsel %vm4185, %v4008, inf
  %v6807 = vmin.f32 %v6805, %v6806
  %v6808 = vsel %vm4185, %v4009, inf
  %v6809 = vmin.f32 %v6807, %v6808
  %v6810 = vsel %vm4185, %v4010, inf
  %v6811 = vmin.f32 %v6809, %v6810
  %v6812 = vsel %vm4185, %v4011, inf
  %v6813 = vmin.f32 %v6811, %v6812
  %v6814 = vsel %vm4185, %v4012, inf
  %v6815 = vmin.f32 %v6813, %v6814
  %v6816 = vsel %vm4185, %v4013, inf
  %v6817 = vmin.f32 %v6815, %v6816
  %v6818 = vsel %vm4185, %v4014, inf
  %v6819 = vsel %vm4185, %v4015, inf
  %v6820 = vmin.f32 %v6818, %v6819
  %v6821 = vsel %vm4185, %v4016, inf
  %v6822 = vmin.f32 %v6820, %v6821
  %v6823 = vsel %vm4185, %v4017, inf
  %v6824 = vmin.f32 %v6822, %v6823
  %v6825 = vsel %vm4185, %v4018, inf
  %v6826 = vmin.f32 %v6824, %v6825
  %v6827 = vsel %vm4185, %v4019, inf
  %v6828 = vmin.f32 %v6826, %v6827
  %v6829 = vsel %vm4185, %v4020, inf
  %v6830 = vmin.f32 %v6828, %v6829
  %v6831 = vsel %vm4185, %v4021, inf
  %v6832 = vmin.f32 %v6830, %v6831
  %v6833 = vsel %vm4185, %v4022, inf
  %v6834 = vsel %vm4185, %v4023, inf
  %v6835 = vmin.f32 %v6833, %v6834
  %v6836 = vsel %vm4185, %v4024, inf
  %v6837 = vmin.f32 %v6835, %v6836
  %v6838 = vsel %vm4185, %v4025, inf
  %v6839 = vmin.f32 %v6837, %v6838
  %v6840 = vsel %vm4185, %v4026, inf
  %v6841 = vmin.f32 %v6839, %v6840
  %v6842 = vsel %vm4185, %v4027, inf
  %v6843 = vmin.f32 %v6841, %v6842
  %v6844 = vsel %vm4185, %v4028, inf
  %v6845 = vmin.f32 %v6843, %v6844
  %v6846 = vsel %vm4185, %v4029, inf
  %v6847 = vmin.f32 %v6845, %v6846
  %v6848 = vsel %vm4185, %v4030, inf
  %v6849 = vsel %vm4185, %v4031, inf
  %v6850 = vmin.f32 %v6848, %v6849
  %v6851 = vsel %vm4185, %v4032, inf
  %v6852 = vmin.f32 %v6850, %v6851
  %v6853 = vsel %vm4185, %v4033, inf
  %v6854 = vmin.f32 %v6852, %v6853
  %v6855 = vsel %vm4185, %v4034, inf
  %v6856 = vmin.f32 %v6854, %v6855
  %v6857 = vsel %vm4185, %v4035, inf
  %v6858 = vmin.f32 %v6856, %v6857
  %v6859 = vsel %vm4185, %v4036, inf
  %v6860 = vmin.f32 %v6858, %v6859
  %v6861 = vsel %vm4185, %v4037, inf
  %v6862 = vmin.f32 %v6860, %v6861
  %v6863 = vsel %vm4185, %v4038, inf
  %v6864 = vsel %vm4185, %v4039, inf
  %v6865 = vmin.f32 %v6863, %v6864
  %v6866 = vsel %vm4185, %v4040, inf
  %v6867 = vmin.f32 %v6865, %v6866
  %v6868 = vsel %vm4185, %v4041, inf
  %v6869 = vmin.f32 %v6867, %v6868
  %v6870 = vsel %vm4185, %v4042, inf
  %v6871 = vmin.f32 %v6869, %v6870
  %v6872 = vsel %vm4185, %v4043, inf
  %v6873 = vmin.f32 %v6871, %v6872
  %v6874 = vsel %vm4185, %v4044, inf
  %v6875 = vmin.f32 %v6873, %v6874
  %v6876 = vsel %vm4185, %v4045, inf
  %v6877 = vmin.f32 %v6875, %v6876
  %v6878 = vsel %vm4185, %v4046, inf
  %v6879 = vsel %vm4185, %v4047, inf
  %v6880 = vmin.f32 %v6878, %v6879
  %v6881 = vsel %vm4185, %v4048, inf
  %v6882 = vmin.f32 %v6880, %v6881
  %v6883 = vsel %vm4185, %v4049, inf
  %v6884 = vmin.f32 %v6882, %v6883
  %v6885 = vsel %vm4185, %v4050, inf
  %v6886 = vmin.f32 %v6884, %v6885
  %v6887 = vsel %vm4185, %v4051, inf
  %v6888 = vmin.f32 %v6886, %v6887
  %v6889 = vsel %vm4185, %v4052, inf
  %v6890 = vmin.f32 %v6888, %v6889
  %v6891 = vsel %vm4185, %v4053, inf
  %v6892 = vmin.f32 %v6890, %v6891
  %v6893 = vsel %vm4185, %v4054, inf
  %v6894 = vsel %vm4185, %v4055, inf
  %v6895 = vmin.f32 %v6893, %v6894
  %v6896 = vsel %vm4185, %v4056, inf
  %v6897 = vmin.f32 %v6895, %v6896
  %v6898 = vsel %vm4185, %v4057, inf
  %v6899 = vmin.f32 %v6897, %v6898
  %v6900 = vsel %vm4185, %v4058, inf
  %v6901 = vmin.f32 %v6899, %v6900
  %v6902 = vsel %vm4185, %v4059, inf
  %v6903 = vmin.f32 %v6901, %v6902
  %v6904 = vsel %vm4185, %v4060, inf
  %v6905 = vmin.f32 %v6903, %v6904
  %v6906 = vsel %vm4185, %v4061, inf
  %v6907 = vmin.f32 %v6905, %v6906
  %v6908 = vsel %vm4185, %v4062, inf
  %v6909 = vsel %vm4185, %v4063, inf
  %v6910 = vmin.f32 %v6908, %v6909
  %v6911 = vsel %vm4185, %v4064, inf
  %v6912 = vmin.f32 %v6910, %v6911
  %v6913 = vsel %vm4185, %v4065, inf
  %v6914 = vmin.f32 %v6912, %v6913
  %v6915 = vsel %vm4185, %v4066, inf
  %v6916 = vmin.f32 %v6914, %v6915
  %v6917 = vsel %vm4185, %v4067, inf
  %v6918 = vmin.f32 %v6916, %v6917
  %v6919 = vsel %vm4185, %v4068, inf
  %v6920 = vmin.f32 %v6918, %v6919
  %v6921 = vsel %vm4185, %v4069, inf
  %v6922 = vmin.f32 %v6920, %v6921
  %v6923 = vsel %vm4185, %v4070, inf
  %v6924 = vsel %vm4185, %v4071, inf
  %v6925 = vmin.f32 %v6923, %v6924
  %v6926 = vsel %vm4185, %v4072, inf
  %v6927 = vmin.f32 %v6925, %v6926
  %v6928 = vsel %vm4185, %v4073, inf
  %v6929 = vmin.f32 %v6927, %v6928
  %v6930 = vsel %vm4185, %v4074, inf
  %v6931 = vmin.f32 %v6929, %v6930
  %v6932 = vsel %vm4185, %v4075, inf
  %v6933 = vmin.f32 %v6931, %v6932
  %v6934 = vsel %vm4185, %v4076, inf
  %v6935 = vmin.f32 %v6933, %v6934
  %v6936 = vsel %vm4185, %v4077, inf
  %v6937 = vmin.f32 %v6935, %v6936
  %v6938 = vsel %vm4185, %v4078, inf
  %v6939 = vsel %vm4185, %v4079, inf
  %v6940 = vmin.f32 %v6938, %v6939
  %v6941 = vsel %vm4185, %v4080, inf
  %v6942 = vmin.f32 %v6940, %v6941
  %v6943 = vsel %vm4185, %v4081, inf
  %v6944 = vmin.f32 %v6942, %v6943
  %v6945 = vsel %vm4185, %v4082, inf
  %v6946 = vmin.f32 %v6944, %v6945
  %v6947 = vsel %vm4185, %v4083, inf
  %v6948 = vmin.f32 %v6946, %v6947
  %v6949 = vsel %vm4185, %v4084, inf
  %v6950 = vmin.f32 %v6948, %v6949
  %v6951 = vsel %vm4185, %v4085, inf
  %v6952 = vmin.f32 %v6950, %v6951
  %v6953 = vsel %vm4185, %v4086, inf
  %v6954 = vsel %vm4185, %v4087, inf
  %v6955 = vmin.f32 %v6953, %v6954
  %v6956 = vsel %vm4185, %v4088, inf
  %v6957 = vmin.f32 %v6955, %v6956
  %v6958 = vsel %vm4185, %v4089, inf
  %v6959 = vmin.f32 %v6957, %v6958
  %v6960 = vsel %vm4185, %v4090, inf
  %v6961 = vmin.f32 %v6959, %v6960
  %v6962 = vsel %vm4185, %v4091, inf
  %v6963 = vmin.f32 %v6961, %v6962
  %v6964 = vsel %vm4185, %v4092, inf
  %v6965 = vmin.f32 %v6963, %v6964
  %v6966 = vsel %vm4185, %v4093, inf
  %v6967 = vmin.f32 %v6965, %v6966
  %v6968 = vsel %vm4185, %v4094, inf
  %v6969 = vsel %vm4185, %v4095, inf
  %v6970 = vmin.f32 %v6968, %v6969
  %v6971 = vsel %vm4185, %v4096, inf
  %v6972 = vmin.f32 %v6970, %v6971
  %v6973 = vsel %vm4185, %v4097, inf
  %v6974 = vmin.f32 %v6972, %v6973
  %v6975 = vsel %vm4185, %v4098, inf
  %v6976 = vmin.f32 %v6974, %v6975
  %v6977 = vsel %vm4185, %v4099, inf
  %v6978 = vmin.f32 %v6976, %v6977
  %v6979 = vsel %vm4185, %v4100, inf
  %v6980 = vmin.f32 %v6978, %v6979
  %v6981 = vsel %vm4185, %v4101, inf
  %v6982 = vmin.f32 %v6980, %v6981
  %v6983 = vsel %vm4185, %v4102, inf
  %v6984 = vsel %vm4185, %v4103, inf
  %v6985 = vmin.f32 %v6983, %v6984
  %v6986 = vsel %vm4185, %v4104, inf
  %v6987 = vmin.f32 %v6985, %v6986
  %v6988 = vsel %vm4185, %v4105, inf
  %v6989 = vmin.f32 %v6987, %v6988
  %v6990 = vsel %vm4185, %v4106, inf
  %v6991 = vmin.f32 %v6989, %v6990
  %v6992 = vsel %vm4185, %v4107, inf
  %v6993 = vmin.f32 %v6991, %v6992
  %v6994 = vsel %vm4185, %v4108, inf
  %v6995 = vmin.f32 %v6993, %v6994
  %v6996 = vsel %vm4185, %v4109, inf
  %v6997 = vmin.f32 %v6995, %v6996
  %v6998 = vsel %vm4185, %v4110, inf
  %v6999 = vsel %vm4185, %v4111, inf
  %v7000 = vmin.f32 %v6998, %v6999
  %v7001 = vsel %vm4185, %v4112, inf
  %v7002 = vmin.f32 %v7000, %v7001
  %v7003 = vsel %vm4185, %v4113, inf
  %v7004 = vmin.f32 %v7002, %v7003
  %v7005 = vsel %vm4185, %v4114, inf
  %v7006 = vmin.f32 %v7004, %v7005
  %v7007 = vsel %vm4185, %v4115, inf
  %v7008 = vmin.f32 %v7006, %v7007
  %v7009 = vsel %vm4185, %v4116, inf
  %v7010 = vmin.f32 %v7008, %v7009
  %v7011 = vsel %vm4185, %v4117, inf
  %v7012 = vmin.f32 %v7010, %v7011
  %v7013 = vsel %vm4185, %v4118, inf
  %v7014 = vsel %vm4185, %v4119, inf
  %v7015 = vmin.f32 %v7013, %v7014
  %v7016 = vsel %vm4185, %v4120, inf
  %v7017 = vmin.f32 %v7015, %v7016
  %v7018 = vsel %vm4185, %v4121, inf
  %v7019 = vmin.f32 %v7017, %v7018
  %v7020 = vsel %vm4185, %v4122, inf
  %v7021 = vmin.f32 %v7019, %v7020
  %v7022 = vsel %vm4185, %v4123, inf
  %v7023 = vmin.f32 %v7021, %v7022
  %v7024 = vsel %vm4185, %v4124, inf
  %v7025 = vmin.f32 %v7023, %v7024
  %v7026 = vsel %vm4185, %v4125, inf
  %v7027 = vmin.f32 %v7025, %v7026
  %v7028 = vsel %vm4185, %v4126, inf
  %v7029 = vsel %vm4185, %v4127, inf
  %v7030 = vmin.f32 %v7028, %v7029
  %v7031 = vsel %vm4185, %v4128, inf
  %v7032 = vmin.f32 %v7030, %v7031
  %v7033 = vsel %vm4185, %v4129, inf
  %v7034 = vmin.f32 %v7032, %v7033
  %v7035 = vsel %vm4185, %v4130, inf
  %v7036 = vmin.f32 %v7034, %v7035
  %v7037 = vsel %vm4185, %v4131, inf
  %v7038 = vmin.f32 %v7036, %v7037
  %v7039 = vsel %vm4185, %v4132, inf
  %v7040 = vmin.f32 %v7038, %v7039
  %v7041 = vsel %vm4185, %v4133, inf
  %v7042 = vmin.f32 %v7040, %v7041
  %v7043 = vsel %vm4185, %v4134, inf
  %v7044 = vsel %vm4185, %v4135, inf
  %v7045 = vmin.f32 %v7043, %v7044
  %v7046 = vsel %vm4185, %v4136, inf
  %v7047 = vmin.f32 %v7045, %v7046
  %v7048 = vsel %vm4185, %v4137, inf
  %v7049 = vmin.f32 %v7047, %v7048
  %v7050 = vsel %vm4185, %v4138, inf
  %v7051 = vmin.f32 %v7049, %v7050
  %v7052 = vsel %vm4185, %v4139, inf
  %v7053 = vmin.f32 %v7051, %v7052
  %v7054 = vsel %vm4185, %v4140, inf
  %v7055 = vmin.f32 %v7053, %v7054
  %v7056 = vsel %vm4185, %v4141, inf
  %v7057 = vmin.f32 %v7055, %v7056
  %v7058 = vsel %vm4185, %v4142, inf
  %v7059 = vsel %vm4185, %v4143, inf
  %v7060 = vmin.f32 %v7058, %v7059
  %v7061 = vsel %vm4185, %v4144, inf
  %v7062 = vmin.f32 %v7060, %v7061
  %v7063 = vsel %vm4185, %v4145, inf
  %v7064 = vmin.f32 %v7062, %v7063
  %v7065 = vsel %vm4185, %v4146, inf
  %v7066 = vmin.f32 %v7064, %v7065
  %v7067 = vsel %vm4185, %v4147, inf
  %v7068 = vmin.f32 %v7066, %v7067
  %v7069 = vsel %vm4185, %v4148, inf
  %v7070 = vmin.f32 %v7068, %v7069
  %v7071 = vsel %vm4185, %v4149, inf
  %v7072 = vmin.f32 %v7070, %v7071
  %7105 = vrot.lane.b32.xlu0 %v5740, 29
  %v7106 = vpop.permute.xlu0 %7105
  %7107 = vrot.lane.b32.xlu0 %v5752, 29
  %v7108 = vpop.permute.xlu0 %7107
  %7109 = vrot.lane.b32.xlu0 %v5764, 29
  %v7110 = vpop.permute.xlu0 %7109
  %7111 = vrot.lane.b32.xlu0 %v5776, 29
  %v7112 = vpop.permute.xlu0 %7111
  %7113 = vrot.lane.b32.xlu0 %v5788, 29
  %v7114 = vpop.permute.xlu0 %7113
  %7115 = vrot.lane.b32.xlu0 %v5800, 29
  %v7116 = vpop.permute.xlu0 %7115
  %7117 = vrot.lane.b32.xlu0 %v5812, 29
  %v7118 = vpop.permute.xlu0 %7117
  %7119 = vrot.lane.b32.xlu0 %v5824, 29
  %v7120 = vpop.permute.xlu0 %7119
  %7121 = vrot.lane.b32.xlu0 %v5836, 29
  %v7122 = vpop.permute.xlu0 %7121
  %7123 = vrot.lane.b32.xlu0 %v5848, 29
  %v7124 = vpop.permute.xlu0 %7123
  %7125 = vrot.lane.b32.xlu0 %v5860, 29
  %v7126 = vpop.permute.xlu0 %7125
  %7127 = vrot.lane.b32.xlu0 %v5872, 29
  %v7128 = vpop.permute.xlu0 %7127
  %7129 = vrot.lane.b32.xlu0 %v5884, 29
  %v7130 = vpop.permute.xlu0 %7129
  %7131 = vrot.lane.b32.xlu0 %v5896, 29
  %v7132 = vpop.permute.xlu0 %7131
  %7133 = vrot.lane.b32.xlu0 %v5908, 29
  %v7134 = vpop.permute.xlu0 %7133
  %7135 = vrot.lane.b32.xlu0 %v5920, 29
  %v7136 = vpop.permute.xlu0 %7135
  %7137 = vrot.lane.b32.xlu0 %v5932, 29
  %v7138 = vpop.permute.xlu0 %7137
  %7139 = vrot.lane.b32.xlu0 %v5944, 29
  %v7140 = vpop.permute.xlu0 %7139
  %7141 = vrot.lane.b32.xlu0 %v5956, 29
  %v7142 = vpop.permute.xlu0 %7141
  %7143 = vrot.lane.b32.xlu0 %v5968, 29
  %v7144 = vpop.permute.xlu0 %7143
  %7145 = vrot.lane.b32.xlu0 %v5980, 29
  %v7146 = vpop.permute.xlu0 %7145
  %7147 = vrot.lane.b32.xlu0 %v5992, 29
  %v7148 = vpop.permute.xlu0 %7147
  %7149 = vrot.lane.b32.xlu0 %v6004, 29
  %v7150 = vpop.permute.xlu0 %7149
  %7151 = vrot.lane.b32.xlu0 %v6016, 29
  %v7152 = vpop.permute.xlu0 %7151
  %7153 = vrot.lane.b32.xlu0 %v6028, 29
  %v7154 = vpop.permute.xlu0 %7153
  %7155 = vrot.lane.b32.xlu0 %v6040, 29
  %v7156 = vpop.permute.xlu0 %7155
  %7157 = vrot.lane.b32.xlu0 %v6052, 29
  %v7158 = vpop.permute.xlu0 %7157
  %7159 = vrot.lane.b32.xlu0 %v6064, 29
  %v7160 = vpop.permute.xlu0 %7159
  %7161 = vrot.lane.b32.xlu0 %v6076, 29
  %v7162 = vpop.permute.xlu0 %7161
  %7163 = vrot.lane.b32.xlu0 %v6088, 29
  %v7164 = vpop.permute.xlu0 %7163
  %7165 = vrot.lane.b32.xlu0 %v6100, 29
  %v7166 = vpop.permute.xlu0 %7165
  %7167 = vrot.lane.b32.xlu0 %v6112, 29
  %v7168 = vpop.permute.xlu0 %7167
  %7233 = vrot.lane.b32.xlu0 %v6127, 58
  %v7234 = vpop.permute.xlu0 %7233
  %7235 = vrot.lane.b32.xlu0 %v6142, 58
  %v7236 = vpop.permute.xlu0 %7235
  %7237 = vrot.lane.b32.xlu0 %v6157, 58
  %v7238 = vpop.permute.xlu0 %7237
  %7239 = vrot.lane.b32.xlu0 %v6172, 58
  %v7240 = vpop.permute.xlu0 %7239
  %7241 = vrot.lane.b32.xlu0 %v6187, 58
  %v7242 = vpop.permute.xlu0 %7241
  %7243 = vrot.lane.b32.xlu0 %v6202, 58
  %v7244 = vpop.permute.xlu0 %7243
  %7245 = vrot.lane.b32.xlu0 %v6217, 58
  %v7246 = vpop.permute.xlu0 %7245
  %7247 = vrot.lane.b32.xlu0 %v6232, 58
  %v7248 = vpop.permute.xlu0 %7247
  %7249 = vrot.lane.b32.xlu0 %v6247, 58
  %v7250 = vpop.permute.xlu0 %7249
  %7251 = vrot.lane.b32.xlu0 %v6262, 58
  %v7252 = vpop.permute.xlu0 %7251
  %7253 = vrot.lane.b32.xlu0 %v6277, 58
  %v7254 = vpop.permute.xlu0 %7253
  %7255 = vrot.lane.b32.xlu0 %v6292, 58
  %v7256 = vpop.permute.xlu0 %7255
  %7257 = vrot.lane.b32.xlu0 %v6307, 58
  %v7258 = vpop.permute.xlu0 %7257
  %7259 = vrot.lane.b32.xlu0 %v6322, 58
  %v7260 = vpop.permute.xlu0 %7259
  %7261 = vrot.lane.b32.xlu0 %v6337, 58
  %v7262 = vpop.permute.xlu0 %7261
  %7263 = vrot.lane.b32.xlu0 %v6352, 58
  %v7264 = vpop.permute.xlu0 %7263
  %7265 = vrot.lane.b32.xlu0 %v6367, 58
  %v7266 = vpop.permute.xlu0 %7265
  %7267 = vrot.lane.b32.xlu0 %v6382, 58
  %v7268 = vpop.permute.xlu0 %7267
  %7269 = vrot.lane.b32.xlu0 %v6397, 58
  %v7270 = vpop.permute.xlu0 %7269
  %7271 = vrot.lane.b32.xlu0 %v6412, 58
  %v7272 = vpop.permute.xlu0 %7271
  %7273 = vrot.lane.b32.xlu0 %v6427, 58
  %v7274 = vpop.permute.xlu0 %7273
  %7275 = vrot.lane.b32.xlu0 %v6442, 58
  %v7276 = vpop.permute.xlu0 %7275
  %7277 = vrot.lane.b32.xlu0 %v6457, 58
  %v7278 = vpop.permute.xlu0 %7277
  %7279 = vrot.lane.b32.xlu0 %v6472, 58
  %v7280 = vpop.permute.xlu0 %7279
  %7281 = vrot.lane.b32.xlu0 %v6487, 58
  %v7282 = vpop.permute.xlu0 %7281
  %7283 = vrot.lane.b32.xlu0 %v6502, 58
  %v7284 = vpop.permute.xlu0 %7283
  %7285 = vrot.lane.b32.xlu0 %v6517, 58
  %v7286 = vpop.permute.xlu0 %7285
  %7287 = vrot.lane.b32.xlu0 %v6532, 58
  %v7288 = vpop.permute.xlu0 %7287
  %7289 = vrot.lane.b32.xlu0 %v6547, 58
  %v7290 = vpop.permute.xlu0 %7289
  %7291 = vrot.lane.b32.xlu0 %v6562, 58
  %v7292 = vpop.permute.xlu0 %7291
  %7293 = vrot.lane.b32.xlu0 %v6577, 58
  %v7294 = vpop.permute.xlu0 %7293
  %7295 = vrot.lane.b32.xlu0 %v6592, 58
  %v7296 = vpop.permute.xlu0 %7295
  %7361 = vrot.lane.b32.xlu0 %v6607, 87
  %v7362 = vpop.permute.xlu0 %7361
  %7363 = vrot.lane.b32.xlu0 %v6622, 87
  %v7364 = vpop.permute.xlu0 %7363
  %7365 = vrot.lane.b32.xlu0 %v6637, 87
  %v7366 = vpop.permute.xlu0 %7365
  %7367 = vrot.lane.b32.xlu0 %v6652, 87
  %v7368 = vpop.permute.xlu0 %7367
  %7369 = vrot.lane.b32.xlu0 %v6667, 87
  %v7370 = vpop.permute.xlu0 %7369
  %7371 = vrot.lane.b32.xlu0 %v6682, 87
  %v7372 = vpop.permute.xlu0 %7371
  %7373 = vrot.lane.b32.xlu0 %v6697, 87
  %v7374 = vpop.permute.xlu0 %7373
  %7375 = vrot.lane.b32.xlu0 %v6712, 87
  %v7376 = vpop.permute.xlu0 %7375
  %7377 = vrot.lane.b32.xlu0 %v6727, 87
  %v7378 = vpop.permute.xlu0 %7377
  %7379 = vrot.lane.b32.xlu0 %v6742, 87
  %v7380 = vpop.permute.xlu0 %7379
  %7381 = vrot.lane.b32.xlu0 %v6757, 87
  %v7382 = vpop.permute.xlu0 %7381
  %7383 = vrot.lane.b32.xlu0 %v6772, 87
  %v7384 = vpop.permute.xlu0 %7383
  %7385 = vrot.lane.b32.xlu0 %v6787, 87
  %v7386 = vpop.permute.xlu0 %7385
  %7387 = vrot.lane.b32.xlu0 %v6802, 87
  %v7388 = vpop.permute.xlu0 %7387
  %7389 = vrot.lane.b32.xlu0 %v6817, 87
  %v7390 = vpop.permute.xlu0 %7389
  %7391 = vrot.lane.b32.xlu0 %v6832, 87
  %v7392 = vpop.permute.xlu0 %7391
  %7393 = vrot.lane.b32.xlu0 %v6847, 87
  %v7394 = vpop.permute.xlu0 %7393
  %7395 = vrot.lane.b32.xlu0 %v6862, 87
  %v7396 = vpop.permute.xlu0 %7395
  %7397 = vrot.lane.b32.xlu0 %v6877, 87
  %v7398 = vpop.permute.xlu0 %7397
  %7399 = vrot.lane.b32.xlu0 %v6892, 87
  %v7400 = vpop.permute.xlu0 %7399
  %7401 = vrot.lane.b32.xlu0 %v6907, 87
  %v7402 = vpop.permute.xlu0 %7401
  %7403 = vrot.lane.b32.xlu0 %v6922, 87
  %v7404 = vpop.permute.xlu0 %7403
  %7405 = vrot.lane.b32.xlu0 %v6937, 87
  %v7406 = vpop.permute.xlu0 %7405
  %7407 = vrot.lane.b32.xlu0 %v6952, 87
  %v7408 = vpop.permute.xlu0 %7407
  %7409 = vrot.lane.b32.xlu0 %v6967, 87
  %v7410 = vpop.permute.xlu0 %7409
  %7411 = vrot.lane.b32.xlu0 %v6982, 87
  %v7412 = vpop.permute.xlu0 %7411
  %7413 = vrot.lane.b32.xlu0 %v6997, 87
  %v7414 = vpop.permute.xlu0 %7413
  %7415 = vrot.lane.b32.xlu0 %v7012, 87
  %v7416 = vpop.permute.xlu0 %7415
  %7417 = vrot.lane.b32.xlu0 %v7027, 87
  %v7418 = vpop.permute.xlu0 %7417
  %7419 = vrot.lane.b32.xlu0 %v7042, 87
  %v7420 = vpop.permute.xlu0 %7419
  %7421 = vrot.lane.b32.xlu0 %v7057, 87
  %v7422 = vpop.permute.xlu0 %7421
  %7423 = vrot.lane.b32.xlu0 %v7072, 87
  %v7424 = vpop.permute.xlu0 %7423
  %7457 = vrot.lane.b32.xlu0 %v2614, 116
  %v7458 = vpop.permute.xlu0 %7457
  %7459 = vrot.lane.b32.xlu0 %v2622, 116
  %v7460 = vpop.permute.xlu0 %7459
  %7461 = vrot.lane.b32.xlu0 %v2630, 116
  %v7462 = vpop.permute.xlu0 %7461
  %7463 = vrot.lane.b32.xlu0 %v2638, 116
  %v7464 = vpop.permute.xlu0 %7463
  %7465 = vrot.lane.b32.xlu0 %v2646, 116
  %v7466 = vpop.permute.xlu0 %7465
  %7467 = vrot.lane.b32.xlu0 %v2654, 116
  %v7468 = vpop.permute.xlu0 %7467
  %7469 = vrot.lane.b32.xlu0 %v2662, 116
  %v7470 = vpop.permute.xlu0 %7469
  %7471 = vrot.lane.b32.xlu0 %v2670, 116
  %v7472 = vpop.permute.xlu0 %7471
  %7473 = vrot.lane.b32.xlu0 %v2678, 116
  %v7474 = vpop.permute.xlu0 %7473
  %7475 = vrot.lane.b32.xlu0 %v2686, 116
  %v7476 = vpop.permute.xlu0 %7475
  %7477 = vrot.lane.b32.xlu0 %v2694, 116
  %v7478 = vpop.permute.xlu0 %7477
  %7479 = vrot.lane.b32.xlu0 %v2702, 116
  %v7480 = vpop.permute.xlu0 %7479
  %7481 = vrot.lane.b32.xlu0 %v2710, 116
  %v7482 = vpop.permute.xlu0 %7481
  %7483 = vrot.lane.b32.xlu0 %v2718, 116
  %v7484 = vpop.permute.xlu0 %7483
  %7485 = vrot.lane.b32.xlu0 %v2726, 116
  %v7486 = vpop.permute.xlu0 %7485
  %7487 = vrot.lane.b32.xlu0 %v2734, 116
  %v7488 = vpop.permute.xlu0 %7487
  %7489 = vrot.lane.b32.xlu0 %v2742, 116
  %v7490 = vpop.permute.xlu0 %7489
  %7491 = vrot.lane.b32.xlu0 %v2750, 116
  %v7492 = vpop.permute.xlu0 %7491
  %7493 = vrot.lane.b32.xlu0 %v2758, 116
  %v7494 = vpop.permute.xlu0 %7493
  %7495 = vrot.lane.b32.xlu0 %v2766, 116
  %v7496 = vpop.permute.xlu0 %7495
  %7497 = vrot.lane.b32.xlu0 %v2774, 116
  %v7498 = vpop.permute.xlu0 %7497
  %7499 = vrot.lane.b32.xlu0 %v2782, 116
  %v7500 = vpop.permute.xlu0 %7499
  %7501 = vrot.lane.b32.xlu0 %v2790, 116
  %v7502 = vpop.permute.xlu0 %7501
  %7503 = vrot.lane.b32.xlu0 %v2798, 116
  %v7504 = vpop.permute.xlu0 %7503
  %7505 = vrot.lane.b32.xlu0 %v2806, 116
  %v7506 = vpop.permute.xlu0 %7505
  %7507 = vrot.lane.b32.xlu0 %v2814, 116
  %v7508 = vpop.permute.xlu0 %7507
  %7509 = vrot.lane.b32.xlu0 %v2822, 116
  %v7510 = vpop.permute.xlu0 %7509
  %7511 = vrot.lane.b32.xlu0 %v2830, 116
  %v7512 = vpop.permute.xlu0 %7511
  %7513 = vrot.lane.b32.xlu0 %v2838, 116
  %v7514 = vpop.permute.xlu0 %7513
  %7515 = vrot.lane.b32.xlu0 %v2846, 116
  %v7516 = vpop.permute.xlu0 %7515
  %7517 = vrot.lane.b32.xlu0 %v2854, 116
  %v7518 = vpop.permute.xlu0 %7517
  %7519 = vrot.lane.b32.xlu0 %v2862, 116
  %v7520 = vpop.permute.xlu0 %7519
  %7553 = vrot.lane.b32.xlu0 %v2615, 4
  %v7554 = vpop.permute.xlu0 %7553
  %7555 = vrot.lane.b32.xlu0 %v2623, 4
  %v7556 = vpop.permute.xlu0 %7555
  %7557 = vrot.lane.b32.xlu0 %v2631, 4
  %v7558 = vpop.permute.xlu0 %7557
  %7559 = vrot.lane.b32.xlu0 %v2639, 4
  %v7560 = vpop.permute.xlu0 %7559
  %7561 = vrot.lane.b32.xlu0 %v2647, 4
  %v7562 = vpop.permute.xlu0 %7561
  %7563 = vrot.lane.b32.xlu0 %v2655, 4
  %v7564 = vpop.permute.xlu0 %7563
  %7565 = vrot.lane.b32.xlu0 %v2663, 4
  %v7566 = vpop.permute.xlu0 %7565
  %7567 = vrot.lane.b32.xlu0 %v2671, 4
  %v7568 = vpop.permute.xlu0 %7567
  %7569 = vrot.lane.b32.xlu0 %v2679, 4
  %v7570 = vpop.permute.xlu0 %7569
  %7571 = vrot.lane.b32.xlu0 %v2687, 4
  %v7572 = vpop.permute.xlu0 %7571
  %7573 = vrot.lane.b32.xlu0 %v2695, 4
  %v7574 = vpop.permute.xlu0 %7573
  %7575 = vrot.lane.b32.xlu0 %v2703, 4
  %v7576 = vpop.permute.xlu0 %7575
  %7577 = vrot.lane.b32.xlu0 %v2711, 4
  %v7578 = vpop.permute.xlu0 %7577
  %7579 = vrot.lane.b32.xlu0 %v2719, 4
  %v7580 = vpop.permute.xlu0 %7579
  %7581 = vrot.lane.b32.xlu0 %v2727, 4
  %v7582 = vpop.permute.xlu0 %7581
  %7583 = vrot.lane.b32.xlu0 %v2735, 4
  %v7584 = vpop.permute.xlu0 %7583
  %7585 = vrot.lane.b32.xlu0 %v2743, 4
  %v7586 = vpop.permute.xlu0 %7585
  %7587 = vrot.lane.b32.xlu0 %v2751, 4
  %v7588 = vpop.permute.xlu0 %7587
  %7589 = vrot.lane.b32.xlu0 %v2759, 4
  %v7590 = vpop.permute.xlu0 %7589
  %7591 = vrot.lane.b32.xlu0 %v2767, 4
  %v7592 = vpop.permute.xlu0 %7591
  %7593 = vrot.lane.b32.xlu0 %v2775, 4
  %v7594 = vpop.permute.xlu0 %7593
  %7595 = vrot.lane.b32.xlu0 %v2783, 4
  %v7596 = vpop.permute.xlu0 %7595
  %7597 = vrot.lane.b32.xlu0 %v2791, 4
  %v7598 = vpop.permute.xlu0 %7597
  %7599 = vrot.lane.b32.xlu0 %v2799, 4
  %v7600 = vpop.permute.xlu0 %7599
  %7601 = vrot.lane.b32.xlu0 %v2807, 4
  %v7602 = vpop.permute.xlu0 %7601
  %7603 = vrot.lane.b32.xlu0 %v2815, 4
  %v7604 = vpop.permute.xlu0 %7603
  %7605 = vrot.lane.b32.xlu0 %v2823, 4
  %v7606 = vpop.permute.xlu0 %7605
  %7607 = vrot.lane.b32.xlu0 %v2831, 4
  %v7608 = vpop.permute.xlu0 %7607
  %7609 = vrot.lane.b32.xlu0 %v2839, 4
  %v7610 = vpop.permute.xlu0 %7609
  %7611 = vrot.lane.b32.xlu0 %v2847, 4
  %v7612 = vpop.permute.xlu0 %7611
  %7613 = vrot.lane.b32.xlu0 %v2855, 4
  %v7614 = vpop.permute.xlu0 %7613
  %7615 = vrot.lane.b32.xlu0 %v2863, 4
  %v7616 = vpop.permute.xlu0 %7615
  %7649 = vrot.lane.b32.xlu0 %v2616, 20
  %v7650 = vpop.permute.xlu0 %7649
  %7651 = vrot.lane.b32.xlu0 %v2624, 20
  %v7652 = vpop.permute.xlu0 %7651
  %7653 = vrot.lane.b32.xlu0 %v2632, 20
  %v7654 = vpop.permute.xlu0 %7653
  %7655 = vrot.lane.b32.xlu0 %v2640, 20
  %v7656 = vpop.permute.xlu0 %7655
  %7657 = vrot.lane.b32.xlu0 %v2648, 20
  %v7658 = vpop.permute.xlu0 %7657
  %7659 = vrot.lane.b32.xlu0 %v2656, 20
  %v7660 = vpop.permute.xlu0 %7659
  %7661 = vrot.lane.b32.xlu0 %v2664, 20
  %v7662 = vpop.permute.xlu0 %7661
  %7663 = vrot.lane.b32.xlu0 %v2672, 20
  %v7664 = vpop.permute.xlu0 %7663
  %7665 = vrot.lane.b32.xlu0 %v2680, 20
  %v7666 = vpop.permute.xlu0 %7665
  %7667 = vrot.lane.b32.xlu0 %v2688, 20
  %v7668 = vpop.permute.xlu0 %7667
  %7669 = vrot.lane.b32.xlu0 %v2696, 20
  %v7670 = vpop.permute.xlu0 %7669
  %7671 = vrot.lane.b32.xlu0 %v2704, 20
  %v7672 = vpop.permute.xlu0 %7671
  %7673 = vrot.lane.b32.xlu0 %v2712, 20
  %v7674 = vpop.permute.xlu0 %7673
  %7675 = vrot.lane.b32.xlu0 %v2720, 20
  %v7676 = vpop.permute.xlu0 %7675
  %7677 = vrot.lane.b32.xlu0 %v2728, 20
  %v7678 = vpop.permute.xlu0 %7677
  %7679 = vrot.lane.b32.xlu0 %v2736, 20
  %v7680 = vpop.permute.xlu0 %7679
  %7681 = vrot.lane.b32.xlu0 %v2744, 20
  %v7682 = vpop.permute.xlu0 %7681
  %7683 = vrot.lane.b32.xlu0 %v2752, 20
  %v7684 = vpop.permute.xlu0 %7683
  %7685 = vrot.lane.b32.xlu0 %v2760, 20
  %v7686 = vpop.permute.xlu0 %7685
  %7687 = vrot.lane.b32.xlu0 %v2768, 20
  %v7688 = vpop.permute.xlu0 %7687
  %7689 = vrot.lane.b32.xlu0 %v2776, 20
  %v7690 = vpop.permute.xlu0 %7689
  %7691 = vrot.lane.b32.xlu0 %v2784, 20
  %v7692 = vpop.permute.xlu0 %7691
  %7693 = vrot.lane.b32.xlu0 %v2792, 20
  %v7694 = vpop.permute.xlu0 %7693
  %7695 = vrot.lane.b32.xlu0 %v2800, 20
  %v7696 = vpop.permute.xlu0 %7695
  %7697 = vrot.lane.b32.xlu0 %v2808, 20
  %v7698 = vpop.permute.xlu0 %7697
  %7699 = vrot.lane.b32.xlu0 %v2816, 20
  %v7700 = vpop.permute.xlu0 %7699
  %7701 = vrot.lane.b32.xlu0 %v2824, 20
  %v7702 = vpop.permute.xlu0 %7701
  %7703 = vrot.lane.b32.xlu0 %v2832, 20
  %v7704 = vpop.permute.xlu0 %7703
  %7705 = vrot.lane.b32.xlu0 %v2840, 20
  %v7706 = vpop.permute.xlu0 %7705
  %7707 = vrot.lane.b32.xlu0 %v2848, 20
  %v7708 = vpop.permute.xlu0 %7707
  %7709 = vrot.lane.b32.xlu0 %v2856, 20
  %v7710 = vpop.permute.xlu0 %7709
  %7711 = vrot.lane.b32.xlu0 %v2864, 20
  %v7712 = vpop.permute.xlu0 %7711
  %7745 = vrot.lane.b32.xlu0 %v2617, 36
  %v7746 = vpop.permute.xlu0 %7745
  %7747 = vrot.lane.b32.xlu0 %v2625, 36
  %v7748 = vpop.permute.xlu0 %7747
  %7749 = vrot.lane.b32.xlu0 %v2633, 36
  %v7750 = vpop.permute.xlu0 %7749
  %7751 = vrot.lane.b32.xlu0 %v2641, 36
  %v7752 = vpop.permute.xlu0 %7751
  %7753 = vrot.lane.b32.xlu0 %v2649, 36
  %v7754 = vpop.permute.xlu0 %7753
  %7755 = vrot.lane.b32.xlu0 %v2657, 36
  %v7756 = vpop.permute.xlu0 %7755
  %7757 = vrot.lane.b32.xlu0 %v2665, 36
  %v7758 = vpop.permute.xlu0 %7757
  %7759 = vrot.lane.b32.xlu0 %v2673, 36
  %v7760 = vpop.permute.xlu0 %7759
  %7761 = vrot.lane.b32.xlu0 %v2681, 36
  %v7762 = vpop.permute.xlu0 %7761
  %7763 = vrot.lane.b32.xlu0 %v2689, 36
  %v7764 = vpop.permute.xlu0 %7763
  %7765 = vrot.lane.b32.xlu0 %v2697, 36
  %v7766 = vpop.permute.xlu0 %7765
  %7767 = vrot.lane.b32.xlu0 %v2705, 36
  %v7768 = vpop.permute.xlu0 %7767
  %7769 = vrot.lane.b32.xlu0 %v2713, 36
  %v7770 = vpop.permute.xlu0 %7769
  %7771 = vrot.lane.b32.xlu0 %v2721, 36
  %v7772 = vpop.permute.xlu0 %7771
  %7773 = vrot.lane.b32.xlu0 %v2729, 36
  %v7774 = vpop.permute.xlu0 %7773
  %7775 = vrot.lane.b32.xlu0 %v2737, 36
  %v7776 = vpop.permute.xlu0 %7775
  %7777 = vrot.lane.b32.xlu0 %v2745, 36
  %v7778 = vpop.permute.xlu0 %7777
  %7779 = vrot.lane.b32.xlu0 %v2753, 36
  %v7780 = vpop.permute.xlu0 %7779
  %7781 = vrot.lane.b32.xlu0 %v2761, 36
  %v7782 = vpop.permute.xlu0 %7781
  %7783 = vrot.lane.b32.xlu0 %v2769, 36
  %v7784 = vpop.permute.xlu0 %7783
  %7785 = vrot.lane.b32.xlu0 %v2777, 36
  %v7786 = vpop.permute.xlu0 %7785
  %7787 = vrot.lane.b32.xlu0 %v2785, 36
  %v7788 = vpop.permute.xlu0 %7787
  %7789 = vrot.lane.b32.xlu0 %v2793, 36
  %v7790 = vpop.permute.xlu0 %7789
  %7791 = vrot.lane.b32.xlu0 %v2801, 36
  %v7792 = vpop.permute.xlu0 %7791
  %7793 = vrot.lane.b32.xlu0 %v2809, 36
  %v7794 = vpop.permute.xlu0 %7793
  %7795 = vrot.lane.b32.xlu0 %v2817, 36
  %v7796 = vpop.permute.xlu0 %7795
  %7797 = vrot.lane.b32.xlu0 %v2825, 36
  %v7798 = vpop.permute.xlu0 %7797
  %7799 = vrot.lane.b32.xlu0 %v2833, 36
  %v7800 = vpop.permute.xlu0 %7799
  %7801 = vrot.lane.b32.xlu0 %v2841, 36
  %v7802 = vpop.permute.xlu0 %7801
  %7803 = vrot.lane.b32.xlu0 %v2849, 36
  %v7804 = vpop.permute.xlu0 %7803
  %7805 = vrot.lane.b32.xlu0 %v2857, 36
  %v7806 = vpop.permute.xlu0 %7805
  %7807 = vrot.lane.b32.xlu0 %v2865, 36
  %v7808 = vpop.permute.xlu0 %7807
  %7841 = vrot.lane.b32.xlu0 %v2618, 52
  %v7842 = vpop.permute.xlu0 %7841
  %7843 = vrot.lane.b32.xlu0 %v2626, 52
  %v7844 = vpop.permute.xlu0 %7843
  %7845 = vrot.lane.b32.xlu0 %v2634, 52
  %v7846 = vpop.permute.xlu0 %7845
  %7847 = vrot.lane.b32.xlu0 %v2642, 52
  %v7848 = vpop.permute.xlu0 %7847
  %7849 = vrot.lane.b32.xlu0 %v2650, 52
  %v7850 = vpop.permute.xlu0 %7849
  %7851 = vrot.lane.b32.xlu0 %v2658, 52
  %v7852 = vpop.permute.xlu0 %7851
  %7853 = vrot.lane.b32.xlu0 %v2666, 52
  %v7854 = vpop.permute.xlu0 %7853
  %7855 = vrot.lane.b32.xlu0 %v2674, 52
  %v7856 = vpop.permute.xlu0 %7855
  %7857 = vrot.lane.b32.xlu0 %v2682, 52
  %v7858 = vpop.permute.xlu0 %7857
  %7859 = vrot.lane.b32.xlu0 %v2690, 52
  %v7860 = vpop.permute.xlu0 %7859
  %7861 = vrot.lane.b32.xlu0 %v2698, 52
  %v7862 = vpop.permute.xlu0 %7861
  %7863 = vrot.lane.b32.xlu0 %v2706, 52
  %v7864 = vpop.permute.xlu0 %7863
  %7865 = vrot.lane.b32.xlu0 %v2714, 52
  %v7866 = vpop.permute.xlu0 %7865
  %7867 = vrot.lane.b32.xlu0 %v2722, 52
  %v7868 = vpop.permute.xlu0 %7867
  %7869 = vrot.lane.b32.xlu0 %v2730, 52
  %v7870 = vpop.permute.xlu0 %7869
  %7871 = vrot.lane.b32.xlu0 %v2738, 52
  %v7872 = vpop.permute.xlu0 %7871
  %7873 = vrot.lane.b32.xlu0 %v2746, 52
  %v7874 = vpop.permute.xlu0 %7873
  %7875 = vrot.lane.b32.xlu0 %v2754, 52
  %v7876 = vpop.permute.xlu0 %7875
  %7877 = vrot.lane.b32.xlu0 %v2762, 52
  %v7878 = vpop.permute.xlu0 %7877
  %7879 = vrot.lane.b32.xlu0 %v2770, 52
  %v7880 = vpop.permute.xlu0 %7879
  %7881 = vrot.lane.b32.xlu0 %v2778, 52
  %v7882 = vpop.permute.xlu0 %7881
  %7883 = vrot.lane.b32.xlu0 %v2786, 52
  %v7884 = vpop.permute.xlu0 %7883
  %7885 = vrot.lane.b32.xlu0 %v2794, 52
  %v7886 = vpop.permute.xlu0 %7885
  %7887 = vrot.lane.b32.xlu0 %v2802, 52
  %v7888 = vpop.permute.xlu0 %7887
  %7889 = vrot.lane.b32.xlu0 %v2810, 52
  %v7890 = vpop.permute.xlu0 %7889
  %7891 = vrot.lane.b32.xlu0 %v2818, 52
  %v7892 = vpop.permute.xlu0 %7891
  %7893 = vrot.lane.b32.xlu0 %v2826, 52
  %v7894 = vpop.permute.xlu0 %7893
  %7895 = vrot.lane.b32.xlu0 %v2834, 52
  %v7896 = vpop.permute.xlu0 %7895
  %7897 = vrot.lane.b32.xlu0 %v2842, 52
  %v7898 = vpop.permute.xlu0 %7897
  %7899 = vrot.lane.b32.xlu0 %v2850, 52
  %v7900 = vpop.permute.xlu0 %7899
  %7901 = vrot.lane.b32.xlu0 %v2858, 52
  %v7902 = vpop.permute.xlu0 %7901
  %7903 = vrot.lane.b32.xlu0 %v2866, 52
  %v7904 = vpop.permute.xlu0 %7903
  %7937 = vrot.lane.b32.xlu0 %v2619, 68
  %v7938 = vpop.permute.xlu0 %7937
  %7939 = vrot.lane.b32.xlu0 %v2627, 68
  %v7940 = vpop.permute.xlu0 %7939
  %7941 = vrot.lane.b32.xlu0 %v2635, 68
  %v7942 = vpop.permute.xlu0 %7941
  %7943 = vrot.lane.b32.xlu0 %v2643, 68
  %v7944 = vpop.permute.xlu0 %7943
  %7945 = vrot.lane.b32.xlu0 %v2651, 68
  %v7946 = vpop.permute.xlu0 %7945
  %7947 = vrot.lane.b32.xlu0 %v2659, 68
  %v7948 = vpop.permute.xlu0 %7947
  %7949 = vrot.lane.b32.xlu0 %v2667, 68
  %v7950 = vpop.permute.xlu0 %7949
  %7951 = vrot.lane.b32.xlu0 %v2675, 68
  %v7952 = vpop.permute.xlu0 %7951
  %7953 = vrot.lane.b32.xlu0 %v2683, 68
  %v7954 = vpop.permute.xlu0 %7953
  %7955 = vrot.lane.b32.xlu0 %v2691, 68
  %v7956 = vpop.permute.xlu0 %7955
  %7957 = vrot.lane.b32.xlu0 %v2699, 68
  %v7958 = vpop.permute.xlu0 %7957
  %7959 = vrot.lane.b32.xlu0 %v2707, 68
  %v7960 = vpop.permute.xlu0 %7959
  %7961 = vrot.lane.b32.xlu0 %v2715, 68
  %v7962 = vpop.permute.xlu0 %7961
  %7963 = vrot.lane.b32.xlu0 %v2723, 68
  %v7964 = vpop.permute.xlu0 %7963
  %7965 = vrot.lane.b32.xlu0 %v2731, 68
  %v7966 = vpop.permute.xlu0 %7965
  %7967 = vrot.lane.b32.xlu0 %v2739, 68
  %v7968 = vpop.permute.xlu0 %7967
  %7969 = vrot.lane.b32.xlu0 %v2747, 68
  %v7970 = vpop.permute.xlu0 %7969
  %7971 = vrot.lane.b32.xlu0 %v2755, 68
  %v7972 = vpop.permute.xlu0 %7971
  %7973 = vrot.lane.b32.xlu0 %v2763, 68
  %v7974 = vpop.permute.xlu0 %7973
  %7975 = vrot.lane.b32.xlu0 %v2771, 68
  %v7976 = vpop.permute.xlu0 %7975
  %7977 = vrot.lane.b32.xlu0 %v2779, 68
  %v7978 = vpop.permute.xlu0 %7977
  %7979 = vrot.lane.b32.xlu0 %v2787, 68
  %v7980 = vpop.permute.xlu0 %7979
  %7981 = vrot.lane.b32.xlu0 %v2795, 68
  %v7982 = vpop.permute.xlu0 %7981
  %7983 = vrot.lane.b32.xlu0 %v2803, 68
  %v7984 = vpop.permute.xlu0 %7983
  %7985 = vrot.lane.b32.xlu0 %v2811, 68
  %v7986 = vpop.permute.xlu0 %7985
  %7987 = vrot.lane.b32.xlu0 %v2819, 68
  %v7988 = vpop.permute.xlu0 %7987
  %7989 = vrot.lane.b32.xlu0 %v2827, 68
  %v7990 = vpop.permute.xlu0 %7989
  %7991 = vrot.lane.b32.xlu0 %v2835, 68
  %v7992 = vpop.permute.xlu0 %7991
  %7993 = vrot.lane.b32.xlu0 %v2843, 68
  %v7994 = vpop.permute.xlu0 %7993
  %7995 = vrot.lane.b32.xlu0 %v2851, 68
  %v7996 = vpop.permute.xlu0 %7995
  %7997 = vrot.lane.b32.xlu0 %v2859, 68
  %v7998 = vpop.permute.xlu0 %7997
  %7999 = vrot.lane.b32.xlu0 %v2867, 68
  %v8000 = vpop.permute.xlu0 %7999
  %8033 = vrot.lane.b32.xlu0 %v2620, 84
  %v8034 = vpop.permute.xlu0 %8033
  %8035 = vrot.lane.b32.xlu0 %v2628, 84
  %v8036 = vpop.permute.xlu0 %8035
  %8037 = vrot.lane.b32.xlu0 %v2636, 84
  %v8038 = vpop.permute.xlu0 %8037
  %8039 = vrot.lane.b32.xlu0 %v2644, 84
  %v8040 = vpop.permute.xlu0 %8039
  %8041 = vrot.lane.b32.xlu0 %v2652, 84
  %v8042 = vpop.permute.xlu0 %8041
  %8043 = vrot.lane.b32.xlu0 %v2660, 84
  %v8044 = vpop.permute.xlu0 %8043
  %8045 = vrot.lane.b32.xlu0 %v2668, 84
  %v8046 = vpop.permute.xlu0 %8045
  %8047 = vrot.lane.b32.xlu0 %v2676, 84
  %v8048 = vpop.permute.xlu0 %8047
  %8049 = vrot.lane.b32.xlu0 %v2684, 84
  %v8050 = vpop.permute.xlu0 %8049
  %8051 = vrot.lane.b32.xlu0 %v2692, 84
  %v8052 = vpop.permute.xlu0 %8051
  %8053 = vrot.lane.b32.xlu0 %v2700, 84
  %v8054 = vpop.permute.xlu0 %8053
  %8055 = vrot.lane.b32.xlu0 %v2708, 84
  %v8056 = vpop.permute.xlu0 %8055
  %8057 = vrot.lane.b32.xlu0 %v2716, 84
  %v8058 = vpop.permute.xlu0 %8057
  %8059 = vrot.lane.b32.xlu0 %v2724, 84
  %v8060 = vpop.permute.xlu0 %8059
  %8061 = vrot.lane.b32.xlu0 %v2732, 84
  %v8062 = vpop.permute.xlu0 %8061
  %8063 = vrot.lane.b32.xlu0 %v2740, 84
  %v8064 = vpop.permute.xlu0 %8063
  %8065 = vrot.lane.b32.xlu0 %v2748, 84
  %v8066 = vpop.permute.xlu0 %8065
  %8067 = vrot.lane.b32.xlu0 %v2756, 84
  %v8068 = vpop.permute.xlu0 %8067
  %8069 = vrot.lane.b32.xlu0 %v2764, 84
  %v8070 = vpop.permute.xlu0 %8069
  %8071 = vrot.lane.b32.xlu0 %v2772, 84
  %v8072 = vpop.permute.xlu0 %8071
  %8073 = vrot.lane.b32.xlu0 %v2780, 84
  %v8074 = vpop.permute.xlu0 %8073
  %8075 = vrot.lane.b32.xlu0 %v2788, 84
  %v8076 = vpop.permute.xlu0 %8075
  %8077 = vrot.lane.b32.xlu0 %v2796, 84
  %v8078 = vpop.permute.xlu0 %8077
  %8079 = vrot.lane.b32.xlu0 %v2804, 84
  %v8080 = vpop.permute.xlu0 %8079
  %8081 = vrot.lane.b32.xlu0 %v2812, 84
  %v8082 = vpop.permute.xlu0 %8081
  %8083 = vrot.lane.b32.xlu0 %v2820, 84
  %v8084 = vpop.permute.xlu0 %8083
  %8085 = vrot.lane.b32.xlu0 %v2828, 84
  %v8086 = vpop.permute.xlu0 %8085
  %8087 = vrot.lane.b32.xlu0 %v2836, 84
  %v8088 = vpop.permute.xlu0 %8087
  %8089 = vrot.lane.b32.xlu0 %v2844, 84
  %v8090 = vpop.permute.xlu0 %8089
  %8091 = vrot.lane.b32.xlu0 %v2852, 84
  %v8092 = vpop.permute.xlu0 %8091
  %8093 = vrot.lane.b32.xlu0 %v2860, 84
  %v8094 = vpop.permute.xlu0 %8093
  %8095 = vrot.lane.b32.xlu0 %v2868, 84
  %v8096 = vpop.permute.xlu0 %8095
  %8129 = vrot.lane.b32.xlu0 %v2621, 100
  %v8130 = vpop.permute.xlu0 %8129
  %8131 = vrot.lane.b32.xlu0 %v2629, 100
  %v8132 = vpop.permute.xlu0 %8131
  %8133 = vrot.lane.b32.xlu0 %v2637, 100
  %v8134 = vpop.permute.xlu0 %8133
  %8135 = vrot.lane.b32.xlu0 %v2645, 100
  %v8136 = vpop.permute.xlu0 %8135
  %8137 = vrot.lane.b32.xlu0 %v2653, 100
  %v8138 = vpop.permute.xlu0 %8137
  %8139 = vrot.lane.b32.xlu0 %v2661, 100
  %v8140 = vpop.permute.xlu0 %8139
  %8141 = vrot.lane.b32.xlu0 %v2669, 100
  %v8142 = vpop.permute.xlu0 %8141
  %8143 = vrot.lane.b32.xlu0 %v2677, 100
  %v8144 = vpop.permute.xlu0 %8143
  %8145 = vrot.lane.b32.xlu0 %v2685, 100
  %v8146 = vpop.permute.xlu0 %8145
  %8147 = vrot.lane.b32.xlu0 %v2693, 100
  %v8148 = vpop.permute.xlu0 %8147
  %8149 = vrot.lane.b32.xlu0 %v2701, 100
  %v8150 = vpop.permute.xlu0 %8149
  %8151 = vrot.lane.b32.xlu0 %v2709, 100
  %v8152 = vpop.permute.xlu0 %8151
  %8153 = vrot.lane.b32.xlu0 %v2717, 100
  %v8154 = vpop.permute.xlu0 %8153
  %8155 = vrot.lane.b32.xlu0 %v2725, 100
  %v8156 = vpop.permute.xlu0 %8155
  %8157 = vrot.lane.b32.xlu0 %v2733, 100
  %v8158 = vpop.permute.xlu0 %8157
  %8159 = vrot.lane.b32.xlu0 %v2741, 100
  %v8160 = vpop.permute.xlu0 %8159
  %8161 = vrot.lane.b32.xlu0 %v2749, 100
  %v8162 = vpop.permute.xlu0 %8161
  %8163 = vrot.lane.b32.xlu0 %v2757, 100
  %v8164 = vpop.permute.xlu0 %8163
  %8165 = vrot.lane.b32.xlu0 %v2765, 100
  %v8166 = vpop.permute.xlu0 %8165
  %8167 = vrot.lane.b32.xlu0 %v2773, 100
  %v8168 = vpop.permute.xlu0 %8167
  %8169 = vrot.lane.b32.xlu0 %v2781, 100
  %v8170 = vpop.permute.xlu0 %8169
  %8171 = vrot.lane.b32.xlu0 %v2789, 100
  %v8172 = vpop.permute.xlu0 %8171
  %8173 = vrot.lane.b32.xlu0 %v2797, 100
  %v8174 = vpop.permute.xlu0 %8173
  %8175 = vrot.lane.b32.xlu0 %v2805, 100
  %v8176 = vpop.permute.xlu0 %8175
  %8177 = vrot.lane.b32.xlu0 %v2813, 100
  %v8178 = vpop.permute.xlu0 %8177
  %8179 = vrot.lane.b32.xlu0 %v2821, 100
  %v8180 = vpop.permute.xlu0 %8179
  %8181 = vrot.lane.b32.xlu0 %v2829, 100
  %v8182 = vpop.permute.xlu0 %8181
  %8183 = vrot.lane.b32.xlu0 %v2837, 100
  %v8184 = vpop.permute.xlu0 %8183
  %8185 = vrot.lane.b32.xlu0 %v2845, 100
  %v8186 = vpop.permute.xlu0 %8185
  %8187 = vrot.lane.b32.xlu0 %v2853, 100
  %v8188 = vpop.permute.xlu0 %8187
  %8189 = vrot.lane.b32.xlu0 %v2861, 100
  %v8190 = vpop.permute.xlu0 %8189
  %8191 = vrot.lane.b32.xlu0 %v2869, 100
  %v8192 = vpop.permute.xlu0 %8191
  %v8225 = vsel %vm4185, %v4673, %v7106
  %v8226 = vsel %vm4185, %v4674, %v7108
  %v8227 = vsel %vm4185, %v4675, %v7110
  %v8228 = vsel %vm4185, %v4676, %v7112
  %v8229 = vsel %vm4185, %v4677, %v7114
  %v8230 = vsel %vm4185, %v4678, %v7116
  %v8231 = vsel %vm4185, %v4679, %v7118
  %v8232 = vsel %vm4185, %v4680, %v7120
  %v8233 = vsel %vm4185, %v4681, %v7122
  %v8234 = vsel %vm4185, %v4682, %v7124
  %v8235 = vsel %vm4185, %v4683, %v7126
  %v8236 = vsel %vm4185, %v4684, %v7128
  %v8237 = vsel %vm4185, %v4685, %v7130
  %v8238 = vsel %vm4185, %v4686, %v7132
  %v8239 = vsel %vm4185, %v4687, %v7134
  %v8240 = vsel %vm4185, %v4688, %v7136
  %v8241 = vsel %vm4185, %v4689, %v7138
  %v8242 = vsel %vm4185, %v4690, %v7140
  %v8243 = vsel %vm4185, %v4691, %v7142
  %v8244 = vsel %vm4185, %v4692, %v7144
  %v8245 = vsel %vm4185, %v4693, %v7146
  %v8246 = vsel %vm4185, %v4694, %v7148
  %v8247 = vsel %vm4185, %v4695, %v7150
  %v8248 = vsel %vm4185, %v4696, %v7152
  %v8249 = vsel %vm4185, %v4697, %v7154
  %v8250 = vsel %vm4185, %v4698, %v7156
  %v8251 = vsel %vm4185, %v4699, %v7158
  %v8252 = vsel %vm4185, %v4700, %v7160
  %v8253 = vsel %vm4185, %v4701, %v7162
  %v8254 = vsel %vm4185, %v4702, %v7164
  %v8255 = vsel %vm4185, %v4703, %v7166
  %v8256 = vsel %vm4185, %v4704, %v7168
  %vm8257 = vcmask 474112
  %v8258 = vsel %vm8257, %v8225, %v7234
  %v8259 = vsel %vm8257, %v8226, %v7236
  %v8260 = vsel %vm8257, %v8227, %v7238
  %v8261 = vsel %vm8257, %v8228, %v7240
  %v8262 = vsel %vm8257, %v8229, %v7242
  %v8263 = vsel %vm8257, %v8230, %v7244
  %v8264 = vsel %vm8257, %v8231, %v7246
  %v8265 = vsel %vm8257, %v8232, %v7248
  %v8266 = vsel %vm8257, %v8233, %v7250
  %v8267 = vsel %vm8257, %v8234, %v7252
  %v8268 = vsel %vm8257, %v8235, %v7254
  %v8269 = vsel %vm8257, %v8236, %v7256
  %v8270 = vsel %vm8257, %v8237, %v7258
  %v8271 = vsel %vm8257, %v8238, %v7260
  %v8272 = vsel %vm8257, %v8239, %v7262
  %v8273 = vsel %vm8257, %v8240, %v7264
  %v8274 = vsel %vm8257, %v8241, %v7266
  %v8275 = vsel %vm8257, %v8242, %v7268
  %v8276 = vsel %vm8257, %v8243, %v7270
  %v8277 = vsel %vm8257, %v8244, %v7272
  %v8278 = vsel %vm8257, %v8245, %v7274
  %v8279 = vsel %vm8257, %v8246, %v7276
  %v8280 = vsel %vm8257, %v8247, %v7278
  %v8281 = vsel %vm8257, %v8248, %v7280
  %v8282 = vsel %vm8257, %v8249, %v7282
  %v8283 = vsel %vm8257, %v8250, %v7284
  %v8284 = vsel %vm8257, %v8251, %v7286
  %v8285 = vsel %vm8257, %v8252, %v7288
  %v8286 = vsel %vm8257, %v8253, %v7290
  %v8287 = vsel %vm8257, %v8254, %v7292
  %v8288 = vsel %vm8257, %v8255, %v7294
  %v8289 = vsel %vm8257, %v8256, %v7296
  %vm8290 = vcmask 711680
  %v8291 = vsel %vm8290, %v8258, %v7362
  %v8292 = vsel %vm8290, %v8259, %v7364
  %v8293 = vsel %vm8290, %v8260, %v7366
  %v8294 = vsel %vm8290, %v8261, %v7368
  %v8295 = vsel %vm8290, %v8262, %v7370
  %v8296 = vsel %vm8290, %v8263, %v7372
  %v8297 = vsel %vm8290, %v8264, %v7374
  %v8298 = vsel %vm8290, %v8265, %v7376
  %v8299 = vsel %vm8290, %v8266, %v7378
  %v8300 = vsel %vm8290, %v8267, %v7380
  %v8301 = vsel %vm8290, %v8268, %v7382
  %v8302 = vsel %vm8290, %v8269, %v7384
  %v8303 = vsel %vm8290, %v8270, %v7386
  %v8304 = vsel %vm8290, %v8271, %v7388
  %v8305 = vsel %vm8290, %v8272, %v7390
  %v8306 = vsel %vm8290, %v8273, %v7392
  %v8307 = vsel %vm8290, %v8274, %v7394
  %v8308 = vsel %vm8290, %v8275, %v7396
  %v8309 = vsel %vm8290, %v8276, %v7398
  %v8310 = vsel %vm8290, %v8277, %v7400
  %v8311 = vsel %vm8290, %v8278, %v7402
  %v8312 = vsel %vm8290, %v8279, %v7404
  %v8313 = vsel %vm8290, %v8280, %v7406
  %v8314 = vsel %vm8290, %v8281, %v7408
  %v8315 = vsel %vm8290, %v8282, %v7410
  %v8316 = vsel %vm8290, %v8283, %v7412
  %v8317 = vsel %vm8290, %v8284, %v7414
  %v8318 = vsel %vm8290, %v8285, %v7416
  %v8319 = vsel %vm8290, %v8286, %v7418
  %v8320 = vsel %vm8290, %v8287, %v7420
  %v8321 = vsel %vm8290, %v8288, %v7422
  %v8322 = vsel %vm8290, %v8289, %v7424
  %vm8323 = vcmask 949248
  %v8324 = vsel %vm8323, %v8291, %v7458
  %v8325 = vsel %vm8323, %v8292, %v7460
  %v8326 = vsel %vm8323, %v8293, %v7462
  %v8327 = vsel %vm8323, %v8294, %v7464
  %v8328 = vsel %vm8323, %v8295, %v7466
  %v8329 = vsel %vm8323, %v8296, %v7468
  %v8330 = vsel %vm8323, %v8297, %v7470
  %v8331 = vsel %vm8323, %v8298, %v7472
  %v8332 = vsel %vm8323, %v8299, %v7474
  %v8333 = vsel %vm8323, %v8300, %v7476
  %v8334 = vsel %vm8323, %v8301, %v7478
  %v8335 = vsel %vm8323, %v8302, %v7480
  %v8336 = vsel %vm8323, %v8303, %v7482
  %v8337 = vsel %vm8323, %v8304, %v7484
  %v8338 = vsel %vm8323, %v8305, %v7486
  %v8339 = vsel %vm8323, %v8306, %v7488
  %v8340 = vsel %vm8323, %v8307, %v7490
  %v8341 = vsel %vm8323, %v8308, %v7492
  %v8342 = vsel %vm8323, %v8309, %v7494
  %v8343 = vsel %vm8323, %v8310, %v7496
  %v8344 = vsel %vm8323, %v8311, %v7498
  %v8345 = vsel %vm8323, %v8312, %v7500
  %v8346 = vsel %vm8323, %v8313, %v7502
  %v8347 = vsel %vm8323, %v8314, %v7504
  %v8348 = vsel %vm8323, %v8315, %v7506
  %v8349 = vsel %vm8323, %v8316, %v7508
  %v8350 = vsel %vm8323, %v8317, %v7510
  %v8351 = vsel %vm8323, %v8318, %v7512
  %v8352 = vsel %vm8323, %v8319, %v7514
  %v8353 = vsel %vm8323, %v8320, %v7516
  %v8354 = vsel %vm8323, %v8321, %v7518
  %v8355 = vsel %vm8323, %v8322, %v7520
  %vm8356 = vcmask 31744
  %v8357 = vsel %vm8356, %v7458, %v7554
  %v8358 = vsel %vm8356, %v7460, %v7556
  %v8359 = vsel %vm8356, %v7462, %v7558
  %v8360 = vsel %vm8356, %v7464, %v7560
  %v8361 = vsel %vm8356, %v7466, %v7562
  %v8362 = vsel %vm8356, %v7468, %v7564
  %v8363 = vsel %vm8356, %v7470, %v7566
  %v8364 = vsel %vm8356, %v7472, %v7568
  %v8365 = vsel %vm8356, %v7474, %v7570
  %v8366 = vsel %vm8356, %v7476, %v7572
  %v8367 = vsel %vm8356, %v7478, %v7574
  %v8368 = vsel %vm8356, %v7480, %v7576
  %v8369 = vsel %vm8356, %v7482, %v7578
  %v8370 = vsel %vm8356, %v7484, %v7580
  %v8371 = vsel %vm8356, %v7486, %v7582
  %v8372 = vsel %vm8356, %v7488, %v7584
  %v8373 = vsel %vm8356, %v7490, %v7586
  %v8374 = vsel %vm8356, %v7492, %v7588
  %v8375 = vsel %vm8356, %v7494, %v7590
  %v8376 = vsel %vm8356, %v7496, %v7592
  %v8377 = vsel %vm8356, %v7498, %v7594
  %v8378 = vsel %vm8356, %v7500, %v7596
  %v8379 = vsel %vm8356, %v7502, %v7598
  %v8380 = vsel %vm8356, %v7504, %v7600
  %v8381 = vsel %vm8356, %v7506, %v7602
  %v8382 = vsel %vm8356, %v7508, %v7604
  %v8383 = vsel %vm8356, %v7510, %v7606
  %v8384 = vsel %vm8356, %v7512, %v7608
  %v8385 = vsel %vm8356, %v7514, %v7610
  %v8386 = vsel %vm8356, %v7516, %v7612
  %v8387 = vsel %vm8356, %v7518, %v7614
  %v8388 = vsel %vm8356, %v7520, %v7616
  %vm8389 = vcmask 162816
  %v8390 = vsel %vm8389, %v8357, %v7650
  %v8391 = vsel %vm8389, %v8358, %v7652
  %v8392 = vsel %vm8389, %v8359, %v7654
  %v8393 = vsel %vm8389, %v8360, %v7656
  %v8394 = vsel %vm8389, %v8361, %v7658
  %v8395 = vsel %vm8389, %v8362, %v7660
  %v8396 = vsel %vm8389, %v8363, %v7662
  %v8397 = vsel %vm8389, %v8364, %v7664
  %v8398 = vsel %vm8389, %v8365, %v7666
  %v8399 = vsel %vm8389, %v8366, %v7668
  %v8400 = vsel %vm8389, %v8367, %v7670
  %v8401 = vsel %vm8389, %v8368, %v7672
  %v8402 = vsel %vm8389, %v8369, %v7674
  %v8403 = vsel %vm8389, %v8370, %v7676
  %v8404 = vsel %vm8389, %v8371, %v7678
  %v8405 = vsel %vm8389, %v8372, %v7680
  %v8406 = vsel %vm8389, %v8373, %v7682
  %v8407 = vsel %vm8389, %v8374, %v7684
  %v8408 = vsel %vm8389, %v8375, %v7686
  %v8409 = vsel %vm8389, %v8376, %v7688
  %v8410 = vsel %vm8389, %v8377, %v7690
  %v8411 = vsel %vm8389, %v8378, %v7692
  %v8412 = vsel %vm8389, %v8379, %v7694
  %v8413 = vsel %vm8389, %v8380, %v7696
  %v8414 = vsel %vm8389, %v8381, %v7698
  %v8415 = vsel %vm8389, %v8382, %v7700
  %v8416 = vsel %vm8389, %v8383, %v7702
  %v8417 = vsel %vm8389, %v8384, %v7704
  %v8418 = vsel %vm8389, %v8385, %v7706
  %v8419 = vsel %vm8389, %v8386, %v7708
  %v8420 = vsel %vm8389, %v8387, %v7710
  %v8421 = vsel %vm8389, %v8388, %v7712
  %vm8422 = vcmask 293888
  %v8423 = vsel %vm8422, %v8390, %v7746
  %v8424 = vsel %vm8422, %v8391, %v7748
  %v8425 = vsel %vm8422, %v8392, %v7750
  %v8426 = vsel %vm8422, %v8393, %v7752
  %v8427 = vsel %vm8422, %v8394, %v7754
  %v8428 = vsel %vm8422, %v8395, %v7756
  %v8429 = vsel %vm8422, %v8396, %v7758
  %v8430 = vsel %vm8422, %v8397, %v7760
  %v8431 = vsel %vm8422, %v8398, %v7762
  %v8432 = vsel %vm8422, %v8399, %v7764
  %v8433 = vsel %vm8422, %v8400, %v7766
  %v8434 = vsel %vm8422, %v8401, %v7768
  %v8435 = vsel %vm8422, %v8402, %v7770
  %v8436 = vsel %vm8422, %v8403, %v7772
  %v8437 = vsel %vm8422, %v8404, %v7774
  %v8438 = vsel %vm8422, %v8405, %v7776
  %v8439 = vsel %vm8422, %v8406, %v7778
  %v8440 = vsel %vm8422, %v8407, %v7780
  %v8441 = vsel %vm8422, %v8408, %v7782
  %v8442 = vsel %vm8422, %v8409, %v7784
  %v8443 = vsel %vm8422, %v8410, %v7786
  %v8444 = vsel %vm8422, %v8411, %v7788
  %v8445 = vsel %vm8422, %v8412, %v7790
  %v8446 = vsel %vm8422, %v8413, %v7792
  %v8447 = vsel %vm8422, %v8414, %v7794
  %v8448 = vsel %vm8422, %v8415, %v7796
  %v8449 = vsel %vm8422, %v8416, %v7798
  %v8450 = vsel %vm8422, %v8417, %v7800
  %v8451 = vsel %vm8422, %v8418, %v7802
  %v8452 = vsel %vm8422, %v8419, %v7804
  %v8453 = vsel %vm8422, %v8420, %v7806
  %v8454 = vsel %vm8422, %v8421, %v7808
  %vm8455 = vcmask 424960
  %v8456 = vsel %vm8455, %v8423, %v7842
  %v8457 = vsel %vm8455, %v8424, %v7844
  %v8458 = vsel %vm8455, %v8425, %v7846
  %v8459 = vsel %vm8455, %v8426, %v7848
  %v8460 = vsel %vm8455, %v8427, %v7850
  %v8461 = vsel %vm8455, %v8428, %v7852
  %v8462 = vsel %vm8455, %v8429, %v7854
  %v8463 = vsel %vm8455, %v8430, %v7856
  %v8464 = vsel %vm8455, %v8431, %v7858
  %v8465 = vsel %vm8455, %v8432, %v7860
  %v8466 = vsel %vm8455, %v8433, %v7862
  %v8467 = vsel %vm8455, %v8434, %v7864
  %v8468 = vsel %vm8455, %v8435, %v7866
  %v8469 = vsel %vm8455, %v8436, %v7868
  %v8470 = vsel %vm8455, %v8437, %v7870
  %v8471 = vsel %vm8455, %v8438, %v7872
  %v8472 = vsel %vm8455, %v8439, %v7874
  %v8473 = vsel %vm8455, %v8440, %v7876
  %v8474 = vsel %vm8455, %v8441, %v7878
  %v8475 = vsel %vm8455, %v8442, %v7880
  %v8476 = vsel %vm8455, %v8443, %v7882
  %v8477 = vsel %vm8455, %v8444, %v7884
  %v8478 = vsel %vm8455, %v8445, %v7886
  %v8479 = vsel %vm8455, %v8446, %v7888
  %v8480 = vsel %vm8455, %v8447, %v7890
  %v8481 = vsel %vm8455, %v8448, %v7892
  %v8482 = vsel %vm8455, %v8449, %v7894
  %v8483 = vsel %vm8455, %v8450, %v7896
  %v8484 = vsel %vm8455, %v8451, %v7898
  %v8485 = vsel %vm8455, %v8452, %v7900
  %v8486 = vsel %vm8455, %v8453, %v7902
  %v8487 = vsel %vm8455, %v8454, %v7904
  %vm8488 = vcmask 556032
  %v8489 = vsel %vm8488, %v8456, %v7938
  %v8490 = vsel %vm8488, %v8457, %v7940
  %v8491 = vsel %vm8488, %v8458, %v7942
  %v8492 = vsel %vm8488, %v8459, %v7944
  %v8493 = vsel %vm8488, %v8460, %v7946
  %v8494 = vsel %vm8488, %v8461, %v7948
  %v8495 = vsel %vm8488, %v8462, %v7950
  %v8496 = vsel %vm8488, %v8463, %v7952
  %v8497 = vsel %vm8488, %v8464, %v7954
  %v8498 = vsel %vm8488, %v8465, %v7956
  %v8499 = vsel %vm8488, %v8466, %v7958
  %v8500 = vsel %vm8488, %v8467, %v7960
  %v8501 = vsel %vm8488, %v8468, %v7962
  %v8502 = vsel %vm8488, %v8469, %v7964
  %v8503 = vsel %vm8488, %v8470, %v7966
  %v8504 = vsel %vm8488, %v8471, %v7968
  %v8505 = vsel %vm8488, %v8472, %v7970
  %v8506 = vsel %vm8488, %v8473, %v7972
  %v8507 = vsel %vm8488, %v8474, %v7974
  %v8508 = vsel %vm8488, %v8475, %v7976
  %v8509 = vsel %vm8488, %v8476, %v7978
  %v8510 = vsel %vm8488, %v8477, %v7980
  %v8511 = vsel %vm8488, %v8478, %v7982
  %v8512 = vsel %vm8488, %v8479, %v7984
  %v8513 = vsel %vm8488, %v8480, %v7986
  %v8514 = vsel %vm8488, %v8481, %v7988
  %v8515 = vsel %vm8488, %v8482, %v7990
  %v8516 = vsel %vm8488, %v8483, %v7992
  %v8517 = vsel %vm8488, %v8484, %v7994
  %v8518 = vsel %vm8488, %v8485, %v7996
  %v8519 = vsel %vm8488, %v8486, %v7998
  %v8520 = vsel %vm8488, %v8487, %v8000
  %vm8521 = vcmask 687104
  %v8522 = vsel %vm8521, %v8489, %v8034
  %v8523 = vsel %vm8521, %v8490, %v8036
  %v8524 = vsel %vm8521, %v8491, %v8038
  %v8525 = vsel %vm8521, %v8492, %v8040
  %v8526 = vsel %vm8521, %v8493, %v8042
  %v8527 = vsel %vm8521, %v8494, %v8044
  %v8528 = vsel %vm8521, %v8495, %v8046
  %v8529 = vsel %vm8521, %v8496, %v8048
  %v8530 = vsel %vm8521, %v8497, %v8050
  %v8531 = vsel %vm8521, %v8498, %v8052
  %v8532 = vsel %vm8521, %v8499, %v8054
  %v8533 = vsel %vm8521, %v8500, %v8056
  %v8534 = vsel %vm8521, %v8501, %v8058
  %v8535 = vsel %vm8521, %v8502, %v8060
  %v8536 = vsel %vm8521, %v8503, %v8062
  %v8537 = vsel %vm8521, %v8504, %v8064
  %v8538 = vsel %vm8521, %v8505, %v8066
  %v8539 = vsel %vm8521, %v8506, %v8068
  %v8540 = vsel %vm8521, %v8507, %v8070
  %v8541 = vsel %vm8521, %v8508, %v8072
  %v8542 = vsel %vm8521, %v8509, %v8074
  %v8543 = vsel %vm8521, %v8510, %v8076
  %v8544 = vsel %vm8521, %v8511, %v8078
  %v8545 = vsel %vm8521, %v8512, %v8080
  %v8546 = vsel %vm8521, %v8513, %v8082
  %v8547 = vsel %vm8521, %v8514, %v8084
  %v8548 = vsel %vm8521, %v8515, %v8086
  %v8549 = vsel %vm8521, %v8516, %v8088
  %v8550 = vsel %vm8521, %v8517, %v8090
  %v8551 = vsel %vm8521, %v8518, %v8092
  %v8552 = vsel %vm8521, %v8519, %v8094
  %v8553 = vsel %vm8521, %v8520, %v8096
  %vm8554 = vcmask 818176
  %v8555 = vsel %vm8554, %v8522, %v8130
  %v8556 = vsel %vm8554, %v8523, %v8132
  %v8557 = vsel %vm8554, %v8524, %v8134
  %v8558 = vsel %vm8554, %v8525, %v8136
  %v8559 = vsel %vm8554, %v8526, %v8138
  %v8560 = vsel %vm8554, %v8527, %v8140
  %v8561 = vsel %vm8554, %v8528, %v8142
  %v8562 = vsel %vm8554, %v8529, %v8144
  %v8563 = vsel %vm8554, %v8530, %v8146
  %v8564 = vsel %vm8554, %v8531, %v8148
  %v8565 = vsel %vm8554, %v8532, %v8150
  %v8566 = vsel %vm8554, %v8533, %v8152
  %v8567 = vsel %vm8554, %v8534, %v8154
  %v8568 = vsel %vm8554, %v8535, %v8156
  %v8569 = vsel %vm8554, %v8536, %v8158
  %v8570 = vsel %vm8554, %v8537, %v8160
  %v8571 = vsel %vm8554, %v8538, %v8162
  %v8572 = vsel %vm8554, %v8539, %v8164
  %v8573 = vsel %vm8554, %v8540, %v8166
  %v8574 = vsel %vm8554, %v8541, %v8168
  %v8575 = vsel %vm8554, %v8542, %v8170
  %v8576 = vsel %vm8554, %v8543, %v8172
  %v8577 = vsel %vm8554, %v8544, %v8174
  %v8578 = vsel %vm8554, %v8545, %v8176
  %v8579 = vsel %vm8554, %v8546, %v8178
  %v8580 = vsel %vm8554, %v8547, %v8180
  %v8581 = vsel %vm8554, %v8548, %v8182
  %v8582 = vsel %vm8554, %v8549, %v8184
  %v8583 = vsel %vm8554, %v8550, %v8186
  %v8584 = vsel %vm8554, %v8551, %v8188
  %v8585 = vsel %vm8554, %v8552, %v8190
  %v8586 = vsel %vm8554, %v8553, %v8192
  %v8588 = vsel %vm8323, %v8555, 0
  %v8591 = vsel %vm8323, %v8556, 0
  %v8594 = vsel %vm8323, %v8557, 0
  %v8597 = vsel %vm8323, %v8558, 0
  %v8600 = vsel %vm8323, %v8559, 0
  %v8603 = vsel %vm8323, %v8560, 0
  %v8606 = vsel %vm8323, %v8561, 0
  %v8609 = vsel %vm8323, %v8562, 0
  %v8612 = vsel %vm8323, %v8563, 0
  %v8615 = vsel %vm8323, %v8564, 0
  %v8618 = vsel %vm8323, %v8565, 0
  %v8621 = vsel %vm8323, %v8566, 0
  %v8624 = vsel %vm8323, %v8567, 0
  %v8627 = vsel %vm8323, %v8568, 0
  %v8630 = vsel %vm8323, %v8569, 0
  %v8633 = vsel %vm8323, %v8570, 0
  %v8636 = vsel %vm8323, %v8571, 0
  %v8639 = vsel %vm8323, %v8572, 0
  %v8642 = vsel %vm8323, %v8573, 0
  %v8645 = vsel %vm8323, %v8574, 0
  %v8648 = vsel %vm8323, %v8575, 0
  %v8651 = vsel %vm8323, %v8576, 0
  %v8654 = vsel %vm8323, %v8577, 0
  %v8657 = vsel %vm8323, %v8578, 0
  %v8660 = vsel %vm8323, %v8579, 0
  %v8663 = vsel %vm8323, %v8580, 0
  %v8666 = vsel %vm8323, %v8581, 0
  %v8669 = vsel %vm8323, %v8582, 0
  %v8672 = vsel %vm8323, %v8583, 0
  %v8675 = vsel %vm8323, %v8584, 0
  %v8678 = vsel %vm8323, %v8585, 0
  %v8681 = vsel %vm8323, %v8586, 0
  %vm8683 = vcmask 1043456
  %v8685 = vsel %vm8683, %v4180, 0
  %8687 = vmatpush.msra.mxu0 %v4165
  %8688 = vmatpush.msra.mxu0 %v4164
  %8689 = vmatpush.msra.mxu0 %v4163
  %8690 = vmatpush.msra.mxu0 %v4162
  %8691 = vmatpush.msra.mxu0 %v4161
  %8692 = vmatpush.msra.mxu0 %v4160
  %8693 = vmatpush.msra.mxu0 %v4159
  %8694 = vmatpush.msra.mxu0 %v4158
  %8695 = vmatpush.msra.mxu0 %v4157
  %8696 = vmatpush.msra.mxu0 %v4156
  %8697 = vmatpush.msra.mxu0 %v4155
  %8698 = vmatpush.msra.mxu0 %v4154
  %8699 = vmatpush.msra.mxu0 %v4153
  %8700 = vmatpush.msra.mxu0 %v4152
  %8701 = vmatpush.msra.mxu0 %v4151
  %8702 = vmatpush.msra.mxu0 %v4150
  %8703 = vmatmul.f32.gmra.mxu0 %v8324
  %v8704 = vpop.f32.mrf.mxu0
  %v8705 = vadd.f32 0.0, %v8704
  %8706 = vmatmul.f32.gmra.mxu0 %v8325
  %v8707 = vpop.f32.mrf.mxu0
  %v8708 = vadd.f32 0.0, %v8707
  %8709 = vmatmul.f32.gmra.mxu0 %v8326
  %v8710 = vpop.f32.mrf.mxu0
  %v8711 = vadd.f32 0.0, %v8710
  %8712 = vmatmul.f32.gmra.mxu0 %v8327
  %v8713 = vpop.f32.mrf.mxu0
  %v8714 = vadd.f32 0.0, %v8713
  %8715 = vmatmul.f32.gmra.mxu0 %v8328
  %v8716 = vpop.f32.mrf.mxu0
  %v8717 = vadd.f32 0.0, %v8716
  %8718 = vmatmul.f32.gmra.mxu0 %v8329
  %v8719 = vpop.f32.mrf.mxu0
  %v8720 = vadd.f32 0.0, %v8719
  %8721 = vmatmul.f32.gmra.mxu0 %v8330
  %v8722 = vpop.f32.mrf.mxu0
  %v8723 = vadd.f32 0.0, %v8722
  %8724 = vmatmul.f32.gmra.mxu0 %v8331
  %v8725 = vpop.f32.mrf.mxu0
  %v8726 = vadd.f32 0.0, %v8725
  %8727 = vmatmul.f32.gmra.mxu0 %v8332
  %v8728 = vpop.f32.mrf.mxu0
  %v8729 = vadd.f32 0.0, %v8728
  %8730 = vmatmul.f32.gmra.mxu0 %v8333
  %v8731 = vpop.f32.mrf.mxu0
  %v8732 = vadd.f32 0.0, %v8731
  %8733 = vmatmul.f32.gmra.mxu0 %v8334
  %v8734 = vpop.f32.mrf.mxu0
  %v8735 = vadd.f32 0.0, %v8734
  %8736 = vmatmul.f32.gmra.mxu0 %v8335
  %v8737 = vpop.f32.mrf.mxu0
  %v8738 = vadd.f32 0.0, %v8737
  %8739 = vmatmul.f32.gmra.mxu0 %v8336
  %v8740 = vpop.f32.mrf.mxu0
  %v8741 = vadd.f32 0.0, %v8740
  %8742 = vmatmul.f32.gmra.mxu0 %v8337
  %v8743 = vpop.f32.mrf.mxu0
  %v8744 = vadd.f32 0.0, %v8743
  %8745 = vmatmul.f32.gmra.mxu0 %v8338
  %v8746 = vpop.f32.mrf.mxu0
  %v8747 = vadd.f32 0.0, %v8746
  %8748 = vmatmul.f32.gmra.mxu0 %v8339
  %v8749 = vpop.f32.mrf.mxu0
  %v8750 = vadd.f32 0.0, %v8749
  %8751 = vmatmul.f32.gmra.mxu0 %v8340
  %v8752 = vpop.f32.mrf.mxu0
  %v8753 = vadd.f32 0.0, %v8752
  %8754 = vmatmul.f32.gmra.mxu0 %v8341
  %v8755 = vpop.f32.mrf.mxu0
  %v8756 = vadd.f32 0.0, %v8755
  %8757 = vmatmul.f32.gmra.mxu0 %v8342
  %v8758 = vpop.f32.mrf.mxu0
  %v8759 = vadd.f32 0.0, %v8758
  %8760 = vmatmul.f32.gmra.mxu0 %v8343
  %v8761 = vpop.f32.mrf.mxu0
  %v8762 = vadd.f32 0.0, %v8761
  %8763 = vmatmul.f32.gmra.mxu0 %v8344
  %v8764 = vpop.f32.mrf.mxu0
  %v8765 = vadd.f32 0.0, %v8764
  %8766 = vmatmul.f32.gmra.mxu0 %v8345
  %v8767 = vpop.f32.mrf.mxu0
  %v8768 = vadd.f32 0.0, %v8767
  %8769 = vmatmul.f32.gmra.mxu0 %v8346
  %v8770 = vpop.f32.mrf.mxu0
  %v8771 = vadd.f32 0.0, %v8770
  %8772 = vmatmul.f32.gmra.mxu0 %v8347
  %v8773 = vpop.f32.mrf.mxu0
  %v8774 = vadd.f32 0.0, %v8773
  %8775 = vmatmul.f32.gmra.mxu0 %v8348
  %v8776 = vpop.f32.mrf.mxu0
  %v8777 = vadd.f32 0.0, %v8776
  %8778 = vmatmul.f32.gmra.mxu0 %v8349
  %v8779 = vpop.f32.mrf.mxu0
  %v8780 = vadd.f32 0.0, %v8779
  %8781 = vmatmul.f32.gmra.mxu0 %v8350
  %v8782 = vpop.f32.mrf.mxu0
  %v8783 = vadd.f32 0.0, %v8782
  %8784 = vmatmul.f32.gmra.mxu0 %v8351
  %v8785 = vpop.f32.mrf.mxu0
  %v8786 = vadd.f32 0.0, %v8785
  %8787 = vmatmul.f32.gmra.mxu0 %v8352
  %v8788 = vpop.f32.mrf.mxu0
  %v8789 = vadd.f32 0.0, %v8788
  %8790 = vmatmul.f32.gmra.mxu0 %v8353
  %v8791 = vpop.f32.mrf.mxu0
  %v8792 = vadd.f32 0.0, %v8791
  %8793 = vmatmul.f32.gmra.mxu0 %v8354
  %v8794 = vpop.f32.mrf.mxu0
  %v8795 = vadd.f32 0.0, %v8794
  %8796 = vmatmul.f32.gmra.mxu0 %v8355
  %v8797 = vpop.f32.mrf.mxu0
  %v8798 = vadd.f32 0.0, %v8797
  %8799 = vdwg.mxu0
  %8800 = vmatpush.msra.mxu0 0.0
  %8801 = vmatpush.msra.mxu0 %v8685
  %8802 = vmatpush.msra.mxu0 %v4179
  %8803 = vmatpush.msra.mxu0 %v4178
  %8804 = vmatpush.msra.mxu0 %v4177
  %8805 = vmatpush.msra.mxu0 %v4176
  %8806 = vmatpush.msra.mxu0 %v4175
  %8807 = vmatpush.msra.mxu0 %v4174
  %8808 = vmatpush.msra.mxu0 %v4173
  %8809 = vmatpush.msra.mxu0 %v4172
  %8810 = vmatpush.msra.mxu0 %v4171
  %8811 = vmatpush.msra.mxu0 %v4170
  %8812 = vmatpush.msra.mxu0 %v4169
  %8813 = vmatpush.msra.mxu0 %v4168
  %8814 = vmatpush.msra.mxu0 %v4167
  %8815 = vmatpush.msra.mxu0 %v4166
  %8816 = vmatmul.f32.gmra.mxu0 %v8588
  %v8817 = vpop.f32.mrf.mxu0
  %v8818 = vadd.f32 %v8705, %v8817
  %8819 = vmatmul.f32.gmra.mxu0 %v8591
  %v8820 = vpop.f32.mrf.mxu0
  %v8821 = vadd.f32 %v8708, %v8820
  %8822 = vmatmul.f32.gmra.mxu0 %v8594
  %v8823 = vpop.f32.mrf.mxu0
  %v8824 = vadd.f32 %v8711, %v8823
  %8825 = vmatmul.f32.gmra.mxu0 %v8597
  %v8826 = vpop.f32.mrf.mxu0
  %v8827 = vadd.f32 %v8714, %v8826
  %8828 = vmatmul.f32.gmra.mxu0 %v8600
  %v8829 = vpop.f32.mrf.mxu0
  %v8830 = vadd.f32 %v8717, %v8829
  %8831 = vmatmul.f32.gmra.mxu0 %v8603
  %v8832 = vpop.f32.mrf.mxu0
  %v8833 = vadd.f32 %v8720, %v8832
  %8834 = vmatmul.f32.gmra.mxu0 %v8606
  %v8835 = vpop.f32.mrf.mxu0
  %v8836 = vadd.f32 %v8723, %v8835
  %8837 = vmatmul.f32.gmra.mxu0 %v8609
  %v8838 = vpop.f32.mrf.mxu0
  %v8839 = vadd.f32 %v8726, %v8838
  %8840 = vmatmul.f32.gmra.mxu0 %v8612
  %v8841 = vpop.f32.mrf.mxu0
  %v8842 = vadd.f32 %v8729, %v8841
  %8843 = vmatmul.f32.gmra.mxu0 %v8615
  %v8844 = vpop.f32.mrf.mxu0
  %v8845 = vadd.f32 %v8732, %v8844
  %8846 = vmatmul.f32.gmra.mxu0 %v8618
  %v8847 = vpop.f32.mrf.mxu0
  %v8848 = vadd.f32 %v8735, %v8847
  %8849 = vmatmul.f32.gmra.mxu0 %v8621
  %v8850 = vpop.f32.mrf.mxu0
  %v8851 = vadd.f32 %v8738, %v8850
  %8852 = vmatmul.f32.gmra.mxu0 %v8624
  %v8853 = vpop.f32.mrf.mxu0
  %v8854 = vadd.f32 %v8741, %v8853
  %8855 = vmatmul.f32.gmra.mxu0 %v8627
  %v8856 = vpop.f32.mrf.mxu0
  %v8857 = vadd.f32 %v8744, %v8856
  %8858 = vmatmul.f32.gmra.mxu0 %v8630
  %v8859 = vpop.f32.mrf.mxu0
  %v8860 = vadd.f32 %v8747, %v8859
  %8861 = vmatmul.f32.gmra.mxu0 %v8633
  %v8862 = vpop.f32.mrf.mxu0
  %v8863 = vadd.f32 %v8750, %v8862
  %8864 = vmatmul.f32.gmra.mxu0 %v8636
  %v8865 = vpop.f32.mrf.mxu0
  %v8866 = vadd.f32 %v8753, %v8865
  %8867 = vmatmul.f32.gmra.mxu0 %v8639
  %v8868 = vpop.f32.mrf.mxu0
  %v8869 = vadd.f32 %v8756, %v8868
  %8870 = vmatmul.f32.gmra.mxu0 %v8642
  %v8871 = vpop.f32.mrf.mxu0
  %v8872 = vadd.f32 %v8759, %v8871
  %8873 = vmatmul.f32.gmra.mxu0 %v8645
  %v8874 = vpop.f32.mrf.mxu0
  %v8875 = vadd.f32 %v8762, %v8874
  %8876 = vmatmul.f32.gmra.mxu0 %v8648
  %v8877 = vpop.f32.mrf.mxu0
  %v8878 = vadd.f32 %v8765, %v8877
  %8879 = vmatmul.f32.gmra.mxu0 %v8651
  %v8880 = vpop.f32.mrf.mxu0
  %v8881 = vadd.f32 %v8768, %v8880
  %8882 = vmatmul.f32.gmra.mxu0 %v8654
  %v8883 = vpop.f32.mrf.mxu0
  %v8884 = vadd.f32 %v8771, %v8883
  %8885 = vmatmul.f32.gmra.mxu0 %v8657
  %v8886 = vpop.f32.mrf.mxu0
  %v8887 = vadd.f32 %v8774, %v8886
  %8888 = vmatmul.f32.gmra.mxu0 %v8660
  %v8889 = vpop.f32.mrf.mxu0
  %v8890 = vadd.f32 %v8777, %v8889
  %8891 = vmatmul.f32.gmra.mxu0 %v8663
  %v8892 = vpop.f32.mrf.mxu0
  %v8893 = vadd.f32 %v8780, %v8892
  %8894 = vmatmul.f32.gmra.mxu0 %v8666
  %v8895 = vpop.f32.mrf.mxu0
  %v8896 = vadd.f32 %v8783, %v8895
  %8897 = vmatmul.f32.gmra.mxu0 %v8669
  %v8898 = vpop.f32.mrf.mxu0
  %v8899 = vadd.f32 %v8786, %v8898
  %8900 = vmatmul.f32.gmra.mxu0 %v8672
  %v8901 = vpop.f32.mrf.mxu0
  %v8902 = vadd.f32 %v8789, %v8901
  %8903 = vmatmul.f32.gmra.mxu0 %v8675
  %v8904 = vpop.f32.mrf.mxu0
  %v8905 = vadd.f32 %v8792, %v8904
  %8906 = vmatmul.f32.gmra.mxu0 %v8678
  %v8907 = vpop.f32.mrf.mxu0
  %v8908 = vadd.f32 %v8795, %v8907
  %8909 = vmatmul.f32.gmra.mxu0 %v8681
  %v8910 = vpop.f32.mrf.mxu0
  %v8911 = vadd.f32 %v8798, %v8910
  %8912 = vdwg.mxu0
  %v8917 = vrot.slane %v4181, 1
  %v8918 = vrot.slane %v4181, 2
  %v8919 = vrot.slane %v4181, 3
  %v8920 = vrot.slane %v4181, 4
  %v8921 = vrot.slane %v4181, 5
  %v8922 = vrot.slane %v4181, 6
  %v8923 = vrot.slane %v4181, 7
  %v8924 = vrot.slane %v4182, 1
  %v8925 = vrot.slane %v4182, 2
  %v8926 = vrot.slane %v4182, 3
  %v8927 = vrot.slane %v4182, 4
  %v8928 = vrot.slane %v4182, 5
  %v8929 = vrot.slane %v4182, 6
  %v8930 = vrot.slane %v4182, 7
  %v8931 = vrot.slane %v4183, 1
  %v8932 = vrot.slane %v4183, 2
  %v8933 = vrot.slane %v4183, 3
  %v8934 = vrot.slane %v4183, 4
  %v8935 = vrot.slane %v4183, 5
  %v8936 = vrot.slane %v4183, 6
  %v8937 = vrot.slane %v4183, 7
  %v8938 = vrot.slane %v4184, 1
  %v8939 = vrot.slane %v4184, 2
  %v8940 = vrot.slane %v4184, 3
  %v8941 = vrot.slane %v4184, 4
  %v8942 = vrot.slane %v4184, 5
  %v8943 = vrot.slane %v4184, 6
  %v8944 = vrot.slane %v4184, 7
  %v8945 = vperm.slane %v4181, 0
  %v8946 = vperm.slane %v8917, 0
  %v8947 = vperm.slane %v8918, 0
  %v8948 = vperm.slane %v8919, 0
  %v8949 = vperm.slane %v8920, 0
  %v8950 = vperm.slane %v8921, 0
  %v8951 = vperm.slane %v8922, 0
  %v8952 = vperm.slane %v8923, 0
  %v8953 = vperm.slane %v4182, 0
  %v8954 = vperm.slane %v8924, 0
  %v8955 = vperm.slane %v8925, 0
  %v8956 = vperm.slane %v8926, 0
  %v8957 = vperm.slane %v8927, 0
  %v8958 = vperm.slane %v8928, 0
  %v8959 = vperm.slane %v8929, 0
  %v8960 = vperm.slane %v8930, 0
  %v8961 = vperm.slane %v4183, 0
  %v8962 = vperm.slane %v8931, 0
  %v8963 = vperm.slane %v8932, 0
  %v8964 = vperm.slane %v8933, 0
  %v8965 = vperm.slane %v8934, 0
  %v8966 = vperm.slane %v8935, 0
  %v8967 = vperm.slane %v8936, 0
  %v8968 = vperm.slane %v8937, 0
  %v8969 = vperm.slane %v4184, 0
  %v8970 = vperm.slane %v8938, 0
  %v8971 = vperm.slane %v8939, 0
  %v8972 = vperm.slane %v8940, 0
  %v8973 = vperm.slane %v8941, 0
  %v8974 = vperm.slane %v8942, 0
  %v8975 = vperm.slane %v8943, 0
  %v8976 = vperm.slane %v8944, 0
  %v9009 = vadd.f32 %v8818, %v8945
  %v9010 = vadd.f32 %v8821, %v8946
  %v9011 = vadd.f32 %v8824, %v8947
  %v9012 = vadd.f32 %v8827, %v8948
  %v9013 = vadd.f32 %v8830, %v8949
  %v9014 = vadd.f32 %v8833, %v8950
  %v9015 = vadd.f32 %v8836, %v8951
  %v9016 = vadd.f32 %v8839, %v8952
  %v9017 = vadd.f32 %v8842, %v8953
  %v9018 = vadd.f32 %v8845, %v8954
  %v9019 = vadd.f32 %v8848, %v8955
  %v9020 = vadd.f32 %v8851, %v8956
  %v9021 = vadd.f32 %v8854, %v8957
  %v9022 = vadd.f32 %v8857, %v8958
  %v9023 = vadd.f32 %v8860, %v8959
  %v9024 = vadd.f32 %v8863, %v8960
  %v9025 = vadd.f32 %v8866, %v8961
  %v9026 = vadd.f32 %v8869, %v8962
  %v9027 = vadd.f32 %v8872, %v8963
  %v9028 = vadd.f32 %v8875, %v8964
  %v9029 = vadd.f32 %v8878, %v8965
  %v9030 = vadd.f32 %v8881, %v8966
  %v9031 = vadd.f32 %v8884, %v8967
  %v9032 = vadd.f32 %v8887, %v8968
  %v9033 = vadd.f32 %v8890, %v8969
  %v9034 = vadd.f32 %v8893, %v8970
  %v9035 = vadd.f32 %v8896, %v8971
  %v9036 = vadd.f32 %v8899, %v8972
  %v9037 = vadd.f32 %v8902, %v8973
  %v9038 = vadd.f32 %v8905, %v8974
  %v9039 = vadd.f32 %v8908, %v8975
  %v9040 = vadd.f32 %v8911, %v8976
  %v9041 = vmax.f32 %v9009, 0.0
  %v9042 = vmax.f32 %v9010, 0.0
  %v9043 = vmax.f32 %v9011, 0.0
  %v9044 = vmax.f32 %v9012, 0.0
  %v9045 = vmax.f32 %v9013, 0.0
  %v9046 = vmax.f32 %v9014, 0.0
  %v9047 = vmax.f32 %v9015, 0.0
  %v9048 = vmax.f32 %v9016, 0.0
  %v9049 = vmax.f32 %v9017, 0.0
  %v9050 = vmax.f32 %v9018, 0.0
  %v9051 = vmax.f32 %v9019, 0.0
  %v9052 = vmax.f32 %v9020, 0.0
  %v9053 = vmax.f32 %v9021, 0.0
  %v9054 = vmax.f32 %v9022, 0.0
  %v9055 = vmax.f32 %v9023, 0.0
  %v9056 = vmax.f32 %v9024, 0.0
  %v9057 = vmax.f32 %v9025, 0.0
  %v9058 = vmax.f32 %v9026, 0.0
  %v9059 = vmax.f32 %v9027, 0.0
  %v9060 = vmax.f32 %v9028, 0.0
  %v9061 = vmax.f32 %v9029, 0.0
  %v9062 = vmax.f32 %v9030, 0.0
  %v9063 = vmax.f32 %v9031, 0.0
  %v9064 = vmax.f32 %v9032, 0.0
  %v9065 = vmax.f32 %v9033, 0.0
  %v9066 = vmax.f32 %v9034, 0.0
  %v9067 = vmax.f32 %v9035, 0.0
  %v9068 = vmax.f32 %v9036, 0.0
  %v9069 = vmax.f32 %v9037, 0.0
  %v9070 = vmax.f32 %v9038, 0.0
  %v9071 = vmax.f32 %v9039, 0.0
  %v9072 = vmax.f32 %v9040, 0.0
  %v9073 = vld [vmem:[%s5] sm:$0xff]
  %v9074 = vld [vmem:[%s5 + $0x8] sm:$0xff]
  %v9075 = vld [vmem:[%s5 + $0x10] sm:$0xff]
  %v9076 = vld [vmem:[%s5 + $0x18] sm:$0xff]
  %v9077 = vld [vmem:[%s5 + $0x20] sm:$0xff]
  %v9078 = vld [vmem:[%s5 + $0x28] sm:$0xff]
  %v9079 = vld [vmem:[%s5 + $0x30] sm:$0xff]
  %v9080 = vld [vmem:[%s5 + $0x38] sm:$0xff]
  %v9081 = vld [vmem:[%s5 + $0x40] sm:$0xff]
  %v9082 = vld [vmem:[%s5 + $0x48] sm:$0xff]
  %v9083 = vld [vmem:[%s5 + $0x50] sm:$0xff]
  %v9084 = vld [vmem:[%s5 + $0x58] sm:$0xff]
  %v9085 = vld [vmem:[%s5 + $0x60] sm:$0xff]
  %v9086 = vld [vmem:[%s5 + $0x68] sm:$0xff]
  %v9087 = vld [vmem:[%s5 + $0x70] sm:$0xff]
  %v9088 = vld [vmem:[%s5 + $0x78] sm:$0xff]
  %v9089 = vld [vmem:[%s5 + $0x80] sm:$0xff]
  %v9090 = vld [vmem:[%s5 + $0x88] sm:$0xff]
  %v9091 = vld [vmem:[%s5 + $0x90] sm:$0xff]
  %v9092 = vld [vmem:[%s5 + $0x98] sm:$0xff]
  %v9093 = vld [vmem:[%s5 + $0xa0] sm:$0xff]
  %v9094 = vld [vmem:[%s5 + $0xa8] sm:$0xff]
  %v9095 = vld [vmem:[%s5 + $0xb0] sm:$0xff]
  %v9096 = vld [vmem:[%s5 + $0xb8] sm:$0xff]
  %v9097 = vld [vmem:[%s5 + $0xc0] sm:$0xff]
  %v9098 = vld [vmem:[%s5 + $0xc8] sm:$0xff]
  %v9099 = vld [vmem:[%s5 + $0xd0] sm:$0xff]
  %v9100 = vld [vmem:[%s5 + $0xd8] sm:$0xff]
  %v9101 = vld [vmem:[%s5 + $0xe0] sm:$0xff]
  %v9102 = vld [vmem:[%s5 + $0xe8] sm:$0xff]
  %v9103 = vld [vmem:[%s5 + $0xf0] sm:$0xf]
  %v9104 = vld [vmem:[%s6] sm:$0xf]
  %v9105 = vadd.f32 %v4200, %v4201
  %v9106 = vadd.f32 %v9105, %v4202
  %v9107 = vadd.f32 %v9106, %v4204
  %v9108 = vadd.f32 %v9107, %v4206
  %v9109 = vadd.f32 %v9108, %v4208
  %v9110 = vadd.f32 %v9109, %v4210
  %v9111 = vadd.f32 %v9110, %v4212
  %v9112 = vadd.f32 %v9111, %v4214
  %v9113 = vadd.f32 %v9112, %v4216
  %v9114 = vadd.f32 %v9113, %v4217
  %v9115 = vadd.f32 %v9114, %v4219
  %v9116 = vadd.f32 %v9115, %v4221
  %v9117 = vadd.f32 %v9116, %v4223
  %v9118 = vadd.f32 %v9117, %v4225
  %v9119 = vadd.f32 %v9118, %v4227
  %v9120 = vadd.f32 %v9119, %v4229
  %v9121 = vadd.f32 %v9120, %v4231
  %v9122 = vadd.f32 %v9121, %v4232
  %v9123 = vadd.f32 %v9122, %v4234
  %v9124 = vadd.f32 %v9123, %v4236
  %v9125 = vadd.f32 %v9124, %v4238
  %v9126 = vadd.f32 %v9125, %v4240
  %v9127 = vadd.f32 %v9126, %v4242
  %v9128 = vadd.f32 %v9127, %v4244
  %v9129 = vadd.f32 %v9128, %v4246
  %v9130 = vadd.f32 %v9129, %v4247
  %v9131 = vadd.f32 %v9130, %v4249
  %v9132 = vadd.f32 %v9131, %v4251
  %v9133 = vadd.f32 %v9132, %v4253
  %v9134 = vadd.f32 %v9133, %v4255
  %v9135 = vadd.f32 %v9134, %v4257
  %v9136 = vadd.f32 %v9135, %v4259
  %v9137 = vadd.f32 %v9136, %v4261
  %v9138 = vadd.f32 %v9137, %v4262
  %v9139 = vadd.f32 %v9138, %v4264
  %v9140 = vadd.f32 %v9139, %v4266
  %v9141 = vadd.f32 %v9140, %v4268
  %v9142 = vadd.f32 %v9141, %v4270
  %v9143 = vadd.f32 %v9142, %v4272
  %v9144 = vadd.f32 %v9143, %v4274
  %v9145 = vadd.f32 %v9144, %v4276
  %v9146 = vadd.f32 %v9145, %v4277
  %v9147 = vadd.f32 %v9146, %v4279
  %v9148 = vadd.f32 %v9147, %v4281
  %v9149 = vadd.f32 %v9148, %v4283
  %v9150 = vadd.f32 %v9149, %v4285
  %v9151 = vadd.f32 %v9150, %v4287
  %v9152 = vadd.f32 %v9151, %v4289
  %v9153 = vadd.f32 %v9152, %v4291
  %v9154 = vadd.f32 %v9153, %v4292
  %v9155 = vadd.f32 %v9154, %v4294
  %v9156 = vadd.f32 %v9155, %v4296
  %v9157 = vadd.f32 %v9156, %v4298
  %v9158 = vadd.f32 %v9157, %v4300
  %v9159 = vadd.f32 %v9158, %v4302
  %v9160 = vadd.f32 %v9159, %v4304
  %v9161 = vadd.f32 %v4320, %v4321
  %v9162 = vadd.f32 %v9161, %v4322
  %v9163 = vadd.f32 %v9162, %v4324
  %v9164 = vadd.f32 %v9163, %v4326
  %v9165 = vadd.f32 %v9164, %v4328
  %v9166 = vadd.f32 %v9165, %v4330
  %v9167 = vadd.f32 %v9166, %v4332
  %v9168 = vadd.f32 %v9167, %v4334
  %v9169 = vadd.f32 %v9168, %v4336
  %v9170 = vadd.f32 %v9169, %v4337
  %v9171 = vadd.f32 %v9170, %v4339
  %v9172 = vadd.f32 %v9171, %v4341
  %v9173 = vadd.f32 %v9172, %v4343
  %v9174 = vadd.f32 %v9173, %v4345
  %v9175 = vadd.f32 %v9174, %v4347
  %v9176 = vadd.f32 %v9175, %v4349
  %v9177 = vadd.f32 %v9176, %v4351
  %v9178 = vadd.f32 %v9177, %v4352
  %v9179 = vadd.f32 %v9178, %v4354
  %v9180 = vadd.f32 %v9179, %v4356
  %v9181 = vadd.f32 %v9180, %v4358
  %v9182 = vadd.f32 %v9181, %v4360
  %v9183 = vadd.f32 %v9182, %v4362
  %v9184 = vadd.f32 %v9183, %v4364
  %v9185 = vadd.f32 %v9184, %v4366
  %v9186 = vadd.f32 %v9185, %v4367
  %v9187 = vadd.f32 %v9186, %v4369
  %v9188 = vadd.f32 %v9187, %v4371
  %v9189 = vadd.f32 %v9188, %v4373
  %v9190 = vadd.f32 %v9189, %v4375
  %v9191 = vadd.f32 %v9190, %v4377
  %v9192 = vadd.f32 %v9191, %v4379
  %v9193 = vadd.f32 %v9192, %v4381
  %v9194 = vadd.f32 %v9193, %v4382
  %v9195 = vadd.f32 %v9194, %v4384
  %v9196 = vadd.f32 %v9195, %v4386
  %v9197 = vadd.f32 %v9196, %v4388
  %v9198 = vadd.f32 %v9197, %v4390
  %v9199 = vadd.f32 %v9198, %v4392
  %v9200 = vadd.f32 %v9199, %v4394
  %v9201 = vadd.f32 %v9200, %v4396
  %v9202 = vadd.f32 %v9201, %v4397
  %v9203 = vadd.f32 %v9202, %v4399
  %v9204 = vadd.f32 %v9203, %v4401
  %v9205 = vadd.f32 %v9204, %v4403
  %v9206 = vadd.f32 %v9205, %v4405
  %v9207 = vadd.f32 %v9206, %v4407
  %v9208 = vadd.f32 %v9207, %v4409
  %v9209 = vadd.f32 %v9208, %v4411
  %v9210 = vadd.f32 %v9209, %v4412
  %v9211 = vadd.f32 %v9210, %v4414
  %v9212 = vadd.f32 %v9211, %v4416
  %v9213 = vadd.f32 %v9212, %v4418
  %v9214 = vadd.f32 %v9213, %v4420
  %v9215 = vadd.f32 %v9214, %v4422
  %v9216 = vadd.f32 %v9215, %v4424
  %v9217 = vadd.f32 %v4440, %v4441
  %v9218 = vadd.f32 %v9217, %v4442
  %v9219 = vadd.f32 %v9218, %v4444
  %v9220 = vadd.f32 %v9219, %v4446
  %v9221 = vadd.f32 %v9220, %v4448
  %v9222 = vadd.f32 %v9221, %v4450
  %v9223 = vadd.f32 %v9222, %v4452
  %v9224 = vadd.f32 %v9223, %v4454
  %v9225 = vadd.f32 %v9224, %v4456
  %v9226 = vadd.f32 %v9225, %v4457
  %v9227 = vadd.f32 %v9226, %v4459
  %v9228 = vadd.f32 %v9227, %v4461
  %v9229 = vadd.f32 %v9228, %v4463
  %v9230 = vadd.f32 %v9229, %v4465
  %v9231 = vadd.f32 %v9230, %v4467
  %v9232 = vadd.f32 %v9231, %v4469
  %v9233 = vadd.f32 %v9232, %v4471
  %v9234 = vadd.f32 %v9233, %v4472
  %v9235 = vadd.f32 %v9234, %v4474
  %v9236 = vadd.f32 %v9235, %v4476
  %v9237 = vadd.f32 %v9236, %v4478
  %v9238 = vadd.f32 %v9237, %v4480
  %v9239 = vadd.f32 %v9238, %v4482
  %v9240 = vadd.f32 %v9239, %v4484
  %v9241 = vadd.f32 %v9240, %v4486
  %v9242 = vadd.f32 %v9241, %v4487
  %v9243 = vadd.f32 %v9242, %v4489
  %v9244 = vadd.f32 %v9243, %v4491
  %v9245 = vadd.f32 %v9244, %v4493
  %v9246 = vadd.f32 %v9245, %v4495
  %v9247 = vadd.f32 %v9246, %v4497
  %v9248 = vadd.f32 %v9247, %v4499
  %v9249 = vadd.f32 %v9248, %v4501
  %v9250 = vadd.f32 %v9249, %v4502
  %v9251 = vadd.f32 %v9250, %v4504
  %v9252 = vadd.f32 %v9251, %v4506
  %v9253 = vadd.f32 %v9252, %v4508
  %v9254 = vadd.f32 %v9253, %v4510
  %v9255 = vadd.f32 %v9254, %v4512
  %v9256 = vadd.f32 %v9255, %v4514
  %v9257 = vadd.f32 %v9256, %v4516
  %v9258 = vadd.f32 %v9257, %v4517
  %v9259 = vadd.f32 %v9258, %v4519
  %v9260 = vadd.f32 %v9259, %v4521
  %v9261 = vadd.f32 %v9260, %v4523
  %v9262 = vadd.f32 %v9261, %v4525
  %v9263 = vadd.f32 %v9262, %v4527
  %v9264 = vadd.f32 %v9263, %v4529
  %v9265 = vadd.f32 %v9264, %v4531
  %v9266 = vadd.f32 %v9265, %v4532
  %v9267 = vadd.f32 %v9266, %v4534
  %v9268 = vadd.f32 %v9267, %v4536
  %v9269 = vadd.f32 %v9268, %v4538
  %v9270 = vadd.f32 %v9269, %v4540
  %v9271 = vadd.f32 %v9270, %v4542
  %v9272 = vadd.f32 %v9271, %v4544
  %v9273 = vadd.f32 %v4560, %v4561
  %v9274 = vadd.f32 %v9273, %v4562
  %v9275 = vadd.f32 %v9274, %v4564
  %v9276 = vadd.f32 %v9275, %v4566
  %v9277 = vadd.f32 %v9276, %v4568
  %v9278 = vadd.f32 %v9277, %v4570
  %v9279 = vadd.f32 %v9278, %v4572
  %v9280 = vadd.f32 %v9279, %v4574
  %v9281 = vadd.f32 %v9280, %v4576
  %v9282 = vadd.f32 %v9281, %v4577
  %v9283 = vadd.f32 %v9282, %v4579
  %v9284 = vadd.f32 %v9283, %v4581
  %v9285 = vadd.f32 %v9284, %v4583
  %v9286 = vadd.f32 %v9285, %v4585
  %v9287 = vadd.f32 %v9286, %v4587
  %v9288 = vadd.f32 %v9287, %v4589
  %v9289 = vadd.f32 %v9288, %v4591
  %v9290 = vadd.f32 %v9289, %v4592
  %v9291 = vadd.f32 %v9290, %v4594
  %v9292 = vadd.f32 %v9291, %v4596
  %v9293 = vadd.f32 %v9292, %v4598
  %v9294 = vadd.f32 %v9293, %v4600
  %v9295 = vadd.f32 %v9294, %v4602
  %v9296 = vadd.f32 %v9295, %v4604
  %v9297 = vadd.f32 %v9296, %v4606
  %v9298 = vadd.f32 %v9297, %v4607
  %v9299 = vadd.f32 %v9298, %v4609
  %v9300 = vadd.f32 %v9299, %v4611
  %v9301 = vadd.f32 %v9300, %v4613
  %v9302 = vadd.f32 %v9301, %v4615
  %v9303 = vadd.f32 %v9302, %v4617
  %v9304 = vadd.f32 %v9303, %v4619
  %v9305 = vadd.f32 %v9304, %v4621
  %v9306 = vadd.f32 %v9305, %v4622
  %v9307 = vadd.f32 %v9306, %v4624
  %v9308 = vadd.f32 %v9307, %v4626
  %v9309 = vadd.f32 %v9308, %v4628
  %v9310 = vadd.f32 %v9309, %v4630
  %v9311 = vadd.f32 %v9310, %v4632
  %v9312 = vadd.f32 %v9311, %v4634
  %v9313 = vadd.f32 %v9312, %v4636
  %v9314 = vadd.f32 %v9313, %v4637
  %v9315 = vadd.f32 %v9314, %v4639
  %v9316 = vadd.f32 %v9315, %v4641
  %v9317 = vadd.f32 %v9316, %v4643
  %v9318 = vadd.f32 %v9317, %v4645
  %v9319 = vadd.f32 %v9318, %v4647
  %v9320 = vadd.f32 %v9319, %v4649
  %v9321 = vadd.f32 %v9320, %v4651
  %v9322 = vadd.f32 %v9321, %v4652
  %v9323 = vadd.f32 %v9322, %v4654
  %v9324 = vadd.f32 %v9323, %v4656
  %v9325 = vadd.f32 %v9324, %v4658
  %v9326 = vadd.f32 %v9325, %v4660
  %v9327 = vadd.f32 %v9326, %v4662
  %v9328 = vadd.f32 %v9327, %v4664
  %v9329 = vrcp.pop 64.0
  %v9330 = vmul.f32 64.0, %v9329
  %v9331 = vsub.f32 1.0, %v9330
  %v9332 = vmul.f32 %v9329, %v9331
  %v9333 = vadd.f32 %v9329, %v9332
  %vm9334 = vweird.f32 %v9329
  %v9335 = vsel %vm9334, %v9329, %v9333
  %v9336 = vmul.f32 %v9160, %v9335
  %v9337 = vmul.f32 %v9216, %v9335
  %v9338 = vmul.f32 %v9272, %v9335
  %v9339 = vmul.f32 %v9328, %v9335
  %v9340 = vsub.f32 %v3894, %v9336
  %v9341 = vsub.f32 %v3895, %v9336
  %v9342 = vsub.f32 %v3896, %v9336
  %v9343 = vsub.f32 %v3897, %v9336
  %v9344 = vsub.f32 %v3898, %v9336
  %v9345 = vsub.f32 %v3899, %v9336
  %v9346 = vsub.f32 %v3900, %v9336
  %v9347 = vsub.f32 %v3901, %v9336
  %v9348 = vsub.f32 %v3902, %v9336
  %v9349 = vsub.f32 %v3903, %v9336
  %v9350 = vsub.f32 %v3904, %v9336
  %v9351 = vsub.f32 %v3905, %v9336
  %v9352 = vsub.f32 %v3906, %v9336
  %v9353 = vsub.f32 %v3907, %v9336
  %v9354 = vsub.f32 %v3908, %v9336
  %v9355 = vsub.f32 %v3909, %v9336
  %v9356 = vsub.f32 %v3910, %v9336
  %v9357 = vsub.f32 %v3911, %v9336
  %v9358 = vsub.f32 %v3912, %v9336
  %v9359 = vsub.f32 %v3913, %v9336
  %v9360 = vsub.f32 %v3914, %v9336
  %v9361 = vsub.f32 %v3915, %v9336
  %v9362 = vsub.f32 %v3916, %v9336
  %v9363 = vsub.f32 %v3917, %v9336
  %v9364 = vsub.f32 %v3918, %v9336
  %v9365 = vsub.f32 %v3919, %v9336
  %v9366 = vsub.f32 %v3920, %v9336
  %v9367 = vsub.f32 %v3921, %v9336
  %v9368 = vsub.f32 %v3922, %v9336
  %v9369 = vsub.f32 %v3923, %v9336
  %v9370 = vsub.f32 %v3924, %v9336
  %v9371 = vsub.f32 %v3925, %v9336
  %v9372 = vsub.f32 %v3926, %v9336
  %v9373 = vsub.f32 %v3927, %v9336
  %v9374 = vsub.f32 %v3928, %v9336
  %v9375 = vsub.f32 %v3929, %v9336
  %v9376 = vsub.f32 %v3930, %v9336
  %v9377 = vsub.f32 %v3931, %v9336
  %v9378 = vsub.f32 %v3932, %v9336
  %v9379 = vsub.f32 %v3933, %v9336
  %v9380 = vsub.f32 %v3934, %v9336
  %v9381 = vsub.f32 %v3935, %v9336
  %v9382 = vsub.f32 %v3936, %v9336
  %v9383 = vsub.f32 %v3937, %v9336
  %v9384 = vsub.f32 %v3938, %v9336
  %v9385 = vsub.f32 %v3939, %v9336
  %v9386 = vsub.f32 %v3940, %v9336
  %v9387 = vsub.f32 %v3941, %v9336
  %v9388 = vsub.f32 %v3942, %v9336
  %v9389 = vsub.f32 %v3943, %v9336
  %v9390 = vsub.f32 %v3944, %v9336
  %v9391 = vsub.f32 %v3945, %v9336
  %v9392 = vsub.f32 %v3946, %v9336
  %v9393 = vsub.f32 %v3947, %v9336
  %v9394 = vsub.f32 %v3948, %v9336
  %v9395 = vsub.f32 %v3949, %v9336
  %v9396 = vsub.f32 %v3950, %v9336
  %v9397 = vsub.f32 %v3951, %v9336
  %v9398 = vsub.f32 %v3952, %v9336
  %v9399 = vsub.f32 %v3953, %v9336
  %v9400 = vsub.f32 %v3954, %v9336
  %v9401 = vsub.f32 %v3955, %v9336
  %v9402 = vsub.f32 %v3956, %v9336
  %v9403 = vsub.f32 %v3957, %v9336
  %v9404 = vsub.f32 %v3958, %v9337
  %v9405 = vsub.f32 %v3959, %v9337
  %v9406 = vsub.f32 %v3960, %v9337
  %v9407 = vsub.f32 %v3961, %v9337
  %v9408 = vsub.f32 %v3962, %v9337
  %v9409 = vsub.f32 %v3963, %v9337
  %v9410 = vsub.f32 %v3964, %v9337
  %v9411 = vsub.f32 %v3965, %v9337
  %v9412 = vsub.f32 %v3966, %v9337
  %v9413 = vsub.f32 %v3967, %v9337
  %v9414 = vsub.f32 %v3968, %v9337
  %v9415 = vsub.f32 %v3969, %v9337
  %v9416 = vsub.f32 %v3970, %v9337
  %v9417 = vsub.f32 %v3971, %v9337
  %v9418 = vsub.f32 %v3972, %v9337
  %v9419 = vsub.f32 %v3973, %v9337
  %v9420 = vsub.f32 %v3974, %v9337
  %v9421 = vsub.f32 %v3975, %v9337
  %v9422 = vsub.f32 %v3976, %v9337
  %v9423 = vsub.f32 %v3977, %v9337
  %v9424 = vsub.f32 %v3978, %v9337
  %v9425 = vsub.f32 %v3979, %v9337
  %v9426 = vsub.f32 %v3980, %v9337
  %v9427 = vsub.f32 %v3981, %v9337
  %v9428 = vsub.f32 %v3982, %v9337
  %v9429 = vsub.f32 %v3983, %v9337
  %v9430 = vsub.f32 %v3984, %v9337
  %v9431 = vsub.f32 %v3985, %v9337
  %v9432 = vsub.f32 %v3986, %v9337
  %v9433 = vsub.f32 %v3987, %v9337
  %v9434 = vsub.f32 %v3988, %v9337
  %v9435 = vsub.f32 %v3989, %v9337
  %v9436 = vsub.f32 %v3990, %v9337
  %v9437 = vsub.f32 %v3991, %v9337
  %v9438 = vsub.f32 %v3992, %v9337
  %v9439 = vsub.f32 %v3993, %v9337
  %v9440 = vsub.f32 %v3994, %v9337
  %v9441 = vsub.f32 %v3995, %v9337
  %v9442 = vsub.f32 %v3996, %v9337
  %v9443 = vsub.f32 %v3997, %v9337
  %v9444 = vsub.f32 %v3998, %v9337
  %v9445 = vsub.f32 %v3999, %v9337
  %v9446 = vsub.f32 %v4000, %v9337
  %v9447 = vsub.f32 %v4001, %v9337
  %v9448 = vsub.f32 %v4002, %v9337
  %v9449 = vsub.f32 %v4003, %v9337
  %v9450 = vsub.f32 %v4004, %v9337
  %v9451 = vsub.f32 %v4005, %v9337
  %v9452 = vsub.f32 %v4006, %v9337
  %v9453 = vsub.f32 %v4007, %v9337
  %v9454 = vsub.f32 %v4008, %v9337
  %v9455 = vsub.f32 %v4009, %v9337
  %v9456 = vsub.f32 %v4010, %v9337
  %v9457 = vsub.f32 %v4011, %v9337
  %v9458 = vsub.f32 %v4012, %v9337
  %v9459 = vsub.f32 %v4013, %v9337
  %v9460 = vsub.f32 %v4014, %v9337
  %v9461 = vsub.f32 %v4015, %v9337
  %v9462 = vsub.f32 %v4016, %v9337
  %v9463 = vsub.f32 %v4017, %v9337
  %v9464 = vsub.f32 %v4018, %v9337
  %v9465 = vsub.f32 %v4019, %v9337
  %v9466 = vsub.f32 %v4020, %v9337
  %v9467 = vsub.f32 %v4021, %v9337
  %v9468 = vsub.f32 %v4022, %v9338
  %v9469 = vsub.f32 %v4023, %v9338
  %v9470 = vsub.f32 %v4024, %v9338
  %v9471 = vsub.f32 %v4025, %v9338
  %v9472 = vsub.f32 %v4026, %v9338
  %v9473 = vsub.f32 %v4027, %v9338
  %v9474 = vsub.f32 %v4028, %v9338
  %v9475 = vsub.f32 %v4029, %v9338
  %v9476 = vsub.f32 %v4030, %v9338
  %v9477 = vsub.f32 %v4031, %v9338
  %v9478 = vsub.f32 %v4032, %v9338
  %v9479 = vsub.f32 %v4033, %v9338
  %v9480 = vsub.f32 %v4034, %v9338
  %v9481 = vsub.f32 %v4035, %v9338
  %v9482 = vsub.f32 %v4036, %v9338
  %v9483 = vsub.f32 %v4037, %v9338
  %v9484 = vsub.f32 %v4038, %v9338
  %v9485 = vsub.f32 %v4039, %v9338
  %v9486 = vsub.f32 %v4040, %v9338
  %v9487 = vsub.f32 %v4041, %v9338
  %v9488 = vsub.f32 %v4042, %v9338
  %v9489 = vsub.f32 %v4043, %v9338
  %v9490 = vsub.f32 %v4044, %v9338
  %v9491 = vsub.f32 %v4045, %v9338
  %v9492 = vsub.f32 %v4046, %v9338
  %v9493 = vsub.f32 %v4047, %v9338
  %v9494 = vsub.f32 %v4048, %v9338
  %v9495 = vsub.f32 %v4049, %v9338
  %v9496 = vsub.f32 %v4050, %v9338
  %v9497 = vsub.f32 %v4051, %v9338
  %v9498 = vsub.f32 %v4052, %v9338
  %v9499 = vsub.f32 %v4053, %v9338
  %v9500 = vsub.f32 %v4054, %v9338
  %v9501 = vsub.f32 %v4055, %v9338
  %v9502 = vsub.f32 %v4056, %v9338
  %v9503 = vsub.f32 %v4057, %v9338
  %v9504 = vsub.f32 %v4058, %v9338
  %v9505 = vsub.f32 %v4059, %v9338
  %v9506 = vsub.f32 %v4060, %v9338
  %v9507 = vsub.f32 %v4061, %v9338
  %v9508 = vsub.f32 %v4062, %v9338
  %v9509 = vsub.f32 %v4063, %v9338
  %v9510 = vsub.f32 %v4064, %v9338
  %v9511 = vsub.f32 %v4065, %v9338
  %v9512 = vsub.f32 %v4066, %v9338
  %v9513 = vsub.f32 %v4067, %v9338
  %v9514 = vsub.f32 %v4068, %v9338
  %v9515 = vsub.f32 %v4069, %v9338
  %v9516 = vsub.f32 %v4070, %v9338
  %v9517 = vsub.f32 %v4071, %v9338
  %v9518 = vsub.f32 %v4072, %v9338
  %v9519 = vsub.f32 %v4073, %v9338
  %v9520 = vsub.f32 %v4074, %v9338
  %v9521 = vsub.f32 %v4075, %v9338
  %v9522 = vsub.f32 %v4076, %v9338
  %v9523 = vsub.f32 %v4077, %v9338
  %v9524 = vsub.f32 %v4078, %v9338
  %v9525 = vsub.f32 %v4079, %v9338
  %v9526 = vsub.f32 %v4080, %v9338
  %v9527 = vsub.f32 %v4081, %v9338
  %v9528 = vsub.f32 %v4082, %v9338
  %v9529 = vsub.f32 %v4083, %v9338
  %v9530 = vsub.f32 %v4084, %v9338
  %v9531 = vsub.f32 %v4085, %v9338
  %v9532 = vsub.f32 %v4086, %v9339
  %v9533 = vsub.f32 %v4087, %v9339
  %v9534 = vsub.f32 %v4088, %v9339
  %v9535 = vsub.f32 %v4089, %v9339
  %v9536 = vsub.f32 %v4090, %v9339
  %v9537 = vsub.f32 %v4091, %v9339
  %v9538 = vsub.f32 %v4092, %v9339
  %v9539 = vsub.f32 %v4093, %v9339
  %v9540 = vsub.f32 %v4094, %v9339
  %v9541 = vsub.f32 %v4095, %v9339
  %v9542 = vsub.f32 %v4096, %v9339
  %v9543 = vsub.f32 %v4097, %v9339
  %v9544 = vsub.f32 %v4098, %v9339
  %v9545 = vsub.f32 %v4099, %v9339
  %v9546 = vsub.f32 %v4100, %v9339
  %v9547 = vsub.f32 %v4101, %v9339
  %v9548 = vsub.f32 %v4102, %v9339
  %v9549 = vsub.f32 %v4103, %v9339
  %v9550 = vsub.f32 %v4104, %v9339
  %v9551 = vsub.f32 %v4105, %v9339
  %v9552 = vsub.f32 %v4106, %v9339
  %v9553 = vsub.f32 %v4107, %v9339
  %v9554 = vsub.f32 %v4108, %v9339
  %v9555 = vsub.f32 %v4109, %v9339
  %v9556 = vsub.f32 %v4110, %v9339
  %v9557 = vsub.f32 %v4111, %v9339
  %v9558 = vsub.f32 %v4112, %v9339
  %v9559 = vsub.f32 %v4113, %v9339
  %v9560 = vsub.f32 %v4114, %v9339
  %v9561 = vsub.f32 %v4115, %v9339
  %v9562 = vsub.f32 %v4116, %v9339
  %v9563 = vsub.f32 %v4117, %v9339
  %v9564 = vsub.f32 %v4118, %v9339
  %v9565 = vsub.f32 %v4119, %v9339
  %v9566 = vsub.f32 %v4120, %v9339
  %v9567 = vsub.f32 %v4121, %v9339
  %v9568 = vsub.f32 %v4122, %v9339
  %v9569 = vsub.f32 %v4123, %v9339
  %v9570 = vsub.f32 %v4124, %v9339
  %v9571 = vsub.f32 %v4125, %v9339
  %v9572 = vsub.f32 %v4126, %v9339
  %v9573 = vsub.f32 %v4127, %v9339
  %v9574 = vsub.f32 %v4128, %v9339
  %v9575 = vsub.f32 %v4129, %v9339
  %v9576 = vsub.f32 %v4130, %v9339
  %v9577 = vsub.f32 %v4131, %v9339
  %v9578 = vsub.f32 %v4132, %v9339
  %v9579 = vsub.f32 %v4133, %v9339
  %v9580 = vsub.f32 %v4134, %v9339
  %v9581 = vsub.f32 %v4135, %v9339
  %v9582 = vsub.f32 %v4136, %v9339
  %v9583 = vsub.f32 %v4137, %v9339
  %v9584 = vsub.f32 %v4138, %v9339
  %v9585 = vsub.f32 %v4139, %v9339
  %v9586 = vsub.f32 %v4140, %v9339
  %v9587 = vsub.f32 %v4141, %v9339
  %v9588 = vsub.f32 %v4142, %v9339
  %v9589 = vsub.f32 %v4143, %v9339
  %v9590 = vsub.f32 %v4144, %v9339
  %v9591 = vsub.f32 %v4145, %v9339
  %v9592 = vsub.f32 %v4146, %v9339
  %v9593 = vsub.f32 %v4147, %v9339
  %v9594 = vsub.f32 %v4148, %v9339
  %v9595 = vsub.f32 %v4149, %v9339
  %v9596 = vmul.f32 %v9340, %v9340
  %v9597 = vmul.f32 %v9341, %v9341
  %v9598 = vmul.f32 %v9342, %v9342
  %v9599 = vmul.f32 %v9343, %v9343
  %v9600 = vmul.f32 %v9344, %v9344
  %v9601 = vmul.f32 %v9345, %v9345
  %v9602 = vmul.f32 %v9346, %v9346
  %v9603 = vmul.f32 %v9347, %v9347
  %v9604 = vmul.f32 %v9348, %v9348
  %v9605 = vmul.f32 %v9349, %v9349
  %v9606 = vmul.f32 %v9350, %v9350
  %v9607 = vmul.f32 %v9351, %v9351
  %v9608 = vmul.f32 %v9352, %v9352
  %v9609 = vmul.f32 %v9353, %v9353
  %v9610 = vmul.f32 %v9354, %v9354
  %v9611 = vmul.f32 %v9355, %v9355
  %v9612 = vmul.f32 %v9356, %v9356
  %v9613 = vmul.f32 %v9357, %v9357
  %v9614 = vmul.f32 %v9358, %v9358
  %v9615 = vmul.f32 %v9359, %v9359
  %v9616 = vmul.f32 %v9360, %v9360
  %v9617 = vmul.f32 %v9361, %v9361
  %v9618 = vmul.f32 %v9362, %v9362
  %v9619 = vmul.f32 %v9363, %v9363
  %v9620 = vmul.f32 %v9364, %v9364
  %v9621 = vmul.f32 %v9365, %v9365
  %v9622 = vmul.f32 %v9366, %v9366
  %v9623 = vmul.f32 %v9367, %v9367
  %v9624 = vmul.f32 %v9368, %v9368
  %v9625 = vmul.f32 %v9369, %v9369
  %v9626 = vmul.f32 %v9370, %v9370
  %v9627 = vmul.f32 %v9371, %v9371
  %v9628 = vmul.f32 %v9372, %v9372
  %v9629 = vmul.f32 %v9373, %v9373
  %v9630 = vmul.f32 %v9374, %v9374
  %v9631 = vmul.f32 %v9375, %v9375
  %v9632 = vmul.f32 %v9376, %v9376
  %v9633 = vmul.f32 %v9377, %v9377
  %v9634 = vmul.f32 %v9378, %v9378
  %v9635 = vmul.f32 %v9379, %v9379
  %v9636 = vmul.f32 %v9380, %v9380
  %v9637 = vmul.f32 %v9381, %v9381
  %v9638 = vmul.f32 %v9382, %v9382
  %v9639 = vmul.f32 %v9383, %v9383
  %v9640 = vmul.f32 %v9384, %v9384
  %v9641 = vmul.f32 %v9385, %v9385
  %v9642 = vmul.f32 %v9386, %v9386
  %v9643 = vmul.f32 %v9387, %v9387
  %v9644 = vmul.f32 %v9388, %v9388
  %v9645 = vmul.f32 %v9389, %v9389
  %v9646 = vmul.f32 %v9390, %v9390
  %v9647 = vmul.f32 %v9391, %v9391
  %v9648 = vmul.f32 %v9392, %v9392
  %v9649 = vmul.f32 %v9393, %v9393
  %v9650 = vmul.f32 %v9394, %v9394
  %v9651 = vmul.f32 %v9395, %v9395
  %v9652 = vmul.f32 %v9396, %v9396
  %v9653 = vmul.f32 %v9397, %v9397
  %v9654 = vmul.f32 %v9398, %v9398
  %v9655 = vmul.f32 %v9399, %v9399
  %v9656 = vmul.f32 %v9400, %v9400
  %v9657 = vmul.f32 %v9401, %v9401
  %v9658 = vmul.f32 %v9402, %v9402
  %v9659 = vmul.f32 %v9403, %v9403
  %v9660 = vmul.f32 %v9404, %v9404
  %v9661 = vmul.f32 %v9405, %v9405
  %v9662 = vmul.f32 %v9406, %v9406
  %v9663 = vmul.f32 %v9407, %v9407
  %v9664 = vmul.f32 %v9408, %v9408
  %v9665 = vmul.f32 %v9409, %v9409
  %v9666 = vmul.f32 %v9410, %v9410
  %v9667 = vmul.f32 %v9411, %v9411
  %v9668 = vmul.f32 %v9412, %v9412
  %v9669 = vmul.f32 %v9413, %v9413
  %v9670 = vmul.f32 %v9414, %v9414
  %v9671 = vmul.f32 %v9415, %v9415
  %v9672 = vmul.f32 %v9416, %v9416
  %v9673 = vmul.f32 %v9417, %v9417
  %v9674 = vmul.f32 %v9418, %v9418
  %v9675 = vmul.f32 %v9419, %v9419
  %v9676 = vmul.f32 %v9420, %v9420
  %v9677 = vmul.f32 %v9421, %v9421
  %v9678 = vmul.f32 %v9422, %v9422
  %v9679 = vmul.f32 %v9423, %v9423
  %v9680 = vmul.f32 %v9424, %v9424
  %v9681 = vmul.f32 %v9425, %v9425
  %v9682 = vmul.f32 %v9426, %v9426
  %v9683 = vmul.f32 %v9427, %v9427
  %v9684 = vmul.f32 %v9428, %v9428
  %v9685 = vmul.f32 %v9429, %v9429
  %v9686 = vmul.f32 %v9430, %v9430
  %v9687 = vmul.f32 %v9431, %v9431
  %v9688 = vmul.f32 %v9432, %v9432
  %v9689 = vmul.f32 %v9433, %v9433
  %v9690 = vmul.f32 %v9434, %v9434
  %v9691 = vmul.f32 %v9435, %v9435
  %v9692 = vmul.f32 %v9436, %v9436
  %v9693 = vmul.f32 %v9437, %v9437
  %v9694 = vmul.f32 %v9438, %v9438
  %v9695 = vmul.f32 %v9439, %v9439
  %v9696 = vmul.f32 %v9440, %v9440
  %v9697 = vmul.f32 %v9441, %v9441
  %v9698 = vmul.f32 %v9442, %v9442
  %v9699 = vmul.f32 %v9443, %v9443
  %v9700 = vmul.f32 %v9444, %v9444
  %v9701 = vmul.f32 %v9445, %v9445
  %v9702 = vmul.f32 %v9446, %v9446
  %v9703 = vmul.f32 %v9447, %v9447
  %v9704 = vmul.f32 %v9448, %v9448
  %v9705 = vmul.f32 %v9449, %v9449
  %v9706 = vmul.f32 %v9450, %v9450
  %v9707 = vmul.f32 %v9451, %v9451
  %v9708 = vmul.f32 %v9452, %v9452
  %v9709 = vmul.f32 %v9453, %v9453
  %v9710 = vmul.f32 %v9454, %v9454
  %v9711 = vmul.f32 %v9455, %v9455
  %v9712 = vmul.f32 %v9456, %v9456
  %v9713 = vmul.f32 %v9457, %v9457
  %v9714 = vmul.f32 %v9458, %v9458
  %v9715 = vmul.f32 %v9459, %v9459
  %v9716 = vmul.f32 %v9460, %v9460
  %v9717 = vmul.f32 %v9461, %v9461
  %v9718 = vmul.f32 %v9462, %v9462
  %v9719 = vmul.f32 %v9463, %v9463
  %v9720 = vmul.f32 %v9464, %v9464
  %v9721 = vmul.f32 %v9465, %v9465
  %v9722 = vmul.f32 %v9466, %v9466
  %v9723 = vmul.f32 %v9467, %v9467
  %v9724 = vmul.f32 %v9468, %v9468
  %v9725 = vmul.f32 %v9469, %v9469
  %v9726 = vmul.f32 %v9470, %v9470
  %v9727 = vmul.f32 %v9471, %v9471
  %v9728 = vmul.f32 %v9472, %v9472
  %v9729 = vmul.f32 %v9473, %v9473
  %v9730 = vmul.f32 %v9474, %v9474
  %v9731 = vmul.f32 %v9475, %v9475
  %v9732 = vmul.f32 %v9476, %v9476
  %v9733 = vmul.f32 %v9477, %v9477
  %v9734 = vmul.f32 %v9478, %v9478
  %v9735 = vmul.f32 %v9479, %v9479
  %v9736 = vmul.f32 %v9480, %v9480
  %v9737 = vmul.f32 %v9481, %v9481
  %v9738 = vmul.f32 %v9482, %v9482
  %v9739 = vmul.f32 %v9483, %v9483
  %v9740 = vmul.f32 %v9484, %v9484
  %v9741 = vmul.f32 %v9485, %v9485
  %v9742 = vmul.f32 %v9486, %v9486
  %v9743 = vmul.f32 %v9487, %v9487
  %v9744 = vmul.f32 %v9488, %v9488
  %v9745 = vmul.f32 %v9489, %v9489
  %v9746 = vmul.f32 %v9490, %v9490
  %v9747 = vmul.f32 %v9491, %v9491
  %v9748 = vmul.f32 %v9492, %v9492
  %v9749 = vmul.f32 %v9493, %v9493
  %v9750 = vmul.f32 %v9494, %v9494
  %v9751 = vmul.f32 %v9495, %v9495
  %v9752 = vmul.f32 %v9496, %v9496
  %v9753 = vmul.f32 %v9497, %v9497
  %v9754 = vmul.f32 %v9498, %v9498
  %v9755 = vmul.f32 %v9499, %v9499
  %v9756 = vmul.f32 %v9500, %v9500
  %v9757 = vmul.f32 %v9501, %v9501
  %v9758 = vmul.f32 %v9502, %v9502
  %v9759 = vmul.f32 %v9503, %v9503
  %v9760 = vmul.f32 %v9504, %v9504
  %v9761 = vmul.f32 %v9505, %v9505
  %v9762 = vmul.f32 %v9506, %v9506
  %v9763 = vmul.f32 %v9507, %v9507
  %v9764 = vmul.f32 %v9508, %v9508
  %v9765 = vmul.f32 %v9509, %v9509
  %v9766 = vmul.f32 %v9510, %v9510
  %v9767 = vmul.f32 %v9511, %v9511
  %v9768 = vmul.f32 %v9512, %v9512
  %v9769 = vmul.f32 %v9513, %v9513
  %v9770 = vmul.f32 %v9514, %v9514
  %v9771 = vmul.f32 %v9515, %v9515
  %v9772 = vmul.f32 %v9516, %v9516
  %v9773 = vmul.f32 %v9517, %v9517
  %v9774 = vmul.f32 %v9518, %v9518
  %v9775 = vmul.f32 %v9519, %v9519
  %v9776 = vmul.f32 %v9520, %v9520
  %v9777 = vmul.f32 %v9521, %v9521
  %v9778 = vmul.f32 %v9522, %v9522
  %v9779 = vmul.f32 %v9523, %v9523
  %v9780 = vmul.f32 %v9524, %v9524
  %v9781 = vmul.f32 %v9525, %v9525
  %v9782 = vmul.f32 %v9526, %v9526
  %v9783 = vmul.f32 %v9527, %v9527
  %v9784 = vmul.f32 %v9528, %v9528
  %v9785 = vmul.f32 %v9529, %v9529
  %v9786 = vmul.f32 %v9530, %v9530
  %v9787 = vmul.f32 %v9531, %v9531
  %v9788 = vmul.f32 %v9532, %v9532
  %v9789 = vmul.f32 %v9533, %v9533
  %v9790 = vmul.f32 %v9534, %v9534
  %v9791 = vmul.f32 %v9535, %v9535
  %v9792 = vmul.f32 %v9536, %v9536
  %v9793 = vmul.f32 %v9537, %v9537
  %v9794 = vmul.f32 %v9538, %v9538
  %v9795 = vmul.f32 %v9539, %v9539
  %v9796 = vmul.f32 %v9540, %v9540
  %v9797 = vmul.f32 %v9541, %v9541
  %v9798 = vmul.f32 %v9542, %v9542
  %v9799 = vmul.f32 %v9543, %v9543
  %v9800 = vmul.f32 %v9544, %v9544
  %v9801 = vmul.f32 %v9545, %v9545
  %v9802 = vmul.f32 %v9546, %v9546
  %v9803 = vmul.f32 %v9547, %v9547
  %v9804 = vmul.f32 %v9548, %v9548
  %v9805 = vmul.f32 %v9549, %v9549
  %v9806 = vmul.f32 %v9550, %v9550
  %v9807 = vmul.f32 %v9551, %v9551
  %v9808 = vmul.f32 %v9552, %v9552
  %v9809 = vmul.f32 %v9553, %v9553
  %v9810 = vmul.f32 %v9554, %v9554
  %v9811 = vmul.f32 %v9555, %v9555
  %v9812 = vmul.f32 %v9556, %v9556
  %v9813 = vmul.f32 %v9557, %v9557
  %v9814 = vmul.f32 %v9558, %v9558
  %v9815 = vmul.f32 %v9559, %v9559
  %v9816 = vmul.f32 %v9560, %v9560
  %v9817 = vmul.f32 %v9561, %v9561
  %v9818 = vmul.f32 %v9562, %v9562
  %v9819 = vmul.f32 %v9563, %v9563
  %v9820 = vmul.f32 %v9564, %v9564
  %v9821 = vmul.f32 %v9565, %v9565
  %v9822 = vmul.f32 %v9566, %v9566
  %v9823 = vmul.f32 %v9567, %v9567
  %v9824 = vmul.f32 %v9568, %v9568
  %v9825 = vmul.f32 %v9569, %v9569
  %v9826 = vmul.f32 %v9570, %v9570
  %v9827 = vmul.f32 %v9571, %v9571
  %v9828 = vmul.f32 %v9572, %v9572
  %v9829 = vmul.f32 %v9573, %v9573
  %v9830 = vmul.f32 %v9574, %v9574
  %v9831 = vmul.f32 %v9575, %v9575
  %v9832 = vmul.f32 %v9576, %v9576
  %v9833 = vmul.f32 %v9577, %v9577
  %v9834 = vmul.f32 %v9578, %v9578
  %v9835 = vmul.f32 %v9579, %v9579
  %v9836 = vmul.f32 %v9580, %v9580
  %v9837 = vmul.f32 %v9581, %v9581
  %v9838 = vmul.f32 %v9582, %v9582
  %v9839 = vmul.f32 %v9583, %v9583
  %v9840 = vmul.f32 %v9584, %v9584
  %v9841 = vmul.f32 %v9585, %v9585
  %v9842 = vmul.f32 %v9586, %v9586
  %v9843 = vmul.f32 %v9587, %v9587
  %v9844 = vmul.f32 %v9588, %v9588
  %v9845 = vmul.f32 %v9589, %v9589
  %v9846 = vmul.f32 %v9590, %v9590
  %v9847 = vmul.f32 %v9591, %v9591
  %v9848 = vmul.f32 %v9592, %v9592
  %v9849 = vmul.f32 %v9593, %v9593
  %v9850 = vmul.f32 %v9594, %v9594
  %v9851 = vmul.f32 %v9595, %v9595
  %v9852 = vsel %vm4185, %v9596, 0.0
  %v9853 = vsel %vm4185, %v9597, 0.0
  %v9854 = vadd.f32 %v9852, %v9853
  %v9855 = vsel %vm4185, %v9598, 0.0
  %v9856 = vadd.f32 %v9854, %v9855
  %v9857 = vsel %vm4185, %v9599, 0.0
  %v9858 = vadd.f32 %v9856, %v9857
  %v9859 = vsel %vm4185, %v9600, 0.0
  %v9860 = vadd.f32 %v9858, %v9859
  %v9861 = vsel %vm4185, %v9601, 0.0
  %v9862 = vadd.f32 %v9860, %v9861
  %v9863 = vsel %vm4185, %v9602, 0.0
  %v9864 = vadd.f32 %v9862, %v9863
  %v9865 = vsel %vm4185, %v9603, 0.0
  %v9866 = vadd.f32 %v9864, %v9865
  %v9867 = vsel %vm4185, %v9604, 0.0
  %v9868 = vadd.f32 %v9866, %v9867
  %v9869 = vsel %vm4185, %v9605, 0.0
  %v9870 = vadd.f32 %v9868, %v9869
  %v9871 = vsel %vm4185, %v9606, 0.0
  %v9872 = vadd.f32 %v9870, %v9871
  %v9873 = vsel %vm4185, %v9607, 0.0
  %v9874 = vadd.f32 %v9872, %v9873
  %v9875 = vsel %vm4185, %v9608, 0.0
  %v9876 = vadd.f32 %v9874, %v9875
  %v9877 = vsel %vm4185, %v9609, 0.0
  %v9878 = vadd.f32 %v9876, %v9877
  %v9879 = vsel %vm4185, %v9610, 0.0
  %v9880 = vadd.f32 %v9878, %v9879
  %v9881 = vsel %vm4185, %v9611, 0.0
  %v9882 = vadd.f32 %v9880, %v9881
  %v9883 = vsel %vm4185, %v9612, 0.0
  %v9884 = vadd.f32 %v9882, %v9883
  %v9885 = vsel %vm4185, %v9613, 0.0
  %v9886 = vadd.f32 %v9884, %v9885
  %v9887 = vsel %vm4185, %v9614, 0.0
  %v9888 = vadd.f32 %v9886, %v9887
  %v9889 = vsel %vm4185, %v9615, 0.0
  %v9890 = vadd.f32 %v9888, %v9889
  %v9891 = vsel %vm4185, %v9616, 0.0
  %v9892 = vadd.f32 %v9890, %v9891
  %v9893 = vsel %vm4185, %v9617, 0.0
  %v9894 = vadd.f32 %v9892, %v9893
  %v9895 = vsel %vm4185, %v9618, 0.0
  %v9896 = vadd.f32 %v9894, %v9895
  %v9897 = vsel %vm4185, %v9619, 0.0
  %v9898 = vadd.f32 %v9896, %v9897
  %v9899 = vsel %vm4185, %v9620, 0.0
  %v9900 = vadd.f32 %v9898, %v9899
  %v9901 = vsel %vm4185, %v9621, 0.0
  %v9902 = vadd.f32 %v9900, %v9901
  %v9903 = vsel %vm4185, %v9622, 0.0
  %v9904 = vadd.f32 %v9902, %v9903
  %v9905 = vsel %vm4185, %v9623, 0.0
  %v9906 = vadd.f32 %v9904, %v9905
  %v9907 = vsel %vm4185, %v9624, 0.0
  %v9908 = vadd.f32 %v9906, %v9907
  %v9909 = vsel %vm4185, %v9625, 0.0
  %v9910 = vadd.f32 %v9908, %v9909
  %v9911 = vsel %vm4185, %v9626, 0.0
  %v9912 = vadd.f32 %v9910, %v9911
  %v9913 = vsel %vm4185, %v9627, 0.0
  %v9914 = vadd.f32 %v9912, %v9913
  %v9915 = vsel %vm4185, %v9628, 0.0
  %v9916 = vadd.f32 %v9914, %v9915
  %v9917 = vsel %vm4185, %v9629, 0.0
  %v9918 = vadd.f32 %v9916, %v9917
  %v9919 = vsel %vm4185, %v9630, 0.0
  %v9920 = vadd.f32 %v9918, %v9919
  %v9921 = vsel %vm4185, %v9631, 0.0
  %v9922 = vadd.f32 %v9920, %v9921
  %v9923 = vsel %vm4185, %v9632, 0.0
  %v9924 = vadd.f32 %v9922, %v9923
  %v9925 = vsel %vm4185, %v9633, 0.0
  %v9926 = vadd.f32 %v9924, %v9925
  %v9927 = vsel %vm4185, %v9634, 0.0
  %v9928 = vadd.f32 %v9926, %v9927
  %v9929 = vsel %vm4185, %v9635, 0.0
  %v9930 = vadd.f32 %v9928, %v9929
  %v9931 = vsel %vm4185, %v9636, 0.0
  %v9932 = vadd.f32 %v9930, %v9931
  %v9933 = vsel %vm4185, %v9637, 0.0
  %v9934 = vadd.f32 %v9932, %v9933
  %v9935 = vsel %vm4185, %v9638, 0.0
  %v9936 = vadd.f32 %v9934, %v9935
  %v9937 = vsel %vm4185, %v9639, 0.0
  %v9938 = vadd.f32 %v9936, %v9937
  %v9939 = vsel %vm4185, %v9640, 0.0
  %v9940 = vadd.f32 %v9938, %v9939
  %v9941 = vsel %vm4185, %v9641, 0.0
  %v9942 = vadd.f32 %v9940, %v9941
  %v9943 = vsel %vm4185, %v9642, 0.0
  %v9944 = vadd.f32 %v9942, %v9943
  %v9945 = vsel %vm4185, %v9643, 0.0
  %v9946 = vadd.f32 %v9944, %v9945
  %v9947 = vsel %vm4185, %v9644, 0.0
  %v9948 = vadd.f32 %v9946, %v9947
  %v9949 = vsel %vm4185, %v9645, 0.0
  %v9950 = vadd.f32 %v9948, %v9949
  %v9951 = vsel %vm4185, %v9646, 0.0
  %v9952 = vadd.f32 %v9950, %v9951
  %v9953 = vsel %vm4185, %v9647, 0.0
  %v9954 = vadd.f32 %v9952, %v9953
  %v9955 = vsel %vm4185, %v9648, 0.0
  %v9956 = vadd.f32 %v9954, %v9955
  %v9957 = vsel %vm4185, %v9649, 0.0
  %v9958 = vadd.f32 %v9956, %v9957
  %v9959 = vsel %vm4185, %v9650, 0.0
  %v9960 = vadd.f32 %v9958, %v9959
  %v9961 = vsel %vm4185, %v9651, 0.0
  %v9962 = vadd.f32 %v9960, %v9961
  %v9963 = vsel %vm4185, %v9652, 0.0
  %v9964 = vadd.f32 %v9962, %v9963
  %v9965 = vsel %vm4185, %v9653, 0.0
  %v9966 = vadd.f32 %v9964, %v9965
  %v9967 = vsel %vm4185, %v9654, 0.0
  %v9968 = vadd.f32 %v9966, %v9967
  %v9969 = vsel %vm4185, %v9655, 0.0
  %v9970 = vadd.f32 %v9968, %v9969
  %v9971 = vsel %vm4185, %v9656, 0.0
  %v9972 = vadd.f32 %v9970, %v9971
  %v9973 = vsel %vm4185, %v9657, 0.0
  %v9974 = vadd.f32 %v9972, %v9973
  %v9975 = vsel %vm4185, %v9658, 0.0
  %v9976 = vadd.f32 %v9974, %v9975
  %v9977 = vsel %vm4185, %v9659, 0.0
  %v9978 = vadd.f32 %v9976, %v9977
  %v9979 = vsel %vm4185, %v9660, 0.0
  %v9980 = vsel %vm4185, %v9661, 0.0
  %v9981 = vadd.f32 %v9979, %v9980
  %v9982 = vsel %vm4185, %v9662, 0.0
  %v9983 = vadd.f32 %v9981, %v9982
  %v9984 = vsel %vm4185, %v9663, 0.0
  %v9985 = vadd.f32 %v9983, %v9984
  %v9986 = vsel %vm4185, %v9664, 0.0
  %v9987 = vadd.f32 %v9985, %v9986
  %v9988 = vsel %vm4185, %v9665, 0.0
  %v9989 = vadd.f32 %v9987, %v9988
  %v9990 = vsel %vm4185, %v9666, 0.0
  %v9991 = vadd.f32 %v9989, %v9990
  %v9992 = vsel %vm4185, %v9667, 0.0
  %v9993 = vadd.f32 %v9991, %v9992
  %v9994 = vsel %vm4185, %v9668, 0.0
  %v9995 = vadd.f32 %v9993, %v9994
  %v9996 = vsel %vm4185, %v9669, 0.0
  %v9997 = vadd.f32 %v9995, %v9996
  %v9998 = vsel %vm4185, %v9670, 0.0
  %v9999 = vadd.f32 %v9997, %v9998
  %v10000 = vsel %vm4185, %v9671, 0.0
  %v10001 = vadd.f32 %v9999, %v10000
  %v10002 = vsel %vm4185, %v9672, 0.0
  %v10003 = vadd.f32 %v10001, %v10002
  %v10004 = vsel %vm4185, %v9673, 0.0
  %v10005 = vadd.f32 %v10003, %v10004
  %v10006 = vsel %vm4185, %v9674, 0.0
  %v10007 = vadd.f32 %v10005, %v10006
  %v10008 = vsel %vm4185, %v9675, 0.0
  %v10009 = vadd.f32 %v10007, %v10008
  %v10010 = vsel %vm4185, %v9676, 0.0
  %v10011 = vadd.f32 %v10009, %v10010
  %v10012 = vsel %vm4185, %v9677, 0.0
  %v10013 = vadd.f32 %v10011, %v10012
  %v10014 = vsel %vm4185, %v9678, 0.0
  %v10015 = vadd.f32 %v10013, %v10014
  %v10016 = vsel %vm4185, %v9679, 0.0
  %v10017 = vadd.f32 %v10015, %v10016
  %v10018 = vsel %vm4185, %v9680, 0.0
  %v10019 = vadd.f32 %v10017, %v10018
  %v10020 = vsel %vm4185, %v9681, 0.0
  %v10021 = vadd.f32 %v10019, %v10020
  %v10022 = vsel %vm4185, %v9682, 0.0
  %v10023 = vadd.f32 %v10021, %v10022
  %v10024 = vsel %vm4185, %v9683, 0.0
  %v10025 = vadd.f32 %v10023, %v10024
  %v10026 = vsel %vm4185, %v9684, 0.0
  %v10027 = vadd.f32 %v10025, %v10026
  %v10028 = vsel %vm4185, %v9685, 0.0
  %v10029 = vadd.f32 %v10027, %v10028
  %v10030 = vsel %vm4185, %v9686, 0.0
  %v10031 = vadd.f32 %v10029, %v10030
  %v10032 = vsel %vm4185, %v9687, 0.0
  %v10033 = vadd.f32 %v10031, %v10032
  %v10034 = vsel %vm4185, %v9688, 0.0
  %v10035 = vadd.f32 %v10033, %v10034
  %v10036 = vsel %vm4185, %v9689, 0.0
  %v10037 = vadd.f32 %v10035, %v10036
  %v10038 = vsel %vm4185, %v9690, 0.0
  %v10039 = vadd.f32 %v10037, %v10038
  %v10040 = vsel %vm4185, %v9691, 0.0
  %v10041 = vadd.f32 %v10039, %v10040
  %v10042 = vsel %vm4185, %v9692, 0.0
  %v10043 = vadd.f32 %v10041, %v10042
  %v10044 = vsel %vm4185, %v9693, 0.0
  %v10045 = vadd.f32 %v10043, %v10044
  %v10046 = vsel %vm4185, %v9694, 0.0
  %v10047 = vadd.f32 %v10045, %v10046
  %v10048 = vsel %vm4185, %v9695, 0.0
  %v10049 = vadd.f32 %v10047, %v10048
  %v10050 = vsel %vm4185, %v9696, 0.0
  %v10051 = vadd.f32 %v10049, %v10050
  %v10052 = vsel %vm4185, %v9697, 0.0
  %v10053 = vadd.f32 %v10051, %v10052
  %v10054 = vsel %vm4185, %v9698, 0.0
  %v10055 = vadd.f32 %v10053, %v10054
  %v10056 = vsel %vm4185, %v9699, 0.0
  %v10057 = vadd.f32 %v10055, %v10056
  %v10058 = vsel %vm4185, %v9700, 0.0
  %v10059 = vadd.f32 %v10057, %v10058
  %v10060 = vsel %vm4185, %v9701, 0.0
  %v10061 = vadd.f32 %v10059, %v10060
  %v10062 = vsel %vm4185, %v9702, 0.0
  %v10063 = vadd.f32 %v10061, %v10062
  %v10064 = vsel %vm4185, %v9703, 0.0
  %v10065 = vadd.f32 %v10063, %v10064
  %v10066 = vsel %vm4185, %v9704, 0.0
  %v10067 = vadd.f32 %v10065, %v10066
  %v10068 = vsel %vm4185, %v9705, 0.0
  %v10069 = vadd.f32 %v10067, %v10068
  %v10070 = vsel %vm4185, %v9706, 0.0
  %v10071 = vadd.f32 %v10069, %v10070
  %v10072 = vsel %vm4185, %v9707, 0.0
  %v10073 = vadd.f32 %v10071, %v10072
  %v10074 = vsel %vm4185, %v9708, 0.0
  %v10075 = vadd.f32 %v10073, %v10074
  %v10076 = vsel %vm4185, %v9709, 0.0
  %v10077 = vadd.f32 %v10075, %v10076
  %v10078 = vsel %vm4185, %v9710, 0.0
  %v10079 = vadd.f32 %v10077, %v10078
  %v10080 = vsel %vm4185, %v9711, 0.0
  %v10081 = vadd.f32 %v10079, %v10080
  %v10082 = vsel %vm4185, %v9712, 0.0
  %v10083 = vadd.f32 %v10081, %v10082
  %v10084 = vsel %vm4185, %v9713, 0.0
  %v10085 = vadd.f32 %v10083, %v10084
  %v10086 = vsel %vm4185, %v9714, 0.0
  %v10087 = vadd.f32 %v10085, %v10086
  %v10088 = vsel %vm4185, %v9715, 0.0
  %v10089 = vadd.f32 %v10087, %v10088
  %v10090 = vsel %vm4185, %v9716, 0.0
  %v10091 = vadd.f32 %v10089, %v10090
  %v10092 = vsel %vm4185, %v9717, 0.0
  %v10093 = vadd.f32 %v10091, %v10092
  %v10094 = vsel %vm4185, %v9718, 0.0
  %v10095 = vadd.f32 %v10093, %v10094
  %v10096 = vsel %vm4185, %v9719, 0.0
  %v10097 = vadd.f32 %v10095, %v10096
  %v10098 = vsel %vm4185, %v9720, 0.0
  %v10099 = vadd.f32 %v10097, %v10098
  %v10100 = vsel %vm4185, %v9721, 0.0
  %v10101 = vadd.f32 %v10099, %v10100
  %v10102 = vsel %vm4185, %v9722, 0.0
  %v10103 = vadd.f32 %v10101, %v10102
  %v10104 = vsel %vm4185, %v9723, 0.0
  %v10105 = vadd.f32 %v10103, %v10104
  %v10106 = vsel %vm4185, %v9724, 0.0
  %v10107 = vsel %vm4185, %v9725, 0.0
  %v10108 = vadd.f32 %v10106, %v10107
  %v10109 = vsel %vm4185, %v9726, 0.0
  %v10110 = vadd.f32 %v10108, %v10109
  %v10111 = vsel %vm4185, %v9727, 0.0
  %v10112 = vadd.f32 %v10110, %v10111
  %v10113 = vsel %vm4185, %v9728, 0.0
  %v10114 = vadd.f32 %v10112, %v10113
  %v10115 = vsel %vm4185, %v9729, 0.0
  %v10116 = vadd.f32 %v10114, %v10115
  %v10117 = vsel %vm4185, %v9730, 0.0
  %v10118 = vadd.f32 %v10116, %v10117
  %v10119 = vsel %vm4185, %v9731, 0.0
  %v10120 = vadd.f32 %v10118, %v10119
  %v10121 = vsel %vm4185, %v9732, 0.0
  %v10122 = vadd.f32 %v10120, %v10121
  %v10123 = vsel %vm4185, %v9733, 0.0
  %v10124 = vadd.f32 %v10122, %v10123
  %v10125 = vsel %vm4185, %v9734, 0.0
  %v10126 = vadd.f32 %v10124, %v10125
  %v10127 = vsel %vm4185, %v9735, 0.0
  %v10128 = vadd.f32 %v10126, %v10127
  %v10129 = vsel %vm4185, %v9736, 0.0
  %v10130 = vadd.f32 %v10128, %v10129
  %v10131 = vsel %vm4185, %v9737, 0.0
  %v10132 = vadd.f32 %v10130, %v10131
  %v10133 = vsel %vm4185, %v9738, 0.0
  %v10134 = vadd.f32 %v10132, %v10133
  %v10135 = vsel %vm4185, %v9739, 0.0
  %v10136 = vadd.f32 %v10134, %v10135
  %v10137 = vsel %vm4185, %v9740, 0.0
  %v10138 = vadd.f32 %v10136, %v10137
  %v10139 = vsel %vm4185, %v9741, 0.0
  %v10140 = vadd.f32 %v10138, %v10139
  %v10141 = vsel %vm4185, %v9742, 0.0
  %v10142 = vadd.f32 %v10140, %v10141
  %v10143 = vsel %vm4185, %v9743, 0.0
  %v10144 = vadd.f32 %v10142, %v10143
  %v10145 = vsel %vm4185, %v9744, 0.0
  %v10146 = vadd.f32 %v10144, %v10145
  %v10147 = vsel %vm4185, %v9745, 0.0
  %v10148 = vadd.f32 %v10146, %v10147
  %v10149 = vsel %vm4185, %v9746, 0.0
  %v10150 = vadd.f32 %v10148, %v10149
  %v10151 = vsel %vm4185, %v9747, 0.0
  %v10152 = vadd.f32 %v10150, %v10151
  %v10153 = vsel %vm4185, %v9748, 0.0
  %v10154 = vadd.f32 %v10152, %v10153
  %v10155 = vsel %vm4185, %v9749, 0.0
  %v10156 = vadd.f32 %v10154, %v10155
  %v10157 = vsel %vm4185, %v9750, 0.0
  %v10158 = vadd.f32 %v10156, %v10157
  %v10159 = vsel %vm4185, %v9751, 0.0
  %v10160 = vadd.f32 %v10158, %v10159
  %v10161 = vsel %vm4185, %v9752, 0.0
  %v10162 = vadd.f32 %v10160, %v10161
  %v10163 = vsel %vm4185, %v9753, 0.0
  %v10164 = vadd.f32 %v10162, %v10163
  %v10165 = vsel %vm4185, %v9754, 0.0
  %v10166 = vadd.f32 %v10164, %v10165
  %v10167 = vsel %vm4185, %v9755, 0.0
  %v10168 = vadd.f32 %v10166, %v10167
  %v10169 = vsel %vm4185, %v9756, 0.0
  %v10170 = vadd.f32 %v10168, %v10169
  %v10171 = vsel %vm4185, %v9757, 0.0
  %v10172 = vadd.f32 %v10170, %v10171
  %v10173 = vsel %vm4185, %v9758, 0.0
  %v10174 = vadd.f32 %v10172, %v10173
  %v10175 = vsel %vm4185, %v9759, 0.0
  %v10176 = vadd.f32 %v10174, %v10175
  %v10177 = vsel %vm4185, %v9760, 0.0
  %v10178 = vadd.f32 %v10176, %v10177
  %v10179 = vsel %vm4185, %v9761, 0.0
  %v10180 = vadd.f32 %v10178, %v10179
  %v10181 = vsel %vm4185, %v9762, 0.0
  %v10182 = vadd.f32 %v10180, %v10181
  %v10183 = vsel %vm4185, %v9763, 0.0
  %v10184 = vadd.f32 %v10182, %v10183
  %v10185 = vsel %vm4185, %v9764, 0.0
  %v10186 = vadd.f32 %v10184, %v10185
  %v10187 = vsel %vm4185, %v9765, 0.0
  %v10188 = vadd.f32 %v10186, %v10187
  %v10189 = vsel %vm4185, %v9766, 0.0
  %v10190 = vadd.f32 %v10188, %v10189
  %v10191 = vsel %vm4185, %v9767, 0.0
  %v10192 = vadd.f32 %v10190, %v10191
  %v10193 = vsel %vm4185, %v9768, 0.0
  %v10194 = vadd.f32 %v10192, %v10193
  %v10195 = vsel %vm4185, %v9769, 0.0
  %v10196 = vadd.f32 %v10194, %v10195
  %v10197 = vsel %vm4185, %v9770, 0.0
  %v10198 = vadd.f32 %v10196, %v10197
  %v10199 = vsel %vm4185, %v9771, 0.0
  %v10200 = vadd.f32 %v10198, %v10199
  %v10201 = vsel %vm4185, %v9772, 0.0
  %v10202 = vadd.f32 %v10200, %v10201
  %v10203 = vsel %vm4185, %v9773, 0.0
  %v10204 = vadd.f32 %v10202, %v10203
  %v10205 = vsel %vm4185, %v9774, 0.0
  %v10206 = vadd.f32 %v10204, %v10205
  %v10207 = vsel %vm4185, %v9775, 0.0
  %v10208 = vadd.f32 %v10206, %v10207
  %v10209 = vsel %vm4185, %v9776, 0.0
  %v10210 = vadd.f32 %v10208, %v10209
  %v10211 = vsel %vm4185, %v9777, 0.0
  %v10212 = vadd.f32 %v10210, %v10211
  %v10213 = vsel %vm4185, %v9778, 0.0
  %v10214 = vadd.f32 %v10212, %v10213
  %v10215 = vsel %vm4185, %v9779, 0.0
  %v10216 = vadd.f32 %v10214, %v10215
  %v10217 = vsel %vm4185, %v9780, 0.0
  %v10218 = vadd.f32 %v10216, %v10217
  %v10219 = vsel %vm4185, %v9781, 0.0
  %v10220 = vadd.f32 %v10218, %v10219
  %v10221 = vsel %vm4185, %v9782, 0.0
  %v10222 = vadd.f32 %v10220, %v10221
  %v10223 = vsel %vm4185, %v9783, 0.0
  %v10224 = vadd.f32 %v10222, %v10223
  %v10225 = vsel %vm4185, %v9784, 0.0
  %v10226 = vadd.f32 %v10224, %v10225
  %v10227 = vsel %vm4185, %v9785, 0.0
  %v10228 = vadd.f32 %v10226, %v10227
  %v10229 = vsel %vm4185, %v9786, 0.0
  %v10230 = vadd.f32 %v10228, %v10229
  %v10231 = vsel %vm4185, %v9787, 0.0
  %v10232 = vadd.f32 %v10230, %v10231
  %v10233 = vsel %vm4185, %v9788, 0.0
  %v10234 = vsel %vm4185, %v9789, 0.0
  %v10235 = vadd.f32 %v10233, %v10234
  %v10236 = vsel %vm4185, %v9790, 0.0
  %v10237 = vadd.f32 %v10235, %v10236
  %v10238 = vsel %vm4185, %v9791, 0.0
  %v10239 = vadd.f32 %v10237, %v10238
  %v10240 = vsel %vm4185, %v9792, 0.0
  %v10241 = vadd.f32 %v10239, %v10240
  %v10242 = vsel %vm4185, %v9793, 0.0
  %v10243 = vadd.f32 %v10241, %v10242
  %v10244 = vsel %vm4185, %v9794, 0.0
  %v10245 = vadd.f32 %v10243, %v10244
  %v10246 = vsel %vm4185, %v9795, 0.0
  %v10247 = vadd.f32 %v10245, %v10246
  %v10248 = vsel %vm4185, %v9796, 0.0
  %v10249 = vadd.f32 %v10247, %v10248
  %v10250 = vsel %vm4185, %v9797, 0.0
  %v10251 = vadd.f32 %v10249, %v10250
  %v10252 = vsel %vm4185, %v9798, 0.0
  %v10253 = vadd.f32 %v10251, %v10252
  %v10254 = vsel %vm4185, %v9799, 0.0
  %v10255 = vadd.f32 %v10253, %v10254
  %v10256 = vsel %vm4185, %v9800, 0.0
  %v10257 = vadd.f32 %v10255, %v10256
  %v10258 = vsel %vm4185, %v9801, 0.0
  %v10259 = vadd.f32 %v10257, %v10258
  %v10260 = vsel %vm4185, %v9802, 0.0
  %v10261 = vadd.f32 %v10259, %v10260
  %v10262 = vsel %vm4185, %v9803, 0.0
  %v10263 = vadd.f32 %v10261, %v10262
  %v10264 = vsel %vm4185, %v9804, 0.0
  %v10265 = vadd.f32 %v10263, %v10264
  %v10266 = vsel %vm4185, %v9805, 0.0
  %v10267 = vadd.f32 %v10265, %v10266
  %v10268 = vsel %vm4185, %v9806, 0.0
  %v10269 = vadd.f32 %v10267, %v10268
  %v10270 = vsel %vm4185, %v9807, 0.0
  %v10271 = vadd.f32 %v10269, %v10270
  %v10272 = vsel %vm4185, %v9808, 0.0
  %v10273 = vadd.f32 %v10271, %v10272
  %v10274 = vsel %vm4185, %v9809, 0.0
  %v10275 = vadd.f32 %v10273, %v10274
  %v10276 = vsel %vm4185, %v9810, 0.0
  %v10277 = vadd.f32 %v10275, %v10276
  %v10278 = vsel %vm4185, %v9811, 0.0
  %v10279 = vadd.f32 %v10277, %v10278
  %v10280 = vsel %vm4185, %v9812, 0.0
  %v10281 = vadd.f32 %v10279, %v10280
  %v10282 = vsel %vm4185, %v9813, 0.0
  %v10283 = vadd.f32 %v10281, %v10282
  %v10284 = vsel %vm4185, %v9814, 0.0
  %v10285 = vadd.f32 %v10283, %v10284
  %v10286 = vsel %vm4185, %v9815, 0.0
  %v10287 = vadd.f32 %v10285, %v10286
  %v10288 = vsel %vm4185, %v9816, 0.0
  %v10289 = vadd.f32 %v10287, %v10288
  %v10290 = vsel %vm4185, %v9817, 0.0
  %v10291 = vadd.f32 %v10289, %v10290
  %v10292 = vsel %vm4185, %v9818, 0.0
  %v10293 = vadd.f32 %v10291, %v10292
  %v10294 = vsel %vm4185, %v9819, 0.0
  %v10295 = vadd.f32 %v10293, %v10294
  %v10296 = vsel %vm4185, %v9820, 0.0
  %v10297 = vadd.f32 %v10295, %v10296
  %v10298 = vsel %vm4185, %v9821, 0.0
  %v10299 = vadd.f32 %v10297, %v10298
  %v10300 = vsel %vm4185, %v9822, 0.0
  %v10301 = vadd.f32 %v10299, %v10300
  %v10302 = vsel %vm4185, %v9823, 0.0
  %v10303 = vadd.f32 %v10301, %v10302
  %v10304 = vsel %vm4185, %v9824, 0.0
  %v10305 = vadd.f32 %v10303, %v10304
  %v10306 = vsel %vm4185, %v9825, 0.0
  %v10307 = vadd.f32 %v10305, %v10306
  %v10308 = vsel %vm4185, %v9826, 0.0
  %v10309 = vadd.f32 %v10307, %v10308
  %v10310 = vsel %vm4185, %v9827, 0.0
  %v10311 = vadd.f32 %v10309, %v10310
  %v10312 = vsel %vm4185, %v9828, 0.0
  %v10313 = vadd.f32 %v10311, %v10312
  %v10314 = vsel %vm4185, %v9829, 0.0
  %v10315 = vadd.f32 %v10313, %v10314
  %v10316 = vsel %vm4185, %v9830, 0.0
  %v10317 = vadd.f32 %v10315, %v10316
  %v10318 = vsel %vm4185, %v9831, 0.0
  %v10319 = vadd.f32 %v10317, %v10318
  %v10320 = vsel %vm4185, %v9832, 0.0
  %v10321 = vadd.f32 %v10319, %v10320
  %v10322 = vsel %vm4185, %v9833, 0.0
  %v10323 = vadd.f32 %v10321, %v10322
  %v10324 = vsel %vm4185, %v9834, 0.0
  %v10325 = vadd.f32 %v10323, %v10324
  %v10326 = vsel %vm4185, %v9835, 0.0
  %v10327 = vadd.f32 %v10325, %v10326
  %v10328 = vsel %vm4185, %v9836, 0.0
  %v10329 = vadd.f32 %v10327, %v10328
  %v10330 = vsel %vm4185, %v9837, 0.0
  %v10331 = vadd.f32 %v10329, %v10330
  %v10332 = vsel %vm4185, %v9838, 0.0
  %v10333 = vadd.f32 %v10331, %v10332
  %v10334 = vsel %vm4185, %v9839, 0.0
  %v10335 = vadd.f32 %v10333, %v10334
  %v10336 = vsel %vm4185, %v9840, 0.0
  %v10337 = vadd.f32 %v10335, %v10336
  %v10338 = vsel %vm4185, %v9841, 0.0
  %v10339 = vadd.f32 %v10337, %v10338
  %v10340 = vsel %vm4185, %v9842, 0.0
  %v10341 = vadd.f32 %v10339, %v10340
  %v10342 = vsel %vm4185, %v9843, 0.0
  %v10343 = vadd.f32 %v10341, %v10342
  %v10344 = vsel %vm4185, %v9844, 0.0
  %v10345 = vadd.f32 %v10343, %v10344
  %v10346 = vsel %vm4185, %v9845, 0.0
  %v10347 = vadd.f32 %v10345, %v10346
  %v10348 = vsel %vm4185, %v9846, 0.0
  %v10349 = vadd.f32 %v10347, %v10348
  %v10350 = vsel %vm4185, %v9847, 0.0
  %v10351 = vadd.f32 %v10349, %v10350
  %v10352 = vsel %vm4185, %v9848, 0.0
  %v10353 = vadd.f32 %v10351, %v10352
  %v10354 = vsel %vm4185, %v9849, 0.0
  %v10355 = vadd.f32 %v10353, %v10354
  %v10356 = vsel %vm4185, %v9850, 0.0
  %v10357 = vadd.f32 %v10355, %v10356
  %v10358 = vsel %vm4185, %v9851, 0.0
  %v10359 = vadd.f32 %v10357, %v10358
  %v10360 = vmul.f32 %v9978, 0.015873017
  %v10361 = vmul.f32 %v10105, 0.015873017
  %v10362 = vmul.f32 %v10232, 0.015873017
  %v10363 = vmul.f32 %v10359, 0.015873017
  %v10364 = vrsqrt.pop %v10360
  %v10365 = vmul.f32 %v10364, %v10360
  %v10366 = vmul.f32 %v10365, %v10364
  %v10367 = vmul.f32 0.5, %v10366
  %v10368 = vsub.f32 1.5, %v10367
  %v10369 = vmul.f32 %v10364, %v10368
  %v10370 = vmul.f32 %v10360, %v10369
  %vm10371 = vcmp.eq.f32.partialorder %v10360, inf
  %v10372 = vsel %vm10371, %v10360, %v10370
  %vm10373 = vcmp.eq.f32.partialorder %v10360, 0.0
  %v10374 = vand.u32 %v10360, 2147483648
  %v10375 = vsel %vm10373, %v10374, %v10372
  %v10376 = vrsqrt.pop %v10361
  %v10377 = vmul.f32 %v10376, %v10361
  %v10378 = vmul.f32 %v10377, %v10376
  %v10379 = vmul.f32 0.5, %v10378
  %v10380 = vsub.f32 1.5, %v10379
  %v10381 = vmul.f32 %v10376, %v10380
  %v10382 = vmul.f32 %v10361, %v10381
  %vm10383 = vcmp.eq.f32.partialorder %v10361, inf
  %v10384 = vsel %vm10383, %v10361, %v10382
  %vm10385 = vcmp.eq.f32.partialorder %v10361, 0.0
  %v10386 = vand.u32 %v10361, 2147483648
  %v10387 = vsel %vm10385, %v10386, %v10384
  %v10388 = vrsqrt.pop %v10362
  %v10389 = vmul.f32 %v10388, %v10362
  %v10390 = vmul.f32 %v10389, %v10388
  %v10391 = vmul.f32 0.5, %v10390
  %v10392 = vsub.f32 1.5, %v10391
  %v10393 = vmul.f32 %v10388, %v10392
  %v10394 = vmul.f32 %v10362, %v10393
  %vm10395 = vcmp.eq.f32.partialorder %v10362, inf
  %v10396 = vsel %vm10395, %v10362, %v10394
  %vm10397 = vcmp.eq.f32.partialorder %v10362, 0.0
  %v10398 = vand.u32 %v10362, 2147483648
  %v10399 = vsel %vm10397, %v10398, %v10396
  %v10400 = vrsqrt.pop %v10363
  %v10401 = vmul.f32 %v10400, %v10363
  %v10402 = vmul.f32 %v10401, %v10400
  %v10403 = vmul.f32 0.5, %v10402
  %v10404 = vsub.f32 1.5, %v10403
  %v10405 = vmul.f32 %v10400, %v10404
  %v10406 = vmul.f32 %v10363, %v10405
  %vm10407 = vcmp.eq.f32.partialorder %v10363, inf
  %v10408 = vsel %vm10407, %v10363, %v10406
  %vm10409 = vcmp.eq.f32.partialorder %v10363, 0.0
  %v10410 = vand.u32 %v10363, 2147483648
  %v10411 = vsel %vm10409, %v10410, %v10408
  %v10412 = vmax.f32 %v6127, %v6128
  %v10413 = vmax.f32 %v10412, %v6129
  %v10414 = vmax.f32 %v10413, %v6131
  %v10415 = vmax.f32 %v10414, %v6133
  %v10416 = vmax.f32 %v10415, %v6135
  %v10417 = vmax.f32 %v10416, %v6137
  %v10418 = vmax.f32 %v10417, %v6139
  %v10419 = vmax.f32 %v10418, %v6141
  %v10420 = vmax.f32 %v10419, %v6143
  %v10421 = vmax.f32 %v10420, %v6144
  %v10422 = vmax.f32 %v10421, %v6146
  %v10423 = vmax.f32 %v10422, %v6148
  %v10424 = vmax.f32 %v10423, %v6150
  %v10425 = vmax.f32 %v10424, %v6152
  %v10426 = vmax.f32 %v10425, %v6154
  %v10427 = vmax.f32 %v10426, %v6156
  %v10428 = vmax.f32 %v10427, %v6158
  %v10429 = vmax.f32 %v10428, %v6159
  %v10430 = vmax.f32 %v10429, %v6161
  %v10431 = vmax.f32 %v10430, %v6163
  %v10432 = vmax.f32 %v10431, %v6165
  %v10433 = vmax.f32 %v10432, %v6167
  %v10434 = vmax.f32 %v10433, %v6169
  %v10435 = vmax.f32 %v10434, %v6171
  %v10436 = vmax.f32 %v10435, %v6173
  %v10437 = vmax.f32 %v10436, %v6174
  %v10438 = vmax.f32 %v10437, %v6176
  %v10439 = vmax.f32 %v10438, %v6178
  %v10440 = vmax.f32 %v10439, %v6180
  %v10441 = vmax.f32 %v10440, %v6182
  %v10442 = vmax.f32 %v10441, %v6184
  %v10443 = vmax.f32 %v10442, %v6186
  %v10444 = vmax.f32 %v10443, %v6188
  %v10445 = vmax.f32 %v10444, %v6189
  %v10446 = vmax.f32 %v10445, %v6191
  %v10447 = vmax.f32 %v10446, %v6193
  %v10448 = vmax.f32 %v10447, %v6195
  %v10449 = vmax.f32 %v10448, %v6197
  %v10450 = vmax.f32 %v10449, %v6199
  %v10451 = vmax.f32 %v10450, %v6201
  %v10452 = vmax.f32 %v10451, %v6203
  %v10453 = vmax.f32 %v10452, %v6204
  %v10454 = vmax.f32 %v10453, %v6206
  %v10455 = vmax.f32 %v10454, %v6208
  %v10456 = vmax.f32 %v10455, %v6210
  %v10457 = vmax.f32 %v10456, %v6212
  %v10458 = vmax.f32 %v10457, %v6214
  %v10459 = vmax.f32 %v10458, %v6216
  %v10460 = vmax.f32 %v10459, %v6218
  %v10461 = vmax.f32 %v10460, %v6219
  %v10462 = vmax.f32 %v10461, %v6221
  %v10463 = vmax.f32 %v10462, %v6223
  %v10464 = vmax.f32 %v10463, %v6225
  %v10465 = vmax.f32 %v10464, %v6227
  %v10466 = vmax.f32 %v10465, %v6229
  %v10467 = vmax.f32 %v10466, %v6231
  %v10468 = vmax.f32 %v6247, %v6248
  %v10469 = vmax.f32 %v10468, %v6249
  %v10470 = vmax.f32 %v10469, %v6251
  %v10471 = vmax.f32 %v10470, %v6253
  %v10472 = vmax.f32 %v10471, %v6255
  %v10473 = vmax.f32 %v10472, %v6257
  %v10474 = vmax.f32 %v10473, %v6259
  %v10475 = vmax.f32 %v10474, %v6261
  %v10476 = vmax.f32 %v10475, %v6263
  %v10477 = vmax.f32 %v10476, %v6264
  %v10478 = vmax.f32 %v10477, %v6266
  %v10479 = vmax.f32 %v10478, %v6268
  %v10480 = vmax.f32 %v10479, %v6270
  %v10481 = vmax.f32 %v10480, %v6272
  %v10482 = vmax.f32 %v10481, %v6274
  %v10483 = vmax.f32 %v10482, %v6276
  %v10484 = vmax.f32 %v10483, %v6278
  %v10485 = vmax.f32 %v10484, %v6279
  %v10486 = vmax.f32 %v10485, %v6281
  %v10487 = vmax.f32 %v10486, %v6283
  %v10488 = vmax.f32 %v10487, %v6285
  %v10489 = vmax.f32 %v10488, %v6287
  %v10490 = vmax.f32 %v10489, %v6289
  %v10491 = vmax.f32 %v10490, %v6291
  %v10492 = vmax.f32 %v10491, %v6293
  %v10493 = vmax.f32 %v10492, %v6294
  %v10494 = vmax.f32 %v10493, %v6296
  %v10495 = vmax.f32 %v10494, %v6298
  %v10496 = vmax.f32 %v10495, %v6300
  %v10497 = vmax.f32 %v10496, %v6302
  %v10498 = vmax.f32 %v10497, %v6304
  %v10499 = vmax.f32 %v10498, %v6306
  %v10500 = vmax.f32 %v10499, %v6308
  %v10501 = vmax.f32 %v10500, %v6309
  %v10502 = vmax.f32 %v10501, %v6311
  %v10503 = vmax.f32 %v10502, %v6313
  %v10504 = vmax.f32 %v10503, %v6315
  %v10505 = vmax.f32 %v10504, %v6317
  %v10506 = vmax.f32 %v10505, %v6319
  %v10507 = vmax.f32 %v10506, %v6321
  %v10508 = vmax.f32 %v10507, %v6323
  %v10509 = vmax.f32 %v10508, %v6324
  %v10510 = vmax.f32 %v10509, %v6326
  %v10511 = vmax.f32 %v10510, %v6328
  %v10512 = vmax.f32 %v10511, %v6330
  %v10513 = vmax.f32 %v10512, %v6332
  %v10514 = vmax.f32 %v10513, %v6334
  %v10515 = vmax.f32 %v10514, %v6336
  %v10516 = vmax.f32 %v10515, %v6338
  %v10517 = vmax.f32 %v10516, %v6339
  %v10518 = vmax.f32 %v10517, %v6341
  %v10519 = vmax.f32 %v10518, %v6343
  %v10520 = vmax.f32 %v10519, %v6345
  %v10521 = vmax.f32 %v10520, %v6347
  %v10522 = vmax.f32 %v10521, %v6349
  %v10523 = vmax.f32 %v10522, %v6351
  %v10524 = vmax.f32 %v6367, %v6368
  %v10525 = vmax.f32 %v10524, %v6369
  %v10526 = vmax.f32 %v10525, %v6371
  %v10527 = vmax.f32 %v10526, %v6373
  %v10528 = vmax.f32 %v10527, %v6375
  %v10529 = vmax.f32 %v10528, %v6377
  %v10530 = vmax.f32 %v10529, %v6379
  %v10531 = vmax.f32 %v10530, %v6381
  %v10532 = vmax.f32 %v10531, %v6383
  %v10533 = vmax.f32 %v10532, %v6384
  %v10534 = vmax.f32 %v10533, %v6386
  %v10535 = vmax.f32 %v10534, %v6388
  %v10536 = vmax.f32 %v10535, %v6390
  %v10537 = vmax.f32 %v10536, %v6392
  %v10538 = vmax.f32 %v10537, %v6394
  %v10539 = vmax.f32 %v10538, %v6396
  %v10540 = vmax.f32 %v10539, %v6398
  %v10541 = vmax.f32 %v10540, %v6399
  %v10542 = vmax.f32 %v10541, %v6401
  %v10543 = vmax.f32 %v10542, %v6403
  %v10544 = vmax.f32 %v10543, %v6405
  %v10545 = vmax.f32 %v10544, %v6407
  %v10546 = vmax.f32 %v10545, %v6409
  %v10547 = vmax.f32 %v10546, %v6411
  %v10548 = vmax.f32 %v10547, %v6413
  %v10549 = vmax.f32 %v10548, %v6414
  %v10550 = vmax.f32 %v10549, %v6416
  %v10551 = vmax.f32 %v10550, %v6418
  %v10552 = vmax.f32 %v10551, %v6420
  %v10553 = vmax.f32 %v10552, %v6422
  %v10554 = vmax.f32 %v10553, %v6424
  %v10555 = vmax.f32 %v10554, %v6426
  %v10556 = vmax.f32 %v10555, %v6428
  %v10557 = vmax.f32 %v10556, %v6429
  %v10558 = vmax.f32 %v10557, %v6431
  %v10559 = vmax.f32 %v10558, %v6433
  %v10560 = vmax.f32 %v10559, %v6435
  %v10561 = vmax.f32 %v10560, %v6437
  %v10562 = vmax.f32 %v10561, %v6439
  %v10563 = vmax.f32 %v10562, %v6441
  %v10564 = vmax.f32 %v10563, %v6443
  %v10565 = vmax.f32 %v10564, %v6444
  %v10566 = vmax.f32 %v10565, %v6446
  %v10567 = vmax.f32 %v10566, %v6448
  %v10568 = vmax.f32 %v10567, %v6450
  %v10569 = vmax.f32 %v10568, %v6452
  %v10570 = vmax.f32 %v10569, %v6454
  %v10571 = vmax.f32 %v10570, %v6456
  %v10572 = vmax.f32 %v10571, %v6458
  %v10573 = vmax.f32 %v10572, %v6459
  %v10574 = vmax.f32 %v10573, %v6461
  %v10575 = vmax.f32 %v10574, %v6463
  %v10576 = vmax.f32 %v10575, %v6465
  %v10577 = vmax.f32 %v10576, %v6467
  %v10578 = vmax.f32 %v10577, %v6469
  %v10579 = vmax.f32 %v10578, %v6471
  %v10580 = vmax.f32 %v6487, %v6488
  %v10581 = vmax.f32 %v10580, %v6489
  %v10582 = vmax.f32 %v10581, %v6491
  %v10583 = vmax.f32 %v10582, %v6493
  %v10584 = vmax.f32 %v10583, %v6495
  %v10585 = vmax.f32 %v10584, %v6497
  %v10586 = vmax.f32 %v10585, %v6499
  %v10587 = vmax.f32 %v10586, %v6501
  %v10588 = vmax.f32 %v10587, %v6503
  %v10589 = vmax.f32 %v10588, %v6504
  %v10590 = vmax.f32 %v10589, %v6506
  %v10591 = vmax.f32 %v10590, %v6508
  %v10592 = vmax.f32 %v10591, %v6510
  %v10593 = vmax.f32 %v10592, %v6512
  %v10594 = vmax.f32 %v10593, %v6514
  %v10595 = vmax.f32 %v10594, %v6516
  %v10596 = vmax.f32 %v10595, %v6518
  %v10597 = vmax.f32 %v10596, %v6519
  %v10598 = vmax.f32 %v10597, %v6521
  %v10599 = vmax.f32 %v10598, %v6523
  %v10600 = vmax.f32 %v10599, %v6525
  %v10601 = vmax.f32 %v10600, %v6527
  %v10602 = vmax.f32 %v10601, %v6529
  %v10603 = vmax.f32 %v10602, %v6531
  %v10604 = vmax.f32 %v10603, %v6533
  %v10605 = vmax.f32 %v10604, %v6534
  %v10606 = vmax.f32 %v10605, %v6536
  %v10607 = vmax.f32 %v10606, %v6538
  %v10608 = vmax.f32 %v10607, %v6540
  %v10609 = vmax.f32 %v10608, %v6542
  %v10610 = vmax.f32 %v10609, %v6544
  %v10611 = vmax.f32 %v10610, %v6546
  %v10612 = vmax.f32 %v10611, %v6548
  %v10613 = vmax.f32 %v10612, %v6549
  %v10614 = vmax.f32 %v10613, %v6551
  %v10615 = vmax.f32 %v10614, %v6553
  %v10616 = vmax.f32 %v10615, %v6555
  %v10617 = vmax.f32 %v10616, %v6557
  %v10618 = vmax.f32 %v10617, %v6559
  %v10619 = vmax.f32 %v10618, %v6561
  %v10620 = vmax.f32 %v10619, %v6563
  %v10621 = vmax.f32 %v10620, %v6564
  %v10622 = vmax.f32 %v10621, %v6566
  %v10623 = vmax.f32 %v10622, %v6568
  %v10624 = vmax.f32 %v10623, %v6570
  %v10625 = vmax.f32 %v10624, %v6572
  %v10626 = vmax.f32 %v10625, %v6574
  %v10627 = vmax.f32 %v10626, %v6576
  %v10628 = vmax.f32 %v10627, %v6578
  %v10629 = vmax.f32 %v10628, %v6579
  %v10630 = vmax.f32 %v10629, %v6581
  %v10631 = vmax.f32 %v10630, %v6583
  %v10632 = vmax.f32 %v10631, %v6585
  %v10633 = vmax.f32 %v10632, %v6587
  %v10634 = vmax.f32 %v10633, %v6589
  %v10635 = vmax.f32 %v10634, %v6591
  %v10636 = vmin.f32 %v6607, %v6608
  %v10637 = vmin.f32 %v10636, %v6609
  %v10638 = vmin.f32 %v10637, %v6611
  %v10639 = vmin.f32 %v10638, %v6613
  %v10640 = vmin.f32 %v10639, %v6615
  %v10641 = vmin.f32 %v10640, %v6617
  %v10642 = vmin.f32 %v10641, %v6619
  %v10643 = vmin.f32 %v10642, %v6621
  %v10644 = vmin.f32 %v10643, %v6623
  %v10645 = vmin.f32 %v10644, %v6624
  %v10646 = vmin.f32 %v10645, %v6626
  %v10647 = vmin.f32 %v10646, %v6628
  %v10648 = vmin.f32 %v10647, %v6630
  %v10649 = vmin.f32 %v10648, %v6632
  %v10650 = vmin.f32 %v10649, %v6634
  %v10651 = vmin.f32 %v10650, %v6636
  %v10652 = vmin.f32 %v10651, %v6638
  %v10653 = vmin.f32 %v10652, %v6639
  %v10654 = vmin.f32 %v10653, %v6641
  %v10655 = vmin.f32 %v10654, %v6643
  %v10656 = vmin.f32 %v10655, %v6645
  %v10657 = vmin.f32 %v10656, %v6647
  %v10658 = vmin.f32 %v10657, %v6649
  %v10659 = vmin.f32 %v10658, %v6651
  %v10660 = vmin.f32 %v10659, %v6653
  %v10661 = vmin.f32 %v10660, %v6654
  %v10662 = vmin.f32 %v10661, %v6656
  %v10663 = vmin.f32 %v10662, %v6658
  %v10664 = vmin.f32 %v10663, %v6660
  %v10665 = vmin.f32 %v10664, %v6662
  %v10666 = vmin.f32 %v10665, %v6664
  %v10667 = vmin.f32 %v10666, %v6666
  %v10668 = vmin.f32 %v10667, %v6668
  %v10669 = vmin.f32 %v10668, %v6669
  %v10670 = vmin.f32 %v10669, %v6671
  %v10671 = vmin.f32 %v10670, %v6673
  %v10672 = vmin.f32 %v10671, %v6675
  %v10673 = vmin.f32 %v10672, %v6677
  %v10674 = vmin.f32 %v10673, %v6679
  %v10675 = vmin.f32 %v10674, %v6681
  %v10676 = vmin.f32 %v10675, %v6683
  %v10677 = vmin.f32 %v10676, %v6684
  %v10678 = vmin.f32 %v10677, %v6686
  %v10679 = vmin.f32 %v10678, %v6688
  %v10680 = vmin.f32 %v10679, %v6690
  %v10681 = vmin.f32 %v10680, %v6692
  %v10682 = vmin.f32 %v10681, %v6694
  %v10683 = vmin.f32 %v10682, %v6696
  %v10684 = vmin.f32 %v10683, %v6698
  %v10685 = vmin.f32 %v10684, %v6699
  %v10686 = vmin.f32 %v10685, %v6701
  %v10687 = vmin.f32 %v10686, %v6703
  %v10688 = vmin.f32 %v10687, %v6705
  %v10689 = vmin.f32 %v10688, %v6707
  %v10690 = vmin.f32 %v10689, %v6709
  %v10691 = vmin.f32 %v10690, %v6711
  %v10692 = vmin.f32 %v6727, %v6728
  %v10693 = vmin.f32 %v10692, %v6729
  %v10694 = vmin.f32 %v10693, %v6731
  %v10695 = vmin.f32 %v10694, %v6733
  %v10696 = vmin.f32 %v10695, %v6735
  %v10697 = vmin.f32 %v10696, %v6737
  %v10698 = vmin.f32 %v10697, %v6739
  %v10699 = vmin.f32 %v10698, %v6741
  %v10700 = vmin.f32 %v10699, %v6743
  %v10701 = vmin.f32 %v10700, %v6744
  %v10702 = vmin.f32 %v10701, %v6746
  %v10703 = vmin.f32 %v10702, %v6748
  %v10704 = vmin.f32 %v10703, %v6750
  %v10705 = vmin.f32 %v10704, %v6752
  %v10706 = vmin.f32 %v10705, %v6754
  %v10707 = vmin.f32 %v10706, %v6756
  %v10708 = vmin.f32 %v10707, %v6758
  %v10709 = vmin.f32 %v10708, %v6759
  %v10710 = vmin.f32 %v10709, %v6761
  %v10711 = vmin.f32 %v10710, %v6763
  %v10712 = vmin.f32 %v10711, %v6765
  %v10713 = vmin.f32 %v10712, %v6767
  %v10714 = vmin.f32 %v10713, %v6769
  %v10715 = vmin.f32 %v10714, %v6771
  %v10716 = vmin.f32 %v10715, %v6773
  %v10717 = vmin.f32 %v10716, %v6774
  %v10718 = vmin.f32 %v10717, %v6776
  %v10719 = vmin.f32 %v10718, %v6778
  %v10720 = vmin.f32 %v10719, %v6780
  %v10721 = vmin.f32 %v10720, %v6782
  %v10722 = vmin.f32 %v10721, %v6784
  %v10723 = vmin.f32 %v10722, %v6786
  %v10724 = vmin.f32 %v10723, %v6788
  %v10725 = vmin.f32 %v10724, %v6789
  %v10726 = vmin.f32 %v10725, %v6791
  %v10727 = vmin.f32 %v10726, %v6793
  %v10728 = vmin.f32 %v10727, %v6795
  %v10729 = vmin.f32 %v10728, %v6797
  %v10730 = vmin.f32 %v10729, %v6799
  %v10731 = vmin.f32 %v10730, %v6801
  %v10732 = vmin.f32 %v10731, %v6803
  %v10733 = vmin.f32 %v10732, %v6804
  %v10734 = vmin.f32 %v10733, %v6806
  %v10735 = vmin.f32 %v10734, %v6808
  %v10736 = vmin.f32 %v10735, %v6810
  %v10737 = vmin.f32 %v10736, %v6812
  %v10738 = vmin.f32 %v10737, %v6814
  %v10739 = vmin.f32 %v10738, %v6816
  %v10740 = vmin.f32 %v10739, %v6818
  %v10741 = vmin.f32 %v10740, %v6819
  %v10742 = vmin.f32 %v10741, %v6821
  %v10743 = vmin.f32 %v10742, %v6823
  %v10744 = vmin.f32 %v10743, %v6825
  %v10745 = vmin.f32 %v10744, %v6827
  %v10746 = vmin.f32 %v10745, %v6829
  %v10747 = vmin.f32 %v10746, %v6831
  %v10748 = vmin.f32 %v6847, %v6848
  %v10749 = vmin.f32 %v10748, %v6849
  %v10750 = vmin.f32 %v10749, %v6851
  %v10751 = vmin.f32 %v10750, %v6853
  %v10752 = vmin.f32 %v10751, %v6855
  %v10753 = vmin.f32 %v10752, %v6857
  %v10754 = vmin.f32 %v10753, %v6859
  %v10755 = vmin.f32 %v10754, %v6861
  %v10756 = vmin.f32 %v10755, %v6863
  %v10757 = vmin.f32 %v10756, %v6864
  %v10758 = vmin.f32 %v10757, %v6866
  %v10759 = vmin.f32 %v10758, %v6868
  %v10760 = vmin.f32 %v10759, %v6870
  %v10761 = vmin.f32 %v10760, %v6872
  %v10762 = vmin.f32 %v10761, %v6874
  %v10763 = vmin.f32 %v10762, %v6876
  %v10764 = vmin.f32 %v10763, %v6878
  %v10765 = vmin.f32 %v10764, %v6879
  %v10766 = vmin.f32 %v10765, %v6881
  %v10767 = vmin.f32 %v10766, %v6883
  %v10768 = vmin.f32 %v10767, %v6885
  %v10769 = vmin.f32 %v10768, %v6887
  %v10770 = vmin.f32 %v10769, %v6889
  %v10771 = vmin.f32 %v10770, %v6891
  %v10772 = vmin.f32 %v10771, %v6893
  %v10773 = vmin.f32 %v10772, %v6894
  %v10774 = vmin.f32 %v10773, %v6896
  %v10775 = vmin.f32 %v10774, %v6898
  %v10776 = vmin.f32 %v10775, %v6900
  %v10777 = vmin.f32 %v10776, %v6902
  %v10778 = vmin.f32 %v10777, %v6904
  %v10779 = vmin.f32 %v10778, %v6906
  %v10780 = vmin.f32 %v10779, %v6908
  %v10781 = vmin.f32 %v10780, %v6909
  %v10782 = vmin.f32 %v10781, %v6911
  %v10783 = vmin.f32 %v10782, %v6913
  %v10784 = vmin.f32 %v10783, %v6915
  %v10785 = vmin.f32 %v10784, %v6917
  %v10786 = vmin.f32 %v10785, %v6919
  %v10787 = vmin.f32 %v10786, %v6921
  %v10788 = vmin.f32 %v10787, %v6923
  %v10789 = vmin.f32 %v10788, %v6924
  %v10790 = vmin.f32 %v10789, %v6926
  %v10791 = vmin.f32 %v10790, %v6928
  %v10792 = vmin.f32 %v10791, %v6930
  %v10793 = vmin.f32 %v10792, %v6932
  %v10794 = vmin.f32 %v10793, %v6934
  %v10795 = vmin.f32 %v10794, %v6936
  %v10796 = vmin.f32 %v10795, %v6938
  %v10797 = vmin.f32 %v10796, %v6939
  %v10798 = vmin.f32 %v10797, %v6941
  %v10799 = vmin.f32 %v10798, %v6943
  %v10800 = vmin.f32 %v10799, %v6945
  %v10801 = vmin.f32 %v10800, %v6947
  %v10802 = vmin.f32 %v10801, %v6949
  %v10803 = vmin.f32 %v10802, %v6951
  %v10804 = vmin.f32 %v6967, %v6968
  %v10805 = vmin.f32 %v10804, %v6969
  %v10806 = vmin.f32 %v10805, %v6971
  %v10807 = vmin.f32 %v10806, %v6973
  %v10808 = vmin.f32 %v10807, %v6975
  %v10809 = vmin.f32 %v10808, %v6977
  %v10810 = vmin.f32 %v10809, %v6979
  %v10811 = vmin.f32 %v10810, %v6981
  %v10812 = vmin.f32 %v10811, %v6983
  %v10813 = vmin.f32 %v10812, %v6984
  %v10814 = vmin.f32 %v10813, %v6986
  %v10815 = vmin.f32 %v10814, %v6988
  %v10816 = vmin.f32 %v10815, %v6990
  %v10817 = vmin.f32 %v10816, %v6992
  %v10818 = vmin.f32 %v10817, %v6994
  %v10819 = vmin.f32 %v10818, %v6996
  %v10820 = vmin.f32 %v10819, %v6998
  %v10821 = vmin.f32 %v10820, %v6999
  %v10822 = vmin.f32 %v10821, %v7001
  %v10823 = vmin.f32 %v10822, %v7003
  %v10824 = vmin.f32 %v10823, %v7005
  %v10825 = vmin.f32 %v10824, %v7007
  %v10826 = vmin.f32 %v10825, %v7009
  %v10827 = vmin.f32 %v10826, %v7011
  %v10828 = vmin.f32 %v10827, %v7013
  %v10829 = vmin.f32 %v10828, %v7014
  %v10830 = vmin.f32 %v10829, %v7016
  %v10831 = vmin.f32 %v10830, %v7018
  %v10832 = vmin.f32 %v10831, %v7020
  %v10833 = vmin.f32 %v10832, %v7022
  %v10834 = vmin.f32 %v10833, %v7024
  %v10835 = vmin.f32 %v10834, %v7026
  %v10836 = vmin.f32 %v10835, %v7028
  %v10837 = vmin.f32 %v10836, %v7029
  %v10838 = vmin.f32 %v10837, %v7031
  %v10839 = vmin.f32 %v10838, %v7033
  %v10840 = vmin.f32 %v10839, %v7035
  %v10841 = vmin.f32 %v10840, %v7037
  %v10842 = vmin.f32 %v10841, %v7039
  %v10843 = vmin.f32 %v10842, %v7041
  %v10844 = vmin.f32 %v10843, %v7043
  %v10845 = vmin.f32 %v10844, %v7044
  %v10846 = vmin.f32 %v10845, %v7046
  %v10847 = vmin.f32 %v10846, %v7048
  %v10848 = vmin.f32 %v10847, %v7050
  %v10849 = vmin.f32 %v10848, %v7052
  %v10850 = vmin.f32 %v10849, %v7054
  %v10851 = vmin.f32 %v10850, %v7056
  %v10852 = vmin.f32 %v10851, %v7058
  %v10853 = vmin.f32 %v10852, %v7059
  %v10854 = vmin.f32 %v10853, %v7061
  %v10855 = vmin.f32 %v10854, %v7063
  %v10856 = vmin.f32 %v10855, %v7065
  %v10857 = vmin.f32 %v10856, %v7067
  %v10858 = vmin.f32 %v10857, %v7069
  %v10859 = vmin.f32 %v10858, %v7071
  %10864 = vrot.lane.b32.xlu0 %v10375, 29
  %v10865 = vpop.permute.xlu0 %10864
  %10866 = vrot.lane.b32.xlu0 %v10387, 29
  %v10867 = vpop.permute.xlu0 %10866
  %10868 = vrot.lane.b32.xlu0 %v10399, 29
  %v10869 = vpop.permute.xlu0 %10868
  %10870 = vrot.lane.b32.xlu0 %v10411, 29
  %v10871 = vpop.permute.xlu0 %10870
  %10880 = vrot.lane.b32.xlu0 %v10467, 58
  %v10881 = vpop.permute.xlu0 %10880
  %10882 = vrot.lane.b32.xlu0 %v10523, 58
  %v10883 = vpop.permute.xlu0 %10882
  %10884 = vrot.lane.b32.xlu0 %v10579, 58
  %v10885 = vpop.permute.xlu0 %10884
  %10886 = vrot.lane.b32.xlu0 %v10635, 58
  %v10887 = vpop.permute.xlu0 %10886
  %10896 = vrot.lane.b32.xlu0 %v10691, 87
  %v10897 = vpop.permute.xlu0 %10896
  %10898 = vrot.lane.b32.xlu0 %v10747, 87
  %v10899 = vpop.permute.xlu0 %10898
  %10900 = vrot.lane.b32.xlu0 %v10803, 87
  %v10901 = vpop.permute.xlu0 %10900
  %10902 = vrot.lane.b32.xlu0 %v10859, 87
  %v10903 = vpop.permute.xlu0 %10902
  %10912 = vrot.lane.b32.xlu0 %v9041, 116
  %v10913 = vpop.permute.xlu0 %10912
  %10914 = vrot.lane.b32.xlu0 %v9049, 116
  %v10915 = vpop.permute.xlu0 %10914
  %10916 = vrot.lane.b32.xlu0 %v9057, 116
  %v10917 = vpop.permute.xlu0 %10916
  %10918 = vrot.lane.b32.xlu0 %v9065, 116
  %v10919 = vpop.permute.xlu0 %10918
  %10928 = vrot.lane.b32.xlu0 %v9042, 4
  %v10929 = vpop.permute.xlu0 %10928
  %10930 = vrot.lane.b32.xlu0 %v9050, 4
  %v10931 = vpop.permute.xlu0 %10930
  %10932 = vrot.lane.b32.xlu0 %v9058, 4
  %v10933 = vpop.permute.xlu0 %10932
  %10934 = vrot.lane.b32.xlu0 %v9066, 4
  %v10935 = vpop.permute.xlu0 %10934
  %10944 = vrot.lane.b32.xlu0 %v9043, 20
  %v10945 = vpop.permute.xlu0 %10944
  %10946 = vrot.lane.b32.xlu0 %v9051, 20
  %v10947 = vpop.permute.xlu0 %10946
  %10948 = vrot.lane.b32.xlu0 %v9059, 20
  %v10949 = vpop.permute.xlu0 %10948
  %10950 = vrot.lane.b32.xlu0 %v9067, 20
  %v10951 = vpop.permute.xlu0 %10950
  %10960 = vrot.lane.b32.xlu0 %v9044, 36
  %v10961 = vpop.permute.xlu0 %10960
  %10962 = vrot.lane.b32.xlu0 %v9052, 36
  %v10963 = vpop.permute.xlu0 %10962
  %10964 = vrot.lane.b32.xlu0 %v9060, 36
  %v10965 = vpop.permute.xlu0 %10964
  %10966 = vrot.lane.b32.xlu0 %v9068, 36
  %v10967 = vpop.permute.xlu0 %10966
  %10976 = vrot.lane.b32.xlu0 %v9045, 52
  %v10977 = vpop.permute.xlu0 %10976
  %10978 = vrot.lane.b32.xlu0 %v9053, 52
  %v10979 = vpop.permute.xlu0 %10978
  %10980 = vrot.lane.b32.xlu0 %v9061, 52
  %v10981 = vpop.permute.xlu0 %10980
  %10982 = vrot.lane.b32.xlu0 %v9069, 52
  %v10983 = vpop.permute.xlu0 %10982
  %10992 = vrot.lane.b32.xlu0 %v9046, 68
  %v10993 = vpop.permute.xlu0 %10992
  %10994 = vrot.lane.b32.xlu0 %v9054, 68
  %v10995 = vpop.permute.xlu0 %10994
  %10996 = vrot.lane.b32.xlu0 %v9062, 68
  %v10997 = vpop.permute.xlu0 %10996
  %10998 = vrot.lane.b32.xlu0 %v9070, 68
  %v10999 = vpop.permute.xlu0 %10998
  %11008 = vrot.lane.b32.xlu0 %v9047, 84
  %v11009 = vpop.permute.xlu0 %11008
  %11010 = vrot.lane.b32.xlu0 %v9055, 84
  %v11011 = vpop.permute.xlu0 %11010
  %11012 = vrot.lane.b32.xlu0 %v9063, 84
  %v11013 = vpop.permute.xlu0 %11012
  %11014 = vrot.lane.b32.xlu0 %v9071, 84
  %v11015 = vpop.permute.xlu0 %11014
  %11024 = vrot.lane.b32.xlu0 %v9048, 100
  %v11025 = vpop.permute.xlu0 %11024
  %11026 = vrot.lane.b32.xlu0 %v9056, 100
  %v11027 = vpop.permute.xlu0 %11026
  %11028 = vrot.lane.b32.xlu0 %v9064, 100
  %v11029 = vpop.permute.xlu0 %11028
  %11030 = vrot.lane.b32.xlu0 %v9072, 100
  %v11031 = vpop.permute.xlu0 %11030
  %v11036 = vsel %vm4185, %v9336, %v10865
  %v11037 = vsel %vm4185, %v9337, %v10867
  %v11038 = vsel %vm4185, %v9338, %v10869
  %v11039 = vsel %vm4185, %v9339, %v10871
  %v11040 = vsel %vm8257, %v11036, %v10881
  %v11041 = vsel %vm8257, %v11037, %v10883
  %v11042 = vsel %vm8257, %v11038, %v10885
  %v11043 = vsel %vm8257, %v11039, %v10887
  %v11044 = vsel %vm8290, %v11040, %v10897
  %v11045 = vsel %vm8290, %v11041, %v10899
  %v11046 = vsel %vm8290, %v11042, %v10901
  %v11047 = vsel %vm8290, %v11043, %v10903
  %v11048 = vsel %vm8323, %v11044, %v10913
  %v11049 = vsel %vm8323, %v11045, %v10915
  %v11050 = vsel %vm8323, %v11046, %v10917
  %v11051 = vsel %vm8323, %v11047, %v10919
  %v11052 = vsel %vm8356, %v10913, %v10929
  %v11053 = vsel %vm8356, %v10915, %v10931
  %v11054 = vsel %vm8356, %v10917, %v10933
  %v11055 = vsel %vm8356, %v10919, %v10935
  %v11056 = vsel %vm8389, %v11052, %v10945
  %v11057 = vsel %vm8389, %v11053, %v10947
  %v11058 = vsel %vm8389, %v11054, %v10949
  %v11059 = vsel %vm8389, %v11055, %v10951
  %v11060 = vsel %vm8422, %v11056, %v10961
  %v11061 = vsel %vm8422, %v11057, %v10963
  %v11062 = vsel %vm8422, %v11058, %v10965
  %v11063 = vsel %vm8422, %v11059, %v10967
  %v11064 = vsel %vm8455, %v11060, %v10977
  %v11065 = vsel %vm8455, %v11061, %v10979
  %v11066 = vsel %vm8455, %v11062, %v10981
  %v11067 = vsel %vm8455, %v11063, %v10983
  %v11068 = vsel %vm8488, %v11064, %v10993
  %v11069 = vsel %vm8488, %v11065, %v10995
  %v11070 = vsel %vm8488, %v11066, %v10997
  %v11071 = vsel %vm8488, %v11067, %v10999
  %v11072 = vsel %vm8521, %v11068, %v11009
  %v11073 = vsel %vm8521, %v11069, %v11011
  %v11074 = vsel %vm8521, %v11070, %v11013
  %v11075 = vsel %vm8521, %v11071, %v11015
  %v11076 = vsel %vm8554, %v11072, %v11025
  %v11077 = vsel %vm8554, %v11073, %v11027
  %v11078 = vsel %vm8554, %v11074, %v11029
  %v11079 = vsel %vm8554, %v11075, %v11031
  %v11081 = vsel %vm8323, %v11076, 0
  %v11084 = vsel %vm8323, %v11077, 0
  %v11087 = vsel %vm8323, %v11078, 0
  %v11090 = vsel %vm8323, %v11079, 0
  %v11093 = vsel %vm8683, %v9103, 0
  %11095 = vmatpush.msra.mxu0 %v9088
  %11096 = vmatpush.msra.mxu0 %v9087
  %11097 = vmatpush.msra.mxu0 %v9086
  %11098 = vmatpush.msra.mxu0 %v9085
  %11099 = vmatpush.msra.mxu0 %v9084
  %11100 = vmatpush.msra.mxu0 %v9083
  %11101 = vmatpush.msra.mxu0 %v9082
  %11102 = vmatpush.msra.mxu0 %v9081
  %11103 = vmatpush.msra.mxu0 %v9080
  %11104 = vmatpush.msra.mxu0 %v9079
  %11105 = vmatpush.msra.mxu0 %v9078
  %11106 = vmatpush.msra.mxu0 %v9077
  %11107 = vmatpush.msra.mxu0 %v9076
  %11108 = vmatpush.msra.mxu0 %v9075
  %11109 = vmatpush.msra.mxu0 %v9074
  %11110 = vmatpush.msra.mxu0 %v9073
  %11111 = vmatmul.f32.gmra.mxu0 %v11048
  %v11112 = vpop.f32.mrf.mxu0
  %v11113 = vadd.f32 0.0, %v11112
  %11114 = vmatmul.f32.gmra.mxu0 %v11049
  %v11115 = vpop.f32.mrf.mxu0
  %v11116 = vadd.f32 0.0, %v11115
  %11117 = vmatmul.f32.gmra.mxu0 %v11050
  %v11118 = vpop.f32.mrf.mxu0
  %v11119 = vadd.f32 0.0, %v11118
  %11120 = vmatmul.f32.gmra.mxu0 %v11051
  %v11121 = vpop.f32.mrf.mxu0
  %v11122 = vadd.f32 0.0, %v11121
  %11123 = vdwg.mxu0
  %11124 = vmatpush.msra.mxu0 0.0
  %11125 = vmatpush.msra.mxu0 %v11093
  %11126 = vmatpush.msra.mxu0 %v9102
  %11127 = vmatpush.msra.mxu0 %v9101
  %11128 = vmatpush.msra.mxu0 %v9100
  %11129 = vmatpush.msra.mxu0 %v9099
  %11130 = vmatpush.msra.mxu0 %v9098
  %11131 = vmatpush.msra.mxu0 %v9097
  %11132 = vmatpush.msra.mxu0 %v9096
  %11133 = vmatpush.msra.mxu0 %v9095
  %11134 = vmatpush.msra.mxu0 %v9094
  %11135 = vmatpush.msra.mxu0 %v9093
  %11136 = vmatpush.msra.mxu0 %v9092
  %11137 = vmatpush.msra.mxu0 %v9091
  %11138 = vmatpush.msra.mxu0 %v9090
  %11139 = vmatpush.msra.mxu0 %v9089
  %11140 = vmatmul.f32.gmra.mxu0 %v11081
  %v11141 = vpop.f32.mrf.mxu0
  %v11142 = vadd.f32 %v11113, %v11141
  %11143 = vmatmul.f32.gmra.mxu0 %v11084
  %v11144 = vpop.f32.mrf.mxu0
  %v11145 = vadd.f32 %v11116, %v11144
  %11146 = vmatmul.f32.gmra.mxu0 %v11087
  %v11147 = vpop.f32.mrf.mxu0
  %v11148 = vadd.f32 %v11119, %v11147
  %11149 = vmatmul.f32.gmra.mxu0 %v11090
  %v11150 = vpop.f32.mrf.mxu0
  %v11151 = vadd.f32 %v11122, %v11150
  %11152 = vdwg.mxu0
  %v11154 = vrot.slane %v9104, 1
  %v11155 = vrot.slane %v9104, 2
  %v11156 = vrot.slane %v9104, 3
  %v11157 = vperm.slane %v9104, 0
  %v11158 = vperm.slane %v11154, 0
  %v11159 = vperm.slane %v11155, 0
  %v11160 = vperm.slane %v11156, 0
  %v11165 = vadd.f32 %v11142, %v11157
  %v11166 = vadd.f32 %v11145, %v11158
  %v11167 = vadd.f32 %v11148, %v11159
  %v11168 = vadd.f32 %v11151, %v11160
  %v11169 = vmax.f32 %v11165, 0.0
  %v11170 = vmax.f32 %v11166, 0.0
  %v11171 = vmax.f32 %v11167, 0.0
  %v11172 = vmax.f32 %v11168, 0.0
  %11173 = vrot.lane.b32.xlu0 %v9070, 16
  %v11174 = vpop.permute.xlu0 %11173
  %11176 = vrot.lane.b32.xlu0 %v9071, 32
  %v11177 = vpop.permute.xlu0 %11176
  %11179 = vrot.lane.b32.xlu0 %v9072, 48
  %v11180 = vpop.permute.xlu0 %11179
  %11183 = vrot.lane.b32.xlu0 %v11169, 64
  %v11184 = vpop.permute.xlu0 %11183
  %11187 = vrot.lane.b32.xlu0 %v11170, 80
  %v11188 = vpop.permute.xlu0 %11187
  %11191 = vrot.lane.b32.xlu0 %v11171, 96
  %v11192 = vpop.permute.xlu0 %11191
  %11195 = vrot.lane.b32.xlu0 %v11172, 112
  %v11196 = vpop.permute.xlu0 %11195
  %vm11198 = vcmask 130048
  %v11199 = vsel %vm11198, %v9069, %v11174
  %vm11200 = vcmask 261120
  %v11201 = vsel %vm11200, %v11199, %v11177
  %vm11202 = vcmask 392192
  %v11203 = vsel %vm11202, %v11201, %v11180
  %vm11204 = vcmask 523264
  %v11205 = vsel %vm11204, %v11203, %v11184
  %vm11206 = vcmask 654336
  %v11207 = vsel %vm11206, %v11205, %v11188
  %vm11208 = vcmask 785408
  %v11209 = vsel %vm11208, %v11207, %v11192
  %vm11210 = vcmask 916480
  %v11211 = vsel %vm11210, %v11209, %v11196
  %11212 = vst [vmem:[%s7] sm:$0xff] %v11211
  // Predicated region
  $region30: #{h1_forward.1} parent=0 // pred_check
    _
  $region31: #{h1_forward.1} parent=0 // pred_check_branch
    %11214 = sbr.rel (0) target = $region33
  $region32: #{h1_forward.1} parent=0 // pred_region
    _
  $region33: #{h1_forward.1} parent=0 // pred_fallthru
    _
  // Predicated region
  $region34: #{h1_forward.1} parent=0 // pred_check
    _
  $region35: #{h1_forward.1} parent=0 // pred_check_branch
    %11216 = sbr.rel (0) target = $region37
  $region36: #{h1_forward.1} parent=0 // pred_region
    _
  $region37: #{h1_forward.1} parent=0 // pred_fallthru
    _

</llo_original>
